<compile_context>
chip_gen: v7x
topology: tpu7x:2x2x1
jax: 0.10.0
libtpu: 0.0.40
codegen_flags: <defaults>
</compile_context>

<pallas_src>
import functools

import jax
import jax.numpy as jnp
from jax.experimental import pallas as pl
from jax.experimental.pallas import tpu as pltpu

MAX_RADIUS = 3.0
NUM_BASIS = 3        # number_of_basis=3
RADIAL_H = 100       # h=100 (zero-padded to H_PAD for the kernel weights)
RADIAL_L = 50        # L=50 hidden layers in the radial MLP
H_PAD = 128          # lane-aligned hidden width
N_NORM = 4.0         # conv(..., n_norm=4) is hardcoded in the reference forward()
LANE = 128           # head-output lane padding
HID_CHUNK = 10       # radial hidden steps per grid step (must divide RADIAL_L)


# ---------------------------------------------------------------------------
# Fused Pallas kernel: 3x (conv + scalar activation) + AvgSpacial + Linear head
# with the radial-MLP hidden weights streamed along grid axis 1.
# ---------------------------------------------------------------------------
def _fused_se3_kernel(*refs, layer_dims, n_points, block_batch, n_norm,
                      hid_chunk):
    """Fused SE3Net forward for one batch-block / one hidden-weight chunk.

    refs layout (inputs..., output, scratch...):
      basis_ref : (bb, N*N, NUM_BASIS)  cosine radial basis, rows p=(z,b,a)
      feat_ref  : (bb, N, Cin0)
      per layer l: w_in (NB, H_PAD), w_hid_chunk (hid_chunk, H_PAD, H_PAD),
                   w_out_flat (H_PAD, Cin*Cout)   [bf16, col = i*Cout + j]
      w_head    : (C_last, 128)  f32 (zero-padded columns)
      b_head    : (1, 128)       f32 (zero-padded columns)
      out_ref   : (bb, 1, 128)   f32
      xs_refs   : nl x VMEM (p, H_PAD) bf16   radial activations carried
                                              across chunk steps
    """
    nl = len(layer_dims)
    basis_ref, feat_ref = refs[0], refs[1]
    w_refs = refs[2:2 + 3 * nl]
    w_head_ref = refs[2 + 3 * nl]
    b_head_ref = refs[3 + 3 * nl]
    out_ref = refs[4 + 3 * nl]
    xs_refs = refs[5 + 3 * nl:5 + 4 * nl]

    n = n_points
    bb = block_batch
    p = bb * n * n
    c = pl.program_id(1)                       # hidden-weight chunk index

    # ---- chunk 0: input layer of the three radial MLPs ---------------------
    @pl.when(c == 0)
    def _():
        basis = basis_ref[...].reshape(p, NUM_BASIS).astype(jnp.bfloat16)
        for l in range(nl):
            x0 = jnp.dot(basis, w_refs[3 * l][...],
                         preferred_element_type=jnp.float32)
            xs_refs[l][...] = jnp.maximum(x0, 0.0).astype(jnp.bfloat16)

    # ---- every chunk: `hid_chunk` hidden steps per chain, statically -------
    # unrolled, the three independent chains interleaved so MXU pushes of one
    # chain overlap the pop/relu of another (review: unroll the hidden loop).
    xs = [xs_refs[l][...] for l in range(nl)]
    for i in range(hid_chunk):
        nxt = []
        for l in range(nl):
            y = jnp.dot(xs[l], w_refs[3 * l + 1][i],
                        preferred_element_type=jnp.float32)
            nxt.append(jnp.maximum(y, 0.0).astype(jnp.bfloat16))
        xs = nxt
    for l in range(nl):
        xs_refs[l][...] = xs[l]

    # ---- last chunk: conv + scalar gate per layer, AvgSpacial + head -------
    @pl.when(c == pl.num_programs(1) - 1)
    def _():
        # out[z,a,j] = relu( (1/sqrt(n_norm)) *
        #                    sum_{b,i,h} xs[(z,b,a),h] w_out[h,j,i] f[z,b,i] )
        inv_norm = 1.0 / (n_norm ** 0.5)
        # feat only feeds VPU lane-broadcast multiplies now -> keep f32
        # (native on v5e's VPU); it never enters a matmul.
        feat = feat_ref[...].astype(jnp.float32)            # (bb, n, cin0)
        for l, (cin, cout) in enumerate(layer_dims):
            # one lane-dense matmul: t[p, i*cout + j] = sum_h xs[p,h] w_out[h,j,i]
            t = jnp.dot(xs_refs[l][...], w_refs[3 * l + 2][...],
                        preferred_element_type=jnp.float32)  # (p, cin*cout)
            # features broadcast to pair rows: f_rows[(z,b,a), i] = f[z,b,i]
            f_rows = jnp.broadcast_to(
                feat.reshape(bb * n, 1, cin), (bb * n, n, cin)
            ).reshape(p, cin)
            # sum over input channel i: static lane slices + row-broadcast
            # multiplies (no sublane<->lane relayout, no reduction matmul).
            conv_pre = t[:, 0:cout] * f_rows[:, 0:1]
            for i in range(1, cin):
                conv_pre = conv_pre + (t[:, i * cout:(i + 1) * cout]
                                       * f_rows[:, i:i + 1])
            # sum over neighbour b (b is the major pair index within a batch
            # element): static sublane slices of n rows each.
            # NOTE: self-pairs (b == a) are included, as in the reference conv.
            cp = conv_pre.reshape(bb, n * n, cout)
            acc = cp[:, 0:n, :]
            for b in range(1, n):
                acc = acc + cp[:, b * n:(b + 1) * n, :]
            # GatedBlock with scalar-only Rs_out == scalar activation (relu)
            feat = jnp.maximum(acc * inv_norm, 0.0)          # (bb, n, cout)

        # AvgSpacial + Linear(64, num_classes), lane-padded output (128 lanes)
        pooled = jnp.mean(feat, axis=1)                      # (bb, C_last)
        logits = (jnp.dot(pooled, w_head_ref[...],
                          preferred_element_type=jnp.float32)
                  + b_head_ref[...])
        out_ref[...] = logits[:, None, :]                    # (bb, 1, 128)


# ---------------------------------------------------------------------------
# Glue / wrappers
# ---------------------------------------------------------------------------
def _choose_batch_splits(batch, n_points):
    """Only split the batch across the two v7x TensorCores when each core gets
    enough pair rows (>=256) to matter; at tiny batch the serial radial chain
    dominates and a split just duplicates the weight DMA (review feedback)."""
    try:
        kind = jax.devices()[0].device_kind.lower()
    except Exception:
        return 1
    two_core = ("v7" in kind) or ("7x" in kind)
    if two_core and batch % 2 == 0 and (batch // 2) * n_points * n_points >= 256:
        return 2
    return 1


def _choose_hid_chunk(radial_l, requested):
    """Hidden-weight chunk size: must divide the number of hidden layers."""
    for cand in (requested, 10, 5, 25, 2, 1):
        if cand is not None and 1 <= cand <= radial_l and radial_l % cand == 0:
            return cand
    return radial_l


def cosine_radial_basis(geometry):
    """Pairwise radial basis; rows p = q*N + r.  d is symmetric in (q, r), so
    the kernel may interpret q as the neighbour and r as the output point.
    (XLA glue, runs outside the Pallas kernel.)"""
    B, N, _ = geometry.shape
    rel = geometry[:, :, None, :] - geometry[:, None, :, :]
    d = jnp.sqrt(jnp.sum(rel * rel, axis=-1) + 1e-12)         # (B, N, N)
    d = d.reshape(B, N * N, 1)
    centers = jnp.linspace(0.0, MAX_RADIUS, NUM_BASIS)
    step = MAX_RADIUS / (NUM_BASIS - 1)
    u = (d - centers[None, None, :]) / step
    # TODO(synk): exact e3nn CosineBasisModel basis chain unavailable; standard cos^2 bump used.
    bump = jnp.where(jnp.abs(u) < 1.0, jnp.cos(0.5 * jnp.pi * u) ** 2, 0.0)
    return bump.astype(jnp.float32)


def init_params(key, representations, num_classes):
    """Deterministic synthetic parameters (shapes follow the module __init__)."""
    layers = []
    for idx, (cin, cout) in enumerate(zip(representations[:-1],
                                          representations[1:])):
        k = jax.random.fold_in(key, idx)
        k1, k2, k3 = jax.random.split(k, 3)
        w_in = (jax.random.normal(k1, (NUM_BASIS, RADIAL_H), jnp.float32)
                * (2.0 / NUM_BASIS) ** 0.5)
        w_hid = (jax.random.normal(k2, (RADIAL_L, RADIAL_H, RADIAL_H), jnp.float32)
                 * (2.0 / RADIAL_H) ** 0.5)
        # per-pair (Cout, Cin) mixing block produced by the radial model
        w_out = (jax.random.normal(k3, (RADIAL_H, cout, cin), jnp.float32)
                 * (1.0 / RADIAL_H) ** 0.5)
        layers.append((w_in, w_hid, w_out))
    kh = jax.random.fold_in(key, 10_000)
    kw, _ = jax.random.split(kh)
    w_head = (jax.random.normal(kw, (representations[-1], num_classes), jnp.float32)
              / (representations[-1] ** 0.5))
    b_head = jnp.zeros((1, num_classes), jnp.float32)
    return {"layers": layers, "head": (w_head, b_head)}


def prepare_params(params):
    """One-time prep: zero-pad radial hidden width 100 -> 128, flatten w_out to
    (H_PAD, Cin*Cout) with column index i*Cout + j (for the lane-slice
    contraction in the kernel), cast radial weights to bf16.  Zero padding +
    relu keeps the math identical to the unpadded model."""
    layers = []
    for (w_in, w_hid, w_out) in params["layers"]:
        pad = H_PAD - w_in.shape[1]
        h, cout, cin = w_out.shape
        w_in_p = jnp.pad(w_in, ((0, 0), (0, pad)))
        w_hid_p = jnp.pad(w_hid, ((0, 0), (0, pad), (0, pad)))
        w_out_p = jnp.pad(w_out, ((0, pad), (0, 0), (0, 0)))
        # (H_PAD, Cout, Cin) -> (H_PAD, Cin*Cout): flat[h, i*Cout + j] = w_out[h, j, i]
        w_out_f = w_out_p.transpose(0, 2, 1).reshape(H_PAD, cin * cout)
        layers.append((w_in_p.astype(jnp.bfloat16),
                       w_hid_p.astype(jnp.bfloat16),
                       w_out_f.astype(jnp.bfloat16)))
    return {"layers": layers, "head": params["head"]}


def se3net_forward(kparams, features, geometry, *, batch_splits=None,
                   hid_chunk=HID_CHUNK):
    """Basis (XLA glue) + one fused Pallas kernel:
    grid = (batch block, hidden-weight chunk)."""
    B, N, cin0 = features.shape
    basis = cosine_radial_basis(geometry)                    # (B, N*N, NUM_BASIS)

    layers = kparams["layers"]
    w_head, b_head = kparams["head"]
    num_classes = w_head.shape[1]
    w_head_p = jnp.pad(w_head.astype(jnp.float32),
                       ((0, 0), (0, LANE - num_classes)))
    b_head_p = jnp.pad(b_head.astype(jnp.float32),
                       ((0, 0), (0, LANE - num_classes)))

    if batch_splits is None:
        batch_splits = _choose_batch_splits(B, N)
    if B % batch_splits != 0:          # never silently drop batch elements
        batch_splits = 1
    # NOTE(v7x): when scaling B, re-derive bb for 64 MiB VMEM — the per-layer
    # matmul result t is ~4*Cin*Cout bytes per pair row (8 KB/row at layer 3).
    bb = B // batch_splits

    radial_l = layers[0][1].shape[0]
    hid_chunk = _choose_hid_chunk(radial_l, hid_chunk)
    n_chunks = radial_l // hid_chunk

    # derive (cin, cout) per layer from the prepared weight shapes
    layer_dims = []
    cin = cin0
    for (_, _, w_out_f) in layers:
        cout = w_out_f.shape[1] // cin
        layer_dims.append((cin, cout))
        cin = cout

    weight_args, weight_specs = [], []
    for (w_in, w_hid, w_out_f) in layers:
        weight_args += [w_in, w_hid, w_out_f]
        weight_specs += [
            pl.BlockSpec(w_in.shape, lambda z, c: (0, 0)),
            # streamed: chunk c of the hidden weights, auto double-buffered so
            # chunk c+1 DMAs while chunk c computes
            pl.BlockSpec((hid_chunk, H_PAD, H_PAD), lambda z, c: (c, 0, 0)),
            pl.BlockSpec(w_out_f.shape, lambda z, c: (0, 0)),
        ]

    kernel = functools.partial(
        _fused_se3_kernel, layer_dims=tuple(layer_dims), n_points=N,
        block_batch=bb, n_norm=N_NORM, hid_chunk=hid_chunk)

    out = pl.pallas_call(
        kernel,
        out_shape=jax.ShapeDtypeStruct((B, 1, LANE), jnp.float32),
        grid=(batch_splits, n_chunks),
        in_specs=([pl.BlockSpec((bb, N * N, NUM_BASIS), lambda z, c: (z, 0, 0)),
                   pl.BlockSpec((bb, N, cin0), lambda z, c: (z, 0, 0))]
                  + weight_specs
                  + [pl.BlockSpec(w_head_p.shape, lambda z, c: (0, 0)),
                     pl.BlockSpec(b_head_p.shape, lambda z, c: (0, 0))]),
        out_specs=pl.BlockSpec((bb, 1, LANE), lambda z, c: (z, 0, 0)),
        scratch_shapes=[pltpu.VMEM((bb * N * N, H_PAD), jnp.bfloat16)
                        for _ in range(len(layers))],
        compiler_params=pltpu.CompilerParams(
            dimension_semantics=("parallel", "arbitrary"),
            vmem_limit_bytes=32 * 1024 * 1024),
    )(basis, features.astype(jnp.float32), *weight_args, w_head_p, b_head_p)

    return out[:, 0, :num_classes]


# ---------------------------------------------------------------------------
if __name__ == "__main__":
    key = jax.random.PRNGKey(0)
    num_classes = 8                        # tetris: 8 shape classes
    representations = [1, 4, 16, 64]       # scalar multiplicities; last is 64 (Linear(64, nc))
    B, N = 2, 4                            # batch=2, 4 points per tetris shape

    kf, kg, kp = jax.random.split(key, 3)
    features = jnp.ones((B, N, representations[0]), jnp.float32)
    geometry = jax.random.normal(kg, (B, N, 3), jnp.float32)

    params = init_params(kp, representations, num_classes)
    kparams = prepare_params(params)       # pad H->128, bf16, flatten w_out (once)

    fwd = jax.jit(se3net_forward)
    out = jax.block_until_ready(fwd(kparams, features, geometry))

    assert out.shape == (B, num_classes), out.shape
    assert jnp.all(jnp.isfinite(out))
    print("KERNEL_OK")
</pallas_src>

<mosaic_0001>
module attributes {stable_mosaic.version = 11 : i64} {
  func.func @_fused_se3_kernel(%arg0: i32, %arg1: i32, %arg2: memref<2x16x3xf32, #tpu.memory_space<vmem>>, %arg3: memref<2x4x1xf32, #tpu.memory_space<vmem>>, %arg4: memref<3x128xbf16, #tpu.memory_space<vmem>>, %arg5: memref<10x128x128xbf16, #tpu.memory_space<vmem>>, %arg6: memref<128x4xbf16, #tpu.memory_space<vmem>>, %arg7: memref<3x128xbf16, #tpu.memory_space<vmem>>, %arg8: memref<10x128x128xbf16, #tpu.memory_space<vmem>>, %arg9: memref<128x64xbf16, #tpu.memory_space<vmem>>, %arg10: memref<3x128xbf16, #tpu.memory_space<vmem>>, %arg11: memref<10x128x128xbf16, #tpu.memory_space<vmem>>, %arg12: memref<128x1024xbf16, #tpu.memory_space<vmem>>, %arg13: memref<64x128xf32, #tpu.memory_space<vmem>>, %arg14: memref<1x128xf32, #tpu.memory_space<vmem>>, %arg15: memref<2x1x128xf32, #tpu.memory_space<vmem>>, %arg16: memref<32x128xbf16, #tpu.memory_space<vmem>>, %arg17: memref<32x128xbf16, #tpu.memory_space<vmem>>, %arg18: memref<32x128xbf16, #tpu.memory_space<vmem>>) attributes {dimension_semantics = [#tpu.dimension_semantics<parallel>, #tpu.dimension_semantics<arbitrary>], iteration_bounds = array<i64: 1, 5>, scalar_prefetch = 0 : i64, scratch_operands = 3 : i64, tpu.core_type = #tpu.core_type<tc>, window_params = [{transform_indices = @transform_0, window_bounds = array<i64: 2, 16, 3>}, {transform_indices = @transform_1, window_bounds = array<i64: 2, 4, 1>}, {pipeline_mode = #tpu.pipeline_mode<synchronous>, transform_indices = @transform_2, window_bounds = array<i64: 3, 128>}, {transform_indices = @transform_3, window_bounds = array<i64: 10, 128, 128>}, {pipeline_mode = #tpu.pipeline_mode<synchronous>, transform_indices = @transform_4, window_bounds = array<i64: 128, 4>}, {pipeline_mode = #tpu.pipeline_mode<synchronous>, transform_indices = @transform_5, window_bounds = array<i64: 3, 128>}, {transform_indices = @transform_6, window_bounds = array<i64: 10, 128, 128>}, {pipeline_mode = #tpu.pipeline_mode<synchronous>, transform_indices = @transform_7, window_bounds = array<i64: 128, 64>}, {pipeline_mode = #tpu.pipeline_mode<synchronous>, transform_indices = @transform_8, window_bounds = array<i64: 3, 128>}, {transform_indices = @transform_9, window_bounds = array<i64: 10, 128, 128>}, {pipeline_mode = #tpu.pipeline_mode<synchronous>, transform_indices = @transform_10, window_bounds = array<i64: 128, 1024>}, {pipeline_mode = #tpu.pipeline_mode<synchronous>, transform_indices = @transform_11, window_bounds = array<i64: 64, 128>}, {pipeline_mode = #tpu.pipeline_mode<synchronous>, transform_indices = @transform_12, window_bounds = array<i64: 1, 128>}, {transform_indices = @transform_13, window_bounds = array<i64: 2, 1, 128>}]} {
    %c0_i32 = arith.constant 0 : i32
    %0 = arith.cmpi eq, %arg1, %c0_i32 : i32
    %1 = arith.extui %0 : i1 to i32
    %c0_i32_0 = arith.constant 0 : i32
    %2 = arith.cmpi ne, %1, %c0_i32_0 : i32
    scf.if %2 {
      %c0_153 = arith.constant 0 : index
      %c0_154 = arith.constant 0 : index
      %c0_155 = arith.constant 0 : index
      %192 = vector.load %arg2[%c0_153, %c0_154, %c0_155] : memref<2x16x3xf32, #tpu.memory_space<vmem>>, vector<2x16x3xf32>
      %193 = vector.shape_cast %192 : vector<2x16x3xf32> to vector<32x3xf32>
      %194 = arith.truncf %193 : vector<32x3xf32> to vector<32x3xbf16>
      %c0_156 = arith.constant 0 : index
      %c0_157 = arith.constant 0 : index
      %195 = vector.load %arg4[%c0_156, %c0_157] : memref<3x128xbf16, #tpu.memory_space<vmem>>, vector<3x128xbf16>
      %cst_158 = arith.constant dense<0.000000e+00> : vector<32x128xf32>
      %196 = tpu.matmul %194, %195, %cst_158 {dimension_numbers = #tpu.dot_dimension_numbers<[1], [0], [0], [1], [0, 0, 1, 1], [], []>} : vector<32x3xbf16>, vector<3x128xbf16>, vector<32x128xf32> -> vector<32x128xf32>
      %cst_159 = arith.constant 0.000000e+00 : f32
      %197 = vector.broadcast %cst_159 : f32 to vector<32x128xf32>
      %198 = arith.maximumf %196, %197 : vector<32x128xf32>
      %199 = arith.truncf %198 : vector<32x128xf32> to vector<32x128xbf16>
      %c0_160 = arith.constant 0 : index
      %c0_161 = arith.constant 0 : index
      %200 = vector.load %arg16[%c0_160, %c0_161] : memref<32x128xbf16, #tpu.memory_space<vmem>>, vector<32x128xbf16>
      tpu.vector_store %arg16[%c0_160, %c0_161], %199 {strides = array<i32>} : memref<32x128xbf16, #tpu.memory_space<vmem>>, vector<32x128xbf16>,
      %c0_162 = arith.constant 0 : index
      %c0_163 = arith.constant 0 : index
      %201 = vector.load %arg7[%c0_162, %c0_163] : memref<3x128xbf16, #tpu.memory_space<vmem>>, vector<3x128xbf16>
      %cst_164 = arith.constant dense<0.000000e+00> : vector<32x128xf32>
      %202 = tpu.matmul %194, %201, %cst_164 {dimension_numbers = #tpu.dot_dimension_numbers<[1], [0], [0], [1], [0, 0, 1, 1], [], []>} : vector<32x3xbf16>, vector<3x128xbf16>, vector<32x128xf32> -> vector<32x128xf32>
      %cst_165 = arith.constant 0.000000e+00 : f32
      %203 = vector.broadcast %cst_165 : f32 to vector<32x128xf32>
      %204 = arith.maximumf %202, %203 : vector<32x128xf32>
      %205 = arith.truncf %204 : vector<32x128xf32> to vector<32x128xbf16>
      %c0_166 = arith.constant 0 : index
      %c0_167 = arith.constant 0 : index
      %206 = vector.load %arg17[%c0_166, %c0_167] : memref<32x128xbf16, #tpu.memory_space<vmem>>, vector<32x128xbf16>
      tpu.vector_store %arg17[%c0_166, %c0_167], %205 {strides = array<i32>} : memref<32x128xbf16, #tpu.memory_space<vmem>>, vector<32x128xbf16>,
      %c0_168 = arith.constant 0 : index
      %c0_169 = arith.constant 0 : index
      %207 = vector.load %arg10[%c0_168, %c0_169] : memref<3x128xbf16, #tpu.memory_space<vmem>>, vector<3x128xbf16>
      %cst_170 = arith.constant dense<0.000000e+00> : vector<32x128xf32>
      %208 = tpu.matmul %194, %207, %cst_170 {dimension_numbers = #tpu.dot_dimension_numbers<[1], [0], [0], [1], [0, 0, 1, 1], [], []>} : vector<32x3xbf16>, vector<3x128xbf16>, vector<32x128xf32> -> vector<32x128xf32>
      %cst_171 = arith.constant 0.000000e+00 : f32
      %209 = vector.broadcast %cst_171 : f32 to vector<32x128xf32>
      %210 = arith.maximumf %208, %209 : vector<32x128xf32>
      %211 = arith.truncf %210 : vector<32x128xf32> to vector<32x128xbf16>
      %c0_172 = arith.constant 0 : index
      %c0_173 = arith.constant 0 : index
      %212 = vector.load %arg18[%c0_172, %c0_173] : memref<32x128xbf16, #tpu.memory_space<vmem>>, vector<32x128xbf16>
      tpu.vector_store %arg18[%c0_172, %c0_173], %211 {strides = array<i32>} : memref<32x128xbf16, #tpu.memory_space<vmem>>, vector<32x128xbf16>,
    } else {
    }
    %c0 = arith.constant 0 : index
    %c0_1 = arith.constant 0 : index
    %3 = vector.load %arg16[%c0, %c0_1] : memref<32x128xbf16, #tpu.memory_space<vmem>>, vector<32x128xbf16>
    %c0_2 = arith.constant 0 : index
    %c0_3 = arith.constant 0 : index
    %4 = vector.load %arg17[%c0_2, %c0_3] : memref<32x128xbf16, #tpu.memory_space<vmem>>, vector<32x128xbf16>
    %c0_4 = arith.constant 0 : index
    %c0_5 = arith.constant 0 : index
    %5 = vector.load %arg18[%c0_4, %c0_5] : memref<32x128xbf16, #tpu.memory_space<vmem>>, vector<32x128xbf16>
    %c0_6 = arith.constant 0 : index
    %c0_7 = arith.constant 0 : index
    %c0_8 = arith.constant 0 : index
    %6 = vector.load %arg5[%c0_6, %c0_7, %c0_8] : memref<10x128x128xbf16, #tpu.memory_space<vmem>>, vector<1x128x128xbf16>
    %7 = vector.shape_cast %6 : vector<1x128x128xbf16> to vector<128x128xbf16>
    %cst = arith.constant dense<0.000000e+00> : vector<32x128xf32>
    %8 = tpu.matmul %3, %7, %cst {dimension_numbers = #tpu.dot_dimension_numbers<[1], [0], [0], [1], [0, 0, 1, 1], [], []>} : vector<32x128xbf16>, vector<128x128xbf16>, vector<32x128xf32> -> vector<32x128xf32>
    %cst_9 = arith.constant 0.000000e+00 : f32
    %9 = vector.broadcast %cst_9 : f32 to vector<32x128xf32>
    %10 = arith.maximumf %8, %9 : vector<32x128xf32>
    %11 = arith.truncf %10 : vector<32x128xf32> to vector<32x128xbf16>
    %c0_10 = arith.constant 0 : index
    %c0_11 = arith.constant 0 : index
    %c0_12 = arith.constant 0 : index
    %12 = vector.load %arg8[%c0_10, %c0_11, %c0_12] : memref<10x128x128xbf16, #tpu.memory_space<vmem>>, vector<1x128x128xbf16>
    %13 = vector.shape_cast %12 : vector<1x128x128xbf16> to vector<128x128xbf16>
    %cst_13 = arith.constant dense<0.000000e+00> : vector<32x128xf32>
    %14 = tpu.matmul %4, %13, %cst_13 {dimension_numbers = #tpu.dot_dimension_numbers<[1], [0], [0], [1], [0, 0, 1, 1], [], []>} : vector<32x128xbf16>, vector<128x128xbf16>, vector<32x128xf32> -> vector<32x128xf32>
    %cst_14 = arith.constant 0.000000e+00 : f32
    %15 = vector.broadcast %cst_14 : f32 to vector<32x128xf32>
    %16 = arith.maximumf %14, %15 : vector<32x128xf32>
    %17 = arith.truncf %16 : vector<32x128xf32> to vector<32x128xbf16>
    %c0_15 = arith.constant 0 : index
    %c0_16 = arith.constant 0 : index
    %c0_17 = arith.constant 0 : index
    %18 = vector.load %arg11[%c0_15, %c0_16, %c0_17] : memref<10x128x128xbf16, #tpu.memory_space<vmem>>, vector<1x128x128xbf16>
    %19 = vector.shape_cast %18 : vector<1x128x128xbf16> to vector<128x128xbf16>
    %cst_18 = arith.constant dense<0.000000e+00> : vector<32x128xf32>
    %20 = tpu.matmul %5, %19, %cst_18 {dimension_numbers = #tpu.dot_dimension_numbers<[1], [0], [0], [1], [0, 0, 1, 1], [], []>} : vector<32x128xbf16>, vector<128x128xbf16>, vector<32x128xf32> -> vector<32x128xf32>
    %cst_19 = arith.constant 0.000000e+00 : f32
    %21 = vector.broadcast %cst_19 : f32 to vector<32x128xf32>
    %22 = arith.maximumf %20, %21 : vector<32x128xf32>
    %23 = arith.truncf %22 : vector<32x128xf32> to vector<32x128xbf16>
    %c1 = arith.constant 1 : index
    %c0_20 = arith.constant 0 : index
    %c0_21 = arith.constant 0 : index
    %24 = vector.load %arg5[%c1, %c0_20, %c0_21] : memref<10x128x128xbf16, #tpu.memory_space<vmem>>, vector<1x128x128xbf16>
    %25 = vector.shape_cast %24 : vector<1x128x128xbf16> to vector<128x128xbf16>
    %cst_22 = arith.constant dense<0.000000e+00> : vector<32x128xf32>
    %26 = tpu.matmul %11, %25, %cst_22 {dimension_numbers = #tpu.dot_dimension_numbers<[1], [0], [0], [1], [0, 0, 1, 1], [], []>} : vector<32x128xbf16>, vector<128x128xbf16>, vector<32x128xf32> -> vector<32x128xf32>
    %cst_23 = arith.constant 0.000000e+00 : f32
    %27 = vector.broadcast %cst_23 : f32 to vector<32x128xf32>
    %28 = arith.maximumf %26, %27 : vector<32x128xf32>
    %29 = arith.truncf %28 : vector<32x128xf32> to vector<32x128xbf16>
    %c1_24 = arith.constant 1 : index
    %c0_25 = arith.constant 0 : index
    %c0_26 = arith.constant 0 : index
    %30 = vector.load %arg8[%c1_24, %c0_25, %c0_26] : memref<10x128x128xbf16, #tpu.memory_space<vmem>>, vector<1x128x128xbf16>
    %31 = vector.shape_cast %30 : vector<1x128x128xbf16> to vector<128x128xbf16>
    %cst_27 = arith.constant dense<0.000000e+00> : vector<32x128xf32>
    %32 = tpu.matmul %17, %31, %cst_27 {dimension_numbers = #tpu.dot_dimension_numbers<[1], [0], [0], [1], [0, 0, 1, 1], [], []>} : vector<32x128xbf16>, vector<128x128xbf16>, vector<32x128xf32> -> vector<32x128xf32>
    %cst_28 = arith.constant 0.000000e+00 : f32
    %33 = vector.broadcast %cst_28 : f32 to vector<32x128xf32>
    %34 = arith.maximumf %32, %33 : vector<32x128xf32>
    %35 = arith.truncf %34 : vector<32x128xf32> to vector<32x128xbf16>
    %c1_29 = arith.constant 1 : index
    %c0_30 = arith.constant 0 : index
    %c0_31 = arith.constant 0 : index
    %36 = vector.load %arg11[%c1_29, %c0_30, %c0_31] : memref<10x128x128xbf16, #tpu.memory_space<vmem>>, vector<1x128x128xbf16>
    %37 = vector.shape_cast %36 : vector<1x128x128xbf16> to vector<128x128xbf16>
    %cst_32 = arith.constant dense<0.000000e+00> : vector<32x128xf32>
    %38 = tpu.matmul %23, %37, %cst_32 {dimension_numbers = #tpu.dot_dimension_numbers<[1], [0], [0], [1], [0, 0, 1, 1], [], []>} : vector<32x128xbf16>, vector<128x128xbf16>, vector<32x128xf32> -> vector<32x128xf32>
    %cst_33 = arith.constant 0.000000e+00 : f32
    %39 = vector.broadcast %cst_33 : f32 to vector<32x128xf32>
    %40 = arith.maximumf %38, %39 : vector<32x128xf32>
    %41 = arith.truncf %40 : vector<32x128xf32> to vector<32x128xbf16>
    %c2 = arith.constant 2 : index
    %c0_34 = arith.constant 0 : index
    %c0_35 = arith.constant 0 : index
    %42 = vector.load %arg5[%c2, %c0_34, %c0_35] : memref<10x128x128xbf16, #tpu.memory_space<vmem>>, vector<1x128x128xbf16>
    %43 = vector.shape_cast %42 : vector<1x128x128xbf16> to vector<128x128xbf16>
    %cst_36 = arith.constant dense<0.000000e+00> : vector<32x128xf32>
    %44 = tpu.matmul %29, %43, %cst_36 {dimension_numbers = #tpu.dot_dimension_numbers<[1], [0], [0], [1], [0, 0, 1, 1], [], []>} : vector<32x128xbf16>, vector<128x128xbf16>, vector<32x128xf32> -> vector<32x128xf32>
    %cst_37 = arith.constant 0.000000e+00 : f32
    %45 = vector.broadcast %cst_37 : f32 to vector<32x128xf32>
    %46 = arith.maximumf %44, %45 : vector<32x128xf32>
    %47 = arith.truncf %46 : vector<32x128xf32> to vector<32x128xbf16>
    %c2_38 = arith.constant 2 : index
    %c0_39 = arith.constant 0 : index
    %c0_40 = arith.constant 0 : index
    %48 = vector.load %arg8[%c2_38, %c0_39, %c0_40] : memref<10x128x128xbf16, #tpu.memory_space<vmem>>, vector<1x128x128xbf16>
    %49 = vector.shape_cast %48 : vector<1x128x128xbf16> to vector<128x128xbf16>
    %cst_41 = arith.constant dense<0.000000e+00> : vector<32x128xf32>
    %50 = tpu.matmul %35, %49, %cst_41 {dimension_numbers = #tpu.dot_dimension_numbers<[1], [0], [0], [1], [0, 0, 1, 1], [], []>} : vector<32x128xbf16>, vector<128x128xbf16>, vector<32x128xf32> -> vector<32x128xf32>
    %cst_42 = arith.constant 0.000000e+00 : f32
    %51 = vector.broadcast %cst_42 : f32 to vector<32x128xf32>
    %52 = arith.maximumf %50, %51 : vector<32x128xf32>
    %53 = arith.truncf %52 : vector<32x128xf32> to vector<32x128xbf16>
    %c2_43 = arith.constant 2 : index
    %c0_44 = arith.constant 0 : index
    %c0_45 = arith.constant 0 : index
    %54 = vector.load %arg11[%c2_43, %c0_44, %c0_45] : memref<10x128x128xbf16, #tpu.memory_space<vmem>>, vector<1x128x128xbf16>
    %55 = vector.shape_cast %54 : vector<1x128x128xbf16> to vector<128x128xbf16>
    %cst_46 = arith.constant dense<0.000000e+00> : vector<32x128xf32>
    %56 = tpu.matmul %41, %55, %cst_46 {dimension_numbers = #tpu.dot_dimension_numbers<[1], [0], [0], [1], [0, 0, 1, 1], [], []>} : vector<32x128xbf16>, vector<128x128xbf16>, vector<32x128xf32> -> vector<32x128xf32>
    %cst_47 = arith.constant 0.000000e+00 : f32
    %57 = vector.broadcast %cst_47 : f32 to vector<32x128xf32>
    %58 = arith.maximumf %56, %57 : vector<32x128xf32>
    %59 = arith.truncf %58 : vector<32x128xf32> to vector<32x128xbf16>
    %c3 = arith.constant 3 : index
    %c0_48 = arith.constant 0 : index
    %c0_49 = arith.constant 0 : index
    %60 = vector.load %arg5[%c3, %c0_48, %c0_49] : memref<10x128x128xbf16, #tpu.memory_space<vmem>>, vector<1x128x128xbf16>
    %61 = vector.shape_cast %60 : vector<1x128x128xbf16> to vector<128x128xbf16>
    %cst_50 = arith.constant dense<0.000000e+00> : vector<32x128xf32>
    %62 = tpu.matmul %47, %61, %cst_50 {dimension_numbers = #tpu.dot_dimension_numbers<[1], [0], [0], [1], [0, 0, 1, 1], [], []>} : vector<32x128xbf16>, vector<128x128xbf16>, vector<32x128xf32> -> vector<32x128xf32>
    %cst_51 = arith.constant 0.000000e+00 : f32
    %63 = vector.broadcast %cst_51 : f32 to vector<32x128xf32>
    %64 = arith.maximumf %62, %63 : vector<32x128xf32>
    %65 = arith.truncf %64 : vector<32x128xf32> to vector<32x128xbf16>
    %c3_52 = arith.constant 3 : index
    %c0_53 = arith.constant 0 : index
    %c0_54 = arith.constant 0 : index
    %66 = vector.load %arg8[%c3_52, %c0_53, %c0_54] : memref<10x128x128xbf16, #tpu.memory_space<vmem>>, vector<1x128x128xbf16>
    %67 = vector.shape_cast %66 : vector<1x128x128xbf16> to vector<128x128xbf16>
    %cst_55 = arith.constant dense<0.000000e+00> : vector<32x128xf32>
    %68 = tpu.matmul %53, %67, %cst_55 {dimension_numbers = #tpu.dot_dimension_numbers<[1], [0], [0], [1], [0, 0, 1, 1], [], []>} : vector<32x128xbf16>, vector<128x128xbf16>, vector<32x128xf32> -> vector<32x128xf32>
    %cst_56 = arith.constant 0.000000e+00 : f32
    %69 = vector.broadcast %cst_56 : f32 to vector<32x128xf32>
    %70 = arith.maximumf %68, %69 : vector<32x128xf32>
    %71 = arith.truncf %70 : vector<32x128xf32> to vector<32x128xbf16>
    %c3_57 = arith.constant 3 : index
    %c0_58 = arith.constant 0 : index
    %c0_59 = arith.constant 0 : index
    %72 = vector.load %arg11[%c3_57, %c0_58, %c0_59] : memref<10x128x128xbf16, #tpu.memory_space<vmem>>, vector<1x128x128xbf16>
    %73 = vector.shape_cast %72 : vector<1x128x128xbf16> to vector<128x128xbf16>
    %cst_60 = arith.constant dense<0.000000e+00> : vector<32x128xf32>
    %74 = tpu.matmul %59, %73, %cst_60 {dimension_numbers = #tpu.dot_dimension_numbers<[1], [0], [0], [1], [0, 0, 1, 1], [], []>} : vector<32x128xbf16>, vector<128x128xbf16>, vector<32x128xf32> -> vector<32x128xf32>
    %cst_61 = arith.constant 0.000000e+00 : f32
    %75 = vector.broadcast %cst_61 : f32 to vector<32x128xf32>
    %76 = arith.maximumf %74, %75 : vector<32x128xf32>
    %77 = arith.truncf %76 : vector<32x128xf32> to vector<32x128xbf16>
    %c4 = arith.constant 4 : index
    %c0_62 = arith.constant 0 : index
    %c0_63 = arith.constant 0 : index
    %78 = vector.load %arg5[%c4, %c0_62, %c0_63] : memref<10x128x128xbf16, #tpu.memory_space<vmem>>, vector<1x128x128xbf16>
    %79 = vector.shape_cast %78 : vector<1x128x128xbf16> to vector<128x128xbf16>
    %cst_64 = arith.constant dense<0.000000e+00> : vector<32x128xf32>
    %80 = tpu.matmul %65, %79, %cst_64 {dimension_numbers = #tpu.dot_dimension_numbers<[1], [0], [0], [1], [0, 0, 1, 1], [], []>} : vector<32x128xbf16>, vector<128x128xbf16>, vector<32x128xf32> -> vector<32x128xf32>
    %cst_65 = arith.constant 0.000000e+00 : f32
    %81 = vector.broadcast %cst_65 : f32 to vector<32x128xf32>
    %82 = arith.maximumf %80, %81 : vector<32x128xf32>
    %83 = arith.truncf %82 : vector<32x128xf32> to vector<32x128xbf16>
    %c4_66 = arith.constant 4 : index
    %c0_67 = arith.constant 0 : index
    %c0_68 = arith.constant 0 : index
    %84 = vector.load %arg8[%c4_66, %c0_67, %c0_68] : memref<10x128x128xbf16, #tpu.memory_space<vmem>>, vector<1x128x128xbf16>
    %85 = vector.shape_cast %84 : vector<1x128x128xbf16> to vector<128x128xbf16>
    %cst_69 = arith.constant dense<0.000000e+00> : vector<32x128xf32>
    %86 = tpu.matmul %71, %85, %cst_69 {dimension_numbers = #tpu.dot_dimension_numbers<[1], [0], [0], [1], [0, 0, 1, 1], [], []>} : vector<32x128xbf16>, vector<128x128xbf16>, vector<32x128xf32> -> vector<32x128xf32>
    %cst_70 = arith.constant 0.000000e+00 : f32
    %87 = vector.broadcast %cst_70 : f32 to vector<32x128xf32>
    %88 = arith.maximumf %86, %87 : vector<32x128xf32>
    %89 = arith.truncf %88 : vector<32x128xf32> to vector<32x128xbf16>
    %c4_71 = arith.constant 4 : index
    %c0_72 = arith.constant 0 : index
    %c0_73 = arith.constant 0 : index
    %90 = vector.load %arg11[%c4_71, %c0_72, %c0_73] : memref<10x128x128xbf16, #tpu.memory_space<vmem>>, vector<1x128x128xbf16>
    %91 = vector.shape_cast %90 : vector<1x128x128xbf16> to vector<128x128xbf16>
    %cst_74 = arith.constant dense<0.000000e+00> : vector<32x128xf32>
    %92 = tpu.matmul %77, %91, %cst_74 {dimension_numbers = #tpu.dot_dimension_numbers<[1], [0], [0], [1], [0, 0, 1, 1], [], []>} : vector<32x128xbf16>, vector<128x128xbf16>, vector<32x128xf32> -> vector<32x128xf32>
    %cst_75 = arith.constant 0.000000e+00 : f32
    %93 = vector.broadcast %cst_75 : f32 to vector<32x128xf32>
    %94 = arith.maximumf %92, %93 : vector<32x128xf32>
    %95 = arith.truncf %94 : vector<32x128xf32> to vector<32x128xbf16>
    %c5 = arith.constant 5 : index
    %c0_76 = arith.constant 0 : index
    %c0_77 = arith.constant 0 : index
    %96 = vector.load %arg5[%c5, %c0_76, %c0_77] : memref<10x128x128xbf16, #tpu.memory_space<vmem>>, vector<1x128x128xbf16>
    %97 = vector.shape_cast %96 : vector<1x128x128xbf16> to vector<128x128xbf16>
    %cst_78 = arith.constant dense<0.000000e+00> : vector<32x128xf32>
    %98 = tpu.matmul %83, %97, %cst_78 {dimension_numbers = #tpu.dot_dimension_numbers<[1], [0], [0], [1], [0, 0, 1, 1], [], []>} : vector<32x128xbf16>, vector<128x128xbf16>, vector<32x128xf32> -> vector<32x128xf32>
    %cst_79 = arith.constant 0.000000e+00 : f32
    %99 = vector.broadcast %cst_79 : f32 to vector<32x128xf32>
    %100 = arith.maximumf %98, %99 : vector<32x128xf32>
    %101 = arith.truncf %100 : vector<32x128xf32> to vector<32x128xbf16>
    %c5_80 = arith.constant 5 : index
    %c0_81 = arith.constant 0 : index
    %c0_82 = arith.constant 0 : index
    %102 = vector.load %arg8[%c5_80, %c0_81, %c0_82] : memref<10x128x128xbf16, #tpu.memory_space<vmem>>, vector<1x128x128xbf16>
    %103 = vector.shape_cast %102 : vector<1x128x128xbf16> to vector<128x128xbf16>
    %cst_83 = arith.constant dense<0.000000e+00> : vector<32x128xf32>
    %104 = tpu.matmul %89, %103, %cst_83 {dimension_numbers = #tpu.dot_dimension_numbers<[1], [0], [0], [1], [0, 0, 1, 1], [], []>} : vector<32x128xbf16>, vector<128x128xbf16>, vector<32x128xf32> -> vector<32x128xf32>
    %cst_84 = arith.constant 0.000000e+00 : f32
    %105 = vector.broadcast %cst_84 : f32 to vector<32x128xf32>
    %106 = arith.maximumf %104, %105 : vector<32x128xf32>
    %107 = arith.truncf %106 : vector<32x128xf32> to vector<32x128xbf16>
    %c5_85 = arith.constant 5 : index
    %c0_86 = arith.constant 0 : index
    %c0_87 = arith.constant 0 : index
    %108 = vector.load %arg11[%c5_85, %c0_86, %c0_87] : memref<10x128x128xbf16, #tpu.memory_space<vmem>>, vector<1x128x128xbf16>
    %109 = vector.shape_cast %108 : vector<1x128x128xbf16> to vector<128x128xbf16>
    %cst_88 = arith.constant dense<0.000000e+00> : vector<32x128xf32>
    %110 = tpu.matmul %95, %109, %cst_88 {dimension_numbers = #tpu.dot_dimension_numbers<[1], [0], [0], [1], [0, 0, 1, 1], [], []>} : vector<32x128xbf16>, vector<128x128xbf16>, vector<32x128xf32> -> vector<32x128xf32>
    %cst_89 = arith.constant 0.000000e+00 : f32
    %111 = vector.broadcast %cst_89 : f32 to vector<32x128xf32>
    %112 = arith.maximumf %110, %111 : vector<32x128xf32>
    %113 = arith.truncf %112 : vector<32x128xf32> to vector<32x128xbf16>
    %c6 = arith.constant 6 : index
    %c0_90 = arith.constant 0 : index
    %c0_91 = arith.constant 0 : index
    %114 = vector.load %arg5[%c6, %c0_90, %c0_91] : memref<10x128x128xbf16, #tpu.memory_space<vmem>>, vector<1x128x128xbf16>
    %115 = vector.shape_cast %114 : vector<1x128x128xbf16> to vector<128x128xbf16>
    %cst_92 = arith.constant dense<0.000000e+00> : vector<32x128xf32>
    %116 = tpu.matmul %101, %115, %cst_92 {dimension_numbers = #tpu.dot_dimension_numbers<[1], [0], [0], [1], [0, 0, 1, 1], [], []>} : vector<32x128xbf16>, vector<128x128xbf16>, vector<32x128xf32> -> vector<32x128xf32>
    %cst_93 = arith.constant 0.000000e+00 : f32
    %117 = vector.broadcast %cst_93 : f32 to vector<32x128xf32>
    %118 = arith.maximumf %116, %117 : vector<32x128xf32>
    %119 = arith.truncf %118 : vector<32x128xf32> to vector<32x128xbf16>
    %c6_94 = arith.constant 6 : index
    %c0_95 = arith.constant 0 : index
    %c0_96 = arith.constant 0 : index
    %120 = vector.load %arg8[%c6_94, %c0_95, %c0_96] : memref<10x128x128xbf16, #tpu.memory_space<vmem>>, vector<1x128x128xbf16>
    %121 = vector.shape_cast %120 : vector<1x128x128xbf16> to vector<128x128xbf16>
    %cst_97 = arith.constant dense<0.000000e+00> : vector<32x128xf32>
    %122 = tpu.matmul %107, %121, %cst_97 {dimension_numbers = #tpu.dot_dimension_numbers<[1], [0], [0], [1], [0, 0, 1, 1], [], []>} : vector<32x128xbf16>, vector<128x128xbf16>, vector<32x128xf32> -> vector<32x128xf32>
    %cst_98 = arith.constant 0.000000e+00 : f32
    %123 = vector.broadcast %cst_98 : f32 to vector<32x128xf32>
    %124 = arith.maximumf %122, %123 : vector<32x128xf32>
    %125 = arith.truncf %124 : vector<32x128xf32> to vector<32x128xbf16>
    %c6_99 = arith.constant 6 : index
    %c0_100 = arith.constant 0 : index
    %c0_101 = arith.constant 0 : index
    %126 = vector.load %arg11[%c6_99, %c0_100, %c0_101] : memref<10x128x128xbf16, #tpu.memory_space<vmem>>, vector<1x128x128xbf16>
    %127 = vector.shape_cast %126 : vector<1x128x128xbf16> to vector<128x128xbf16>
    %cst_102 = arith.constant dense<0.000000e+00> : vector<32x128xf32>
    %128 = tpu.matmul %113, %127, %cst_102 {dimension_numbers = #tpu.dot_dimension_numbers<[1], [0], [0], [1], [0, 0, 1, 1], [], []>} : vector<32x128xbf16>, vector<128x128xbf16>, vector<32x128xf32> -> vector<32x128xf32>
    %cst_103 = arith.constant 0.000000e+00 : f32
    %129 = vector.broadcast %cst_103 : f32 to vector<32x128xf32>
    %130 = arith.maximumf %128, %129 : vector<32x128xf32>
    %131 = arith.truncf %130 : vector<32x128xf32> to vector<32x128xbf16>
    %c7 = arith.constant 7 : index
    %c0_104 = arith.constant 0 : index
    %c0_105 = arith.constant 0 : index
    %132 = vector.load %arg5[%c7, %c0_104, %c0_105] : memref<10x128x128xbf16, #tpu.memory_space<vmem>>, vector<1x128x128xbf16>
    %133 = vector.shape_cast %132 : vector<1x128x128xbf16> to vector<128x128xbf16>
    %cst_106 = arith.constant dense<0.000000e+00> : vector<32x128xf32>
    %134 = tpu.matmul %119, %133, %cst_106 {dimension_numbers = #tpu.dot_dimension_numbers<[1], [0], [0], [1], [0, 0, 1, 1], [], []>} : vector<32x128xbf16>, vector<128x128xbf16>, vector<32x128xf32> -> vector<32x128xf32>
    %cst_107 = arith.constant 0.000000e+00 : f32
    %135 = vector.broadcast %cst_107 : f32 to vector<32x128xf32>
    %136 = arith.maximumf %134, %135 : vector<32x128xf32>
    %137 = arith.truncf %136 : vector<32x128xf32> to vector<32x128xbf16>
    %c7_108 = arith.constant 7 : index
    %c0_109 = arith.constant 0 : index
    %c0_110 = arith.constant 0 : index
    %138 = vector.load %arg8[%c7_108, %c0_109, %c0_110] : memref<10x128x128xbf16, #tpu.memory_space<vmem>>, vector<1x128x128xbf16>
    %139 = vector.shape_cast %138 : vector<1x128x128xbf16> to vector<128x128xbf16>
    %cst_111 = arith.constant dense<0.000000e+00> : vector<32x128xf32>
    %140 = tpu.matmul %125, %139, %cst_111 {dimension_numbers = #tpu.dot_dimension_numbers<[1], [0], [0], [1], [0, 0, 1, 1], [], []>} : vector<32x128xbf16>, vector<128x128xbf16>, vector<32x128xf32> -> vector<32x128xf32>
    %cst_112 = arith.constant 0.000000e+00 : f32
    %141 = vector.broadcast %cst_112 : f32 to vector<32x128xf32>
    %142 = arith.maximumf %140, %141 : vector<32x128xf32>
    %143 = arith.truncf %142 : vector<32x128xf32> to vector<32x128xbf16>
    %c7_113 = arith.constant 7 : index
    %c0_114 = arith.constant 0 : index
    %c0_115 = arith.constant 0 : index
    %144 = vector.load %arg11[%c7_113, %c0_114, %c0_115] : memref<10x128x128xbf16, #tpu.memory_space<vmem>>, vector<1x128x128xbf16>
    %145 = vector.shape_cast %144 : vector<1x128x128xbf16> to vector<128x128xbf16>
    %cst_116 = arith.constant dense<0.000000e+00> : vector<32x128xf32>
    %146 = tpu.matmul %131, %145, %cst_116 {dimension_numbers = #tpu.dot_dimension_numbers<[1], [0], [0], [1], [0, 0, 1, 1], [], []>} : vector<32x128xbf16>, vector<128x128xbf16>, vector<32x128xf32> -> vector<32x128xf32>
    %cst_117 = arith.constant 0.000000e+00 : f32
    %147 = vector.broadcast %cst_117 : f32 to vector<32x128xf32>
    %148 = arith.maximumf %146, %147 : vector<32x128xf32>
    %149 = arith.truncf %148 : vector<32x128xf32> to vector<32x128xbf16>
    %c8 = arith.constant 8 : index
    %c0_118 = arith.constant 0 : index
    %c0_119 = arith.constant 0 : index
    %150 = vector.load %arg5[%c8, %c0_118, %c0_119] : memref<10x128x128xbf16, #tpu.memory_space<vmem>>, vector<1x128x128xbf16>
    %151 = vector.shape_cast %150 : vector<1x128x128xbf16> to vector<128x128xbf16>
    %cst_120 = arith.constant dense<0.000000e+00> : vector<32x128xf32>
    %152 = tpu.matmul %137, %151, %cst_120 {dimension_numbers = #tpu.dot_dimension_numbers<[1], [0], [0], [1], [0, 0, 1, 1], [], []>} : vector<32x128xbf16>, vector<128x128xbf16>, vector<32x128xf32> -> vector<32x128xf32>
    %cst_121 = arith.constant 0.000000e+00 : f32
    %153 = vector.broadcast %cst_121 : f32 to vector<32x128xf32>
    %154 = arith.maximumf %152, %153 : vector<32x128xf32>
    %155 = arith.truncf %154 : vector<32x128xf32> to vector<32x128xbf16>
    %c8_122 = arith.constant 8 : index
    %c0_123 = arith.constant 0 : index
    %c0_124 = arith.constant 0 : index
    %156 = vector.load %arg8[%c8_122, %c0_123, %c0_124] : memref<10x128x128xbf16, #tpu.memory_space<vmem>>, vector<1x128x128xbf16>
    %157 = vector.shape_cast %156 : vector<1x128x128xbf16> to vector<128x128xbf16>
    %cst_125 = arith.constant dense<0.000000e+00> : vector<32x128xf32>
    %158 = tpu.matmul %143, %157, %cst_125 {dimension_numbers = #tpu.dot_dimension_numbers<[1], [0], [0], [1], [0, 0, 1, 1], [], []>} : vector<32x128xbf16>, vector<128x128xbf16>, vector<32x128xf32> -> vector<32x128xf32>
    %cst_126 = arith.constant 0.000000e+00 : f32
    %159 = vector.broadcast %cst_126 : f32 to vector<32x128xf32>
    %160 = arith.maximumf %158, %159 : vector<32x128xf32>
    %161 = arith.truncf %160 : vector<32x128xf32> to vector<32x128xbf16>
    %c8_127 = arith.constant 8 : index
    %c0_128 = arith.constant 0 : index
    %c0_129 = arith.constant 0 : index
    %162 = vector.load %arg11[%c8_127, %c0_128, %c0_129] : memref<10x128x128xbf16, #tpu.memory_space<vmem>>, vector<1x128x128xbf16>
    %163 = vector.shape_cast %162 : vector<1x128x128xbf16> to vector<128x128xbf16>
    %cst_130 = arith.constant dense<0.000000e+00> : vector<32x128xf32>
    %164 = tpu.matmul %149, %163, %cst_130 {dimension_numbers = #tpu.dot_dimension_numbers<[1], [0], [0], [1], [0, 0, 1, 1], [], []>} : vector<32x128xbf16>, vector<128x128xbf16>, vector<32x128xf32> -> vector<32x128xf32>
    %cst_131 = arith.constant 0.000000e+00 : f32
    %165 = vector.broadcast %cst_131 : f32 to vector<32x128xf32>
    %166 = arith.maximumf %164, %165 : vector<32x128xf32>
    %167 = arith.truncf %166 : vector<32x128xf32> to vector<32x128xbf16>
    %c9 = arith.constant 9 : index
    %c0_132 = arith.constant 0 : index
    %c0_133 = arith.constant 0 : index
    %168 = vector.load %arg5[%c9, %c0_132, %c0_133] : memref<10x128x128xbf16, #tpu.memory_space<vmem>>, vector<1x128x128xbf16>
    %169 = vector.shape_cast %168 : vector<1x128x128xbf16> to vector<128x128xbf16>
    %cst_134 = arith.constant dense<0.000000e+00> : vector<32x128xf32>
    %170 = tpu.matmul %155, %169, %cst_134 {dimension_numbers = #tpu.dot_dimension_numbers<[1], [0], [0], [1], [0, 0, 1, 1], [], []>} : vector<32x128xbf16>, vector<128x128xbf16>, vector<32x128xf32> -> vector<32x128xf32>
    %cst_135 = arith.constant 0.000000e+00 : f32
    %171 = vector.broadcast %cst_135 : f32 to vector<32x128xf32>
    %172 = arith.maximumf %170, %171 : vector<32x128xf32>
    %173 = arith.truncf %172 : vector<32x128xf32> to vector<32x128xbf16>
    %c9_136 = arith.constant 9 : index
    %c0_137 = arith.constant 0 : index
    %c0_138 = arith.constant 0 : index
    %174 = vector.load %arg8[%c9_136, %c0_137, %c0_138] : memref<10x128x128xbf16, #tpu.memory_space<vmem>>, vector<1x128x128xbf16>
    %175 = vector.shape_cast %174 : vector<1x128x128xbf16> to vector<128x128xbf16>
    %cst_139 = arith.constant dense<0.000000e+00> : vector<32x128xf32>
    %176 = tpu.matmul %161, %175, %cst_139 {dimension_numbers = #tpu.dot_dimension_numbers<[1], [0], [0], [1], [0, 0, 1, 1], [], []>} : vector<32x128xbf16>, vector<128x128xbf16>, vector<32x128xf32> -> vector<32x128xf32>
    %cst_140 = arith.constant 0.000000e+00 : f32
    %177 = vector.broadcast %cst_140 : f32 to vector<32x128xf32>
    %178 = arith.maximumf %176, %177 : vector<32x128xf32>
    %179 = arith.truncf %178 : vector<32x128xf32> to vector<32x128xbf16>
    %c9_141 = arith.constant 9 : index
    %c0_142 = arith.constant 0 : index
    %c0_143 = arith.constant 0 : index
    %180 = vector.load %arg11[%c9_141, %c0_142, %c0_143] : memref<10x128x128xbf16, #tpu.memory_space<vmem>>, vector<1x128x128xbf16>
    %181 = vector.shape_cast %180 : vector<1x128x128xbf16> to vector<128x128xbf16>
    %cst_144 = arith.constant dense<0.000000e+00> : vector<32x128xf32>
    %182 = tpu.matmul %167, %181, %cst_144 {dimension_numbers = #tpu.dot_dimension_numbers<[1], [0], [0], [1], [0, 0, 1, 1], [], []>} : vector<32x128xbf16>, vector<128x128xbf16>, vector<32x128xf32> -> vector<32x128xf32>
    %cst_145 = arith.constant 0.000000e+00 : f32
    %183 = vector.broadcast %cst_145 : f32 to vector<32x128xf32>
    %184 = arith.maximumf %182, %183 : vector<32x128xf32>
    %185 = arith.truncf %184 : vector<32x128xf32> to vector<32x128xbf16>
    %c0_146 = arith.constant 0 : index
    %c0_147 = arith.constant 0 : index
    %186 = vector.load %arg16[%c0_146, %c0_147] : memref<32x128xbf16, #tpu.memory_space<vmem>>, vector<32x128xbf16>
    tpu.vector_store %arg16[%c0_146, %c0_147], %173 {strides = array<i32>} : memref<32x128xbf16, #tpu.memory_space<vmem>>, vector<32x128xbf16>,
    %c0_148 = arith.constant 0 : index
    %c0_149 = arith.constant 0 : index
    %187 = vector.load %arg17[%c0_148, %c0_149] : memref<32x128xbf16, #tpu.memory_space<vmem>>, vector<32x128xbf16>
    tpu.vector_store %arg17[%c0_148, %c0_149], %179 {strides = array<i32>} : memref<32x128xbf16, #tpu.memory_space<vmem>>, vector<32x128xbf16>,
    %c0_150 = arith.constant 0 : index
    %c0_151 = arith.constant 0 : index
    %188 = vector.load %arg18[%c0_150, %c0_151] : memref<32x128xbf16, #tpu.memory_space<vmem>>, vector<32x128xbf16>
    tpu.vector_store %arg18[%c0_150, %c0_151], %185 {strides = array<i32>} : memref<32x128xbf16, #tpu.memory_space<vmem>>, vector<32x128xbf16>,
    %c4_i32 = arith.constant 4 : i32
    %189 = arith.cmpi eq, %arg1, %c4_i32 : i32
    %190 = arith.extui %189 : i1 to i32
    %c0_i32_152 = arith.constant 0 : i32
    %191 = arith.cmpi ne, %190, %c0_i32_152 : i32
    scf.if %191 {
      %c0_153 = arith.constant 0 : index
      %c0_154 = arith.constant 0 : index
      %c0_155 = arith.constant 0 : index
      %192 = vector.load %arg3[%c0_153, %c0_154, %c0_155] : memref<2x4x1xf32, #tpu.memory_space<vmem>>, vector<2x4x1xf32>
      %c0_156 = arith.constant 0 : index
      %c0_157 = arith.constant 0 : index
      %193 = vector.load %arg16[%c0_156, %c0_157] : memref<32x128xbf16, #tpu.memory_space<vmem>>, vector<32x128xbf16>
      %c0_158 = arith.constant 0 : index
      %c0_159 = arith.constant 0 : index
      %194 = vector.load %arg6[%c0_158, %c0_159] : memref<128x4xbf16, #tpu.memory_space<vmem>>, vector<128x4xbf16>
      %cst_160 = arith.constant dense<0.000000e+00> : vector<32x4xf32>
      %195 = tpu.matmul %193, %194, %cst_160 {dimension_numbers = #tpu.dot_dimension_numbers<[1], [0], [0], [1], [0, 0, 1, 1], [], []>} : vector<32x128xbf16>, vector<128x4xbf16>, vector<32x4xf32> -> vector<32x4xf32>
      %196 = vector.shape_cast %192 : vector<2x4x1xf32> to vector<8x1x1xf32>
      %197 = vector.shape_cast %196 : vector<8x1x1xf32> to vector<8x1x1xf32>
      %198 = vector.broadcast %197 : vector<8x1x1xf32> to vector<8x4x1xf32>
      %199 = vector.shape_cast %198 : vector<8x4x1xf32> to vector<32x1xf32>
      %200 = vector.broadcast %199 : vector<32x1xf32> to vector<32x4xf32>
      %201 = arith.mulf %195, %200 : vector<32x4xf32>
      %202 = vector.shape_cast %201 : vector<32x4xf32> to vector<2x16x4xf32>
      %203 = vector.extract_strided_slice %202 {offsets = [0, 0, 0], sizes = [2, 4, 4], strides = [1, 1, 1]} : vector<2x16x4xf32> to vector<2x4x4xf32>
      %204 = vector.extract_strided_slice %202 {offsets = [0, 4, 0], sizes = [2, 4, 4], strides = [1, 1, 1]} : vector<2x16x4xf32> to vector<2x4x4xf32>
      %205 = arith.addf %203, %204 : vector<2x4x4xf32>
      %206 = vector.extract_strided_slice %202 {offsets = [0, 8, 0], sizes = [2, 4, 4], strides = [1, 1, 1]} : vector<2x16x4xf32> to vector<2x4x4xf32>
      %207 = arith.addf %205, %206 : vector<2x4x4xf32>
      %208 = vector.extract_strided_slice %202 {offsets = [0, 12, 0], sizes = [2, 4, 4], strides = [1, 1, 1]} : vector<2x16x4xf32> to vector<2x4x4xf32>
      %209 = arith.addf %207, %208 : vector<2x4x4xf32>
      %cst_161 = arith.constant 5.000000e-01 : f32
      %210 = vector.broadcast %cst_161 : f32 to vector<2x4x4xf32>
      %211 = arith.mulf %209, %210 : vector<2x4x4xf32>
      %cst_162 = arith.constant 0.000000e+00 : f32
      %212 = vector.broadcast %cst_162 : f32 to vector<2x4x4xf32>
      %213 = arith.maximumf %211, %212 : vector<2x4x4xf32>
      %c0_163 = arith.constant 0 : index
      %c0_164 = arith.constant 0 : index
      %214 = vector.load %arg17[%c0_163, %c0_164] : memref<32x128xbf16, #tpu.memory_space<vmem>>, vector<32x128xbf16>
      %c0_165 = arith.constant 0 : index
      %c0_166 = arith.constant 0 : index
      %215 = vector.load %arg9[%c0_165, %c0_166] : memref<128x64xbf16, #tpu.memory_space<vmem>>, vector<128x64xbf16>
      %cst_167 = arith.constant dense<0.000000e+00> : vector<32x64xf32>
      %216 = tpu.matmul %214, %215, %cst_167 {dimension_numbers = #tpu.dot_dimension_numbers<[1], [0], [0], [1], [0, 0, 1, 1], [], []>} : vector<32x128xbf16>, vector<128x64xbf16>, vector<32x64xf32> -> vector<32x64xf32>
      %217 = vector.shape_cast %213 : vector<2x4x4xf32> to vector<8x1x4xf32>
      %218 = vector.shape_cast %217 : vector<8x1x4xf32> to vector<8x1x4xf32>
      %219 = vector.broadcast %218 : vector<8x1x4xf32> to vector<8x4x4xf32>
      %220 = vector.shape_cast %219 : vector<8x4x4xf32> to vector<32x4xf32>
      %221 = vector.extract_strided_slice %216 {offsets = [0, 0], sizes = [32, 16], strides = [1, 1]} : vector<32x64xf32> to vector<32x16xf32>
      %222 = vector.extract_strided_slice %220 {offsets = [0, 0], sizes = [32, 1], strides = [1, 1]} : vector<32x4xf32> to vector<32x1xf32>
      %223 = vector.broadcast %222 : vector<32x1xf32> to vector<32x16xf32>
      %224 = arith.mulf %221, %223 : vector<32x16xf32>
      %225 = vector.extract_strided_slice %216 {offsets = [0, 16], sizes = [32, 16], strides = [1, 1]} : vector<32x64xf32> to vector<32x16xf32>
      %226 = vector.extract_strided_slice %220 {offsets = [0, 1], sizes = [32, 1], strides = [1, 1]} : vector<32x4xf32> to vector<32x1xf32>
      %227 = vector.broadcast %226 : vector<32x1xf32> to vector<32x16xf32>
      %228 = arith.mulf %225, %227 : vector<32x16xf32>
      %229 = arith.addf %224, %228 : vector<32x16xf32>
      %230 = vector.extract_strided_slice %216 {offsets = [0, 32], sizes = [32, 16], strides = [1, 1]} : vector<32x64xf32> to vector<32x16xf32>
      %231 = vector.extract_strided_slice %220 {offsets = [0, 2], sizes = [32, 1], strides = [1, 1]} : vector<32x4xf32> to vector<32x1xf32>
      %232 = vector.broadcast %231 : vector<32x1xf32> to vector<32x16xf32>
      %233 = arith.mulf %230, %232 : vector<32x16xf32>
      %234 = arith.addf %229, %233 : vector<32x16xf32>
      %235 = vector.extract_strided_slice %216 {offsets = [0, 48], sizes = [32, 16], strides = [1, 1]} : vector<32x64xf32> to vector<32x16xf32>
      %236 = vector.extract_strided_slice %220 {offsets = [0, 3], sizes = [32, 1], strides = [1, 1]} : vector<32x4xf32> to vector<32x1xf32>
      %237 = vector.broadcast %236 : vector<32x1xf32> to vector<32x16xf32>
      %238 = arith.mulf %235, %237 : vector<32x16xf32>
      %239 = arith.addf %234, %238 : vector<32x16xf32>
      %240 = vector.shape_cast %239 : vector<32x16xf32> to vector<2x16x16xf32>
      %241 = vector.extract_strided_slice %240 {offsets = [0, 0, 0], sizes = [2, 4, 16], strides = [1, 1, 1]} : vector<2x16x16xf32> to vector<2x4x16xf32>
      %242 = vector.extract_strided_slice %240 {offsets = [0, 4, 0], sizes = [2, 4, 16], strides = [1, 1, 1]} : vector<2x16x16xf32> to vector<2x4x16xf32>
      %243 = arith.addf %241, %242 : vector<2x4x16xf32>
      %244 = vector.extract_strided_slice %240 {offsets = [0, 8, 0], sizes = [2, 4, 16], strides = [1, 1, 1]} : vector<2x16x16xf32> to vector<2x4x16xf32>
      %245 = arith.addf %243, %244 : vector<2x4x16xf32>
      %246 = vector.extract_strided_slice %240 {offsets = [0, 12, 0], sizes = [2, 4, 16], strides = [1, 1, 1]} : vector<2x16x16xf32> to vector<2x4x16xf32>
      %247 = arith.addf %245, %246 : vector<2x4x16xf32>
      %cst_168 = arith.constant 5.000000e-01 : f32
      %248 = vector.broadcast %cst_168 : f32 to vector<2x4x16xf32>
      %249 = arith.mulf %247, %248 : vector<2x4x16xf32>
      %cst_169 = arith.constant 0.000000e+00 : f32
      %250 = vector.broadcast %cst_169 : f32 to vector<2x4x16xf32>
      %251 = arith.maximumf %249, %250 : vector<2x4x16xf32>
      %c0_170 = arith.constant 0 : index
      %c0_171 = arith.constant 0 : index
      %252 = vector.load %arg18[%c0_170, %c0_171] : memref<32x128xbf16, #tpu.memory_space<vmem>>, vector<32x128xbf16>
      %c0_172 = arith.constant 0 : index
      %c0_173 = arith.constant 0 : index
      %253 = vector.load %arg12[%c0_172, %c0_173] : memref<128x1024xbf16, #tpu.memory_space<vmem>>, vector<128x1024xbf16>
      %cst_174 = arith.constant dense<0.000000e+00> : vector<32x1024xf32>
      %254 = tpu.matmul %252, %253, %cst_174 {dimension_numbers = #tpu.dot_dimension_numbers<[1], [0], [0], [1], [0, 0, 1, 1], [], []>} : vector<32x128xbf16>, vector<128x1024xbf16>, vector<32x1024xf32> -> vector<32x1024xf32>
      %255 = vector.shape_cast %251 : vector<2x4x16xf32> to vector<8x1x16xf32>
      %256 = vector.shape_cast %255 : vector<8x1x16xf32> to vector<8x1x16xf32>
      %257 = vector.broadcast %256 : vector<8x1x16xf32> to vector<8x4x16xf32>
      %258 = vector.shape_cast %257 : vector<8x4x16xf32> to vector<32x16xf32>
      %259 = vector.extract_strided_slice %254 {offsets = [0, 0], sizes = [32, 64], strides = [1, 1]} : vector<32x1024xf32> to vector<32x64xf32>
      %260 = vector.extract_strided_slice %258 {offsets = [0, 0], sizes = [32, 1], strides = [1, 1]} : vector<32x16xf32> to vector<32x1xf32>
      %261 = vector.broadcast %260 : vector<32x1xf32> to vector<32x64xf32>
      %262 = arith.mulf %259, %261 : vector<32x64xf32>
      %263 = vector.extract_strided_slice %254 {offsets = [0, 64], sizes = [32, 64], strides = [1, 1]} : vector<32x1024xf32> to vector<32x64xf32>
      %264 = vector.extract_strided_slice %258 {offsets = [0, 1], sizes = [32, 1], strides = [1, 1]} : vector<32x16xf32> to vector<32x1xf32>
      %265 = vector.broadcast %264 : vector<32x1xf32> to vector<32x64xf32>
      %266 = arith.mulf %263, %265 : vector<32x64xf32>
      %267 = arith.addf %262, %266 : vector<32x64xf32>
      %268 = vector.extract_strided_slice %254 {offsets = [0, 128], sizes = [32, 64], strides = [1, 1]} : vector<32x1024xf32> to vector<32x64xf32>
      %269 = vector.extract_strided_slice %258 {offsets = [0, 2], sizes = [32, 1], strides = [1, 1]} : vector<32x16xf32> to vector<32x1xf32>
      %270 = vector.broadcast %269 : vector<32x1xf32> to vector<32x64xf32>
      %271 = arith.mulf %268, %270 : vector<32x64xf32>
      %272 = arith.addf %267, %271 : vector<32x64xf32>
      %273 = vector.extract_strided_slice %254 {offsets = [0, 192], sizes = [32, 64], strides = [1, 1]} : vector<32x1024xf32> to vector<32x64xf32>
      %274 = vector.extract_strided_slice %258 {offsets = [0, 3], sizes = [32, 1], strides = [1, 1]} : vector<32x16xf32> to vector<32x1xf32>
      %275 = vector.broadcast %274 : vector<32x1xf32> to vector<32x64xf32>
      %276 = arith.mulf %273, %275 : vector<32x64xf32>
      %277 = arith.addf %272, %276 : vector<32x64xf32>
      %278 = vector.extract_strided_slice %254 {offsets = [0, 256], sizes = [32, 64], strides = [1, 1]} : vector<32x1024xf32> to vector<32x64xf32>
      %279 = vector.extract_strided_slice %258 {offsets = [0, 4], sizes = [32, 1], strides = [1, 1]} : vector<32x16xf32> to vector<32x1xf32>
      %280 = vector.broadcast %279 : vector<32x1xf32> to vector<32x64xf32>
      %281 = arith.mulf %278, %280 : vector<32x64xf32>
      %282 = arith.addf %277, %281 : vector<32x64xf32>
      %283 = vector.extract_strided_slice %254 {offsets = [0, 320], sizes = [32, 64], strides = [1, 1]} : vector<32x1024xf32> to vector<32x64xf32>
      %284 = vector.extract_strided_slice %258 {offsets = [0, 5], sizes = [32, 1], strides = [1, 1]} : vector<32x16xf32> to vector<32x1xf32>
      %285 = vector.broadcast %284 : vector<32x1xf32> to vector<32x64xf32>
      %286 = arith.mulf %283, %285 : vector<32x64xf32>
      %287 = arith.addf %282, %286 : vector<32x64xf32>
      %288 = vector.extract_strided_slice %254 {offsets = [0, 384], sizes = [32, 64], strides = [1, 1]} : vector<32x1024xf32> to vector<32x64xf32>
      %289 = vector.extract_strided_slice %258 {offsets = [0, 6], sizes = [32, 1], strides = [1, 1]} : vector<32x16xf32> to vector<32x1xf32>
      %290 = vector.broadcast %289 : vector<32x1xf32> to vector<32x64xf32>
      %291 = arith.mulf %288, %290 : vector<32x64xf32>
      %292 = arith.addf %287, %291 : vector<32x64xf32>
      %293 = vector.extract_strided_slice %254 {offsets = [0, 448], sizes = [32, 64], strides = [1, 1]} : vector<32x1024xf32> to vector<32x64xf32>
      %294 = vector.extract_strided_slice %258 {offsets = [0, 7], sizes = [32, 1], strides = [1, 1]} : vector<32x16xf32> to vector<32x1xf32>
      %295 = vector.broadcast %294 : vector<32x1xf32> to vector<32x64xf32>
      %296 = arith.mulf %293, %295 : vector<32x64xf32>
      %297 = arith.addf %292, %296 : vector<32x64xf32>
      %298 = vector.extract_strided_slice %254 {offsets = [0, 512], sizes = [32, 64], strides = [1, 1]} : vector<32x1024xf32> to vector<32x64xf32>
      %299 = vector.extract_strided_slice %258 {offsets = [0, 8], sizes = [32, 1], strides = [1, 1]} : vector<32x16xf32> to vector<32x1xf32>
      %300 = vector.broadcast %299 : vector<32x1xf32> to vector<32x64xf32>
      %301 = arith.mulf %298, %300 : vector<32x64xf32>
      %302 = arith.addf %297, %301 : vector<32x64xf32>
      %303 = vector.extract_strided_slice %254 {offsets = [0, 576], sizes = [32, 64], strides = [1, 1]} : vector<32x1024xf32> to vector<32x64xf32>
      %304 = vector.extract_strided_slice %258 {offsets = [0, 9], sizes = [32, 1], strides = [1, 1]} : vector<32x16xf32> to vector<32x1xf32>
      %305 = vector.broadcast %304 : vector<32x1xf32> to vector<32x64xf32>
      %306 = arith.mulf %303, %305 : vector<32x64xf32>
      %307 = arith.addf %302, %306 : vector<32x64xf32>
      %308 = vector.extract_strided_slice %254 {offsets = [0, 640], sizes = [32, 64], strides = [1, 1]} : vector<32x1024xf32> to vector<32x64xf32>
      %309 = vector.extract_strided_slice %258 {offsets = [0, 10], sizes = [32, 1], strides = [1, 1]} : vector<32x16xf32> to vector<32x1xf32>
      %310 = vector.broadcast %309 : vector<32x1xf32> to vector<32x64xf32>
      %311 = arith.mulf %308, %310 : vector<32x64xf32>
      %312 = arith.addf %307, %311 : vector<32x64xf32>
      %313 = vector.extract_strided_slice %254 {offsets = [0, 704], sizes = [32, 64], strides = [1, 1]} : vector<32x1024xf32> to vector<32x64xf32>
      %314 = vector.extract_strided_slice %258 {offsets = [0, 11], sizes = [32, 1], strides = [1, 1]} : vector<32x16xf32> to vector<32x1xf32>
      %315 = vector.broadcast %314 : vector<32x1xf32> to vector<32x64xf32>
      %316 = arith.mulf %313, %315 : vector<32x64xf32>
      %317 = arith.addf %312, %316 : vector<32x64xf32>
      %318 = vector.extract_strided_slice %254 {offsets = [0, 768], sizes = [32, 64], strides = [1, 1]} : vector<32x1024xf32> to vector<32x64xf32>
      %319 = vector.extract_strided_slice %258 {offsets = [0, 12], sizes = [32, 1], strides = [1, 1]} : vector<32x16xf32> to vector<32x1xf32>
      %320 = vector.broadcast %319 : vector<32x1xf32> to vector<32x64xf32>
      %321 = arith.mulf %318, %320 : vector<32x64xf32>
      %322 = arith.addf %317, %321 : vector<32x64xf32>
      %323 = vector.extract_strided_slice %254 {offsets = [0, 832], sizes = [32, 64], strides = [1, 1]} : vector<32x1024xf32> to vector<32x64xf32>
      %324 = vector.extract_strided_slice %258 {offsets = [0, 13], sizes = [32, 1], strides = [1, 1]} : vector<32x16xf32> to vector<32x1xf32>
      %325 = vector.broadcast %324 : vector<32x1xf32> to vector<32x64xf32>
      %326 = arith.mulf %323, %325 : vector<32x64xf32>
      %327 = arith.addf %322, %326 : vector<32x64xf32>
      %328 = vector.extract_strided_slice %254 {offsets = [0, 896], sizes = [32, 64], strides = [1, 1]} : vector<32x1024xf32> to vector<32x64xf32>
      %329 = vector.extract_strided_slice %258 {offsets = [0, 14], sizes = [32, 1], strides = [1, 1]} : vector<32x16xf32> to vector<32x1xf32>
      %330 = vector.broadcast %329 : vector<32x1xf32> to vector<32x64xf32>
      %331 = arith.mulf %328, %330 : vector<32x64xf32>
      %332 = arith.addf %327, %331 : vector<32x64xf32>
      %333 = vector.extract_strided_slice %254 {offsets = [0, 960], sizes = [32, 64], strides = [1, 1]} : vector<32x1024xf32> to vector<32x64xf32>
      %334 = vector.extract_strided_slice %258 {offsets = [0, 15], sizes = [32, 1], strides = [1, 1]} : vector<32x16xf32> to vector<32x1xf32>
      %335 = vector.broadcast %334 : vector<32x1xf32> to vector<32x64xf32>
      %336 = arith.mulf %333, %335 : vector<32x64xf32>
      %337 = arith.addf %332, %336 : vector<32x64xf32>
      %338 = vector.shape_cast %337 : vector<32x64xf32> to vector<2x16x64xf32>
      %339 = vector.extract_strided_slice %338 {offsets = [0, 0, 0], sizes = [2, 4, 64], strides = [1, 1, 1]} : vector<2x16x64xf32> to vector<2x4x64xf32>
      %340 = vector.extract_strided_slice %338 {offsets = [0, 4, 0], sizes = [2, 4, 64], strides = [1, 1, 1]} : vector<2x16x64xf32> to vector<2x4x64xf32>
      %341 = arith.addf %339, %340 : vector<2x4x64xf32>
      %342 = vector.extract_strided_slice %338 {offsets = [0, 8, 0], sizes = [2, 4, 64], strides = [1, 1, 1]} : vector<2x16x64xf32> to vector<2x4x64xf32>
      %343 = arith.addf %341, %342 : vector<2x4x64xf32>
      %344 = vector.extract_strided_slice %338 {offsets = [0, 12, 0], sizes = [2, 4, 64], strides = [1, 1, 1]} : vector<2x16x64xf32> to vector<2x4x64xf32>
      %345 = arith.addf %343, %344 : vector<2x4x64xf32>
      %cst_175 = arith.constant 5.000000e-01 : f32
      %346 = vector.broadcast %cst_175 : f32 to vector<2x4x64xf32>
      %347 = arith.mulf %345, %346 : vector<2x4x64xf32>
      %cst_176 = arith.constant 0.000000e+00 : f32
      %348 = vector.broadcast %cst_176 : f32 to vector<2x4x64xf32>
      %349 = arith.maximumf %347, %348 : vector<2x4x64xf32>
      %cst_177 = arith.constant dense<0.000000e+00> : vector<2x64xf32>
      %350 = vector.multi_reduction <add>, %349, %cst_177 [1] : vector<2x4x64xf32> to vector<2x64xf32>
      %cst_178 = arith.constant 4.000000e+00 : f32
      %351 = vector.broadcast %cst_178 : f32 to vector<2x64xf32>
      %352 = arith.divf %350, %351 : vector<2x64xf32>
      %c0_179 = arith.constant 0 : index
      %c0_180 = arith.constant 0 : index
      %353 = vector.load %arg13[%c0_179, %c0_180] : memref<64x128xf32, #tpu.memory_space<vmem>>, vector<64x128xf32>
      %cst_181 = arith.constant dense<0.000000e+00> : vector<2x128xf32>
      %354 = tpu.matmul %352, %353, %cst_181 {dimension_numbers = #tpu.dot_dimension_numbers<[1], [0], [0], [1], [0, 0, 1, 1], [], []>} : vector<2x64xf32>, vector<64x128xf32>, vector<2x128xf32> -> vector<2x128xf32>
      %c0_182 = arith.constant 0 : index
      %c0_183 = arith.constant 0 : index
      %355 = vector.load %arg14[%c0_182, %c0_183] : memref<1x128xf32, #tpu.memory_space<vmem>>, vector<1x128xf32>
      %356 = vector.broadcast %355 : vector<1x128xf32> to vector<2x128xf32>
      %357 = arith.addf %354, %356 : vector<2x128xf32>
      %358 = vector.shape_cast %357 : vector<2x128xf32> to vector<2x1x128xf32>
      %c0_184 = arith.constant 0 : index
      %c0_185 = arith.constant 0 : index
      %c0_186 = arith.constant 0 : index
      %359 = vector.load %arg15[%c0_184, %c0_185, %c0_186] : memref<2x1x128xf32, #tpu.memory_space<vmem>>, vector<2x1x128xf32>
      tpu.vector_store %arg15[%c0_184, %c0_185, %c0_186], %358 {strides = array<i32>} : memref<2x1x128xf32, #tpu.memory_space<vmem>>, vector<2x1x128xf32>,
    } else {
    }
    return
  }
  func.func @transform_0(%arg0: i32, %arg1: i32) -> (i32, i32, i32) {
    %c0_i32 = arith.constant 0 : i32
    %c0_i32_0 = arith.constant 0 : i32
    %c0_i32_1 = arith.constant 0 : i32
    return %arg0, %c0_i32, %c0_i32_0 : i32, i32, i32
  }
  func.func @transform_1(%arg0: i32, %arg1: i32) -> (i32, i32, i32) {
    %c0_i32 = arith.constant 0 : i32
    %c0_i32_0 = arith.constant 0 : i32
    %c0_i32_1 = arith.constant 0 : i32
    return %arg0, %c0_i32, %c0_i32_0 : i32, i32, i32
  }
  func.func @transform_2(%arg0: i32, %arg1: i32) -> (i32, i32) {
    %c0_i32 = arith.constant 0 : i32
    %c0_i32_0 = arith.constant 0 : i32
    %c0_i32_1 = arith.constant 0 : i32
    return %c0_i32, %c0_i32_0 : i32, i32
  }
  func.func @transform_3(%arg0: i32, %arg1: i32) -> (i32, i32, i32) {
    %c0_i32 = arith.constant 0 : i32
    %c0_i32_0 = arith.constant 0 : i32
    %c0_i32_1 = arith.constant 0 : i32
    return %arg1, %c0_i32, %c0_i32_0 : i32, i32, i32
  }
  func.func @transform_4(%arg0: i32, %arg1: i32) -> (i32, i32) {
    %c0_i32 = arith.constant 0 : i32
    %c0_i32_0 = arith.constant 0 : i32
    %c0_i32_1 = arith.constant 0 : i32
    return %c0_i32, %c0_i32_0 : i32, i32
  }
  func.func @transform_5(%arg0: i32, %arg1: i32) -> (i32, i32) {
    %c0_i32 = arith.constant 0 : i32
    %c0_i32_0 = arith.constant 0 : i32
    %c0_i32_1 = arith.constant 0 : i32
    return %c0_i32, %c0_i32_0 : i32, i32
  }
  func.func @transform_6(%arg0: i32, %arg1: i32) -> (i32, i32, i32) {
    %c0_i32 = arith.constant 0 : i32
    %c0_i32_0 = arith.constant 0 : i32
    %c0_i32_1 = arith.constant 0 : i32
    return %arg1, %c0_i32, %c0_i32_0 : i32, i32, i32
  }
  func.func @transform_7(%arg0: i32, %arg1: i32) -> (i32, i32) {
    %c0_i32 = arith.constant 0 : i32
    %c0_i32_0 = arith.constant 0 : i32
    %c0_i32_1 = arith.constant 0 : i32
    return %c0_i32, %c0_i32_0 : i32, i32
  }
  func.func @transform_8(%arg0: i32, %arg1: i32) -> (i32, i32) {
    %c0_i32 = arith.constant 0 : i32
    %c0_i32_0 = arith.constant 0 : i32
    %c0_i32_1 = arith.constant 0 : i32
    return %c0_i32, %c0_i32_0 : i32, i32
  }
  func.func @transform_9(%arg0: i32, %arg1: i32) -> (i32, i32, i32) {
    %c0_i32 = arith.constant 0 : i32
    %c0_i32_0 = arith.constant 0 : i32
    %c0_i32_1 = arith.constant 0 : i32
    return %arg1, %c0_i32, %c0_i32_0 : i32, i32, i32
  }
  func.func @transform_10(%arg0: i32, %arg1: i32) -> (i32, i32) {
    %c0_i32 = arith.constant 0 : i32
    %c0_i32_0 = arith.constant 0 : i32
    %c0_i32_1 = arith.constant 0 : i32
    return %c0_i32, %c0_i32_0 : i32, i32
  }
  func.func @transform_11(%arg0: i32, %arg1: i32) -> (i32, i32) {
    %c0_i32 = arith.constant 0 : i32
    %c0_i32_0 = arith.constant 0 : i32
    %c0_i32_1 = arith.constant 0 : i32
    return %c0_i32, %c0_i32_0 : i32, i32
  }
  func.func @transform_12(%arg0: i32, %arg1: i32) -> (i32, i32) {
    %c0_i32 = arith.constant 0 : i32
    %c0_i32_0 = arith.constant 0 : i32
    %c0_i32_1 = arith.constant 0 : i32
    return %c0_i32, %c0_i32_0 : i32, i32
  }
  func.func @transform_13(%arg0: i32, %arg1: i32) -> (i32, i32, i32) {
    %c0_i32 = arith.constant 0 : i32
    %c0_i32_0 = arith.constant 0 : i32
    %c0_i32_1 = arith.constant 0 : i32
    return %arg0, %c0_i32, %c0_i32_0 : i32, i32, i32
  }
}

</mosaic_0001>

<llo_original>
// kernel: se3net_forward.1
$region0: #{se3net_forward.1}
  #allocation0 [shape = 'u32[]', space=smem, size = 0x4, offset = 0x4, fixed_abs, tag = 'smem constant byte address 0x4 - core index']
  #allocation1 [shape = 'u32[144,128]{1,0:T(1,128)}', space=vmem, size = 0x12000, scoped, tag = 'internal scratch']
  #allocation2 [shape = 'bf16[32,128]{1,0:T(16,128)(2,1)}', space=vmem, size = 0x2000, scoped, tag = 'scratch operand']
  #allocation3 [shape = 'bf16[32,128]{1,0:T(16,128)(2,1)}', space=vmem, size = 0x2000, scoped, tag = 'scratch operand']
  #allocation4 [shape = 'bf16[32,128]{1,0:T(16,128)(2,1)}', space=vmem, size = 0x2000, scoped, tag = 'scratch operand']
  %s0 = inlined_call_operand.vmem [shape: f32[2,16,3], index: 0, kind: input, shape index: {}]
  %s1 = inlined_call_operand.vmem [shape: f32[2,4,1], index: 1, kind: input, shape index: {}]
  %s2 = inlined_call_operand.hbm [shape: bf16[3,128], index: 2, kind: input, shape index: {}]
  %s3 = inlined_call_operand.hbm [shape: bf16[50,128,128], index: 3, kind: input, shape index: {}]
  %s4 = inlined_call_operand.vmem [shape: bf16[128,4], index: 4, kind: input, shape index: {}]
  %s5 = inlined_call_operand.hbm [shape: bf16[3,128], index: 5, kind: input, shape index: {}]
  %s6 = inlined_call_operand.hbm [shape: bf16[50,128,128], index: 6, kind: input, shape index: {}]
  %s7 = inlined_call_operand.vmem [shape: bf16[128,64], index: 7, kind: input, shape index: {}]
  %s8 = inlined_call_operand.hbm [shape: bf16[3,128], index: 8, kind: input, shape index: {}]
  %s9 = inlined_call_operand.hbm [shape: bf16[50,128,128], index: 9, kind: input, shape index: {}]
  %s10 = inlined_call_operand.hbm [shape: bf16[128,1024], index: 10, kind: input, shape index: {}]
  %s11 = inlined_call_operand.vmem [shape: f32[64,128], index: 11, kind: input, shape index: {}]
  %s12 = inlined_call_operand.vmem [shape: f32[1,128], index: 12, kind: input, shape index: {}]
  %s13 = inlined_call_operand.hbm [shape: f32[2,1,128], index: 13, kind: output, shape index: {}]
  %s14 = sld [smem:[#allocation0]]
  $region121: #{se3net_forward.1} parent=0
    _
  %s16 = ssub.s32 1, %s14
  %s17 = scalar_select 0, %s16, %s14
  $region1: #{se3net_forward.1} parent=0
    #allocation5 [shape = 'u8[1024]{0}', space=vmem, size = 0x400, scoped, tag = 'input window, operand 2, single buffered']
    #allocation6 [shape = 's32[2]{0}', space=sflag, size = 0x8, scoped, tag = 'scoped memory for se3net_forward.1']
    #allocation7 [shape = 's32[2]{0}', space=sflag, size = 0x8, scoped, tag = 'scoped memory for se3net_forward.1']
    #allocation8 [shape = 'u8[655360]{0}', space=vmem, size = 0xa0000, scoped, tag = 'input window, operand 3']
    #allocation9 [shape = 's32[2]{0}', space=sflag, size = 0x8, scoped, tag = 'scoped memory for se3net_forward.1']
    #allocation10 [shape = 'u8[1024]{0}', space=vmem, size = 0x400, scoped, tag = 'input window, operand 5, single buffered']
    #allocation11 [shape = 'u8[655360]{0}', space=vmem, size = 0xa0000, scoped, tag = 'input window, operand 6']
    #allocation12 [shape = 's32[2]{0}', space=sflag, size = 0x8, scoped, tag = 'scoped memory for se3net_forward.1']
    #allocation13 [shape = 'u8[1024]{0}', space=vmem, size = 0x400, scoped, tag = 'input window, operand 8, single buffered']
    #allocation14 [shape = 'u8[655360]{0}', space=vmem, size = 0xa0000, scoped, tag = 'input window, operand 9']
    #allocation15 [shape = 's32[2]{0}', space=sflag, size = 0x8, scoped, tag = 'scoped memory for se3net_forward.1']
    #allocation16 [shape = 'u8[262144]{0}', space=vmem, size = 0x40000, scoped, tag = 'input window, operand 10, single buffered']
    #allocation17 [shape = 'u8[1024]{0}', space=vmem, size = 0x400, scoped, tag = 'output window, operand 0, single buffered']
    %18 = vsyncpa [#allocation6], 0
    %19 = vsyncpa [#allocation9], 0
    %s20 = scalar_lea.sflag [#allocation9], 1
    %21 = vsyncpa %s20, 0
    %22 = vsyncpa [#allocation12], 0
    %s23 = scalar_lea.sflag [#allocation12], 1
    %24 = vsyncpa %s23, 0
    %25 = vsyncpa [#allocation15], 0
    %s26 = scalar_lea.sflag [#allocation15], 1
    %27 = vsyncpa %s26, 0
    %28 = vsyncpa [#allocation7], 0
    loop: start=0, step=1, limit=7
    $region2: #{se3net_forward.1} parent=1 // loop_pre_header
      _
    $region3: #{se3net_forward.1} parent=1 // loop_header
      %s30 = sphi 0, %s34
      %p31 = scmp.ge.s32.totalorder %s30, 7
      %s37 = sphi 0, %s49
      %s38 = sphi 0, %s45
      %s39 = sphi 0, %s37
      %s40 = sphi 0, %s38
      %s41 = sphi 0, %s39
      %s42 = sphi 0, %s40
      %s52 = sphi 0, %s54
      %s55 = sphi 0, %s52
      %s56 = sphi 0, %s55
      %s72 = sphi 0, %s56
      %s78 = sphi 0, %s80
      %s81 = sphi 0, %s78
      %s82 = sphi 0, %s81
      %s98 = sphi 0, %s82
      %s102 = sphi 0, %s102
      %s104 = sphi 0, %s102
      %s105 = sphi 0, %s104
      %s119 = sphi 0, %s105
      %s125 = sphi 0, %s127
      %s128 = sphi 0, %s125
      %s129 = sphi 0, %s128
      %s145 = sphi 0, %s129
      %s149 = sphi 0, %s149
      %s151 = sphi 0, %s149
      %s152 = sphi 0, %s151
      %s166 = sphi 0, %s152
      %s170 = sphi 0, %s170
      %s172 = sphi 0, %s170
      %s173 = sphi 0, %s172
      %s187 = sphi 0, %s173
      %s193 = sphi 0, %s195
      %s196 = sphi 0, %s193
      %s197 = sphi 0, %s196
      %s213 = sphi 0, %s197
      %s217 = sphi 0, %s217
      %s219 = sphi 0, %s217
      %s220 = sphi 0, %s219
      %s234 = sphi 0, %s220
      %s238 = sphi 0, %s238
      %s240 = sphi 0, %s238
      %s241 = sphi 0, %s240
      %s255 = sphi 0, %s241
      %s261 = sphi 0, %s263
      %s264 = sphi 0, %s261
      %s265 = sphi 0, %s264
      %s281 = sphi 0, %s265
      %s285 = sphi 0, %s285
      %s287 = sphi 0, %s285
      %s288 = sphi 0, %s287
      %s302 = sphi 0, %s288
      %s306 = sphi 0, %s306
      %s308 = sphi 0, %s306
      %s309 = sphi 0, %s308
      %s323 = sphi 0, %s309
      %s327 = sphi 0, %s327
      %s329 = sphi 0, %s327
      %s330 = sphi 0, %s329
      %s344 = sphi 0, %s330
      %s350 = sphi 0, %s352
      %s353 = sphi 0, %s350
      %s354 = sphi 0, %s353
      %s370 = sphi 0, %s354
    $region4: #{se3net_forward.1} parent=1 // loop_header_branch
      %33 = sbr.rel (%p31) target = $region8
    $region5: #{se3net_forward.1} parent=1 // loop_body
      %s35 = ssub.s32 %s30, 1
      %s36 = ssub.s32 %s30, 2
      %s43 = sadd.s32 1, %s38
      %p44 = scmp.ge.s32.totalorder %s43, 5
      %s45 = scalar_select %p44, 0, %s43
      %s46 = sadd.s32 1, %s37
      %s47 = scalar_select %p44, %s46, %s37
      %p48 = scmp.ge.s32.totalorder %s47, 1
      %s49 = scalar_select %p48, 0, %s47
      %s50 = ssub.s32 %s37, %s49
      %p51 = scmp.eq.s32.totalorder %s50, 0
      %s53 = sadd.s32 %s52, 1
      %s54 = scalar_select %p51, %s52, %s53
      %p57 = pneg %p51
      %p58 = scmp.eq.s32.totalorder %s30, 4
      %p59 = por %p57, %p58
      %p60 = scmp.ne.s32.totalorder %s52, %s55
      %p61 = scmp.eq.s32.totalorder %s30, 0
      %p62 = por %p60, %p61
      %p63 = scmp.ne.s32.totalorder %s52, %s55
      %p64 = scmp.eq.s32.totalorder %s35, 4
      %p65 = por %p63, %p64
      %p66 = scmp.ne.s32.totalorder %s55, %s56
      %p67 = scmp.eq.s32.totalorder %s35, 0
      %p68 = por %p66, %p67
      %p69 = scmp.ne.s32.totalorder %s55, %s56
      %p70 = scmp.eq.s32.totalorder %s36, 4
      %p71 = por %p69, %p70
      %p73 = scmp.ne.s32.totalorder %s56, %s72
      %p74 = scmp.eq.s32.totalorder %s36, 0
      %p75 = por %p73, %p74
      %s76 = ssub.s32 %s37, %s49
      %p77 = scmp.eq.s32.totalorder %s76, 0
      %s79 = sadd.s32 %s78, 1
      %s80 = scalar_select %p77, %s78, %s79
      %p83 = pneg %p77
      %p84 = scmp.eq.s32.totalorder %s30, 4
      %p85 = por %p83, %p84
      %p86 = scmp.ne.s32.totalorder %s78, %s81
      %p87 = scmp.eq.s32.totalorder %s30, 0
      %p88 = por %p86, %p87
      %p89 = scmp.ne.s32.totalorder %s78, %s81
      %p90 = scmp.eq.s32.totalorder %s35, 4
      %p91 = por %p89, %p90
      %p92 = scmp.ne.s32.totalorder %s81, %s82
      %p93 = scmp.eq.s32.totalorder %s35, 0
      %p94 = por %p92, %p93
      %p95 = scmp.ne.s32.totalorder %s81, %s82
      %p96 = scmp.eq.s32.totalorder %s36, 4
      %p97 = por %p95, %p96
      %p99 = scmp.ne.s32.totalorder %s82, %s98
      %p100 = scmp.eq.s32.totalorder %s36, 0
      %p101 = por %p99, %p100
      %s103 = sadd.s32 %s102, 1
      %p106 = scmp.eq.s32.totalorder %s30, 4
      %p107 = scmp.ne.s32.totalorder %s102, %s104
      %p108 = scmp.eq.s32.totalorder %s30, 0
      %p109 = por %p107, %p108
      %p110 = scmp.ne.s32.totalorder %s102, %s104
      %p111 = scmp.eq.s32.totalorder %s35, 4
      %p112 = por %p110, %p111
      %p113 = scmp.ne.s32.totalorder %s104, %s105
      %p114 = scmp.eq.s32.totalorder %s35, 0
      %p115 = por %p113, %p114
      %p116 = scmp.ne.s32.totalorder %s104, %s105
      %p117 = scmp.eq.s32.totalorder %s36, 4
      %p118 = por %p116, %p117
      %p120 = scmp.ne.s32.totalorder %s105, %s119
      %p121 = scmp.eq.s32.totalorder %s36, 0
      %p122 = por %p120, %p121
      %s123 = ssub.s32 %s38, %s45
      %p124 = scmp.eq.s32.totalorder %s123, 0
      %s126 = sadd.s32 %s125, 1
      %s127 = scalar_select %p124, %s125, %s126
      %p130 = pneg %p124
      %p131 = scmp.eq.s32.totalorder %s30, 4
      %p132 = por %p130, %p131
      %p133 = scmp.ne.s32.totalorder %s125, %s128
      %p134 = scmp.eq.s32.totalorder %s30, 0
      %p135 = por %p133, %p134
      %p136 = scmp.ne.s32.totalorder %s125, %s128
      %p137 = scmp.eq.s32.totalorder %s35, 4
      %p138 = por %p136, %p137
      %p139 = scmp.ne.s32.totalorder %s128, %s129
      %p140 = scmp.eq.s32.totalorder %s35, 0
      %p141 = por %p139, %p140
      %p142 = scmp.ne.s32.totalorder %s128, %s129
      %p143 = scmp.eq.s32.totalorder %s36, 4
      %p144 = por %p142, %p143
      %p146 = scmp.ne.s32.totalorder %s129, %s145
      %p147 = scmp.eq.s32.totalorder %s36, 0
      %p148 = por %p146, %p147
      %s150 = sadd.s32 %s149, 1
      %p153 = scmp.eq.s32.totalorder %s30, 4
      %p154 = scmp.ne.s32.totalorder %s149, %s151
      %p155 = scmp.eq.s32.totalorder %s30, 0
      %p156 = por %p154, %p155
      %p157 = scmp.ne.s32.totalorder %s149, %s151
      %p158 = scmp.eq.s32.totalorder %s35, 4
      %p159 = por %p157, %p158
      %p160 = scmp.ne.s32.totalorder %s151, %s152
      %p161 = scmp.eq.s32.totalorder %s35, 0
      %p162 = por %p160, %p161
      %p163 = scmp.ne.s32.totalorder %s151, %s152
      %p164 = scmp.eq.s32.totalorder %s36, 4
      %p165 = por %p163, %p164
      %p167 = scmp.ne.s32.totalorder %s152, %s166
      %p168 = scmp.eq.s32.totalorder %s36, 0
      %p169 = por %p167, %p168
      %s171 = sadd.s32 %s170, 1
      %p174 = scmp.eq.s32.totalorder %s30, 4
      %p175 = scmp.ne.s32.totalorder %s170, %s172
      %p176 = scmp.eq.s32.totalorder %s30, 0
      %p177 = por %p175, %p176
      %p178 = scmp.ne.s32.totalorder %s170, %s172
      %p179 = scmp.eq.s32.totalorder %s35, 4
      %p180 = por %p178, %p179
      %p181 = scmp.ne.s32.totalorder %s172, %s173
      %p182 = scmp.eq.s32.totalorder %s35, 0
      %p183 = por %p181, %p182
      %p184 = scmp.ne.s32.totalorder %s172, %s173
      %p185 = scmp.eq.s32.totalorder %s36, 4
      %p186 = por %p184, %p185
      %p188 = scmp.ne.s32.totalorder %s173, %s187
      %p189 = scmp.eq.s32.totalorder %s36, 0
      %p190 = por %p188, %p189
      %s191 = ssub.s32 %s38, %s45
      %p192 = scmp.eq.s32.totalorder %s191, 0
      %s194 = sadd.s32 %s193, 1
      %s195 = scalar_select %p192, %s193, %s194
      %p198 = pneg %p192
      %p199 = scmp.eq.s32.totalorder %s30, 4
      %p200 = por %p198, %p199
      %p201 = scmp.ne.s32.totalorder %s193, %s196
      %p202 = scmp.eq.s32.totalorder %s30, 0
      %p203 = por %p201, %p202
      %p204 = scmp.ne.s32.totalorder %s193, %s196
      %p205 = scmp.eq.s32.totalorder %s35, 4
      %p206 = por %p204, %p205
      %p207 = scmp.ne.s32.totalorder %s196, %s197
      %p208 = scmp.eq.s32.totalorder %s35, 0
      %p209 = por %p207, %p208
      %p210 = scmp.ne.s32.totalorder %s196, %s197
      %p211 = scmp.eq.s32.totalorder %s36, 4
      %p212 = por %p210, %p211
      %p214 = scmp.ne.s32.totalorder %s197, %s213
      %p215 = scmp.eq.s32.totalorder %s36, 0
      %p216 = por %p214, %p215
      %s218 = sadd.s32 %s217, 1
      %p221 = scmp.eq.s32.totalorder %s30, 4
      %p222 = scmp.ne.s32.totalorder %s217, %s219
      %p223 = scmp.eq.s32.totalorder %s30, 0
      %p224 = por %p222, %p223
      %p225 = scmp.ne.s32.totalorder %s217, %s219
      %p226 = scmp.eq.s32.totalorder %s35, 4
      %p227 = por %p225, %p226
      %p228 = scmp.ne.s32.totalorder %s219, %s220
      %p229 = scmp.eq.s32.totalorder %s35, 0
      %p230 = por %p228, %p229
      %p231 = scmp.ne.s32.totalorder %s219, %s220
      %p232 = scmp.eq.s32.totalorder %s36, 4
      %p233 = por %p231, %p232
      %p235 = scmp.ne.s32.totalorder %s220, %s234
      %p236 = scmp.eq.s32.totalorder %s36, 0
      %p237 = por %p235, %p236
      %s239 = sadd.s32 %s238, 1
      %p242 = scmp.eq.s32.totalorder %s30, 4
      %p243 = scmp.ne.s32.totalorder %s238, %s240
      %p244 = scmp.eq.s32.totalorder %s30, 0
      %p245 = por %p243, %p244
      %p246 = scmp.ne.s32.totalorder %s238, %s240
      %p247 = scmp.eq.s32.totalorder %s35, 4
      %p248 = por %p246, %p247
      %p249 = scmp.ne.s32.totalorder %s240, %s241
      %p250 = scmp.eq.s32.totalorder %s35, 0
      %p251 = por %p249, %p250
      %p252 = scmp.ne.s32.totalorder %s240, %s241
      %p253 = scmp.eq.s32.totalorder %s36, 4
      %p254 = por %p252, %p253
      %p256 = scmp.ne.s32.totalorder %s241, %s255
      %p257 = scmp.eq.s32.totalorder %s36, 0
      %p258 = por %p256, %p257
      %s259 = ssub.s32 %s38, %s45
      %p260 = scmp.eq.s32.totalorder %s259, 0
      %s262 = sadd.s32 %s261, 1
      %s263 = scalar_select %p260, %s261, %s262
      %p266 = pneg %p260
      %p267 = scmp.eq.s32.totalorder %s30, 4
      %p268 = por %p266, %p267
      %p269 = scmp.ne.s32.totalorder %s261, %s264
      %p270 = scmp.eq.s32.totalorder %s30, 0
      %p271 = por %p269, %p270
      %p272 = scmp.ne.s32.totalorder %s261, %s264
      %p273 = scmp.eq.s32.totalorder %s35, 4
      %p274 = por %p272, %p273
      %p275 = scmp.ne.s32.totalorder %s264, %s265
      %p276 = scmp.eq.s32.totalorder %s35, 0
      %p277 = por %p275, %p276
      %p278 = scmp.ne.s32.totalorder %s264, %s265
      %p279 = scmp.eq.s32.totalorder %s36, 4
      %p280 = por %p278, %p279
      %p282 = scmp.ne.s32.totalorder %s265, %s281
      %p283 = scmp.eq.s32.totalorder %s36, 0
      %p284 = por %p282, %p283
      %s286 = sadd.s32 %s285, 1
      %p289 = scmp.eq.s32.totalorder %s30, 4
      %p290 = scmp.ne.s32.totalorder %s285, %s287
      %p291 = scmp.eq.s32.totalorder %s30, 0
      %p292 = por %p290, %p291
      %p293 = scmp.ne.s32.totalorder %s285, %s287
      %p294 = scmp.eq.s32.totalorder %s35, 4
      %p295 = por %p293, %p294
      %p296 = scmp.ne.s32.totalorder %s287, %s288
      %p297 = scmp.eq.s32.totalorder %s35, 0
      %p298 = por %p296, %p297
      %p299 = scmp.ne.s32.totalorder %s287, %s288
      %p300 = scmp.eq.s32.totalorder %s36, 4
      %p301 = por %p299, %p300
      %p303 = scmp.ne.s32.totalorder %s288, %s302
      %p304 = scmp.eq.s32.totalorder %s36, 0
      %p305 = por %p303, %p304
      %s307 = sadd.s32 %s306, 1
      %p310 = scmp.eq.s32.totalorder %s30, 4
      %p311 = scmp.ne.s32.totalorder %s306, %s308
      %p312 = scmp.eq.s32.totalorder %s30, 0
      %p313 = por %p311, %p312
      %p314 = scmp.ne.s32.totalorder %s306, %s308
      %p315 = scmp.eq.s32.totalorder %s35, 4
      %p316 = por %p314, %p315
      %p317 = scmp.ne.s32.totalorder %s308, %s309
      %p318 = scmp.eq.s32.totalorder %s35, 0
      %p319 = por %p317, %p318
      %p320 = scmp.ne.s32.totalorder %s308, %s309
      %p321 = scmp.eq.s32.totalorder %s36, 4
      %p322 = por %p320, %p321
      %p324 = scmp.ne.s32.totalorder %s309, %s323
      %p325 = scmp.eq.s32.totalorder %s36, 0
      %p326 = por %p324, %p325
      %s328 = sadd.s32 %s327, 1
      %p331 = scmp.eq.s32.totalorder %s30, 4
      %p332 = scmp.ne.s32.totalorder %s327, %s329
      %p333 = scmp.eq.s32.totalorder %s30, 0
      %p334 = por %p332, %p333
      %p335 = scmp.ne.s32.totalorder %s327, %s329
      %p336 = scmp.eq.s32.totalorder %s35, 4
      %p337 = por %p335, %p336
      %p338 = scmp.ne.s32.totalorder %s329, %s330
      %p339 = scmp.eq.s32.totalorder %s35, 0
      %p340 = por %p338, %p339
      %p341 = scmp.ne.s32.totalorder %s329, %s330
      %p342 = scmp.eq.s32.totalorder %s36, 4
      %p343 = por %p341, %p342
      %p345 = scmp.ne.s32.totalorder %s330, %s344
      %p346 = scmp.eq.s32.totalorder %s36, 0
      %p347 = por %p345, %p346
      %s348 = ssub.s32 %s37, %s49
      %p349 = scmp.eq.s32.totalorder %s348, 0
      %s351 = sadd.s32 %s350, 1
      %s352 = scalar_select %p349, %s350, %s351
      %p355 = pneg %p349
      %p356 = scmp.eq.s32.totalorder %s30, 4
      %p357 = por %p355, %p356
      %p358 = scmp.ne.s32.totalorder %s350, %s353
      %p359 = scmp.eq.s32.totalorder %s30, 0
      %p360 = por %p358, %p359
      %p361 = scmp.ne.s32.totalorder %s350, %s353
      %p362 = scmp.eq.s32.totalorder %s35, 4
      %p363 = por %p361, %p362
      %p364 = scmp.ne.s32.totalorder %s353, %s354
      %p365 = scmp.eq.s32.totalorder %s35, 0
      %p366 = por %p364, %p365
      %p367 = scmp.ne.s32.totalorder %s353, %s354
      %p368 = scmp.eq.s32.totalorder %s36, 4
      %p369 = por %p367, %p368
      %p371 = scmp.ne.s32.totalorder %s354, %s370
      %p372 = scmp.eq.s32.totalorder %s36, 0
      %p373 = por %p371, %p372
      %p374 = scmp.le.s32.totalorder 1, %s30
      %p375 = scmp.lt.s32.totalorder %s30, 6
      %p376 = pnand %p374, %p375
      %p377 = pneg %p376
      // Predicated region
      $region9: #{se3net_forward.1} parent=5 // pred_check
        _
      $region10: #{se3net_forward.1} parent=5 // pred_check_branch
        %379 = sbr.rel (%p376) target = $region12
      $region11: #{se3net_forward.1} parent=5 // pred_region
        %s380 = ssub.s32 %s30, 1
        // Predicated region
        $region13: #{se3net_forward.1} parent=11 // pred_check
          %p381 = pneg %p68
        $region14: #{se3net_forward.1} parent=11 // pred_check_branch
          %383 = sbr.rel (%p381) target = $region16
        $region15: #{se3net_forward.1} parent=11 // pred_region
          %s384 = smul.u32 2, %s39
          %p385 = scmp.lt.s32.totalorder %s384, 1
          %s386 = scalar_select %p385, %s384, 1
          %s387 = smul.addr %s386, 2
          %s388 = smul.addr %s387, 8
          %s389 = scalar_lea.vmem %s0, %s388
          %s390 = smul.u32 2, %s39
        $region16: #{se3net_forward.1} parent=11 // pred_fallthru
          _
        // Predicated region
        $region17: #{se3net_forward.1} parent=11 // pred_check
          %p391 = pneg %p94
        $region18: #{se3net_forward.1} parent=11 // pred_check_branch
          %393 = sbr.rel (%p391) target = $region20
        $region19: #{se3net_forward.1} parent=11 // pred_region
          %s394 = smul.u32 2, %s39
          %p395 = scmp.lt.s32.totalorder %s394, 1
          %s396 = scalar_select %p395, %s394, 1
          %s397 = smul.addr %s396, 4
          %s398 = scalar_lea.vmem %s1, %s397
          %s399 = smul.u32 2, %s39
        $region20: #{se3net_forward.1} parent=11 // pred_fallthru
          _
        // Predicated region
        $region21: #{se3net_forward.1} parent=11 // pred_check
          %p400 = pneg %p115
        $region22: #{se3net_forward.1} parent=11 // pred_check_branch
          %402 = sbr.rel (%p400) target = $region24
        $region23: #{se3net_forward.1} parent=11 // pred_region
          %s404 = ssub.s32 32, 32
          %405 = vsyncadd [#allocation6], %s404
          %s407 = sshll.u32 [#allocation5], 4
          %s408 = int_to_ptr.vmem [resolvable:$true] %s407
          %410 = dma.hbm_to_vmem [thread:$0]  %s2, 32, %s408, [#allocation6]
        $region24: #{se3net_forward.1} parent=11 // pred_fallthru
          _
        // Predicated region
        $region25: #{se3net_forward.1} parent=11 // pred_check
          %p411 = pneg %p162
        $region26: #{se3net_forward.1} parent=11 // pred_check_branch
          %413 = sbr.rel (%p411) target = $region28
        $region27: #{se3net_forward.1} parent=11 // pred_region
          _
        $region28: #{se3net_forward.1} parent=11 // pred_fallthru
          _
        // Predicated region
        $region29: #{se3net_forward.1} parent=11 // pred_check
          %p414 = pneg %p183
        $region30: #{se3net_forward.1} parent=11 // pred_check_branch
          %416 = sbr.rel (%p414) target = $region32
        $region31: #{se3net_forward.1} parent=11 // pred_region
          %s418 = ssub.s32 32, 32
          %419 = vsyncadd [#allocation9], %s418
          %s421 = sshll.u32 [#allocation10], 4
          %s422 = int_to_ptr.vmem [resolvable:$true] %s421
          %424 = dma.hbm_to_vmem [thread:$0]  %s5, 32, %s422, [#allocation9]
        $region32: #{se3net_forward.1} parent=11 // pred_fallthru
          _
        // Predicated region
        $region33: #{se3net_forward.1} parent=11 // pred_check
          %p425 = pneg %p230
        $region34: #{se3net_forward.1} parent=11 // pred_check_branch
          %427 = sbr.rel (%p425) target = $region36
        $region35: #{se3net_forward.1} parent=11 // pred_region
          _
        $region36: #{se3net_forward.1} parent=11 // pred_fallthru
          _
        // Predicated region
        $region37: #{se3net_forward.1} parent=11 // pred_check
          %p428 = pneg %p251
        $region38: #{se3net_forward.1} parent=11 // pred_check_branch
          %430 = sbr.rel (%p428) target = $region40
        $region39: #{se3net_forward.1} parent=11 // pred_region
          %s432 = ssub.s32 32, 32
          %433 = vsyncadd [#allocation12], %s432
          %s435 = sshll.u32 [#allocation13], 4
          %s436 = int_to_ptr.vmem [resolvable:$true] %s435
          %438 = dma.hbm_to_vmem [thread:$0]  %s8, 32, %s436, [#allocation12]
        $region40: #{se3net_forward.1} parent=11 // pred_fallthru
          _
        // Predicated region
        $region41: #{se3net_forward.1} parent=11 // pred_check
          %p439 = pneg %p298
        $region42: #{se3net_forward.1} parent=11 // pred_check_branch
          %441 = sbr.rel (%p439) target = $region44
        $region43: #{se3net_forward.1} parent=11 // pred_region
          %s443 = ssub.s32 8192, 8192
          %444 = vsyncadd [#allocation15], %s443
          %s445 = sshll.u32 [#allocation16], 4
          %s446 = int_to_ptr.vmem [resolvable:$true] %s445
          %451 = dma.hbm_to_vmem [thread:$0]  %s10, 8192, %s446, [#allocation15], 512, 512, 32
        $region44: #{se3net_forward.1} parent=11 // pred_fallthru
          _
        // Predicated region
        $region45: #{se3net_forward.1} parent=11 // pred_check
          %p452 = pneg %p319
        $region46: #{se3net_forward.1} parent=11 // pred_check_branch
          %454 = sbr.rel (%p452) target = $region48
        $region47: #{se3net_forward.1} parent=11 // pred_region
          _
        $region48: #{se3net_forward.1} parent=11 // pred_fallthru
          _
        // Predicated region
        $region49: #{se3net_forward.1} parent=11 // pred_check
          %p455 = pneg %p340
        $region50: #{se3net_forward.1} parent=11 // pred_check_branch
          %457 = sbr.rel (%p455) target = $region52
        $region51: #{se3net_forward.1} parent=11 // pred_region
          _
        $region52: #{se3net_forward.1} parent=11 // pred_fallthru
          _
      $region12: #{se3net_forward.1} parent=5 // pred_fallthru
        _
      %p458 = scmp.lt.s32.totalorder %s30, 5
      // Predicated region
      $region53: #{se3net_forward.1} parent=5 // pred_check
        %p459 = pneg %p458
      $region54: #{se3net_forward.1} parent=5 // pred_check_branch
        %461 = sbr.rel (%p459) target = $region56
      $region55: #{se3net_forward.1} parent=5 // pred_region
        // Predicated region
        $region57: #{se3net_forward.1} parent=55 // pred_check
          %p462 = pneg %p135
        $region58: #{se3net_forward.1} parent=55 // pred_check_branch
          %464 = sbr.rel (%p462) target = $region60
        $region59: #{se3net_forward.1} parent=55 // pred_region
          %s465 = sand.u32 %s30, 1
          %s466 = scalar_lea.sflag [#allocation9], %s465
          %s467 = sand.u32 %s125, 1
          %s468 = smul.addr %s467, 640
          %s469 = scalar_lea.vmem [#allocation8], %s468
          %s470 = smul.u32 10, %s38
          %s472 = ssub.s32 10240, 10240
          %473 = vsyncadd %s466, %s472
          %s474 = smul.addr %s470, 16
          %s475 = smul.addr %s474, 64
          %s476 = scalar_lea.hbm %s3, %s475
          %s477 = sshll.u32 %s469, 4
          %s478 = int_to_ptr.vmem [resolvable:$true] %s477
          %483 = dma.hbm_to_vmem [thread:$0]  %s476, 10240, %s478, %s466, 64, 64, 4
        $region60: #{se3net_forward.1} parent=55 // pred_fallthru
          _
        // Predicated region
        $region61: #{se3net_forward.1} parent=55 // pred_check
          %p484 = pneg %p203
        $region62: #{se3net_forward.1} parent=55 // pred_check_branch
          %486 = sbr.rel (%p484) target = $region64
        $region63: #{se3net_forward.1} parent=55 // pred_region
          %s487 = sand.u32 %s30, 1
          %s488 = scalar_lea.sflag [#allocation12], %s487
          %s489 = sand.u32 %s193, 1
          %s490 = smul.addr %s489, 640
          %s491 = scalar_lea.vmem [#allocation11], %s490
          %s492 = smul.u32 10, %s38
          %s494 = ssub.s32 10240, 10240
          %495 = vsyncadd %s488, %s494
          %s496 = smul.addr %s492, 16
          %s497 = smul.addr %s496, 64
          %s498 = scalar_lea.hbm %s6, %s497
          %s499 = sshll.u32 %s491, 4
          %s500 = int_to_ptr.vmem [resolvable:$true] %s499
          %505 = dma.hbm_to_vmem [thread:$0]  %s498, 10240, %s500, %s488, 64, 64, 4
        $region64: #{se3net_forward.1} parent=55 // pred_fallthru
          _
        // Predicated region
        $region65: #{se3net_forward.1} parent=55 // pred_check
          %p506 = pneg %p271
        $region66: #{se3net_forward.1} parent=55 // pred_check_branch
          %508 = sbr.rel (%p506) target = $region68
        $region67: #{se3net_forward.1} parent=55 // pred_region
          %s509 = sand.u32 %s30, 1
          %s510 = scalar_lea.sflag [#allocation15], %s509
          %s511 = sand.u32 %s261, 1
          %s512 = smul.addr %s511, 640
          %s513 = scalar_lea.vmem [#allocation14], %s512
          %s514 = smul.u32 10, %s38
          %s516 = ssub.s32 10240, 10240
          %517 = vsyncadd %s510, %s516
          %s518 = smul.addr %s514, 16
          %s519 = smul.addr %s518, 64
          %s520 = scalar_lea.hbm %s9, %s519
          %s521 = sshll.u32 %s513, 4
          %s522 = int_to_ptr.vmem [resolvable:$true] %s521
          %527 = dma.hbm_to_vmem [thread:$0]  %s520, 10240, %s522, %s510, 64, 64, 4
        $region68: #{se3net_forward.1} parent=55 // pred_fallthru
          _
      $region56: #{se3net_forward.1} parent=5 // pred_fallthru
        _
      %p528 = scmp.le.s32.totalorder 1, %s30
      %p529 = scmp.lt.s32.totalorder %s30, 6
      %p530 = pnand %p528, %p529
      %p531 = pneg %p530
      // Predicated region
      $region69: #{se3net_forward.1} parent=5 // pred_check
        _
      $region70: #{se3net_forward.1} parent=5 // pred_check_branch
        %533 = sbr.rel (%p530) target = $region72
      $region71: #{se3net_forward.1} parent=5 // pred_region
        %s534 = ssub.s32 %s30, 1
        // Predicated region
        $region73: #{se3net_forward.1} parent=71 // pred_check
          %p535 = pneg %p115
        $region74: #{se3net_forward.1} parent=71 // pred_check_branch
          %537 = sbr.rel (%p535) target = $region76
        $region75: #{se3net_forward.1} parent=71 // pred_region
          %538 = dma.done [#allocation6], 32
        $region76: #{se3net_forward.1} parent=71 // pred_fallthru
          _
        %s539 = sand.u32 %s35, 1
        %s540 = scalar_lea.sflag [#allocation9], %s539
        %s541 = sand.u32 %s128, 1
        %s542 = smul.addr %s541, 640
        %s543 = scalar_lea.vmem [#allocation8], %s542
        // Predicated region
        $region77: #{se3net_forward.1} parent=71 // pred_check
          %p544 = pneg %p141
        $region78: #{se3net_forward.1} parent=71 // pred_check_branch
          %546 = sbr.rel (%p544) target = $region80
        $region79: #{se3net_forward.1} parent=71 // pred_region
          %547 = dma.done %s540, 10240
        $region80: #{se3net_forward.1} parent=71 // pred_fallthru
          _
        // Predicated region
        $region81: #{se3net_forward.1} parent=71 // pred_check
          %p548 = pneg %p183
        $region82: #{se3net_forward.1} parent=71 // pred_check_branch
          %550 = sbr.rel (%p548) target = $region84
        $region83: #{se3net_forward.1} parent=71 // pred_region
          %551 = dma.done [#allocation9], 32
        $region84: #{se3net_forward.1} parent=71 // pred_fallthru
          _
        %s552 = sand.u32 %s35, 1
        %s553 = scalar_lea.sflag [#allocation12], %s552
        %s554 = sand.u32 %s196, 1
        %s555 = smul.addr %s554, 640
        %s556 = scalar_lea.vmem [#allocation11], %s555
        // Predicated region
        $region85: #{se3net_forward.1} parent=71 // pred_check
          %p557 = pneg %p209
        $region86: #{se3net_forward.1} parent=71 // pred_check_branch
          %559 = sbr.rel (%p557) target = $region88
        $region87: #{se3net_forward.1} parent=71 // pred_region
          %560 = dma.done %s553, 10240
        $region88: #{se3net_forward.1} parent=71 // pred_fallthru
          _
        // Predicated region
        $region89: #{se3net_forward.1} parent=71 // pred_check
          %p561 = pneg %p251
        $region90: #{se3net_forward.1} parent=71 // pred_check_branch
          %563 = sbr.rel (%p561) target = $region92
        $region91: #{se3net_forward.1} parent=71 // pred_region
          %564 = dma.done [#allocation12], 32
        $region92: #{se3net_forward.1} parent=71 // pred_fallthru
          _
        %s565 = sand.u32 %s35, 1
        %s566 = scalar_lea.sflag [#allocation15], %s565
        %s567 = sand.u32 %s264, 1
        %s568 = smul.addr %s567, 640
        %s569 = scalar_lea.vmem [#allocation14], %s568
        // Predicated region
        $region93: #{se3net_forward.1} parent=71 // pred_check
          %p570 = pneg %p277
        $region94: #{se3net_forward.1} parent=71 // pred_check_branch
          %572 = sbr.rel (%p570) target = $region96
        $region95: #{se3net_forward.1} parent=71 // pred_region
          %573 = dma.done %s566, 10240
        $region96: #{se3net_forward.1} parent=71 // pred_fallthru
          _
        // Predicated region
        $region97: #{se3net_forward.1} parent=71 // pred_check
          %p574 = pneg %p298
        $region98: #{se3net_forward.1} parent=71 // pred_check_branch
          %576 = sbr.rel (%p574) target = $region100
        $region99: #{se3net_forward.1} parent=71 // pred_region
          %577 = dma.done [#allocation15], 8192
        $region100: #{se3net_forward.1} parent=71 // pred_fallthru
          _
        %s578 = smul.u32 2, %s39
        %p579 = scmp.lt.s32.totalorder %s578, 1
        %s580 = scalar_select %p579, %s578, 1
        %s581 = smul.addr %s580, 2
        %s582 = smul.addr %s581, 8
        %s583 = scalar_lea.vmem %s0, %s582
        %p584 = pneg %p68
        %p585 = pneg %p65
        %s586 = smul.u32 2, %s39
        %p587 = scmp.lt.s32.totalorder %s586, 1
        %s588 = scalar_select %p587, %s586, 1
        %s589 = smul.addr %s588, 4
        %s590 = scalar_lea.vmem %s1, %s589
        %p591 = pneg %p94
        %p592 = pneg %p91
        %p593 = pneg %p115
        %p594 = pneg %p112
        %s595 = sand.u32 %s35, 1
        %s596 = scalar_lea.sflag [#allocation9], %s595
        %s597 = sand.u32 %s128, 1
        %s598 = smul.addr %s597, 640
        %s599 = scalar_lea.vmem [#allocation8], %s598
        %p600 = pneg %p141
        %p601 = pneg %p138
        %p602 = pneg %p162
        %p603 = pneg %p159
        %p604 = pneg %p183
        %p605 = pneg %p180
        %s606 = sand.u32 %s35, 1
        %s607 = scalar_lea.sflag [#allocation12], %s606
        %s608 = sand.u32 %s196, 1
        %s609 = smul.addr %s608, 640
        %s610 = scalar_lea.vmem [#allocation11], %s609
        %p611 = pneg %p209
        %p612 = pneg %p206
        %p613 = pneg %p230
        %p614 = pneg %p227
        %p615 = pneg %p251
        %p616 = pneg %p248
        %s617 = sand.u32 %s35, 1
        %s618 = scalar_lea.sflag [#allocation15], %s617
        %s619 = sand.u32 %s264, 1
        %s620 = smul.addr %s619, 640
        %s621 = scalar_lea.vmem [#allocation14], %s620
        %p622 = pneg %p277
        %p623 = pneg %p274
        %p624 = pneg %p298
        %p625 = pneg %p295
        %p626 = pneg %p319
        %p627 = pneg %p316
        %p628 = pneg %p340
        %p629 = pneg %p337
        %p630 = pneg %p366
        %p631 = pneg %p363
        %s632 = smul.u32 2, %s39
        %p633 = scmp.lt.s32.totalorder %s632, 1
        %s634 = scalar_select %p633, %s632, 1
        %s635 = smul.addr %s634, 2
        %s636 = smul.addr %s635, 8
        %s637 = scalar_lea.vmem %s0, %s636
        %s638 = smul.u32 2, %s39
        %s639 = smul.u32 2, %s39
        %p640 = scmp.lt.s32.totalorder %s639, 1
        %s641 = scalar_select %p640, %s639, 1
        %s642 = smul.addr %s641, 4
        %s643 = scalar_lea.vmem %s1, %s642
        %s644 = smul.u32 2, %s39
        %s645 = smul.u32 10, %s40
        %s646 = smul.u32 10, %s40
        %s647 = smul.u32 10, %s40
        %s648 = smul.u32 2, %s39
        %p650 = scmp.eq.s32.totalorder %s40, 0
        // Predicated region
        $region101: #{se3net_forward.1} parent=71 // pred_check
          %p651 = pneg %p650
        $region102: #{se3net_forward.1} parent=71 // pred_check_branch
          %653 = sbr.rel (%p651) target = $region104
        $region103: #{se3net_forward.1} parent=71 // pred_region
          %v654 = vld [vmem:[%s637] sm:$0xff]
          %v655 = vld [vmem:[%s637 + $0x8] sm:$0xff]
          %v656 = vld [vmem:[%s637 + $0x10] sm:$0xff]
          %v657 = vld [vmem:[%s637 + $0x18] sm:$0xff]
          %v658 = vpack.c.bf16 %v655, %v654
          %v659 = vpack.c.bf16 %v657, %v656
          %v660 = vld [vmem:[#allocation5] sm:$0x3]
          %vm661 = vcmask 23552
          %v663 = vsel %vm661, %v658, 0
          %v666 = vsel %vm661, %v659, 0
          %vm668 = vcmask 1040384
          %vm669 = vcmask 1041408
          %v670 = vsel %vm668, 4294967295, 65535
          %v671 = vsel %vm669, %v670, 0
          %v673 = vand.u32 %v660, %v671
          %675 = vmatprep.subr.bf16.mxu0 0
          %676 = vmatpush1.bf16.msra.mxu0 %v673
          %677 = vmatprep.subr.bf16.mxu0 0
          %678 = vmatpush1.bf16.msra.mxu0 0
          %679 = vmatprep.subr.bf16.mxu0 0
          %680 = vmatpush1.bf16.msra.mxu0 0
          %681 = vmatprep.subr.bf16.mxu0 0
          %682 = vmatpush1.bf16.msra.mxu0 0
          %683 = vmatprep.subr.bf16.mxu0 0
          %684 = vmatpush1.bf16.msra.mxu0 0
          %685 = vmatprep.subr.bf16.mxu0 0
          %686 = vmatpush1.bf16.msra.mxu0 0
          %687 = vmatprep.subr.bf16.mxu0 0
          %688 = vmatpush1.bf16.msra.mxu0 0
          %689 = vmatprep.subr.bf16.mxu0 0
          %690 = vmatpush1.bf16.msra.mxu0 0
          %691 = vmatprep.subr.bf16.mxu0 0
          %692 = vmatpush1.bf16.msra.mxu0 0
          %693 = vmatprep.subr.bf16.mxu0 0
          %694 = vmatpush1.bf16.msra.mxu0 0
          %695 = vmatprep.subr.bf16.mxu0 0
          %696 = vmatpush1.bf16.msra.mxu0 0
          %697 = vmatprep.subr.bf16.mxu0 0
          %698 = vmatpush1.bf16.msra.mxu0 0
          %699 = vmatprep.subr.bf16.mxu0 0
          %700 = vmatpush1.bf16.msra.mxu0 0
          %701 = vmatprep.subr.bf16.mxu0 0
          %702 = vmatpush1.bf16.msra.mxu0 0
          %703 = vmatprep.subr.bf16.mxu0 0
          %704 = vmatpush1.bf16.msra.mxu0 0
          %705 = vmatprep.subr.bf16.mxu0 0
          %706 = vmatpush1.bf16.msra.mxu0 0
          %707 = vmatprep.mubr.bf16.mxu0 0
          %708 = vmatmul.mubr.bf16.gmra.mrb[0].mxu0 %v663
          %v709 = vpop.f32.mrb[0].mxu0
          %v710 = vadd.f32 0.0, %v709
          %v711 = vpop.f32.mrb[0].mxu0
          %v712 = vpop.f32.mrb[0].mxu0
          %v713 = vadd.f32 0.0, %v712
          %v714 = vpop.f32.mrb[0].mxu0
          %715 = vmatprep.mubr.bf16.mxu0 0
          %716 = vmatmul.mubr.bf16.gmra.mrb[0].mxu0 %v666
          %v717 = vpop.f32.mrb[0].mxu0
          %v718 = vadd.f32 0.0, %v717
          %v719 = vpop.f32.mrb[0].mxu0
          %v720 = vpop.f32.mrb[0].mxu0
          %v721 = vadd.f32 0.0, %v720
          %v722 = vpop.f32.mrb[0].mxu0
          %723 = vdwg.mxu0
          %v724 = vmax.f32 %v710, 0.0
          %v725 = vmax.f32 %v713, 0.0
          %v726 = vmax.f32 %v718, 0.0
          %v727 = vmax.f32 %v721, 0.0
          %v728 = vpack.c.bf16 %v725, %v724
          %v729 = vpack.c.bf16 %v727, %v726
          %730 = vst [vmem:[#allocation2] sm:$0xff] %v728
          %731 = vst [vmem:[#allocation2 + $0x8] sm:$0xff] %v729
          %v732 = vld [vmem:[#allocation10] sm:$0x3]
          %v734 = vand.u32 %v732, %v671
          %736 = vmatprep.subr.bf16.mxu0 0
          %737 = vmatpush1.bf16.msra.mxu0 %v734
          %738 = vmatprep.subr.bf16.mxu0 0
          %739 = vmatpush1.bf16.msra.mxu0 0
          %740 = vmatprep.subr.bf16.mxu0 0
          %741 = vmatpush1.bf16.msra.mxu0 0
          %742 = vmatprep.subr.bf16.mxu0 0
          %743 = vmatpush1.bf16.msra.mxu0 0
          %744 = vmatprep.subr.bf16.mxu0 0
          %745 = vmatpush1.bf16.msra.mxu0 0
          %746 = vmatprep.subr.bf16.mxu0 0
          %747 = vmatpush1.bf16.msra.mxu0 0
          %748 = vmatprep.subr.bf16.mxu0 0
          %749 = vmatpush1.bf16.msra.mxu0 0
          %750 = vmatprep.subr.bf16.mxu0 0
          %751 = vmatpush1.bf16.msra.mxu0 0
          %752 = vmatprep.subr.bf16.mxu0 0
          %753 = vmatpush1.bf16.msra.mxu0 0
          %754 = vmatprep.subr.bf16.mxu0 0
          %755 = vmatpush1.bf16.msra.mxu0 0
          %756 = vmatprep.subr.bf16.mxu0 0
          %757 = vmatpush1.bf16.msra.mxu0 0
          %758 = vmatprep.subr.bf16.mxu0 0
          %759 = vmatpush1.bf16.msra.mxu0 0
          %760 = vmatprep.subr.bf16.mxu0 0
          %761 = vmatpush1.bf16.msra.mxu0 0
          %762 = vmatprep.subr.bf16.mxu0 0
          %763 = vmatpush1.bf16.msra.mxu0 0
          %764 = vmatprep.subr.bf16.mxu0 0
          %765 = vmatpush1.bf16.msra.mxu0 0
          %766 = vmatprep.subr.bf16.mxu0 0
          %767 = vmatpush1.bf16.msra.mxu0 0
          %768 = vmatprep.mubr.bf16.mxu0 0
          %769 = vmatmul.mubr.bf16.gmra.mrb[0].mxu0 %v663
          %v770 = vpop.f32.mrb[0].mxu0
          %v771 = vadd.f32 0.0, %v770
          %v772 = vpop.f32.mrb[0].mxu0
          %v773 = vpop.f32.mrb[0].mxu0
          %v774 = vadd.f32 0.0, %v773
          %v775 = vpop.f32.mrb[0].mxu0
          %776 = vmatprep.mubr.bf16.mxu0 0
          %777 = vmatmul.mubr.bf16.gmra.mrb[0].mxu0 %v666
          %v778 = vpop.f32.mrb[0].mxu0
          %v779 = vadd.f32 0.0, %v778
          %v780 = vpop.f32.mrb[0].mxu0
          %v781 = vpop.f32.mrb[0].mxu0
          %v782 = vadd.f32 0.0, %v781
          %v783 = vpop.f32.mrb[0].mxu0
          %784 = vdwg.mxu0
          %v785 = vmax.f32 %v771, 0.0
          %v786 = vmax.f32 %v774, 0.0
          %v787 = vmax.f32 %v779, 0.0
          %v788 = vmax.f32 %v782, 0.0
          %v789 = vpack.c.bf16 %v786, %v785
          %v790 = vpack.c.bf16 %v788, %v787
          %791 = vst [vmem:[#allocation3] sm:$0xff] %v789
          %792 = vst [vmem:[#allocation3 + $0x8] sm:$0xff] %v790
          %v793 = vld [vmem:[#allocation13] sm:$0x3]
          %v795 = vand.u32 %v793, %v671
          %797 = vmatprep.subr.bf16.mxu0 0
          %798 = vmatpush1.bf16.msra.mxu0 %v795
          %799 = vmatprep.subr.bf16.mxu0 0
          %800 = vmatpush1.bf16.msra.mxu0 0
          %801 = vmatprep.subr.bf16.mxu0 0
          %802 = vmatpush1.bf16.msra.mxu0 0
          %803 = vmatprep.subr.bf16.mxu0 0
          %804 = vmatpush1.bf16.msra.mxu0 0
          %805 = vmatprep.subr.bf16.mxu0 0
          %806 = vmatpush1.bf16.msra.mxu0 0
          %807 = vmatprep.subr.bf16.mxu0 0
          %808 = vmatpush1.bf16.msra.mxu0 0
          %809 = vmatprep.subr.bf16.mxu0 0
          %810 = vmatpush1.bf16.msra.mxu0 0
          %811 = vmatprep.subr.bf16.mxu0 0
          %812 = vmatpush1.bf16.msra.mxu0 0
          %813 = vmatprep.subr.bf16.mxu0 0
          %814 = vmatpush1.bf16.msra.mxu0 0
          %815 = vmatprep.subr.bf16.mxu0 0
          %816 = vmatpush1.bf16.msra.mxu0 0
          %817 = vmatprep.subr.bf16.mxu0 0
          %818 = vmatpush1.bf16.msra.mxu0 0
          %819 = vmatprep.subr.bf16.mxu0 0
          %820 = vmatpush1.bf16.msra.mxu0 0
          %821 = vmatprep.subr.bf16.mxu0 0
          %822 = vmatpush1.bf16.msra.mxu0 0
          %823 = vmatprep.subr.bf16.mxu0 0
          %824 = vmatpush1.bf16.msra.mxu0 0
          %825 = vmatprep.subr.bf16.mxu0 0
          %826 = vmatpush1.bf16.msra.mxu0 0
          %827 = vmatprep.subr.bf16.mxu0 0
          %828 = vmatpush1.bf16.msra.mxu0 0
          %829 = vmatprep.mubr.bf16.mxu0 0
          %830 = vmatmul.mubr.bf16.gmra.mrb[0].mxu0 %v663
          %v831 = vpop.f32.mrb[0].mxu0
          %v832 = vadd.f32 0.0, %v831
          %v833 = vpop.f32.mrb[0].mxu0
          %v834 = vpop.f32.mrb[0].mxu0
          %v835 = vadd.f32 0.0, %v834
          %v836 = vpop.f32.mrb[0].mxu0
          %837 = vmatprep.mubr.bf16.mxu0 0
          %838 = vmatmul.mubr.bf16.gmra.mrb[0].mxu0 %v666
          %v839 = vpop.f32.mrb[0].mxu0
          %v840 = vadd.f32 0.0, %v839
          %v841 = vpop.f32.mrb[0].mxu0
          %v842 = vpop.f32.mrb[0].mxu0
          %v843 = vadd.f32 0.0, %v842
          %v844 = vpop.f32.mrb[0].mxu0
          %845 = vdwg.mxu0
          %v846 = vmax.f32 %v832, 0.0
          %v847 = vmax.f32 %v835, 0.0
          %v848 = vmax.f32 %v840, 0.0
          %v849 = vmax.f32 %v843, 0.0
          %v850 = vpack.c.bf16 %v847, %v846
          %v851 = vpack.c.bf16 %v849, %v848
          %852 = vst [vmem:[#allocation4] sm:$0xff] %v850
          %853 = vst [vmem:[#allocation4 + $0x8] sm:$0xff] %v851
        $region104: #{se3net_forward.1} parent=71 // pred_fallthru
          _
        %v854 = vld [vmem:[#allocation2] sm:$0xff]
        %v855 = vld [vmem:[#allocation2 + $0x8] sm:$0xff]
        %v856 = vld [vmem:[#allocation3] sm:$0xff]
        %v857 = vld [vmem:[#allocation3 + $0x8] sm:$0xff]
        %v858 = vld [vmem:[#allocation4] sm:$0xff]
        %v859 = vld [vmem:[#allocation4 + $0x8] sm:$0xff]
        %v860 = vld [vmem:[%s543] sm:$0xf]
        %v861 = vld [vmem:[%s543 + $0x4] sm:$0xf]
        %v862 = vld [vmem:[%s543 + $0x8] sm:$0xf]
        %v863 = vld [vmem:[%s543 + $0xc] sm:$0xf]
        %v864 = vld [vmem:[%s543 + $0x10] sm:$0xf]
        %v865 = vld [vmem:[%s543 + $0x14] sm:$0xf]
        %v866 = vld [vmem:[%s543 + $0x18] sm:$0xf]
        %v867 = vld [vmem:[%s543 + $0x1c] sm:$0xf]
        %v868 = vld [vmem:[%s543 + $0x20] sm:$0xf]
        %v869 = vld [vmem:[%s543 + $0x24] sm:$0xf]
        %v870 = vld [vmem:[%s543 + $0x28] sm:$0xf]
        %v871 = vld [vmem:[%s543 + $0x2c] sm:$0xf]
        %v872 = vld [vmem:[%s543 + $0x30] sm:$0xf]
        %v873 = vld [vmem:[%s543 + $0x34] sm:$0xf]
        %v874 = vld [vmem:[%s543 + $0x38] sm:$0xf]
        %v875 = vld [vmem:[%s543 + $0x3c] sm:$0xf]
        %v892 = vunpack.c.l.b16 %v860
        %v893 = vunpack.c.l.b16 %v861
        %v894 = vunpack.c.l.b16 %v862
        %v895 = vunpack.c.l.b16 %v863
        %v896 = vunpack.c.l.b16 %v864
        %v897 = vunpack.c.l.b16 %v865
        %v898 = vunpack.c.l.b16 %v866
        %v899 = vunpack.c.l.b16 %v867
        %v900 = vunpack.c.l.b16 %v868
        %v901 = vunpack.c.l.b16 %v869
        %v902 = vunpack.c.l.b16 %v870
        %v903 = vunpack.c.l.b16 %v871
        %v904 = vunpack.c.l.b16 %v872
        %v905 = vunpack.c.l.b16 %v873
        %v906 = vunpack.c.l.b16 %v874
        %v907 = vunpack.c.l.b16 %v875
        %v908 = vpack.c.b16 %v893, %v892
        %v909 = vpack.c.b16 %v895, %v894
        %v910 = vpack.c.b16 %v897, %v896
        %v911 = vpack.c.b16 %v899, %v898
        %v912 = vpack.c.b16 %v901, %v900
        %v913 = vpack.c.b16 %v903, %v902
        %v914 = vpack.c.b16 %v905, %v904
        %v915 = vpack.c.b16 %v907, %v906
        %924 = vmatprep.subr.bf16.mxu0 0
        %925 = vmatpush1.bf16.msra.mxu0 %v908
        %926 = vmatprep.subr.bf16.mxu0 0
        %927 = vmatpush1.bf16.msra.mxu0 %v909
        %928 = vmatprep.subr.bf16.mxu0 0
        %929 = vmatpush1.bf16.msra.mxu0 %v910
        %930 = vmatprep.subr.bf16.mxu0 0
        %931 = vmatpush1.bf16.msra.mxu0 %v911
        %932 = vmatprep.subr.bf16.mxu0 0
        %933 = vmatpush1.bf16.msra.mxu0 %v912
        %934 = vmatprep.subr.bf16.mxu0 0
        %935 = vmatpush1.bf16.msra.mxu0 %v913
        %936 = vmatprep.subr.bf16.mxu0 0
        %937 = vmatpush1.bf16.msra.mxu0 %v914
        %938 = vmatprep.subr.bf16.mxu0 0
        %939 = vmatpush1.bf16.msra.mxu0 %v915
        %940 = vmatprep.subr.bf16.mxu0 0
        %941 = vmatpush1.bf16.msra.mxu0 0
        %942 = vmatprep.subr.bf16.mxu0 0
        %943 = vmatpush1.bf16.msra.mxu0 0
        %944 = vmatprep.subr.bf16.mxu0 0
        %945 = vmatpush1.bf16.msra.mxu0 0
        %946 = vmatprep.subr.bf16.mxu0 0
        %947 = vmatpush1.bf16.msra.mxu0 0
        %948 = vmatprep.subr.bf16.mxu0 0
        %949 = vmatpush1.bf16.msra.mxu0 0
        %950 = vmatprep.subr.bf16.mxu0 0
        %951 = vmatpush1.bf16.msra.mxu0 0
        %952 = vmatprep.subr.bf16.mxu0 0
        %953 = vmatpush1.bf16.msra.mxu0 0
        %954 = vmatprep.subr.bf16.mxu0 0
        %955 = vmatpush1.bf16.msra.mxu0 0
        %956 = vmatprep.mubr.bf16.mxu0 0
        %957 = vmatmul.mubr.bf16.gmra.mrb[0].mxu0 %v854
        %v958 = vpop.f32.mrb[0].mxu0
        %v959 = vadd.f32 0.0, %v958
        %v960 = vpop.f32.mrb[0].mxu0
        %v961 = vpop.f32.mrb[0].mxu0
        %v962 = vadd.f32 0.0, %v961
        %v963 = vpop.f32.mrb[0].mxu0
        %964 = vmatprep.mubr.bf16.mxu0 0
        %965 = vmatmul.mubr.bf16.gmra.mrb[0].mxu0 %v855
        %v966 = vpop.f32.mrb[0].mxu0
        %v967 = vadd.f32 0.0, %v966
        %v968 = vpop.f32.mrb[0].mxu0
        %v969 = vpop.f32.mrb[0].mxu0
        %v970 = vadd.f32 0.0, %v969
        %v971 = vpop.f32.mrb[0].mxu0
        %972 = vdwg.mxu0
        %v973 = vmax.f32 %v959, 0.0
        %v974 = vmax.f32 %v962, 0.0
        %v975 = vmax.f32 %v967, 0.0
        %v976 = vmax.f32 %v970, 0.0
        %v977 = vpack.c.bf16 %v974, %v973
        %v978 = vpack.c.bf16 %v976, %v975
        %v979 = vld [vmem:[%s556] sm:$0xf]
        %v980 = vld [vmem:[%s556 + $0x4] sm:$0xf]
        %v981 = vld [vmem:[%s556 + $0x8] sm:$0xf]
        %v982 = vld [vmem:[%s556 + $0xc] sm:$0xf]
        %v983 = vld [vmem:[%s556 + $0x10] sm:$0xf]
        %v984 = vld [vmem:[%s556 + $0x14] sm:$0xf]
        %v985 = vld [vmem:[%s556 + $0x18] sm:$0xf]
        %v986 = vld [vmem:[%s556 + $0x1c] sm:$0xf]
        %v987 = vld [vmem:[%s556 + $0x20] sm:$0xf]
        %v988 = vld [vmem:[%s556 + $0x24] sm:$0xf]
        %v989 = vld [vmem:[%s556 + $0x28] sm:$0xf]
        %v990 = vld [vmem:[%s556 + $0x2c] sm:$0xf]
        %v991 = vld [vmem:[%s556 + $0x30] sm:$0xf]
        %v992 = vld [vmem:[%s556 + $0x34] sm:$0xf]
        %v993 = vld [vmem:[%s556 + $0x38] sm:$0xf]
        %v994 = vld [vmem:[%s556 + $0x3c] sm:$0xf]
        %v1011 = vunpack.c.l.b16 %v979
        %v1012 = vunpack.c.l.b16 %v980
        %v1013 = vunpack.c.l.b16 %v981
        %v1014 = vunpack.c.l.b16 %v982
        %v1015 = vunpack.c.l.b16 %v983
        %v1016 = vunpack.c.l.b16 %v984
        %v1017 = vunpack.c.l.b16 %v985
        %v1018 = vunpack.c.l.b16 %v986
        %v1019 = vunpack.c.l.b16 %v987
        %v1020 = vunpack.c.l.b16 %v988
        %v1021 = vunpack.c.l.b16 %v989
        %v1022 = vunpack.c.l.b16 %v990
        %v1023 = vunpack.c.l.b16 %v991
        %v1024 = vunpack.c.l.b16 %v992
        %v1025 = vunpack.c.l.b16 %v993
        %v1026 = vunpack.c.l.b16 %v994
        %v1027 = vpack.c.b16 %v1012, %v1011
        %v1028 = vpack.c.b16 %v1014, %v1013
        %v1029 = vpack.c.b16 %v1016, %v1015
        %v1030 = vpack.c.b16 %v1018, %v1017
        %v1031 = vpack.c.b16 %v1020, %v1019
        %v1032 = vpack.c.b16 %v1022, %v1021
        %v1033 = vpack.c.b16 %v1024, %v1023
        %v1034 = vpack.c.b16 %v1026, %v1025
        %1043 = vmatprep.subr.bf16.mxu0 0
        %1044 = vmatpush1.bf16.msra.mxu0 %v1027
        %1045 = vmatprep.subr.bf16.mxu0 0
        %1046 = vmatpush1.bf16.msra.mxu0 %v1028
        %1047 = vmatprep.subr.bf16.mxu0 0
        %1048 = vmatpush1.bf16.msra.mxu0 %v1029
        %1049 = vmatprep.subr.bf16.mxu0 0
        %1050 = vmatpush1.bf16.msra.mxu0 %v1030
        %1051 = vmatprep.subr.bf16.mxu0 0
        %1052 = vmatpush1.bf16.msra.mxu0 %v1031
        %1053 = vmatprep.subr.bf16.mxu0 0
        %1054 = vmatpush1.bf16.msra.mxu0 %v1032
        %1055 = vmatprep.subr.bf16.mxu0 0
        %1056 = vmatpush1.bf16.msra.mxu0 %v1033
        %1057 = vmatprep.subr.bf16.mxu0 0
        %1058 = vmatpush1.bf16.msra.mxu0 %v1034
        %1059 = vmatprep.subr.bf16.mxu0 0
        %1060 = vmatpush1.bf16.msra.mxu0 0
        %1061 = vmatprep.subr.bf16.mxu0 0
        %1062 = vmatpush1.bf16.msra.mxu0 0
        %1063 = vmatprep.subr.bf16.mxu0 0
        %1064 = vmatpush1.bf16.msra.mxu0 0
        %1065 = vmatprep.subr.bf16.mxu0 0
        %1066 = vmatpush1.bf16.msra.mxu0 0
        %1067 = vmatprep.subr.bf16.mxu0 0
        %1068 = vmatpush1.bf16.msra.mxu0 0
        %1069 = vmatprep.subr.bf16.mxu0 0
        %1070 = vmatpush1.bf16.msra.mxu0 0
        %1071 = vmatprep.subr.bf16.mxu0 0
        %1072 = vmatpush1.bf16.msra.mxu0 0
        %1073 = vmatprep.subr.bf16.mxu0 0
        %1074 = vmatpush1.bf16.msra.mxu0 0
        %1075 = vmatprep.mubr.bf16.mxu0 0
        %1076 = vmatmul.mubr.bf16.gmra.mrb[0].mxu0 %v856
        %v1077 = vpop.f32.mrb[0].mxu0
        %v1078 = vadd.f32 0.0, %v1077
        %v1079 = vpop.f32.mrb[0].mxu0
        %v1080 = vpop.f32.mrb[0].mxu0
        %v1081 = vadd.f32 0.0, %v1080
        %v1082 = vpop.f32.mrb[0].mxu0
        %1083 = vmatprep.mubr.bf16.mxu0 0
        %1084 = vmatmul.mubr.bf16.gmra.mrb[0].mxu0 %v857
        %v1085 = vpop.f32.mrb[0].mxu0
        %v1086 = vadd.f32 0.0, %v1085
        %v1087 = vpop.f32.mrb[0].mxu0
        %v1088 = vpop.f32.mrb[0].mxu0
        %v1089 = vadd.f32 0.0, %v1088
        %v1090 = vpop.f32.mrb[0].mxu0
        %1091 = vdwg.mxu0
        %v1092 = vmax.f32 %v1078, 0.0
        %v1093 = vmax.f32 %v1081, 0.0
        %v1094 = vmax.f32 %v1086, 0.0
        %v1095 = vmax.f32 %v1089, 0.0
        %v1096 = vpack.c.bf16 %v1093, %v1092
        %v1097 = vpack.c.bf16 %v1095, %v1094
        %v1098 = vld [vmem:[%s569] sm:$0xf]
        %v1099 = vld [vmem:[%s569 + $0x4] sm:$0xf]
        %v1100 = vld [vmem:[%s569 + $0x8] sm:$0xf]
        %v1101 = vld [vmem:[%s569 + $0xc] sm:$0xf]
        %v1102 = vld [vmem:[%s569 + $0x10] sm:$0xf]
        %v1103 = vld [vmem:[%s569 + $0x14] sm:$0xf]
        %v1104 = vld [vmem:[%s569 + $0x18] sm:$0xf]
        %v1105 = vld [vmem:[%s569 + $0x1c] sm:$0xf]
        %v1106 = vld [vmem:[%s569 + $0x20] sm:$0xf]
        %v1107 = vld [vmem:[%s569 + $0x24] sm:$0xf]
        %v1108 = vld [vmem:[%s569 + $0x28] sm:$0xf]
        %v1109 = vld [vmem:[%s569 + $0x2c] sm:$0xf]
        %v1110 = vld [vmem:[%s569 + $0x30] sm:$0xf]
        %v1111 = vld [vmem:[%s569 + $0x34] sm:$0xf]
        %v1112 = vld [vmem:[%s569 + $0x38] sm:$0xf]
        %v1113 = vld [vmem:[%s569 + $0x3c] sm:$0xf]
        %v1130 = vunpack.c.l.b16 %v1098
        %v1131 = vunpack.c.l.b16 %v1099
        %v1132 = vunpack.c.l.b16 %v1100
        %v1133 = vunpack.c.l.b16 %v1101
        %v1134 = vunpack.c.l.b16 %v1102
        %v1135 = vunpack.c.l.b16 %v1103
        %v1136 = vunpack.c.l.b16 %v1104
        %v1137 = vunpack.c.l.b16 %v1105
        %v1138 = vunpack.c.l.b16 %v1106
        %v1139 = vunpack.c.l.b16 %v1107
        %v1140 = vunpack.c.l.b16 %v1108
        %v1141 = vunpack.c.l.b16 %v1109
        %v1142 = vunpack.c.l.b16 %v1110
        %v1143 = vunpack.c.l.b16 %v1111
        %v1144 = vunpack.c.l.b16 %v1112
        %v1145 = vunpack.c.l.b16 %v1113
        %v1146 = vpack.c.b16 %v1131, %v1130
        %v1147 = vpack.c.b16 %v1133, %v1132
        %v1148 = vpack.c.b16 %v1135, %v1134
        %v1149 = vpack.c.b16 %v1137, %v1136
        %v1150 = vpack.c.b16 %v1139, %v1138
        %v1151 = vpack.c.b16 %v1141, %v1140
        %v1152 = vpack.c.b16 %v1143, %v1142
        %v1153 = vpack.c.b16 %v1145, %v1144
        %1162 = vmatprep.subr.bf16.mxu0 0
        %1163 = vmatpush1.bf16.msra.mxu0 %v1146
        %1164 = vmatprep.subr.bf16.mxu0 0
        %1165 = vmatpush1.bf16.msra.mxu0 %v1147
        %1166 = vmatprep.subr.bf16.mxu0 0
        %1167 = vmatpush1.bf16.msra.mxu0 %v1148
        %1168 = vmatprep.subr.bf16.mxu0 0
        %1169 = vmatpush1.bf16.msra.mxu0 %v1149
        %1170 = vmatprep.subr.bf16.mxu0 0
        %1171 = vmatpush1.bf16.msra.mxu0 %v1150
        %1172 = vmatprep.subr.bf16.mxu0 0
        %1173 = vmatpush1.bf16.msra.mxu0 %v1151
        %1174 = vmatprep.subr.bf16.mxu0 0
        %1175 = vmatpush1.bf16.msra.mxu0 %v1152
        %1176 = vmatprep.subr.bf16.mxu0 0
        %1177 = vmatpush1.bf16.msra.mxu0 %v1153
        %1178 = vmatprep.subr.bf16.mxu0 0
        %1179 = vmatpush1.bf16.msra.mxu0 0
        %1180 = vmatprep.subr.bf16.mxu0 0
        %1181 = vmatpush1.bf16.msra.mxu0 0
        %1182 = vmatprep.subr.bf16.mxu0 0
        %1183 = vmatpush1.bf16.msra.mxu0 0
        %1184 = vmatprep.subr.bf16.mxu0 0
        %1185 = vmatpush1.bf16.msra.mxu0 0
        %1186 = vmatprep.subr.bf16.mxu0 0
        %1187 = vmatpush1.bf16.msra.mxu0 0
        %1188 = vmatprep.subr.bf16.mxu0 0
        %1189 = vmatpush1.bf16.msra.mxu0 0
        %1190 = vmatprep.subr.bf16.mxu0 0
        %1191 = vmatpush1.bf16.msra.mxu0 0
        %1192 = vmatprep.subr.bf16.mxu0 0
        %1193 = vmatpush1.bf16.msra.mxu0 0
        %1194 = vmatprep.mubr.bf16.mxu0 0
        %1195 = vmatmul.mubr.bf16.gmra.mrb[0].mxu0 %v858
        %v1196 = vpop.f32.mrb[0].mxu0
        %v1197 = vadd.f32 0.0, %v1196
        %v1198 = vpop.f32.mrb[0].mxu0
        %v1199 = vpop.f32.mrb[0].mxu0
        %v1200 = vadd.f32 0.0, %v1199
        %v1201 = vpop.f32.mrb[0].mxu0
        %1202 = vmatprep.mubr.bf16.mxu0 0
        %1203 = vmatmul.mubr.bf16.gmra.mrb[0].mxu0 %v859
        %v1204 = vpop.f32.mrb[0].mxu0
        %v1205 = vadd.f32 0.0, %v1204
        %v1206 = vpop.f32.mrb[0].mxu0
        %v1207 = vpop.f32.mrb[0].mxu0
        %v1208 = vadd.f32 0.0, %v1207
        %v1209 = vpop.f32.mrb[0].mxu0
        %1210 = vdwg.mxu0
        %v1211 = vmax.f32 %v1197, 0.0
        %v1212 = vmax.f32 %v1200, 0.0
        %v1213 = vmax.f32 %v1205, 0.0
        %v1214 = vmax.f32 %v1208, 0.0
        %v1215 = vpack.c.bf16 %v1212, %v1211
        %v1216 = vpack.c.bf16 %v1214, %v1213
        %s1217 = scalar_lea.vmem %s543, 64 [#allocation8]
        %v1218 = vld [vmem:[%s1217] sm:$0xf]
        %v1219 = vld [vmem:[%s1217 + $0x4] sm:$0xf]
        %v1220 = vld [vmem:[%s1217 + $0x8] sm:$0xf]
        %v1221 = vld [vmem:[%s1217 + $0xc] sm:$0xf]
        %v1222 = vld [vmem:[%s1217 + $0x10] sm:$0xf]
        %v1223 = vld [vmem:[%s1217 + $0x14] sm:$0xf]
        %v1224 = vld [vmem:[%s1217 + $0x18] sm:$0xf]
        %v1225 = vld [vmem:[%s1217 + $0x1c] sm:$0xf]
        %v1226 = vld [vmem:[%s1217 + $0x20] sm:$0xf]
        %v1227 = vld [vmem:[%s1217 + $0x24] sm:$0xf]
        %v1228 = vld [vmem:[%s1217 + $0x28] sm:$0xf]
        %v1229 = vld [vmem:[%s1217 + $0x2c] sm:$0xf]
        %v1230 = vld [vmem:[%s1217 + $0x30] sm:$0xf]
        %v1231 = vld [vmem:[%s1217 + $0x34] sm:$0xf]
        %v1232 = vld [vmem:[%s1217 + $0x38] sm:$0xf]
        %v1233 = vld [vmem:[%s1217 + $0x3c] sm:$0xf]
        %v1250 = vunpack.c.l.b16 %v1218
        %v1251 = vunpack.c.l.b16 %v1219
        %v1252 = vunpack.c.l.b16 %v1220
        %v1253 = vunpack.c.l.b16 %v1221
        %v1254 = vunpack.c.l.b16 %v1222
        %v1255 = vunpack.c.l.b16 %v1223
        %v1256 = vunpack.c.l.b16 %v1224
        %v1257 = vunpack.c.l.b16 %v1225
        %v1258 = vunpack.c.l.b16 %v1226
        %v1259 = vunpack.c.l.b16 %v1227
        %v1260 = vunpack.c.l.b16 %v1228
        %v1261 = vunpack.c.l.b16 %v1229
        %v1262 = vunpack.c.l.b16 %v1230
        %v1263 = vunpack.c.l.b16 %v1231
        %v1264 = vunpack.c.l.b16 %v1232
        %v1265 = vunpack.c.l.b16 %v1233
        %v1266 = vpack.c.b16 %v1251, %v1250
        %v1267 = vpack.c.b16 %v1253, %v1252
        %v1268 = vpack.c.b16 %v1255, %v1254
        %v1269 = vpack.c.b16 %v1257, %v1256
        %v1270 = vpack.c.b16 %v1259, %v1258
        %v1271 = vpack.c.b16 %v1261, %v1260
        %v1272 = vpack.c.b16 %v1263, %v1262
        %v1273 = vpack.c.b16 %v1265, %v1264
        %1282 = vmatprep.subr.bf16.mxu0 0
        %1283 = vmatpush1.bf16.msra.mxu0 %v1266
        %1284 = vmatprep.subr.bf16.mxu0 0
        %1285 = vmatpush1.bf16.msra.mxu0 %v1267
        %1286 = vmatprep.subr.bf16.mxu0 0
        %1287 = vmatpush1.bf16.msra.mxu0 %v1268
        %1288 = vmatprep.subr.bf16.mxu0 0
        %1289 = vmatpush1.bf16.msra.mxu0 %v1269
        %1290 = vmatprep.subr.bf16.mxu0 0
        %1291 = vmatpush1.bf16.msra.mxu0 %v1270
        %1292 = vmatprep.subr.bf16.mxu0 0
        %1293 = vmatpush1.bf16.msra.mxu0 %v1271
        %1294 = vmatprep.subr.bf16.mxu0 0
        %1295 = vmatpush1.bf16.msra.mxu0 %v1272
        %1296 = vmatprep.subr.bf16.mxu0 0
        %1297 = vmatpush1.bf16.msra.mxu0 %v1273
        %1298 = vmatprep.subr.bf16.mxu0 0
        %1299 = vmatpush1.bf16.msra.mxu0 0
        %1300 = vmatprep.subr.bf16.mxu0 0
        %1301 = vmatpush1.bf16.msra.mxu0 0
        %1302 = vmatprep.subr.bf16.mxu0 0
        %1303 = vmatpush1.bf16.msra.mxu0 0
        %1304 = vmatprep.subr.bf16.mxu0 0
        %1305 = vmatpush1.bf16.msra.mxu0 0
        %1306 = vmatprep.subr.bf16.mxu0 0
        %1307 = vmatpush1.bf16.msra.mxu0 0
        %1308 = vmatprep.subr.bf16.mxu0 0
        %1309 = vmatpush1.bf16.msra.mxu0 0
        %1310 = vmatprep.subr.bf16.mxu0 0
        %1311 = vmatpush1.bf16.msra.mxu0 0
        %1312 = vmatprep.subr.bf16.mxu0 0
        %1313 = vmatpush1.bf16.msra.mxu0 0
        %1314 = vmatprep.mubr.bf16.mxu0 0
        %1315 = vmatmul.mubr.bf16.gmra.mrb[0].mxu0 %v977
        %v1316 = vpop.f32.mrb[0].mxu0
        %v1317 = vadd.f32 0.0, %v1316
        %v1318 = vpop.f32.mrb[0].mxu0
        %v1319 = vpop.f32.mrb[0].mxu0
        %v1320 = vadd.f32 0.0, %v1319
        %v1321 = vpop.f32.mrb[0].mxu0
        %1322 = vmatprep.mubr.bf16.mxu0 0
        %1323 = vmatmul.mubr.bf16.gmra.mrb[0].mxu0 %v978
        %v1324 = vpop.f32.mrb[0].mxu0
        %v1325 = vadd.f32 0.0, %v1324
        %v1326 = vpop.f32.mrb[0].mxu0
        %v1327 = vpop.f32.mrb[0].mxu0
        %v1328 = vadd.f32 0.0, %v1327
        %v1329 = vpop.f32.mrb[0].mxu0
        %1330 = vdwg.mxu0
        %v1331 = vmax.f32 %v1317, 0.0
        %v1332 = vmax.f32 %v1320, 0.0
        %v1333 = vmax.f32 %v1325, 0.0
        %v1334 = vmax.f32 %v1328, 0.0
        %v1335 = vpack.c.bf16 %v1332, %v1331
        %v1336 = vpack.c.bf16 %v1334, %v1333
        %s1337 = scalar_lea.vmem %s556, 64 [#allocation11]
        %v1338 = vld [vmem:[%s1337] sm:$0xf]
        %v1339 = vld [vmem:[%s1337 + $0x4] sm:$0xf]
        %v1340 = vld [vmem:[%s1337 + $0x8] sm:$0xf]
        %v1341 = vld [vmem:[%s1337 + $0xc] sm:$0xf]
        %v1342 = vld [vmem:[%s1337 + $0x10] sm:$0xf]
        %v1343 = vld [vmem:[%s1337 + $0x14] sm:$0xf]
        %v1344 = vld [vmem:[%s1337 + $0x18] sm:$0xf]
        %v1345 = vld [vmem:[%s1337 + $0x1c] sm:$0xf]
        %v1346 = vld [vmem:[%s1337 + $0x20] sm:$0xf]
        %v1347 = vld [vmem:[%s1337 + $0x24] sm:$0xf]
        %v1348 = vld [vmem:[%s1337 + $0x28] sm:$0xf]
        %v1349 = vld [vmem:[%s1337 + $0x2c] sm:$0xf]
        %v1350 = vld [vmem:[%s1337 + $0x30] sm:$0xf]
        %v1351 = vld [vmem:[%s1337 + $0x34] sm:$0xf]
        %v1352 = vld [vmem:[%s1337 + $0x38] sm:$0xf]
        %v1353 = vld [vmem:[%s1337 + $0x3c] sm:$0xf]
        %v1370 = vunpack.c.l.b16 %v1338
        %v1371 = vunpack.c.l.b16 %v1339
        %v1372 = vunpack.c.l.b16 %v1340
        %v1373 = vunpack.c.l.b16 %v1341
        %v1374 = vunpack.c.l.b16 %v1342
        %v1375 = vunpack.c.l.b16 %v1343
        %v1376 = vunpack.c.l.b16 %v1344
        %v1377 = vunpack.c.l.b16 %v1345
        %v1378 = vunpack.c.l.b16 %v1346
        %v1379 = vunpack.c.l.b16 %v1347
        %v1380 = vunpack.c.l.b16 %v1348
        %v1381 = vunpack.c.l.b16 %v1349
        %v1382 = vunpack.c.l.b16 %v1350
        %v1383 = vunpack.c.l.b16 %v1351
        %v1384 = vunpack.c.l.b16 %v1352
        %v1385 = vunpack.c.l.b16 %v1353
        %v1386 = vpack.c.b16 %v1371, %v1370
        %v1387 = vpack.c.b16 %v1373, %v1372
        %v1388 = vpack.c.b16 %v1375, %v1374
        %v1389 = vpack.c.b16 %v1377, %v1376
        %v1390 = vpack.c.b16 %v1379, %v1378
        %v1391 = vpack.c.b16 %v1381, %v1380
        %v1392 = vpack.c.b16 %v1383, %v1382
        %v1393 = vpack.c.b16 %v1385, %v1384
        %1402 = vmatprep.subr.bf16.mxu0 0
        %1403 = vmatpush1.bf16.msra.mxu0 %v1386
        %1404 = vmatprep.subr.bf16.mxu0 0
        %1405 = vmatpush1.bf16.msra.mxu0 %v1387
        %1406 = vmatprep.subr.bf16.mxu0 0
        %1407 = vmatpush1.bf16.msra.mxu0 %v1388
        %1408 = vmatprep.subr.bf16.mxu0 0
        %1409 = vmatpush1.bf16.msra.mxu0 %v1389
        %1410 = vmatprep.subr.bf16.mxu0 0
        %1411 = vmatpush1.bf16.msra.mxu0 %v1390
        %1412 = vmatprep.subr.bf16.mxu0 0
        %1413 = vmatpush1.bf16.msra.mxu0 %v1391
        %1414 = vmatprep.subr.bf16.mxu0 0
        %1415 = vmatpush1.bf16.msra.mxu0 %v1392
        %1416 = vmatprep.subr.bf16.mxu0 0
        %1417 = vmatpush1.bf16.msra.mxu0 %v1393
        %1418 = vmatprep.subr.bf16.mxu0 0
        %1419 = vmatpush1.bf16.msra.mxu0 0
        %1420 = vmatprep.subr.bf16.mxu0 0
        %1421 = vmatpush1.bf16.msra.mxu0 0
        %1422 = vmatprep.subr.bf16.mxu0 0
        %1423 = vmatpush1.bf16.msra.mxu0 0
        %1424 = vmatprep.subr.bf16.mxu0 0
        %1425 = vmatpush1.bf16.msra.mxu0 0
        %1426 = vmatprep.subr.bf16.mxu0 0
        %1427 = vmatpush1.bf16.msra.mxu0 0
        %1428 = vmatprep.subr.bf16.mxu0 0
        %1429 = vmatpush1.bf16.msra.mxu0 0
        %1430 = vmatprep.subr.bf16.mxu0 0
        %1431 = vmatpush1.bf16.msra.mxu0 0
        %1432 = vmatprep.subr.bf16.mxu0 0
        %1433 = vmatpush1.bf16.msra.mxu0 0
        %1434 = vmatprep.mubr.bf16.mxu0 0
        %1435 = vmatmul.mubr.bf16.gmra.mrb[0].mxu0 %v1096
        %v1436 = vpop.f32.mrb[0].mxu0
        %v1437 = vadd.f32 0.0, %v1436
        %v1438 = vpop.f32.mrb[0].mxu0
        %v1439 = vpop.f32.mrb[0].mxu0
        %v1440 = vadd.f32 0.0, %v1439
        %v1441 = vpop.f32.mrb[0].mxu0
        %1442 = vmatprep.mubr.bf16.mxu0 0
        %1443 = vmatmul.mubr.bf16.gmra.mrb[0].mxu0 %v1097
        %v1444 = vpop.f32.mrb[0].mxu0
        %v1445 = vadd.f32 0.0, %v1444
        %v1446 = vpop.f32.mrb[0].mxu0
        %v1447 = vpop.f32.mrb[0].mxu0
        %v1448 = vadd.f32 0.0, %v1447
        %v1449 = vpop.f32.mrb[0].mxu0
        %1450 = vdwg.mxu0
        %v1451 = vmax.f32 %v1437, 0.0
        %v1452 = vmax.f32 %v1440, 0.0
        %v1453 = vmax.f32 %v1445, 0.0
        %v1454 = vmax.f32 %v1448, 0.0
        %v1455 = vpack.c.bf16 %v1452, %v1451
        %v1456 = vpack.c.bf16 %v1454, %v1453
        %s1457 = scalar_lea.vmem %s569, 64 [#allocation14]
        %v1458 = vld [vmem:[%s1457] sm:$0xf]
        %v1459 = vld [vmem:[%s1457 + $0x4] sm:$0xf]
        %v1460 = vld [vmem:[%s1457 + $0x8] sm:$0xf]
        %v1461 = vld [vmem:[%s1457 + $0xc] sm:$0xf]
        %v1462 = vld [vmem:[%s1457 + $0x10] sm:$0xf]
        %v1463 = vld [vmem:[%s1457 + $0x14] sm:$0xf]
        %v1464 = vld [vmem:[%s1457 + $0x18] sm:$0xf]
        %v1465 = vld [vmem:[%s1457 + $0x1c] sm:$0xf]
        %v1466 = vld [vmem:[%s1457 + $0x20] sm:$0xf]
        %v1467 = vld [vmem:[%s1457 + $0x24] sm:$0xf]
        %v1468 = vld [vmem:[%s1457 + $0x28] sm:$0xf]
        %v1469 = vld [vmem:[%s1457 + $0x2c] sm:$0xf]
        %v1470 = vld [vmem:[%s1457 + $0x30] sm:$0xf]
        %v1471 = vld [vmem:[%s1457 + $0x34] sm:$0xf]
        %v1472 = vld [vmem:[%s1457 + $0x38] sm:$0xf]
        %v1473 = vld [vmem:[%s1457 + $0x3c] sm:$0xf]
        %v1490 = vunpack.c.l.b16 %v1458
        %v1491 = vunpack.c.l.b16 %v1459
        %v1492 = vunpack.c.l.b16 %v1460
        %v1493 = vunpack.c.l.b16 %v1461
        %v1494 = vunpack.c.l.b16 %v1462
        %v1495 = vunpack.c.l.b16 %v1463
        %v1496 = vunpack.c.l.b16 %v1464
        %v1497 = vunpack.c.l.b16 %v1465
        %v1498 = vunpack.c.l.b16 %v1466
        %v1499 = vunpack.c.l.b16 %v1467
        %v1500 = vunpack.c.l.b16 %v1468
        %v1501 = vunpack.c.l.b16 %v1469
        %v1502 = vunpack.c.l.b16 %v1470
        %v1503 = vunpack.c.l.b16 %v1471
        %v1504 = vunpack.c.l.b16 %v1472
        %v1505 = vunpack.c.l.b16 %v1473
        %v1506 = vpack.c.b16 %v1491, %v1490
        %v1507 = vpack.c.b16 %v1493, %v1492
        %v1508 = vpack.c.b16 %v1495, %v1494
        %v1509 = vpack.c.b16 %v1497, %v1496
        %v1510 = vpack.c.b16 %v1499, %v1498
        %v1511 = vpack.c.b16 %v1501, %v1500
        %v1512 = vpack.c.b16 %v1503, %v1502
        %v1513 = vpack.c.b16 %v1505, %v1504
        %1522 = vmatprep.subr.bf16.mxu0 0
        %1523 = vmatpush1.bf16.msra.mxu0 %v1506
        %1524 = vmatprep.subr.bf16.mxu0 0
        %1525 = vmatpush1.bf16.msra.mxu0 %v1507
        %1526 = vmatprep.subr.bf16.mxu0 0
        %1527 = vmatpush1.bf16.msra.mxu0 %v1508
        %1528 = vmatprep.subr.bf16.mxu0 0
        %1529 = vmatpush1.bf16.msra.mxu0 %v1509
        %1530 = vmatprep.subr.bf16.mxu0 0
        %1531 = vmatpush1.bf16.msra.mxu0 %v1510
        %1532 = vmatprep.subr.bf16.mxu0 0
        %1533 = vmatpush1.bf16.msra.mxu0 %v1511
        %1534 = vmatprep.subr.bf16.mxu0 0
        %1535 = vmatpush1.bf16.msra.mxu0 %v1512
        %1536 = vmatprep.subr.bf16.mxu0 0
        %1537 = vmatpush1.bf16.msra.mxu0 %v1513
        %1538 = vmatprep.subr.bf16.mxu0 0
        %1539 = vmatpush1.bf16.msra.mxu0 0
        %1540 = vmatprep.subr.bf16.mxu0 0
        %1541 = vmatpush1.bf16.msra.mxu0 0
        %1542 = vmatprep.subr.bf16.mxu0 0
        %1543 = vmatpush1.bf16.msra.mxu0 0
        %1544 = vmatprep.subr.bf16.mxu0 0
        %1545 = vmatpush1.bf16.msra.mxu0 0
        %1546 = vmatprep.subr.bf16.mxu0 0
        %1547 = vmatpush1.bf16.msra.mxu0 0
        %1548 = vmatprep.subr.bf16.mxu0 0
        %1549 = vmatpush1.bf16.msra.mxu0 0
        %1550 = vmatprep.subr.bf16.mxu0 0
        %1551 = vmatpush1.bf16.msra.mxu0 0
        %1552 = vmatprep.subr.bf16.mxu0 0
        %1553 = vmatpush1.bf16.msra.mxu0 0
        %1554 = vmatprep.mubr.bf16.mxu0 0
        %1555 = vmatmul.mubr.bf16.gmra.mrb[0].mxu0 %v1215
        %v1556 = vpop.f32.mrb[0].mxu0
        %v1557 = vadd.f32 0.0, %v1556
        %v1558 = vpop.f32.mrb[0].mxu0
        %v1559 = vpop.f32.mrb[0].mxu0
        %v1560 = vadd.f32 0.0, %v1559
        %v1561 = vpop.f32.mrb[0].mxu0
        %1562 = vmatprep.mubr.bf16.mxu0 0
        %1563 = vmatmul.mubr.bf16.gmra.mrb[0].mxu0 %v1216
        %v1564 = vpop.f32.mrb[0].mxu0
        %v1565 = vadd.f32 0.0, %v1564
        %v1566 = vpop.f32.mrb[0].mxu0
        %v1567 = vpop.f32.mrb[0].mxu0
        %v1568 = vadd.f32 0.0, %v1567
        %v1569 = vpop.f32.mrb[0].mxu0
        %1570 = vdwg.mxu0
        %v1571 = vmax.f32 %v1557, 0.0
        %v1572 = vmax.f32 %v1560, 0.0
        %v1573 = vmax.f32 %v1565, 0.0
        %v1574 = vmax.f32 %v1568, 0.0
        %v1575 = vpack.c.bf16 %v1572, %v1571
        %v1576 = vpack.c.bf16 %v1574, %v1573
        %s1577 = scalar_lea.vmem %s543, 128 [#allocation8]
        %v1578 = vld [vmem:[%s1577] sm:$0xf]
        %v1579 = vld [vmem:[%s1577 + $0x4] sm:$0xf]
        %v1580 = vld [vmem:[%s1577 + $0x8] sm:$0xf]
        %v1581 = vld [vmem:[%s1577 + $0xc] sm:$0xf]
        %v1582 = vld [vmem:[%s1577 + $0x10] sm:$0xf]
        %v1583 = vld [vmem:[%s1577 + $0x14] sm:$0xf]
        %v1584 = vld [vmem:[%s1577 + $0x18] sm:$0xf]
        %v1585 = vld [vmem:[%s1577 + $0x1c] sm:$0xf]
        %v1586 = vld [vmem:[%s1577 + $0x20] sm:$0xf]
        %v1587 = vld [vmem:[%s1577 + $0x24] sm:$0xf]
        %v1588 = vld [vmem:[%s1577 + $0x28] sm:$0xf]
        %v1589 = vld [vmem:[%s1577 + $0x2c] sm:$0xf]
        %v1590 = vld [vmem:[%s1577 + $0x30] sm:$0xf]
        %v1591 = vld [vmem:[%s1577 + $0x34] sm:$0xf]
        %v1592 = vld [vmem:[%s1577 + $0x38] sm:$0xf]
        %v1593 = vld [vmem:[%s1577 + $0x3c] sm:$0xf]
        %v1610 = vunpack.c.l.b16 %v1578
        %v1611 = vunpack.c.l.b16 %v1579
        %v1612 = vunpack.c.l.b16 %v1580
        %v1613 = vunpack.c.l.b16 %v1581
        %v1614 = vunpack.c.l.b16 %v1582
        %v1615 = vunpack.c.l.b16 %v1583
        %v1616 = vunpack.c.l.b16 %v1584
        %v1617 = vunpack.c.l.b16 %v1585
        %v1618 = vunpack.c.l.b16 %v1586
        %v1619 = vunpack.c.l.b16 %v1587
        %v1620 = vunpack.c.l.b16 %v1588
        %v1621 = vunpack.c.l.b16 %v1589
        %v1622 = vunpack.c.l.b16 %v1590
        %v1623 = vunpack.c.l.b16 %v1591
        %v1624 = vunpack.c.l.b16 %v1592
        %v1625 = vunpack.c.l.b16 %v1593
        %v1626 = vpack.c.b16 %v1611, %v1610
        %v1627 = vpack.c.b16 %v1613, %v1612
        %v1628 = vpack.c.b16 %v1615, %v1614
        %v1629 = vpack.c.b16 %v1617, %v1616
        %v1630 = vpack.c.b16 %v1619, %v1618
        %v1631 = vpack.c.b16 %v1621, %v1620
        %v1632 = vpack.c.b16 %v1623, %v1622
        %v1633 = vpack.c.b16 %v1625, %v1624
        %1642 = vmatprep.subr.bf16.mxu0 0
        %1643 = vmatpush1.bf16.msra.mxu0 %v1626
        %1644 = vmatprep.subr.bf16.mxu0 0
        %1645 = vmatpush1.bf16.msra.mxu0 %v1627
        %1646 = vmatprep.subr.bf16.mxu0 0
        %1647 = vmatpush1.bf16.msra.mxu0 %v1628
        %1648 = vmatprep.subr.bf16.mxu0 0
        %1649 = vmatpush1.bf16.msra.mxu0 %v1629
        %1650 = vmatprep.subr.bf16.mxu0 0
        %1651 = vmatpush1.bf16.msra.mxu0 %v1630
        %1652 = vmatprep.subr.bf16.mxu0 0
        %1653 = vmatpush1.bf16.msra.mxu0 %v1631
        %1654 = vmatprep.subr.bf16.mxu0 0
        %1655 = vmatpush1.bf16.msra.mxu0 %v1632
        %1656 = vmatprep.subr.bf16.mxu0 0
        %1657 = vmatpush1.bf16.msra.mxu0 %v1633
        %1658 = vmatprep.subr.bf16.mxu0 0
        %1659 = vmatpush1.bf16.msra.mxu0 0
        %1660 = vmatprep.subr.bf16.mxu0 0
        %1661 = vmatpush1.bf16.msra.mxu0 0
        %1662 = vmatprep.subr.bf16.mxu0 0
        %1663 = vmatpush1.bf16.msra.mxu0 0
        %1664 = vmatprep.subr.bf16.mxu0 0
        %1665 = vmatpush1.bf16.msra.mxu0 0
        %1666 = vmatprep.subr.bf16.mxu0 0
        %1667 = vmatpush1.bf16.msra.mxu0 0
        %1668 = vmatprep.subr.bf16.mxu0 0
        %1669 = vmatpush1.bf16.msra.mxu0 0
        %1670 = vmatprep.subr.bf16.mxu0 0
        %1671 = vmatpush1.bf16.msra.mxu0 0
        %1672 = vmatprep.subr.bf16.mxu0 0
        %1673 = vmatpush1.bf16.msra.mxu0 0
        %1674 = vmatprep.mubr.bf16.mxu0 0
        %1675 = vmatmul.mubr.bf16.gmra.mrb[0].mxu0 %v1335
        %v1676 = vpop.f32.mrb[0].mxu0
        %v1677 = vadd.f32 0.0, %v1676
        %v1678 = vpop.f32.mrb[0].mxu0
        %v1679 = vpop.f32.mrb[0].mxu0
        %v1680 = vadd.f32 0.0, %v1679
        %v1681 = vpop.f32.mrb[0].mxu0
        %1682 = vmatprep.mubr.bf16.mxu0 0
        %1683 = vmatmul.mubr.bf16.gmra.mrb[0].mxu0 %v1336
        %v1684 = vpop.f32.mrb[0].mxu0
        %v1685 = vadd.f32 0.0, %v1684
        %v1686 = vpop.f32.mrb[0].mxu0
        %v1687 = vpop.f32.mrb[0].mxu0
        %v1688 = vadd.f32 0.0, %v1687
        %v1689 = vpop.f32.mrb[0].mxu0
        %1690 = vdwg.mxu0
        %v1691 = vmax.f32 %v1677, 0.0
        %v1692 = vmax.f32 %v1680, 0.0
        %v1693 = vmax.f32 %v1685, 0.0
        %v1694 = vmax.f32 %v1688, 0.0
        %v1695 = vpack.c.bf16 %v1692, %v1691
        %v1696 = vpack.c.bf16 %v1694, %v1693
        %s1697 = scalar_lea.vmem %s556, 128 [#allocation11]
        %v1698 = vld [vmem:[%s1697] sm:$0xf]
        %v1699 = vld [vmem:[%s1697 + $0x4] sm:$0xf]
        %v1700 = vld [vmem:[%s1697 + $0x8] sm:$0xf]
        %v1701 = vld [vmem:[%s1697 + $0xc] sm:$0xf]
        %v1702 = vld [vmem:[%s1697 + $0x10] sm:$0xf]
        %v1703 = vld [vmem:[%s1697 + $0x14] sm:$0xf]
        %v1704 = vld [vmem:[%s1697 + $0x18] sm:$0xf]
        %v1705 = vld [vmem:[%s1697 + $0x1c] sm:$0xf]
        %v1706 = vld [vmem:[%s1697 + $0x20] sm:$0xf]
        %v1707 = vld [vmem:[%s1697 + $0x24] sm:$0xf]
        %v1708 = vld [vmem:[%s1697 + $0x28] sm:$0xf]
        %v1709 = vld [vmem:[%s1697 + $0x2c] sm:$0xf]
        %v1710 = vld [vmem:[%s1697 + $0x30] sm:$0xf]
        %v1711 = vld [vmem:[%s1697 + $0x34] sm:$0xf]
        %v1712 = vld [vmem:[%s1697 + $0x38] sm:$0xf]
        %v1713 = vld [vmem:[%s1697 + $0x3c] sm:$0xf]
        %v1730 = vunpack.c.l.b16 %v1698
        %v1731 = vunpack.c.l.b16 %v1699
        %v1732 = vunpack.c.l.b16 %v1700
        %v1733 = vunpack.c.l.b16 %v1701
        %v1734 = vunpack.c.l.b16 %v1702
        %v1735 = vunpack.c.l.b16 %v1703
        %v1736 = vunpack.c.l.b16 %v1704
        %v1737 = vunpack.c.l.b16 %v1705
        %v1738 = vunpack.c.l.b16 %v1706
        %v1739 = vunpack.c.l.b16 %v1707
        %v1740 = vunpack.c.l.b16 %v1708
        %v1741 = vunpack.c.l.b16 %v1709
        %v1742 = vunpack.c.l.b16 %v1710
        %v1743 = vunpack.c.l.b16 %v1711
        %v1744 = vunpack.c.l.b16 %v1712
        %v1745 = vunpack.c.l.b16 %v1713
        %v1746 = vpack.c.b16 %v1731, %v1730
        %v1747 = vpack.c.b16 %v1733, %v1732
        %v1748 = vpack.c.b16 %v1735, %v1734
        %v1749 = vpack.c.b16 %v1737, %v1736
        %v1750 = vpack.c.b16 %v1739, %v1738
        %v1751 = vpack.c.b16 %v1741, %v1740
        %v1752 = vpack.c.b16 %v1743, %v1742
        %v1753 = vpack.c.b16 %v1745, %v1744
        %1762 = vmatprep.subr.bf16.mxu0 0
        %1763 = vmatpush1.bf16.msra.mxu0 %v1746
        %1764 = vmatprep.subr.bf16.mxu0 0
        %1765 = vmatpush1.bf16.msra.mxu0 %v1747
        %1766 = vmatprep.subr.bf16.mxu0 0
        %1767 = vmatpush1.bf16.msra.mxu0 %v1748
        %1768 = vmatprep.subr.bf16.mxu0 0
        %1769 = vmatpush1.bf16.msra.mxu0 %v1749
        %1770 = vmatprep.subr.bf16.mxu0 0
        %1771 = vmatpush1.bf16.msra.mxu0 %v1750
        %1772 = vmatprep.subr.bf16.mxu0 0
        %1773 = vmatpush1.bf16.msra.mxu0 %v1751
        %1774 = vmatprep.subr.bf16.mxu0 0
        %1775 = vmatpush1.bf16.msra.mxu0 %v1752
        %1776 = vmatprep.subr.bf16.mxu0 0
        %1777 = vmatpush1.bf16.msra.mxu0 %v1753
        %1778 = vmatprep.subr.bf16.mxu0 0
        %1779 = vmatpush1.bf16.msra.mxu0 0
        %1780 = vmatprep.subr.bf16.mxu0 0
        %1781 = vmatpush1.bf16.msra.mxu0 0
        %1782 = vmatprep.subr.bf16.mxu0 0
        %1783 = vmatpush1.bf16.msra.mxu0 0
        %1784 = vmatprep.subr.bf16.mxu0 0
        %1785 = vmatpush1.bf16.msra.mxu0 0
        %1786 = vmatprep.subr.bf16.mxu0 0
        %1787 = vmatpush1.bf16.msra.mxu0 0
        %1788 = vmatprep.subr.bf16.mxu0 0
        %1789 = vmatpush1.bf16.msra.mxu0 0
        %1790 = vmatprep.subr.bf16.mxu0 0
        %1791 = vmatpush1.bf16.msra.mxu0 0
        %1792 = vmatprep.subr.bf16.mxu0 0
        %1793 = vmatpush1.bf16.msra.mxu0 0
        %1794 = vmatprep.mubr.bf16.mxu0 0
        %1795 = vmatmul.mubr.bf16.gmra.mrb[0].mxu0 %v1455
        %v1796 = vpop.f32.mrb[0].mxu0
        %v1797 = vadd.f32 0.0, %v1796
        %v1798 = vpop.f32.mrb[0].mxu0
        %v1799 = vpop.f32.mrb[0].mxu0
        %v1800 = vadd.f32 0.0, %v1799
        %v1801 = vpop.f32.mrb[0].mxu0
        %1802 = vmatprep.mubr.bf16.mxu0 0
        %1803 = vmatmul.mubr.bf16.gmra.mrb[0].mxu0 %v1456
        %v1804 = vpop.f32.mrb[0].mxu0
        %v1805 = vadd.f32 0.0, %v1804
        %v1806 = vpop.f32.mrb[0].mxu0
        %v1807 = vpop.f32.mrb[0].mxu0
        %v1808 = vadd.f32 0.0, %v1807
        %v1809 = vpop.f32.mrb[0].mxu0
        %1810 = vdwg.mxu0
        %v1811 = vmax.f32 %v1797, 0.0
        %v1812 = vmax.f32 %v1800, 0.0
        %v1813 = vmax.f32 %v1805, 0.0
        %v1814 = vmax.f32 %v1808, 0.0
        %v1815 = vpack.c.bf16 %v1812, %v1811
        %v1816 = vpack.c.bf16 %v1814, %v1813
        %s1817 = scalar_lea.vmem %s569, 128 [#allocation14]
        %v1818 = vld [vmem:[%s1817] sm:$0xf]
        %v1819 = vld [vmem:[%s1817 + $0x4] sm:$0xf]
        %v1820 = vld [vmem:[%s1817 + $0x8] sm:$0xf]
        %v1821 = vld [vmem:[%s1817 + $0xc] sm:$0xf]
        %v1822 = vld [vmem:[%s1817 + $0x10] sm:$0xf]
        %v1823 = vld [vmem:[%s1817 + $0x14] sm:$0xf]
        %v1824 = vld [vmem:[%s1817 + $0x18] sm:$0xf]
        %v1825 = vld [vmem:[%s1817 + $0x1c] sm:$0xf]
        %v1826 = vld [vmem:[%s1817 + $0x20] sm:$0xf]
        %v1827 = vld [vmem:[%s1817 + $0x24] sm:$0xf]
        %v1828 = vld [vmem:[%s1817 + $0x28] sm:$0xf]
        %v1829 = vld [vmem:[%s1817 + $0x2c] sm:$0xf]
        %v1830 = vld [vmem:[%s1817 + $0x30] sm:$0xf]
        %v1831 = vld [vmem:[%s1817 + $0x34] sm:$0xf]
        %v1832 = vld [vmem:[%s1817 + $0x38] sm:$0xf]
        %v1833 = vld [vmem:[%s1817 + $0x3c] sm:$0xf]
        %v1850 = vunpack.c.l.b16 %v1818
        %v1851 = vunpack.c.l.b16 %v1819
        %v1852 = vunpack.c.l.b16 %v1820
        %v1853 = vunpack.c.l.b16 %v1821
        %v1854 = vunpack.c.l.b16 %v1822
        %v1855 = vunpack.c.l.b16 %v1823
        %v1856 = vunpack.c.l.b16 %v1824
        %v1857 = vunpack.c.l.b16 %v1825
        %v1858 = vunpack.c.l.b16 %v1826
        %v1859 = vunpack.c.l.b16 %v1827
        %v1860 = vunpack.c.l.b16 %v1828
        %v1861 = vunpack.c.l.b16 %v1829
        %v1862 = vunpack.c.l.b16 %v1830
        %v1863 = vunpack.c.l.b16 %v1831
        %v1864 = vunpack.c.l.b16 %v1832
        %v1865 = vunpack.c.l.b16 %v1833
        %v1866 = vpack.c.b16 %v1851, %v1850
        %v1867 = vpack.c.b16 %v1853, %v1852
        %v1868 = vpack.c.b16 %v1855, %v1854
        %v1869 = vpack.c.b16 %v1857, %v1856
        %v1870 = vpack.c.b16 %v1859, %v1858
        %v1871 = vpack.c.b16 %v1861, %v1860
        %v1872 = vpack.c.b16 %v1863, %v1862
        %v1873 = vpack.c.b16 %v1865, %v1864
        %1882 = vmatprep.subr.bf16.mxu0 0
        %1883 = vmatpush1.bf16.msra.mxu0 %v1866
        %1884 = vmatprep.subr.bf16.mxu0 0
        %1885 = vmatpush1.bf16.msra.mxu0 %v1867
        %1886 = vmatprep.subr.bf16.mxu0 0
        %1887 = vmatpush1.bf16.msra.mxu0 %v1868
        %1888 = vmatprep.subr.bf16.mxu0 0
        %1889 = vmatpush1.bf16.msra.mxu0 %v1869
        %1890 = vmatprep.subr.bf16.mxu0 0
        %1891 = vmatpush1.bf16.msra.mxu0 %v1870
        %1892 = vmatprep.subr.bf16.mxu0 0
        %1893 = vmatpush1.bf16.msra.mxu0 %v1871
        %1894 = vmatprep.subr.bf16.mxu0 0
        %1895 = vmatpush1.bf16.msra.mxu0 %v1872
        %1896 = vmatprep.subr.bf16.mxu0 0
        %1897 = vmatpush1.bf16.msra.mxu0 %v1873
        %1898 = vmatprep.subr.bf16.mxu0 0
        %1899 = vmatpush1.bf16.msra.mxu0 0
        %1900 = vmatprep.subr.bf16.mxu0 0
        %1901 = vmatpush1.bf16.msra.mxu0 0
        %1902 = vmatprep.subr.bf16.mxu0 0
        %1903 = vmatpush1.bf16.msra.mxu0 0
        %1904 = vmatprep.subr.bf16.mxu0 0
        %1905 = vmatpush1.bf16.msra.mxu0 0
        %1906 = vmatprep.subr.bf16.mxu0 0
        %1907 = vmatpush1.bf16.msra.mxu0 0
        %1908 = vmatprep.subr.bf16.mxu0 0
        %1909 = vmatpush1.bf16.msra.mxu0 0
        %1910 = vmatprep.subr.bf16.mxu0 0
        %1911 = vmatpush1.bf16.msra.mxu0 0
        %1912 = vmatprep.subr.bf16.mxu0 0
        %1913 = vmatpush1.bf16.msra.mxu0 0
        %1914 = vmatprep.mubr.bf16.mxu0 0
        %1915 = vmatmul.mubr.bf16.gmra.mrb[0].mxu0 %v1575
        %v1916 = vpop.f32.mrb[0].mxu0
        %v1917 = vadd.f32 0.0, %v1916
        %v1918 = vpop.f32.mrb[0].mxu0
        %v1919 = vpop.f32.mrb[0].mxu0
        %v1920 = vadd.f32 0.0, %v1919
        %v1921 = vpop.f32.mrb[0].mxu0
        %1922 = vmatprep.mubr.bf16.mxu0 0
        %1923 = vmatmul.mubr.bf16.gmra.mrb[0].mxu0 %v1576
        %v1924 = vpop.f32.mrb[0].mxu0
        %v1925 = vadd.f32 0.0, %v1924
        %v1926 = vpop.f32.mrb[0].mxu0
        %v1927 = vpop.f32.mrb[0].mxu0
        %v1928 = vadd.f32 0.0, %v1927
        %v1929 = vpop.f32.mrb[0].mxu0
        %1930 = vdwg.mxu0
        %v1931 = vmax.f32 %v1917, 0.0
        %v1932 = vmax.f32 %v1920, 0.0
        %v1933 = vmax.f32 %v1925, 0.0
        %v1934 = vmax.f32 %v1928, 0.0
        %v1935 = vpack.c.bf16 %v1932, %v1931
        %v1936 = vpack.c.bf16 %v1934, %v1933
        %s1937 = scalar_lea.vmem %s543, 192 [#allocation8]
        %v1938 = vld [vmem:[%s1937] sm:$0xf]
        %v1939 = vld [vmem:[%s1937 + $0x4] sm:$0xf]
        %v1940 = vld [vmem:[%s1937 + $0x8] sm:$0xf]
        %v1941 = vld [vmem:[%s1937 + $0xc] sm:$0xf]
        %v1942 = vld [vmem:[%s1937 + $0x10] sm:$0xf]
        %v1943 = vld [vmem:[%s1937 + $0x14] sm:$0xf]
        %v1944 = vld [vmem:[%s1937 + $0x18] sm:$0xf]
        %v1945 = vld [vmem:[%s1937 + $0x1c] sm:$0xf]
        %v1946 = vld [vmem:[%s1937 + $0x20] sm:$0xf]
        %v1947 = vld [vmem:[%s1937 + $0x24] sm:$0xf]
        %v1948 = vld [vmem:[%s1937 + $0x28] sm:$0xf]
        %v1949 = vld [vmem:[%s1937 + $0x2c] sm:$0xf]
        %v1950 = vld [vmem:[%s1937 + $0x30] sm:$0xf]
        %v1951 = vld [vmem:[%s1937 + $0x34] sm:$0xf]
        %v1952 = vld [vmem:[%s1937 + $0x38] sm:$0xf]
        %v1953 = vld [vmem:[%s1937 + $0x3c] sm:$0xf]
        %v1970 = vunpack.c.l.b16 %v1938
        %v1971 = vunpack.c.l.b16 %v1939
        %v1972 = vunpack.c.l.b16 %v1940
        %v1973 = vunpack.c.l.b16 %v1941
        %v1974 = vunpack.c.l.b16 %v1942
        %v1975 = vunpack.c.l.b16 %v1943
        %v1976 = vunpack.c.l.b16 %v1944
        %v1977 = vunpack.c.l.b16 %v1945
        %v1978 = vunpack.c.l.b16 %v1946
        %v1979 = vunpack.c.l.b16 %v1947
        %v1980 = vunpack.c.l.b16 %v1948
        %v1981 = vunpack.c.l.b16 %v1949
        %v1982 = vunpack.c.l.b16 %v1950
        %v1983 = vunpack.c.l.b16 %v1951
        %v1984 = vunpack.c.l.b16 %v1952
        %v1985 = vunpack.c.l.b16 %v1953
        %v1986 = vpack.c.b16 %v1971, %v1970
        %v1987 = vpack.c.b16 %v1973, %v1972
        %v1988 = vpack.c.b16 %v1975, %v1974
        %v1989 = vpack.c.b16 %v1977, %v1976
        %v1990 = vpack.c.b16 %v1979, %v1978
        %v1991 = vpack.c.b16 %v1981, %v1980
        %v1992 = vpack.c.b16 %v1983, %v1982
        %v1993 = vpack.c.b16 %v1985, %v1984
        %2002 = vmatprep.subr.bf16.mxu0 0
        %2003 = vmatpush1.bf16.msra.mxu0 %v1986
        %2004 = vmatprep.subr.bf16.mxu0 0
        %2005 = vmatpush1.bf16.msra.mxu0 %v1987
        %2006 = vmatprep.subr.bf16.mxu0 0
        %2007 = vmatpush1.bf16.msra.mxu0 %v1988
        %2008 = vmatprep.subr.bf16.mxu0 0
        %2009 = vmatpush1.bf16.msra.mxu0 %v1989
        %2010 = vmatprep.subr.bf16.mxu0 0
        %2011 = vmatpush1.bf16.msra.mxu0 %v1990
        %2012 = vmatprep.subr.bf16.mxu0 0
        %2013 = vmatpush1.bf16.msra.mxu0 %v1991
        %2014 = vmatprep.subr.bf16.mxu0 0
        %2015 = vmatpush1.bf16.msra.mxu0 %v1992
        %2016 = vmatprep.subr.bf16.mxu0 0
        %2017 = vmatpush1.bf16.msra.mxu0 %v1993
        %2018 = vmatprep.subr.bf16.mxu0 0
        %2019 = vmatpush1.bf16.msra.mxu0 0
        %2020 = vmatprep.subr.bf16.mxu0 0
        %2021 = vmatpush1.bf16.msra.mxu0 0
        %2022 = vmatprep.subr.bf16.mxu0 0
        %2023 = vmatpush1.bf16.msra.mxu0 0
        %2024 = vmatprep.subr.bf16.mxu0 0
        %2025 = vmatpush1.bf16.msra.mxu0 0
        %2026 = vmatprep.subr.bf16.mxu0 0
        %2027 = vmatpush1.bf16.msra.mxu0 0
        %2028 = vmatprep.subr.bf16.mxu0 0
        %2029 = vmatpush1.bf16.msra.mxu0 0
        %2030 = vmatprep.subr.bf16.mxu0 0
        %2031 = vmatpush1.bf16.msra.mxu0 0
        %2032 = vmatprep.subr.bf16.mxu0 0
        %2033 = vmatpush1.bf16.msra.mxu0 0
        %2034 = vmatprep.mubr.bf16.mxu0 0
        %2035 = vmatmul.mubr.bf16.gmra.mrb[0].mxu0 %v1695
        %v2036 = vpop.f32.mrb[0].mxu0
        %v2037 = vadd.f32 0.0, %v2036
        %v2038 = vpop.f32.mrb[0].mxu0
        %v2039 = vpop.f32.mrb[0].mxu0
        %v2040 = vadd.f32 0.0, %v2039
        %v2041 = vpop.f32.mrb[0].mxu0
        %2042 = vmatprep.mubr.bf16.mxu0 0
        %2043 = vmatmul.mubr.bf16.gmra.mrb[0].mxu0 %v1696
        %v2044 = vpop.f32.mrb[0].mxu0
        %v2045 = vadd.f32 0.0, %v2044
        %v2046 = vpop.f32.mrb[0].mxu0
        %v2047 = vpop.f32.mrb[0].mxu0
        %v2048 = vadd.f32 0.0, %v2047
        %v2049 = vpop.f32.mrb[0].mxu0
        %2050 = vdwg.mxu0
        %v2051 = vmax.f32 %v2037, 0.0
        %v2052 = vmax.f32 %v2040, 0.0
        %v2053 = vmax.f32 %v2045, 0.0
        %v2054 = vmax.f32 %v2048, 0.0
        %v2055 = vpack.c.bf16 %v2052, %v2051
        %v2056 = vpack.c.bf16 %v2054, %v2053
        %s2057 = scalar_lea.vmem %s556, 192 [#allocation11]
        %v2058 = vld [vmem:[%s2057] sm:$0xf]
        %v2059 = vld [vmem:[%s2057 + $0x4] sm:$0xf]
        %v2060 = vld [vmem:[%s2057 + $0x8] sm:$0xf]
        %v2061 = vld [vmem:[%s2057 + $0xc] sm:$0xf]
        %v2062 = vld [vmem:[%s2057 + $0x10] sm:$0xf]
        %v2063 = vld [vmem:[%s2057 + $0x14] sm:$0xf]
        %v2064 = vld [vmem:[%s2057 + $0x18] sm:$0xf]
        %v2065 = vld [vmem:[%s2057 + $0x1c] sm:$0xf]
        %v2066 = vld [vmem:[%s2057 + $0x20] sm:$0xf]
        %v2067 = vld [vmem:[%s2057 + $0x24] sm:$0xf]
        %v2068 = vld [vmem:[%s2057 + $0x28] sm:$0xf]
        %v2069 = vld [vmem:[%s2057 + $0x2c] sm:$0xf]
        %v2070 = vld [vmem:[%s2057 + $0x30] sm:$0xf]
        %v2071 = vld [vmem:[%s2057 + $0x34] sm:$0xf]
        %v2072 = vld [vmem:[%s2057 + $0x38] sm:$0xf]
        %v2073 = vld [vmem:[%s2057 + $0x3c] sm:$0xf]
        %v2090 = vunpack.c.l.b16 %v2058
        %v2091 = vunpack.c.l.b16 %v2059
        %v2092 = vunpack.c.l.b16 %v2060
        %v2093 = vunpack.c.l.b16 %v2061
        %v2094 = vunpack.c.l.b16 %v2062
        %v2095 = vunpack.c.l.b16 %v2063
        %v2096 = vunpack.c.l.b16 %v2064
        %v2097 = vunpack.c.l.b16 %v2065
        %v2098 = vunpack.c.l.b16 %v2066
        %v2099 = vunpack.c.l.b16 %v2067
        %v2100 = vunpack.c.l.b16 %v2068
        %v2101 = vunpack.c.l.b16 %v2069
        %v2102 = vunpack.c.l.b16 %v2070
        %v2103 = vunpack.c.l.b16 %v2071
        %v2104 = vunpack.c.l.b16 %v2072
        %v2105 = vunpack.c.l.b16 %v2073
        %v2106 = vpack.c.b16 %v2091, %v2090
        %v2107 = vpack.c.b16 %v2093, %v2092
        %v2108 = vpack.c.b16 %v2095, %v2094
        %v2109 = vpack.c.b16 %v2097, %v2096
        %v2110 = vpack.c.b16 %v2099, %v2098
        %v2111 = vpack.c.b16 %v2101, %v2100
        %v2112 = vpack.c.b16 %v2103, %v2102
        %v2113 = vpack.c.b16 %v2105, %v2104
        %2122 = vmatprep.subr.bf16.mxu0 0
        %2123 = vmatpush1.bf16.msra.mxu0 %v2106
        %2124 = vmatprep.subr.bf16.mxu0 0
        %2125 = vmatpush1.bf16.msra.mxu0 %v2107
        %2126 = vmatprep.subr.bf16.mxu0 0
        %2127 = vmatpush1.bf16.msra.mxu0 %v2108
        %2128 = vmatprep.subr.bf16.mxu0 0
        %2129 = vmatpush1.bf16.msra.mxu0 %v2109
        %2130 = vmatprep.subr.bf16.mxu0 0
        %2131 = vmatpush1.bf16.msra.mxu0 %v2110
        %2132 = vmatprep.subr.bf16.mxu0 0
        %2133 = vmatpush1.bf16.msra.mxu0 %v2111
        %2134 = vmatprep.subr.bf16.mxu0 0
        %2135 = vmatpush1.bf16.msra.mxu0 %v2112
        %2136 = vmatprep.subr.bf16.mxu0 0
        %2137 = vmatpush1.bf16.msra.mxu0 %v2113
        %2138 = vmatprep.subr.bf16.mxu0 0
        %2139 = vmatpush1.bf16.msra.mxu0 0
        %2140 = vmatprep.subr.bf16.mxu0 0
        %2141 = vmatpush1.bf16.msra.mxu0 0
        %2142 = vmatprep.subr.bf16.mxu0 0
        %2143 = vmatpush1.bf16.msra.mxu0 0
        %2144 = vmatprep.subr.bf16.mxu0 0
        %2145 = vmatpush1.bf16.msra.mxu0 0
        %2146 = vmatprep.subr.bf16.mxu0 0
        %2147 = vmatpush1.bf16.msra.mxu0 0
        %2148 = vmatprep.subr.bf16.mxu0 0
        %2149 = vmatpush1.bf16.msra.mxu0 0
        %2150 = vmatprep.subr.bf16.mxu0 0
        %2151 = vmatpush1.bf16.msra.mxu0 0
        %2152 = vmatprep.subr.bf16.mxu0 0
        %2153 = vmatpush1.bf16.msra.mxu0 0
        %2154 = vmatprep.mubr.bf16.mxu0 0
        %2155 = vmatmul.mubr.bf16.gmra.mrb[0].mxu0 %v1815
        %v2156 = vpop.f32.mrb[0].mxu0
        %v2157 = vadd.f32 0.0, %v2156
        %v2158 = vpop.f32.mrb[0].mxu0
        %v2159 = vpop.f32.mrb[0].mxu0
        %v2160 = vadd.f32 0.0, %v2159
        %v2161 = vpop.f32.mrb[0].mxu0
        %2162 = vmatprep.mubr.bf16.mxu0 0
        %2163 = vmatmul.mubr.bf16.gmra.mrb[0].mxu0 %v1816
        %v2164 = vpop.f32.mrb[0].mxu0
        %v2165 = vadd.f32 0.0, %v2164
        %v2166 = vpop.f32.mrb[0].mxu0
        %v2167 = vpop.f32.mrb[0].mxu0
        %v2168 = vadd.f32 0.0, %v2167
        %v2169 = vpop.f32.mrb[0].mxu0
        %2170 = vdwg.mxu0
        %v2171 = vmax.f32 %v2157, 0.0
        %v2172 = vmax.f32 %v2160, 0.0
        %v2173 = vmax.f32 %v2165, 0.0
        %v2174 = vmax.f32 %v2168, 0.0
        %v2175 = vpack.c.bf16 %v2172, %v2171
        %v2176 = vpack.c.bf16 %v2174, %v2173
        %s2177 = scalar_lea.vmem %s569, 192 [#allocation14]
        %v2178 = vld [vmem:[%s2177] sm:$0xf]
        %v2179 = vld [vmem:[%s2177 + $0x4] sm:$0xf]
        %v2180 = vld [vmem:[%s2177 + $0x8] sm:$0xf]
        %v2181 = vld [vmem:[%s2177 + $0xc] sm:$0xf]
        %v2182 = vld [vmem:[%s2177 + $0x10] sm:$0xf]
        %v2183 = vld [vmem:[%s2177 + $0x14] sm:$0xf]
        %v2184 = vld [vmem:[%s2177 + $0x18] sm:$0xf]
        %v2185 = vld [vmem:[%s2177 + $0x1c] sm:$0xf]
        %v2186 = vld [vmem:[%s2177 + $0x20] sm:$0xf]
        %v2187 = vld [vmem:[%s2177 + $0x24] sm:$0xf]
        %v2188 = vld [vmem:[%s2177 + $0x28] sm:$0xf]
        %v2189 = vld [vmem:[%s2177 + $0x2c] sm:$0xf]
        %v2190 = vld [vmem:[%s2177 + $0x30] sm:$0xf]
        %v2191 = vld [vmem:[%s2177 + $0x34] sm:$0xf]
        %v2192 = vld [vmem:[%s2177 + $0x38] sm:$0xf]
        %v2193 = vld [vmem:[%s2177 + $0x3c] sm:$0xf]
        %v2210 = vunpack.c.l.b16 %v2178
        %v2211 = vunpack.c.l.b16 %v2179
        %v2212 = vunpack.c.l.b16 %v2180
        %v2213 = vunpack.c.l.b16 %v2181
        %v2214 = vunpack.c.l.b16 %v2182
        %v2215 = vunpack.c.l.b16 %v2183
        %v2216 = vunpack.c.l.b16 %v2184
        %v2217 = vunpack.c.l.b16 %v2185
        %v2218 = vunpack.c.l.b16 %v2186
        %v2219 = vunpack.c.l.b16 %v2187
        %v2220 = vunpack.c.l.b16 %v2188
        %v2221 = vunpack.c.l.b16 %v2189
        %v2222 = vunpack.c.l.b16 %v2190
        %v2223 = vunpack.c.l.b16 %v2191
        %v2224 = vunpack.c.l.b16 %v2192
        %v2225 = vunpack.c.l.b16 %v2193
        %v2226 = vpack.c.b16 %v2211, %v2210
        %v2227 = vpack.c.b16 %v2213, %v2212
        %v2228 = vpack.c.b16 %v2215, %v2214
        %v2229 = vpack.c.b16 %v2217, %v2216
        %v2230 = vpack.c.b16 %v2219, %v2218
        %v2231 = vpack.c.b16 %v2221, %v2220
        %v2232 = vpack.c.b16 %v2223, %v2222
        %v2233 = vpack.c.b16 %v2225, %v2224
        %2242 = vmatprep.subr.bf16.mxu0 0
        %2243 = vmatpush1.bf16.msra.mxu0 %v2226
        %2244 = vmatprep.subr.bf16.mxu0 0
        %2245 = vmatpush1.bf16.msra.mxu0 %v2227
        %2246 = vmatprep.subr.bf16.mxu0 0
        %2247 = vmatpush1.bf16.msra.mxu0 %v2228
        %2248 = vmatprep.subr.bf16.mxu0 0
        %2249 = vmatpush1.bf16.msra.mxu0 %v2229
        %2250 = vmatprep.subr.bf16.mxu0 0
        %2251 = vmatpush1.bf16.msra.mxu0 %v2230
        %2252 = vmatprep.subr.bf16.mxu0 0
        %2253 = vmatpush1.bf16.msra.mxu0 %v2231
        %2254 = vmatprep.subr.bf16.mxu0 0
        %2255 = vmatpush1.bf16.msra.mxu0 %v2232
        %2256 = vmatprep.subr.bf16.mxu0 0
        %2257 = vmatpush1.bf16.msra.mxu0 %v2233
        %2258 = vmatprep.subr.bf16.mxu0 0
        %2259 = vmatpush1.bf16.msra.mxu0 0
        %2260 = vmatprep.subr.bf16.mxu0 0
        %2261 = vmatpush1.bf16.msra.mxu0 0
        %2262 = vmatprep.subr.bf16.mxu0 0
        %2263 = vmatpush1.bf16.msra.mxu0 0
        %2264 = vmatprep.subr.bf16.mxu0 0
        %2265 = vmatpush1.bf16.msra.mxu0 0
        %2266 = vmatprep.subr.bf16.mxu0 0
        %2267 = vmatpush1.bf16.msra.mxu0 0
        %2268 = vmatprep.subr.bf16.mxu0 0
        %2269 = vmatpush1.bf16.msra.mxu0 0
        %2270 = vmatprep.subr.bf16.mxu0 0
        %2271 = vmatpush1.bf16.msra.mxu0 0
        %2272 = vmatprep.subr.bf16.mxu0 0
        %2273 = vmatpush1.bf16.msra.mxu0 0
        %2274 = vmatprep.mubr.bf16.mxu0 0
        %2275 = vmatmul.mubr.bf16.gmra.mrb[0].mxu0 %v1935
        %v2276 = vpop.f32.mrb[0].mxu0
        %v2277 = vadd.f32 0.0, %v2276
        %v2278 = vpop.f32.mrb[0].mxu0
        %v2279 = vpop.f32.mrb[0].mxu0
        %v2280 = vadd.f32 0.0, %v2279
        %v2281 = vpop.f32.mrb[0].mxu0
        %2282 = vmatprep.mubr.bf16.mxu0 0
        %2283 = vmatmul.mubr.bf16.gmra.mrb[0].mxu0 %v1936
        %v2284 = vpop.f32.mrb[0].mxu0
        %v2285 = vadd.f32 0.0, %v2284
        %v2286 = vpop.f32.mrb[0].mxu0
        %v2287 = vpop.f32.mrb[0].mxu0
        %v2288 = vadd.f32 0.0, %v2287
        %v2289 = vpop.f32.mrb[0].mxu0
        %2290 = vdwg.mxu0
        %v2291 = vmax.f32 %v2277, 0.0
        %v2292 = vmax.f32 %v2280, 0.0
        %v2293 = vmax.f32 %v2285, 0.0
        %v2294 = vmax.f32 %v2288, 0.0
        %v2295 = vpack.c.bf16 %v2292, %v2291
        %v2296 = vpack.c.bf16 %v2294, %v2293
        %s2297 = scalar_lea.vmem %s543, 256 [#allocation8]
        %v2298 = vld [vmem:[%s2297] sm:$0xf]
        %v2299 = vld [vmem:[%s2297 + $0x4] sm:$0xf]
        %v2300 = vld [vmem:[%s2297 + $0x8] sm:$0xf]
        %v2301 = vld [vmem:[%s2297 + $0xc] sm:$0xf]
        %v2302 = vld [vmem:[%s2297 + $0x10] sm:$0xf]
        %v2303 = vld [vmem:[%s2297 + $0x14] sm:$0xf]
        %v2304 = vld [vmem:[%s2297 + $0x18] sm:$0xf]
        %v2305 = vld [vmem:[%s2297 + $0x1c] sm:$0xf]
        %v2306 = vld [vmem:[%s2297 + $0x20] sm:$0xf]
        %v2307 = vld [vmem:[%s2297 + $0x24] sm:$0xf]
        %v2308 = vld [vmem:[%s2297 + $0x28] sm:$0xf]
        %v2309 = vld [vmem:[%s2297 + $0x2c] sm:$0xf]
        %v2310 = vld [vmem:[%s2297 + $0x30] sm:$0xf]
        %v2311 = vld [vmem:[%s2297 + $0x34] sm:$0xf]
        %v2312 = vld [vmem:[%s2297 + $0x38] sm:$0xf]
        %v2313 = vld [vmem:[%s2297 + $0x3c] sm:$0xf]
        %v2330 = vunpack.c.l.b16 %v2298
        %v2331 = vunpack.c.l.b16 %v2299
        %v2332 = vunpack.c.l.b16 %v2300
        %v2333 = vunpack.c.l.b16 %v2301
        %v2334 = vunpack.c.l.b16 %v2302
        %v2335 = vunpack.c.l.b16 %v2303
        %v2336 = vunpack.c.l.b16 %v2304
        %v2337 = vunpack.c.l.b16 %v2305
        %v2338 = vunpack.c.l.b16 %v2306
        %v2339 = vunpack.c.l.b16 %v2307
        %v2340 = vunpack.c.l.b16 %v2308
        %v2341 = vunpack.c.l.b16 %v2309
        %v2342 = vunpack.c.l.b16 %v2310
        %v2343 = vunpack.c.l.b16 %v2311
        %v2344 = vunpack.c.l.b16 %v2312
        %v2345 = vunpack.c.l.b16 %v2313
        %v2346 = vpack.c.b16 %v2331, %v2330
        %v2347 = vpack.c.b16 %v2333, %v2332
        %v2348 = vpack.c.b16 %v2335, %v2334
        %v2349 = vpack.c.b16 %v2337, %v2336
        %v2350 = vpack.c.b16 %v2339, %v2338
        %v2351 = vpack.c.b16 %v2341, %v2340
        %v2352 = vpack.c.b16 %v2343, %v2342
        %v2353 = vpack.c.b16 %v2345, %v2344
        %2362 = vmatprep.subr.bf16.mxu0 0
        %2363 = vmatpush1.bf16.msra.mxu0 %v2346
        %2364 = vmatprep.subr.bf16.mxu0 0
        %2365 = vmatpush1.bf16.msra.mxu0 %v2347
        %2366 = vmatprep.subr.bf16.mxu0 0
        %2367 = vmatpush1.bf16.msra.mxu0 %v2348
        %2368 = vmatprep.subr.bf16.mxu0 0
        %2369 = vmatpush1.bf16.msra.mxu0 %v2349
        %2370 = vmatprep.subr.bf16.mxu0 0
        %2371 = vmatpush1.bf16.msra.mxu0 %v2350
        %2372 = vmatprep.subr.bf16.mxu0 0
        %2373 = vmatpush1.bf16.msra.mxu0 %v2351
        %2374 = vmatprep.subr.bf16.mxu0 0
        %2375 = vmatpush1.bf16.msra.mxu0 %v2352
        %2376 = vmatprep.subr.bf16.mxu0 0
        %2377 = vmatpush1.bf16.msra.mxu0 %v2353
        %2378 = vmatprep.subr.bf16.mxu0 0
        %2379 = vmatpush1.bf16.msra.mxu0 0
        %2380 = vmatprep.subr.bf16.mxu0 0
        %2381 = vmatpush1.bf16.msra.mxu0 0
        %2382 = vmatprep.subr.bf16.mxu0 0
        %2383 = vmatpush1.bf16.msra.mxu0 0
        %2384 = vmatprep.subr.bf16.mxu0 0
        %2385 = vmatpush1.bf16.msra.mxu0 0
        %2386 = vmatprep.subr.bf16.mxu0 0
        %2387 = vmatpush1.bf16.msra.mxu0 0
        %2388 = vmatprep.subr.bf16.mxu0 0
        %2389 = vmatpush1.bf16.msra.mxu0 0
        %2390 = vmatprep.subr.bf16.mxu0 0
        %2391 = vmatpush1.bf16.msra.mxu0 0
        %2392 = vmatprep.subr.bf16.mxu0 0
        %2393 = vmatpush1.bf16.msra.mxu0 0
        %2394 = vmatprep.mubr.bf16.mxu0 0
        %2395 = vmatmul.mubr.bf16.gmra.mrb[0].mxu0 %v2055
        %v2396 = vpop.f32.mrb[0].mxu0
        %v2397 = vadd.f32 0.0, %v2396
        %v2398 = vpop.f32.mrb[0].mxu0
        %v2399 = vpop.f32.mrb[0].mxu0
        %v2400 = vadd.f32 0.0, %v2399
        %v2401 = vpop.f32.mrb[0].mxu0
        %2402 = vmatprep.mubr.bf16.mxu0 0
        %2403 = vmatmul.mubr.bf16.gmra.mrb[0].mxu0 %v2056
        %v2404 = vpop.f32.mrb[0].mxu0
        %v2405 = vadd.f32 0.0, %v2404
        %v2406 = vpop.f32.mrb[0].mxu0
        %v2407 = vpop.f32.mrb[0].mxu0
        %v2408 = vadd.f32 0.0, %v2407
        %v2409 = vpop.f32.mrb[0].mxu0
        %2410 = vdwg.mxu0
        %v2411 = vmax.f32 %v2397, 0.0
        %v2412 = vmax.f32 %v2400, 0.0
        %v2413 = vmax.f32 %v2405, 0.0
        %v2414 = vmax.f32 %v2408, 0.0
        %v2415 = vpack.c.bf16 %v2412, %v2411
        %v2416 = vpack.c.bf16 %v2414, %v2413
        %s2417 = scalar_lea.vmem %s556, 256 [#allocation11]
        %v2418 = vld [vmem:[%s2417] sm:$0xf]
        %v2419 = vld [vmem:[%s2417 + $0x4] sm:$0xf]
        %v2420 = vld [vmem:[%s2417 + $0x8] sm:$0xf]
        %v2421 = vld [vmem:[%s2417 + $0xc] sm:$0xf]
        %v2422 = vld [vmem:[%s2417 + $0x10] sm:$0xf]
        %v2423 = vld [vmem:[%s2417 + $0x14] sm:$0xf]
        %v2424 = vld [vmem:[%s2417 + $0x18] sm:$0xf]
        %v2425 = vld [vmem:[%s2417 + $0x1c] sm:$0xf]
        %v2426 = vld [vmem:[%s2417 + $0x20] sm:$0xf]
        %v2427 = vld [vmem:[%s2417 + $0x24] sm:$0xf]
        %v2428 = vld [vmem:[%s2417 + $0x28] sm:$0xf]
        %v2429 = vld [vmem:[%s2417 + $0x2c] sm:$0xf]
        %v2430 = vld [vmem:[%s2417 + $0x30] sm:$0xf]
        %v2431 = vld [vmem:[%s2417 + $0x34] sm:$0xf]
        %v2432 = vld [vmem:[%s2417 + $0x38] sm:$0xf]
        %v2433 = vld [vmem:[%s2417 + $0x3c] sm:$0xf]
        %v2450 = vunpack.c.l.b16 %v2418
        %v2451 = vunpack.c.l.b16 %v2419
        %v2452 = vunpack.c.l.b16 %v2420
        %v2453 = vunpack.c.l.b16 %v2421
        %v2454 = vunpack.c.l.b16 %v2422
        %v2455 = vunpack.c.l.b16 %v2423
        %v2456 = vunpack.c.l.b16 %v2424
        %v2457 = vunpack.c.l.b16 %v2425
        %v2458 = vunpack.c.l.b16 %v2426
        %v2459 = vunpack.c.l.b16 %v2427
        %v2460 = vunpack.c.l.b16 %v2428
        %v2461 = vunpack.c.l.b16 %v2429
        %v2462 = vunpack.c.l.b16 %v2430
        %v2463 = vunpack.c.l.b16 %v2431
        %v2464 = vunpack.c.l.b16 %v2432
        %v2465 = vunpack.c.l.b16 %v2433
        %v2466 = vpack.c.b16 %v2451, %v2450
        %v2467 = vpack.c.b16 %v2453, %v2452
        %v2468 = vpack.c.b16 %v2455, %v2454
        %v2469 = vpack.c.b16 %v2457, %v2456
        %v2470 = vpack.c.b16 %v2459, %v2458
        %v2471 = vpack.c.b16 %v2461, %v2460
        %v2472 = vpack.c.b16 %v2463, %v2462
        %v2473 = vpack.c.b16 %v2465, %v2464
        %2482 = vmatprep.subr.bf16.mxu0 0
        %2483 = vmatpush1.bf16.msra.mxu0 %v2466
        %2484 = vmatprep.subr.bf16.mxu0 0
        %2485 = vmatpush1.bf16.msra.mxu0 %v2467
        %2486 = vmatprep.subr.bf16.mxu0 0
        %2487 = vmatpush1.bf16.msra.mxu0 %v2468
        %2488 = vmatprep.subr.bf16.mxu0 0
        %2489 = vmatpush1.bf16.msra.mxu0 %v2469
        %2490 = vmatprep.subr.bf16.mxu0 0
        %2491 = vmatpush1.bf16.msra.mxu0 %v2470
        %2492 = vmatprep.subr.bf16.mxu0 0
        %2493 = vmatpush1.bf16.msra.mxu0 %v2471
        %2494 = vmatprep.subr.bf16.mxu0 0
        %2495 = vmatpush1.bf16.msra.mxu0 %v2472
        %2496 = vmatprep.subr.bf16.mxu0 0
        %2497 = vmatpush1.bf16.msra.mxu0 %v2473
        %2498 = vmatprep.subr.bf16.mxu0 0
        %2499 = vmatpush1.bf16.msra.mxu0 0
        %2500 = vmatprep.subr.bf16.mxu0 0
        %2501 = vmatpush1.bf16.msra.mxu0 0
        %2502 = vmatprep.subr.bf16.mxu0 0
        %2503 = vmatpush1.bf16.msra.mxu0 0
        %2504 = vmatprep.subr.bf16.mxu0 0
        %2505 = vmatpush1.bf16.msra.mxu0 0
        %2506 = vmatprep.subr.bf16.mxu0 0
        %2507 = vmatpush1.bf16.msra.mxu0 0
        %2508 = vmatprep.subr.bf16.mxu0 0
        %2509 = vmatpush1.bf16.msra.mxu0 0
        %2510 = vmatprep.subr.bf16.mxu0 0
        %2511 = vmatpush1.bf16.msra.mxu0 0
        %2512 = vmatprep.subr.bf16.mxu0 0
        %2513 = vmatpush1.bf16.msra.mxu0 0
        %2514 = vmatprep.mubr.bf16.mxu0 0
        %2515 = vmatmul.mubr.bf16.gmra.mrb[0].mxu0 %v2175
        %v2516 = vpop.f32.mrb[0].mxu0
        %v2517 = vadd.f32 0.0, %v2516
        %v2518 = vpop.f32.mrb[0].mxu0
        %v2519 = vpop.f32.mrb[0].mxu0
        %v2520 = vadd.f32 0.0, %v2519
        %v2521 = vpop.f32.mrb[0].mxu0
        %2522 = vmatprep.mubr.bf16.mxu0 0
        %2523 = vmatmul.mubr.bf16.gmra.mrb[0].mxu0 %v2176
        %v2524 = vpop.f32.mrb[0].mxu0
        %v2525 = vadd.f32 0.0, %v2524
        %v2526 = vpop.f32.mrb[0].mxu0
        %v2527 = vpop.f32.mrb[0].mxu0
        %v2528 = vadd.f32 0.0, %v2527
        %v2529 = vpop.f32.mrb[0].mxu0
        %2530 = vdwg.mxu0
        %v2531 = vmax.f32 %v2517, 0.0
        %v2532 = vmax.f32 %v2520, 0.0
        %v2533 = vmax.f32 %v2525, 0.0
        %v2534 = vmax.f32 %v2528, 0.0
        %v2535 = vpack.c.bf16 %v2532, %v2531
        %v2536 = vpack.c.bf16 %v2534, %v2533
        %s2537 = scalar_lea.vmem %s569, 256 [#allocation14]
        %v2538 = vld [vmem:[%s2537] sm:$0xf]
        %v2539 = vld [vmem:[%s2537 + $0x4] sm:$0xf]
        %v2540 = vld [vmem:[%s2537 + $0x8] sm:$0xf]
        %v2541 = vld [vmem:[%s2537 + $0xc] sm:$0xf]
        %v2542 = vld [vmem:[%s2537 + $0x10] sm:$0xf]
        %v2543 = vld [vmem:[%s2537 + $0x14] sm:$0xf]
        %v2544 = vld [vmem:[%s2537 + $0x18] sm:$0xf]
        %v2545 = vld [vmem:[%s2537 + $0x1c] sm:$0xf]
        %v2546 = vld [vmem:[%s2537 + $0x20] sm:$0xf]
        %v2547 = vld [vmem:[%s2537 + $0x24] sm:$0xf]
        %v2548 = vld [vmem:[%s2537 + $0x28] sm:$0xf]
        %v2549 = vld [vmem:[%s2537 + $0x2c] sm:$0xf]
        %v2550 = vld [vmem:[%s2537 + $0x30] sm:$0xf]
        %v2551 = vld [vmem:[%s2537 + $0x34] sm:$0xf]
        %v2552 = vld [vmem:[%s2537 + $0x38] sm:$0xf]
        %v2553 = vld [vmem:[%s2537 + $0x3c] sm:$0xf]
        %v2570 = vunpack.c.l.b16 %v2538
        %v2571 = vunpack.c.l.b16 %v2539
        %v2572 = vunpack.c.l.b16 %v2540
        %v2573 = vunpack.c.l.b16 %v2541
        %v2574 = vunpack.c.l.b16 %v2542
        %v2575 = vunpack.c.l.b16 %v2543
        %v2576 = vunpack.c.l.b16 %v2544
        %v2577 = vunpack.c.l.b16 %v2545
        %v2578 = vunpack.c.l.b16 %v2546
        %v2579 = vunpack.c.l.b16 %v2547
        %v2580 = vunpack.c.l.b16 %v2548
        %v2581 = vunpack.c.l.b16 %v2549
        %v2582 = vunpack.c.l.b16 %v2550
        %v2583 = vunpack.c.l.b16 %v2551
        %v2584 = vunpack.c.l.b16 %v2552
        %v2585 = vunpack.c.l.b16 %v2553
        %v2586 = vpack.c.b16 %v2571, %v2570
        %v2587 = vpack.c.b16 %v2573, %v2572
        %v2588 = vpack.c.b16 %v2575, %v2574
        %v2589 = vpack.c.b16 %v2577, %v2576
        %v2590 = vpack.c.b16 %v2579, %v2578
        %v2591 = vpack.c.b16 %v2581, %v2580
        %v2592 = vpack.c.b16 %v2583, %v2582
        %v2593 = vpack.c.b16 %v2585, %v2584
        %2602 = vmatprep.subr.bf16.mxu0 0
        %2603 = vmatpush1.bf16.msra.mxu0 %v2586
        %2604 = vmatprep.subr.bf16.mxu0 0
        %2605 = vmatpush1.bf16.msra.mxu0 %v2587
        %2606 = vmatprep.subr.bf16.mxu0 0
        %2607 = vmatpush1.bf16.msra.mxu0 %v2588
        %2608 = vmatprep.subr.bf16.mxu0 0
        %2609 = vmatpush1.bf16.msra.mxu0 %v2589
        %2610 = vmatprep.subr.bf16.mxu0 0
        %2611 = vmatpush1.bf16.msra.mxu0 %v2590
        %2612 = vmatprep.subr.bf16.mxu0 0
        %2613 = vmatpush1.bf16.msra.mxu0 %v2591
        %2614 = vmatprep.subr.bf16.mxu0 0
        %2615 = vmatpush1.bf16.msra.mxu0 %v2592
        %2616 = vmatprep.subr.bf16.mxu0 0
        %2617 = vmatpush1.bf16.msra.mxu0 %v2593
        %2618 = vmatprep.subr.bf16.mxu0 0
        %2619 = vmatpush1.bf16.msra.mxu0 0
        %2620 = vmatprep.subr.bf16.mxu0 0
        %2621 = vmatpush1.bf16.msra.mxu0 0
        %2622 = vmatprep.subr.bf16.mxu0 0
        %2623 = vmatpush1.bf16.msra.mxu0 0
        %2624 = vmatprep.subr.bf16.mxu0 0
        %2625 = vmatpush1.bf16.msra.mxu0 0
        %2626 = vmatprep.subr.bf16.mxu0 0
        %2627 = vmatpush1.bf16.msra.mxu0 0
        %2628 = vmatprep.subr.bf16.mxu0 0
        %2629 = vmatpush1.bf16.msra.mxu0 0
        %2630 = vmatprep.subr.bf16.mxu0 0
        %2631 = vmatpush1.bf16.msra.mxu0 0
        %2632 = vmatprep.subr.bf16.mxu0 0
        %2633 = vmatpush1.bf16.msra.mxu0 0
        %2634 = vmatprep.mubr.bf16.mxu0 0
        %2635 = vmatmul.mubr.bf16.gmra.mrb[0].mxu0 %v2295
        %v2636 = vpop.f32.mrb[0].mxu0
        %v2637 = vadd.f32 0.0, %v2636
        %v2638 = vpop.f32.mrb[0].mxu0
        %v2639 = vpop.f32.mrb[0].mxu0
        %v2640 = vadd.f32 0.0, %v2639
        %v2641 = vpop.f32.mrb[0].mxu0
        %2642 = vmatprep.mubr.bf16.mxu0 0
        %2643 = vmatmul.mubr.bf16.gmra.mrb[0].mxu0 %v2296
        %v2644 = vpop.f32.mrb[0].mxu0
        %v2645 = vadd.f32 0.0, %v2644
        %v2646 = vpop.f32.mrb[0].mxu0
        %v2647 = vpop.f32.mrb[0].mxu0
        %v2648 = vadd.f32 0.0, %v2647
        %v2649 = vpop.f32.mrb[0].mxu0
        %2650 = vdwg.mxu0
        %v2651 = vmax.f32 %v2637, 0.0
        %v2652 = vmax.f32 %v2640, 0.0
        %v2653 = vmax.f32 %v2645, 0.0
        %v2654 = vmax.f32 %v2648, 0.0
        %v2655 = vpack.c.bf16 %v2652, %v2651
        %v2656 = vpack.c.bf16 %v2654, %v2653
        %s2657 = scalar_lea.vmem %s543, 320 [#allocation8]
        %v2658 = vld [vmem:[%s2657] sm:$0xf]
        %v2659 = vld [vmem:[%s2657 + $0x4] sm:$0xf]
        %v2660 = vld [vmem:[%s2657 + $0x8] sm:$0xf]
        %v2661 = vld [vmem:[%s2657 + $0xc] sm:$0xf]
        %v2662 = vld [vmem:[%s2657 + $0x10] sm:$0xf]
        %v2663 = vld [vmem:[%s2657 + $0x14] sm:$0xf]
        %v2664 = vld [vmem:[%s2657 + $0x18] sm:$0xf]
        %v2665 = vld [vmem:[%s2657 + $0x1c] sm:$0xf]
        %v2666 = vld [vmem:[%s2657 + $0x20] sm:$0xf]
        %v2667 = vld [vmem:[%s2657 + $0x24] sm:$0xf]
        %v2668 = vld [vmem:[%s2657 + $0x28] sm:$0xf]
        %v2669 = vld [vmem:[%s2657 + $0x2c] sm:$0xf]
        %v2670 = vld [vmem:[%s2657 + $0x30] sm:$0xf]
        %v2671 = vld [vmem:[%s2657 + $0x34] sm:$0xf]
        %v2672 = vld [vmem:[%s2657 + $0x38] sm:$0xf]
        %v2673 = vld [vmem:[%s2657 + $0x3c] sm:$0xf]
        %v2690 = vunpack.c.l.b16 %v2658
        %v2691 = vunpack.c.l.b16 %v2659
        %v2692 = vunpack.c.l.b16 %v2660
        %v2693 = vunpack.c.l.b16 %v2661
        %v2694 = vunpack.c.l.b16 %v2662
        %v2695 = vunpack.c.l.b16 %v2663
        %v2696 = vunpack.c.l.b16 %v2664
        %v2697 = vunpack.c.l.b16 %v2665
        %v2698 = vunpack.c.l.b16 %v2666
        %v2699 = vunpack.c.l.b16 %v2667
        %v2700 = vunpack.c.l.b16 %v2668
        %v2701 = vunpack.c.l.b16 %v2669
        %v2702 = vunpack.c.l.b16 %v2670
        %v2703 = vunpack.c.l.b16 %v2671
        %v2704 = vunpack.c.l.b16 %v2672
        %v2705 = vunpack.c.l.b16 %v2673
        %v2706 = vpack.c.b16 %v2691, %v2690
        %v2707 = vpack.c.b16 %v2693, %v2692
        %v2708 = vpack.c.b16 %v2695, %v2694
        %v2709 = vpack.c.b16 %v2697, %v2696
        %v2710 = vpack.c.b16 %v2699, %v2698
        %v2711 = vpack.c.b16 %v2701, %v2700
        %v2712 = vpack.c.b16 %v2703, %v2702
        %v2713 = vpack.c.b16 %v2705, %v2704
        %2722 = vmatprep.subr.bf16.mxu0 0
        %2723 = vmatpush1.bf16.msra.mxu0 %v2706
        %2724 = vmatprep.subr.bf16.mxu0 0
        %2725 = vmatpush1.bf16.msra.mxu0 %v2707
        %2726 = vmatprep.subr.bf16.mxu0 0
        %2727 = vmatpush1.bf16.msra.mxu0 %v2708
        %2728 = vmatprep.subr.bf16.mxu0 0
        %2729 = vmatpush1.bf16.msra.mxu0 %v2709
        %2730 = vmatprep.subr.bf16.mxu0 0
        %2731 = vmatpush1.bf16.msra.mxu0 %v2710
        %2732 = vmatprep.subr.bf16.mxu0 0
        %2733 = vmatpush1.bf16.msra.mxu0 %v2711
        %2734 = vmatprep.subr.bf16.mxu0 0
        %2735 = vmatpush1.bf16.msra.mxu0 %v2712
        %2736 = vmatprep.subr.bf16.mxu0 0
        %2737 = vmatpush1.bf16.msra.mxu0 %v2713
        %2738 = vmatprep.subr.bf16.mxu0 0
        %2739 = vmatpush1.bf16.msra.mxu0 0
        %2740 = vmatprep.subr.bf16.mxu0 0
        %2741 = vmatpush1.bf16.msra.mxu0 0
        %2742 = vmatprep.subr.bf16.mxu0 0
        %2743 = vmatpush1.bf16.msra.mxu0 0
        %2744 = vmatprep.subr.bf16.mxu0 0
        %2745 = vmatpush1.bf16.msra.mxu0 0
        %2746 = vmatprep.subr.bf16.mxu0 0
        %2747 = vmatpush1.bf16.msra.mxu0 0
        %2748 = vmatprep.subr.bf16.mxu0 0
        %2749 = vmatpush1.bf16.msra.mxu0 0
        %2750 = vmatprep.subr.bf16.mxu0 0
        %2751 = vmatpush1.bf16.msra.mxu0 0
        %2752 = vmatprep.subr.bf16.mxu0 0
        %2753 = vmatpush1.bf16.msra.mxu0 0
        %2754 = vmatprep.mubr.bf16.mxu0 0
        %2755 = vmatmul.mubr.bf16.gmra.mrb[0].mxu0 %v2415
        %v2756 = vpop.f32.mrb[0].mxu0
        %v2757 = vadd.f32 0.0, %v2756
        %v2758 = vpop.f32.mrb[0].mxu0
        %v2759 = vpop.f32.mrb[0].mxu0
        %v2760 = vadd.f32 0.0, %v2759
        %v2761 = vpop.f32.mrb[0].mxu0
        %2762 = vmatprep.mubr.bf16.mxu0 0
        %2763 = vmatmul.mubr.bf16.gmra.mrb[0].mxu0 %v2416
        %v2764 = vpop.f32.mrb[0].mxu0
        %v2765 = vadd.f32 0.0, %v2764
        %v2766 = vpop.f32.mrb[0].mxu0
        %v2767 = vpop.f32.mrb[0].mxu0
        %v2768 = vadd.f32 0.0, %v2767
        %v2769 = vpop.f32.mrb[0].mxu0
        %2770 = vdwg.mxu0
        %v2771 = vmax.f32 %v2757, 0.0
        %v2772 = vmax.f32 %v2760, 0.0
        %v2773 = vmax.f32 %v2765, 0.0
        %v2774 = vmax.f32 %v2768, 0.0
        %v2775 = vpack.c.bf16 %v2772, %v2771
        %v2776 = vpack.c.bf16 %v2774, %v2773
        %s2777 = scalar_lea.vmem %s556, 320 [#allocation11]
        %v2778 = vld [vmem:[%s2777] sm:$0xf]
        %v2779 = vld [vmem:[%s2777 + $0x4] sm:$0xf]
        %v2780 = vld [vmem:[%s2777 + $0x8] sm:$0xf]
        %v2781 = vld [vmem:[%s2777 + $0xc] sm:$0xf]
        %v2782 = vld [vmem:[%s2777 + $0x10] sm:$0xf]
        %v2783 = vld [vmem:[%s2777 + $0x14] sm:$0xf]
        %v2784 = vld [vmem:[%s2777 + $0x18] sm:$0xf]
        %v2785 = vld [vmem:[%s2777 + $0x1c] sm:$0xf]
        %v2786 = vld [vmem:[%s2777 + $0x20] sm:$0xf]
        %v2787 = vld [vmem:[%s2777 + $0x24] sm:$0xf]
        %v2788 = vld [vmem:[%s2777 + $0x28] sm:$0xf]
        %v2789 = vld [vmem:[%s2777 + $0x2c] sm:$0xf]
        %v2790 = vld [vmem:[%s2777 + $0x30] sm:$0xf]
        %v2791 = vld [vmem:[%s2777 + $0x34] sm:$0xf]
        %v2792 = vld [vmem:[%s2777 + $0x38] sm:$0xf]
        %v2793 = vld [vmem:[%s2777 + $0x3c] sm:$0xf]
        %v2810 = vunpack.c.l.b16 %v2778
        %v2811 = vunpack.c.l.b16 %v2779
        %v2812 = vunpack.c.l.b16 %v2780
        %v2813 = vunpack.c.l.b16 %v2781
        %v2814 = vunpack.c.l.b16 %v2782
        %v2815 = vunpack.c.l.b16 %v2783
        %v2816 = vunpack.c.l.b16 %v2784
        %v2817 = vunpack.c.l.b16 %v2785
        %v2818 = vunpack.c.l.b16 %v2786
        %v2819 = vunpack.c.l.b16 %v2787
        %v2820 = vunpack.c.l.b16 %v2788
        %v2821 = vunpack.c.l.b16 %v2789
        %v2822 = vunpack.c.l.b16 %v2790
        %v2823 = vunpack.c.l.b16 %v2791
        %v2824 = vunpack.c.l.b16 %v2792
        %v2825 = vunpack.c.l.b16 %v2793
        %v2826 = vpack.c.b16 %v2811, %v2810
        %v2827 = vpack.c.b16 %v2813, %v2812
        %v2828 = vpack.c.b16 %v2815, %v2814
        %v2829 = vpack.c.b16 %v2817, %v2816
        %v2830 = vpack.c.b16 %v2819, %v2818
        %v2831 = vpack.c.b16 %v2821, %v2820
        %v2832 = vpack.c.b16 %v2823, %v2822
        %v2833 = vpack.c.b16 %v2825, %v2824
        %2842 = vmatprep.subr.bf16.mxu0 0
        %2843 = vmatpush1.bf16.msra.mxu0 %v2826
        %2844 = vmatprep.subr.bf16.mxu0 0
        %2845 = vmatpush1.bf16.msra.mxu0 %v2827
        %2846 = vmatprep.subr.bf16.mxu0 0
        %2847 = vmatpush1.bf16.msra.mxu0 %v2828
        %2848 = vmatprep.subr.bf16.mxu0 0
        %2849 = vmatpush1.bf16.msra.mxu0 %v2829
        %2850 = vmatprep.subr.bf16.mxu0 0
        %2851 = vmatpush1.bf16.msra.mxu0 %v2830
        %2852 = vmatprep.subr.bf16.mxu0 0
        %2853 = vmatpush1.bf16.msra.mxu0 %v2831
        %2854 = vmatprep.subr.bf16.mxu0 0
        %2855 = vmatpush1.bf16.msra.mxu0 %v2832
        %2856 = vmatprep.subr.bf16.mxu0 0
        %2857 = vmatpush1.bf16.msra.mxu0 %v2833
        %2858 = vmatprep.subr.bf16.mxu0 0
        %2859 = vmatpush1.bf16.msra.mxu0 0
        %2860 = vmatprep.subr.bf16.mxu0 0
        %2861 = vmatpush1.bf16.msra.mxu0 0
        %2862 = vmatprep.subr.bf16.mxu0 0
        %2863 = vmatpush1.bf16.msra.mxu0 0
        %2864 = vmatprep.subr.bf16.mxu0 0
        %2865 = vmatpush1.bf16.msra.mxu0 0
        %2866 = vmatprep.subr.bf16.mxu0 0
        %2867 = vmatpush1.bf16.msra.mxu0 0
        %2868 = vmatprep.subr.bf16.mxu0 0
        %2869 = vmatpush1.bf16.msra.mxu0 0
        %2870 = vmatprep.subr.bf16.mxu0 0
        %2871 = vmatpush1.bf16.msra.mxu0 0
        %2872 = vmatprep.subr.bf16.mxu0 0
        %2873 = vmatpush1.bf16.msra.mxu0 0
        %2874 = vmatprep.mubr.bf16.mxu0 0
        %2875 = vmatmul.mubr.bf16.gmra.mrb[0].mxu0 %v2535
        %v2876 = vpop.f32.mrb[0].mxu0
        %v2877 = vadd.f32 0.0, %v2876
        %v2878 = vpop.f32.mrb[0].mxu0
        %v2879 = vpop.f32.mrb[0].mxu0
        %v2880 = vadd.f32 0.0, %v2879
        %v2881 = vpop.f32.mrb[0].mxu0
        %2882 = vmatprep.mubr.bf16.mxu0 0
        %2883 = vmatmul.mubr.bf16.gmra.mrb[0].mxu0 %v2536
        %v2884 = vpop.f32.mrb[0].mxu0
        %v2885 = vadd.f32 0.0, %v2884
        %v2886 = vpop.f32.mrb[0].mxu0
        %v2887 = vpop.f32.mrb[0].mxu0
        %v2888 = vadd.f32 0.0, %v2887
        %v2889 = vpop.f32.mrb[0].mxu0
        %2890 = vdwg.mxu0
        %v2891 = vmax.f32 %v2877, 0.0
        %v2892 = vmax.f32 %v2880, 0.0
        %v2893 = vmax.f32 %v2885, 0.0
        %v2894 = vmax.f32 %v2888, 0.0
        %v2895 = vpack.c.bf16 %v2892, %v2891
        %v2896 = vpack.c.bf16 %v2894, %v2893
        %s2897 = scalar_lea.vmem %s569, 320 [#allocation14]
        %v2898 = vld [vmem:[%s2897] sm:$0xf]
        %v2899 = vld [vmem:[%s2897 + $0x4] sm:$0xf]
        %v2900 = vld [vmem:[%s2897 + $0x8] sm:$0xf]
        %v2901 = vld [vmem:[%s2897 + $0xc] sm:$0xf]
        %v2902 = vld [vmem:[%s2897 + $0x10] sm:$0xf]
        %v2903 = vld [vmem:[%s2897 + $0x14] sm:$0xf]
        %v2904 = vld [vmem:[%s2897 + $0x18] sm:$0xf]
        %v2905 = vld [vmem:[%s2897 + $0x1c] sm:$0xf]
        %v2906 = vld [vmem:[%s2897 + $0x20] sm:$0xf]
        %v2907 = vld [vmem:[%s2897 + $0x24] sm:$0xf]
        %v2908 = vld [vmem:[%s2897 + $0x28] sm:$0xf]
        %v2909 = vld [vmem:[%s2897 + $0x2c] sm:$0xf]
        %v2910 = vld [vmem:[%s2897 + $0x30] sm:$0xf]
        %v2911 = vld [vmem:[%s2897 + $0x34] sm:$0xf]
        %v2912 = vld [vmem:[%s2897 + $0x38] sm:$0xf]
        %v2913 = vld [vmem:[%s2897 + $0x3c] sm:$0xf]
        %v2930 = vunpack.c.l.b16 %v2898
        %v2931 = vunpack.c.l.b16 %v2899
        %v2932 = vunpack.c.l.b16 %v2900
        %v2933 = vunpack.c.l.b16 %v2901
        %v2934 = vunpack.c.l.b16 %v2902
        %v2935 = vunpack.c.l.b16 %v2903
        %v2936 = vunpack.c.l.b16 %v2904
        %v2937 = vunpack.c.l.b16 %v2905
        %v2938 = vunpack.c.l.b16 %v2906
        %v2939 = vunpack.c.l.b16 %v2907
        %v2940 = vunpack.c.l.b16 %v2908
        %v2941 = vunpack.c.l.b16 %v2909
        %v2942 = vunpack.c.l.b16 %v2910
        %v2943 = vunpack.c.l.b16 %v2911
        %v2944 = vunpack.c.l.b16 %v2912
        %v2945 = vunpack.c.l.b16 %v2913
        %v2946 = vpack.c.b16 %v2931, %v2930
        %v2947 = vpack.c.b16 %v2933, %v2932
        %v2948 = vpack.c.b16 %v2935, %v2934
        %v2949 = vpack.c.b16 %v2937, %v2936
        %v2950 = vpack.c.b16 %v2939, %v2938
        %v2951 = vpack.c.b16 %v2941, %v2940
        %v2952 = vpack.c.b16 %v2943, %v2942
        %v2953 = vpack.c.b16 %v2945, %v2944
        %2962 = vmatprep.subr.bf16.mxu0 0
        %2963 = vmatpush1.bf16.msra.mxu0 %v2946
        %2964 = vmatprep.subr.bf16.mxu0 0
        %2965 = vmatpush1.bf16.msra.mxu0 %v2947
        %2966 = vmatprep.subr.bf16.mxu0 0
        %2967 = vmatpush1.bf16.msra.mxu0 %v2948
        %2968 = vmatprep.subr.bf16.mxu0 0
        %2969 = vmatpush1.bf16.msra.mxu0 %v2949
        %2970 = vmatprep.subr.bf16.mxu0 0
        %2971 = vmatpush1.bf16.msra.mxu0 %v2950
        %2972 = vmatprep.subr.bf16.mxu0 0
        %2973 = vmatpush1.bf16.msra.mxu0 %v2951
        %2974 = vmatprep.subr.bf16.mxu0 0
        %2975 = vmatpush1.bf16.msra.mxu0 %v2952
        %2976 = vmatprep.subr.bf16.mxu0 0
        %2977 = vmatpush1.bf16.msra.mxu0 %v2953
        %2978 = vmatprep.subr.bf16.mxu0 0
        %2979 = vmatpush1.bf16.msra.mxu0 0
        %2980 = vmatprep.subr.bf16.mxu0 0
        %2981 = vmatpush1.bf16.msra.mxu0 0
        %2982 = vmatprep.subr.bf16.mxu0 0
        %2983 = vmatpush1.bf16.msra.mxu0 0
        %2984 = vmatprep.subr.bf16.mxu0 0
        %2985 = vmatpush1.bf16.msra.mxu0 0
        %2986 = vmatprep.subr.bf16.mxu0 0
        %2987 = vmatpush1.bf16.msra.mxu0 0
        %2988 = vmatprep.subr.bf16.mxu0 0
        %2989 = vmatpush1.bf16.msra.mxu0 0
        %2990 = vmatprep.subr.bf16.mxu0 0
        %2991 = vmatpush1.bf16.msra.mxu0 0
        %2992 = vmatprep.subr.bf16.mxu0 0
        %2993 = vmatpush1.bf16.msra.mxu0 0
        %2994 = vmatprep.mubr.bf16.mxu0 0
        %2995 = vmatmul.mubr.bf16.gmra.mrb[0].mxu0 %v2655
        %v2996 = vpop.f32.mrb[0].mxu0
        %v2997 = vadd.f32 0.0, %v2996
        %v2998 = vpop.f32.mrb[0].mxu0
        %v2999 = vpop.f32.mrb[0].mxu0
        %v3000 = vadd.f32 0.0, %v2999
        %v3001 = vpop.f32.mrb[0].mxu0
        %3002 = vmatprep.mubr.bf16.mxu0 0
        %3003 = vmatmul.mubr.bf16.gmra.mrb[0].mxu0 %v2656
        %v3004 = vpop.f32.mrb[0].mxu0
        %v3005 = vadd.f32 0.0, %v3004
        %v3006 = vpop.f32.mrb[0].mxu0
        %v3007 = vpop.f32.mrb[0].mxu0
        %v3008 = vadd.f32 0.0, %v3007
        %v3009 = vpop.f32.mrb[0].mxu0
        %3010 = vdwg.mxu0
        %v3011 = vmax.f32 %v2997, 0.0
        %v3012 = vmax.f32 %v3000, 0.0
        %v3013 = vmax.f32 %v3005, 0.0
        %v3014 = vmax.f32 %v3008, 0.0
        %v3015 = vpack.c.bf16 %v3012, %v3011
        %v3016 = vpack.c.bf16 %v3014, %v3013
        %s3017 = scalar_lea.vmem %s543, 384 [#allocation8]
        %v3018 = vld [vmem:[%s3017] sm:$0xf]
        %v3019 = vld [vmem:[%s3017 + $0x4] sm:$0xf]
        %v3020 = vld [vmem:[%s3017 + $0x8] sm:$0xf]
        %v3021 = vld [vmem:[%s3017 + $0xc] sm:$0xf]
        %v3022 = vld [vmem:[%s3017 + $0x10] sm:$0xf]
        %v3023 = vld [vmem:[%s3017 + $0x14] sm:$0xf]
        %v3024 = vld [vmem:[%s3017 + $0x18] sm:$0xf]
        %v3025 = vld [vmem:[%s3017 + $0x1c] sm:$0xf]
        %v3026 = vld [vmem:[%s3017 + $0x20] sm:$0xf]
        %v3027 = vld [vmem:[%s3017 + $0x24] sm:$0xf]
        %v3028 = vld [vmem:[%s3017 + $0x28] sm:$0xf]
        %v3029 = vld [vmem:[%s3017 + $0x2c] sm:$0xf]
        %v3030 = vld [vmem:[%s3017 + $0x30] sm:$0xf]
        %v3031 = vld [vmem:[%s3017 + $0x34] sm:$0xf]
        %v3032 = vld [vmem:[%s3017 + $0x38] sm:$0xf]
        %v3033 = vld [vmem:[%s3017 + $0x3c] sm:$0xf]
        %v3050 = vunpack.c.l.b16 %v3018
        %v3051 = vunpack.c.l.b16 %v3019
        %v3052 = vunpack.c.l.b16 %v3020
        %v3053 = vunpack.c.l.b16 %v3021
        %v3054 = vunpack.c.l.b16 %v3022
        %v3055 = vunpack.c.l.b16 %v3023
        %v3056 = vunpack.c.l.b16 %v3024
        %v3057 = vunpack.c.l.b16 %v3025
        %v3058 = vunpack.c.l.b16 %v3026
        %v3059 = vunpack.c.l.b16 %v3027
        %v3060 = vunpack.c.l.b16 %v3028
        %v3061 = vunpack.c.l.b16 %v3029
        %v3062 = vunpack.c.l.b16 %v3030
        %v3063 = vunpack.c.l.b16 %v3031
        %v3064 = vunpack.c.l.b16 %v3032
        %v3065 = vunpack.c.l.b16 %v3033
        %v3066 = vpack.c.b16 %v3051, %v3050
        %v3067 = vpack.c.b16 %v3053, %v3052
        %v3068 = vpack.c.b16 %v3055, %v3054
        %v3069 = vpack.c.b16 %v3057, %v3056
        %v3070 = vpack.c.b16 %v3059, %v3058
        %v3071 = vpack.c.b16 %v3061, %v3060
        %v3072 = vpack.c.b16 %v3063, %v3062
        %v3073 = vpack.c.b16 %v3065, %v3064
        %3082 = vmatprep.subr.bf16.mxu0 0
        %3083 = vmatpush1.bf16.msra.mxu0 %v3066
        %3084 = vmatprep.subr.bf16.mxu0 0
        %3085 = vmatpush1.bf16.msra.mxu0 %v3067
        %3086 = vmatprep.subr.bf16.mxu0 0
        %3087 = vmatpush1.bf16.msra.mxu0 %v3068
        %3088 = vmatprep.subr.bf16.mxu0 0
        %3089 = vmatpush1.bf16.msra.mxu0 %v3069
        %3090 = vmatprep.subr.bf16.mxu0 0
        %3091 = vmatpush1.bf16.msra.mxu0 %v3070
        %3092 = vmatprep.subr.bf16.mxu0 0
        %3093 = vmatpush1.bf16.msra.mxu0 %v3071
        %3094 = vmatprep.subr.bf16.mxu0 0
        %3095 = vmatpush1.bf16.msra.mxu0 %v3072
        %3096 = vmatprep.subr.bf16.mxu0 0
        %3097 = vmatpush1.bf16.msra.mxu0 %v3073
        %3098 = vmatprep.subr.bf16.mxu0 0
        %3099 = vmatpush1.bf16.msra.mxu0 0
        %3100 = vmatprep.subr.bf16.mxu0 0
        %3101 = vmatpush1.bf16.msra.mxu0 0
        %3102 = vmatprep.subr.bf16.mxu0 0
        %3103 = vmatpush1.bf16.msra.mxu0 0
        %3104 = vmatprep.subr.bf16.mxu0 0
        %3105 = vmatpush1.bf16.msra.mxu0 0
        %3106 = vmatprep.subr.bf16.mxu0 0
        %3107 = vmatpush1.bf16.msra.mxu0 0
        %3108 = vmatprep.subr.bf16.mxu0 0
        %3109 = vmatpush1.bf16.msra.mxu0 0
        %3110 = vmatprep.subr.bf16.mxu0 0
        %3111 = vmatpush1.bf16.msra.mxu0 0
        %3112 = vmatprep.subr.bf16.mxu0 0
        %3113 = vmatpush1.bf16.msra.mxu0 0
        %3114 = vmatprep.mubr.bf16.mxu0 0
        %3115 = vmatmul.mubr.bf16.gmra.mrb[0].mxu0 %v2775
        %v3116 = vpop.f32.mrb[0].mxu0
        %v3117 = vadd.f32 0.0, %v3116
        %v3118 = vpop.f32.mrb[0].mxu0
        %v3119 = vpop.f32.mrb[0].mxu0
        %v3120 = vadd.f32 0.0, %v3119
        %v3121 = vpop.f32.mrb[0].mxu0
        %3122 = vmatprep.mubr.bf16.mxu0 0
        %3123 = vmatmul.mubr.bf16.gmra.mrb[0].mxu0 %v2776
        %v3124 = vpop.f32.mrb[0].mxu0
        %v3125 = vadd.f32 0.0, %v3124
        %v3126 = vpop.f32.mrb[0].mxu0
        %v3127 = vpop.f32.mrb[0].mxu0
        %v3128 = vadd.f32 0.0, %v3127
        %v3129 = vpop.f32.mrb[0].mxu0
        %3130 = vdwg.mxu0
        %v3131 = vmax.f32 %v3117, 0.0
        %v3132 = vmax.f32 %v3120, 0.0
        %v3133 = vmax.f32 %v3125, 0.0
        %v3134 = vmax.f32 %v3128, 0.0
        %v3135 = vpack.c.bf16 %v3132, %v3131
        %v3136 = vpack.c.bf16 %v3134, %v3133
        %s3137 = scalar_lea.vmem %s556, 384 [#allocation11]
        %v3138 = vld [vmem:[%s3137] sm:$0xf]
        %v3139 = vld [vmem:[%s3137 + $0x4] sm:$0xf]
        %v3140 = vld [vmem:[%s3137 + $0x8] sm:$0xf]
        %v3141 = vld [vmem:[%s3137 + $0xc] sm:$0xf]
        %v3142 = vld [vmem:[%s3137 + $0x10] sm:$0xf]
        %v3143 = vld [vmem:[%s3137 + $0x14] sm:$0xf]
        %v3144 = vld [vmem:[%s3137 + $0x18] sm:$0xf]
        %v3145 = vld [vmem:[%s3137 + $0x1c] sm:$0xf]
        %v3146 = vld [vmem:[%s3137 + $0x20] sm:$0xf]
        %v3147 = vld [vmem:[%s3137 + $0x24] sm:$0xf]
        %v3148 = vld [vmem:[%s3137 + $0x28] sm:$0xf]
        %v3149 = vld [vmem:[%s3137 + $0x2c] sm:$0xf]
        %v3150 = vld [vmem:[%s3137 + $0x30] sm:$0xf]
        %v3151 = vld [vmem:[%s3137 + $0x34] sm:$0xf]
        %v3152 = vld [vmem:[%s3137 + $0x38] sm:$0xf]
        %v3153 = vld [vmem:[%s3137 + $0x3c] sm:$0xf]
        %v3170 = vunpack.c.l.b16 %v3138
        %v3171 = vunpack.c.l.b16 %v3139
        %v3172 = vunpack.c.l.b16 %v3140
        %v3173 = vunpack.c.l.b16 %v3141
        %v3174 = vunpack.c.l.b16 %v3142
        %v3175 = vunpack.c.l.b16 %v3143
        %v3176 = vunpack.c.l.b16 %v3144
        %v3177 = vunpack.c.l.b16 %v3145
        %v3178 = vunpack.c.l.b16 %v3146
        %v3179 = vunpack.c.l.b16 %v3147
        %v3180 = vunpack.c.l.b16 %v3148
        %v3181 = vunpack.c.l.b16 %v3149
        %v3182 = vunpack.c.l.b16 %v3150
        %v3183 = vunpack.c.l.b16 %v3151
        %v3184 = vunpack.c.l.b16 %v3152
        %v3185 = vunpack.c.l.b16 %v3153
        %v3186 = vpack.c.b16 %v3171, %v3170
        %v3187 = vpack.c.b16 %v3173, %v3172
        %v3188 = vpack.c.b16 %v3175, %v3174
        %v3189 = vpack.c.b16 %v3177, %v3176
        %v3190 = vpack.c.b16 %v3179, %v3178
        %v3191 = vpack.c.b16 %v3181, %v3180
        %v3192 = vpack.c.b16 %v3183, %v3182
        %v3193 = vpack.c.b16 %v3185, %v3184
        %3202 = vmatprep.subr.bf16.mxu0 0
        %3203 = vmatpush1.bf16.msra.mxu0 %v3186
        %3204 = vmatprep.subr.bf16.mxu0 0
        %3205 = vmatpush1.bf16.msra.mxu0 %v3187
        %3206 = vmatprep.subr.bf16.mxu0 0
        %3207 = vmatpush1.bf16.msra.mxu0 %v3188
        %3208 = vmatprep.subr.bf16.mxu0 0
        %3209 = vmatpush1.bf16.msra.mxu0 %v3189
        %3210 = vmatprep.subr.bf16.mxu0 0
        %3211 = vmatpush1.bf16.msra.mxu0 %v3190
        %3212 = vmatprep.subr.bf16.mxu0 0
        %3213 = vmatpush1.bf16.msra.mxu0 %v3191
        %3214 = vmatprep.subr.bf16.mxu0 0
        %3215 = vmatpush1.bf16.msra.mxu0 %v3192
        %3216 = vmatprep.subr.bf16.mxu0 0
        %3217 = vmatpush1.bf16.msra.mxu0 %v3193
        %3218 = vmatprep.subr.bf16.mxu0 0
        %3219 = vmatpush1.bf16.msra.mxu0 0
        %3220 = vmatprep.subr.bf16.mxu0 0
        %3221 = vmatpush1.bf16.msra.mxu0 0
        %3222 = vmatprep.subr.bf16.mxu0 0
        %3223 = vmatpush1.bf16.msra.mxu0 0
        %3224 = vmatprep.subr.bf16.mxu0 0
        %3225 = vmatpush1.bf16.msra.mxu0 0
        %3226 = vmatprep.subr.bf16.mxu0 0
        %3227 = vmatpush1.bf16.msra.mxu0 0
        %3228 = vmatprep.subr.bf16.mxu0 0
        %3229 = vmatpush1.bf16.msra.mxu0 0
        %3230 = vmatprep.subr.bf16.mxu0 0
        %3231 = vmatpush1.bf16.msra.mxu0 0
        %3232 = vmatprep.subr.bf16.mxu0 0
        %3233 = vmatpush1.bf16.msra.mxu0 0
        %3234 = vmatprep.mubr.bf16.mxu0 0
        %3235 = vmatmul.mubr.bf16.gmra.mrb[0].mxu0 %v2895
        %v3236 = vpop.f32.mrb[0].mxu0
        %v3237 = vadd.f32 0.0, %v3236
        %v3238 = vpop.f32.mrb[0].mxu0
        %v3239 = vpop.f32.mrb[0].mxu0
        %v3240 = vadd.f32 0.0, %v3239
        %v3241 = vpop.f32.mrb[0].mxu0
        %3242 = vmatprep.mubr.bf16.mxu0 0
        %3243 = vmatmul.mubr.bf16.gmra.mrb[0].mxu0 %v2896
        %v3244 = vpop.f32.mrb[0].mxu0
        %v3245 = vadd.f32 0.0, %v3244
        %v3246 = vpop.f32.mrb[0].mxu0
        %v3247 = vpop.f32.mrb[0].mxu0
        %v3248 = vadd.f32 0.0, %v3247
        %v3249 = vpop.f32.mrb[0].mxu0
        %3250 = vdwg.mxu0
        %v3251 = vmax.f32 %v3237, 0.0
        %v3252 = vmax.f32 %v3240, 0.0
        %v3253 = vmax.f32 %v3245, 0.0
        %v3254 = vmax.f32 %v3248, 0.0
        %v3255 = vpack.c.bf16 %v3252, %v3251
        %v3256 = vpack.c.bf16 %v3254, %v3253
        %s3257 = scalar_lea.vmem %s569, 384 [#allocation14]
        %v3258 = vld [vmem:[%s3257] sm:$0xf]
        %v3259 = vld [vmem:[%s3257 + $0x4] sm:$0xf]
        %v3260 = vld [vmem:[%s3257 + $0x8] sm:$0xf]
        %v3261 = vld [vmem:[%s3257 + $0xc] sm:$0xf]
        %v3262 = vld [vmem:[%s3257 + $0x10] sm:$0xf]
        %v3263 = vld [vmem:[%s3257 + $0x14] sm:$0xf]
        %v3264 = vld [vmem:[%s3257 + $0x18] sm:$0xf]
        %v3265 = vld [vmem:[%s3257 + $0x1c] sm:$0xf]
        %v3266 = vld [vmem:[%s3257 + $0x20] sm:$0xf]
        %v3267 = vld [vmem:[%s3257 + $0x24] sm:$0xf]
        %v3268 = vld [vmem:[%s3257 + $0x28] sm:$0xf]
        %v3269 = vld [vmem:[%s3257 + $0x2c] sm:$0xf]
        %v3270 = vld [vmem:[%s3257 + $0x30] sm:$0xf]
        %v3271 = vld [vmem:[%s3257 + $0x34] sm:$0xf]
        %v3272 = vld [vmem:[%s3257 + $0x38] sm:$0xf]
        %v3273 = vld [vmem:[%s3257 + $0x3c] sm:$0xf]
        %v3290 = vunpack.c.l.b16 %v3258
        %v3291 = vunpack.c.l.b16 %v3259
        %v3292 = vunpack.c.l.b16 %v3260
        %v3293 = vunpack.c.l.b16 %v3261
        %v3294 = vunpack.c.l.b16 %v3262
        %v3295 = vunpack.c.l.b16 %v3263
        %v3296 = vunpack.c.l.b16 %v3264
        %v3297 = vunpack.c.l.b16 %v3265
        %v3298 = vunpack.c.l.b16 %v3266
        %v3299 = vunpack.c.l.b16 %v3267
        %v3300 = vunpack.c.l.b16 %v3268
        %v3301 = vunpack.c.l.b16 %v3269
        %v3302 = vunpack.c.l.b16 %v3270
        %v3303 = vunpack.c.l.b16 %v3271
        %v3304 = vunpack.c.l.b16 %v3272
        %v3305 = vunpack.c.l.b16 %v3273
        %v3306 = vpack.c.b16 %v3291, %v3290
        %v3307 = vpack.c.b16 %v3293, %v3292
        %v3308 = vpack.c.b16 %v3295, %v3294
        %v3309 = vpack.c.b16 %v3297, %v3296
        %v3310 = vpack.c.b16 %v3299, %v3298
        %v3311 = vpack.c.b16 %v3301, %v3300
        %v3312 = vpack.c.b16 %v3303, %v3302
        %v3313 = vpack.c.b16 %v3305, %v3304
        %3322 = vmatprep.subr.bf16.mxu0 0
        %3323 = vmatpush1.bf16.msra.mxu0 %v3306
        %3324 = vmatprep.subr.bf16.mxu0 0
        %3325 = vmatpush1.bf16.msra.mxu0 %v3307
        %3326 = vmatprep.subr.bf16.mxu0 0
        %3327 = vmatpush1.bf16.msra.mxu0 %v3308
        %3328 = vmatprep.subr.bf16.mxu0 0
        %3329 = vmatpush1.bf16.msra.mxu0 %v3309
        %3330 = vmatprep.subr.bf16.mxu0 0
        %3331 = vmatpush1.bf16.msra.mxu0 %v3310
        %3332 = vmatprep.subr.bf16.mxu0 0
        %3333 = vmatpush1.bf16.msra.mxu0 %v3311
        %3334 = vmatprep.subr.bf16.mxu0 0
        %3335 = vmatpush1.bf16.msra.mxu0 %v3312
        %3336 = vmatprep.subr.bf16.mxu0 0
        %3337 = vmatpush1.bf16.msra.mxu0 %v3313
        %3338 = vmatprep.subr.bf16.mxu0 0
        %3339 = vmatpush1.bf16.msra.mxu0 0
        %3340 = vmatprep.subr.bf16.mxu0 0
        %3341 = vmatpush1.bf16.msra.mxu0 0
        %3342 = vmatprep.subr.bf16.mxu0 0
        %3343 = vmatpush1.bf16.msra.mxu0 0
        %3344 = vmatprep.subr.bf16.mxu0 0
        %3345 = vmatpush1.bf16.msra.mxu0 0
        %3346 = vmatprep.subr.bf16.mxu0 0
        %3347 = vmatpush1.bf16.msra.mxu0 0
        %3348 = vmatprep.subr.bf16.mxu0 0
        %3349 = vmatpush1.bf16.msra.mxu0 0
        %3350 = vmatprep.subr.bf16.mxu0 0
        %3351 = vmatpush1.bf16.msra.mxu0 0
        %3352 = vmatprep.subr.bf16.mxu0 0
        %3353 = vmatpush1.bf16.msra.mxu0 0
        %3354 = vmatprep.mubr.bf16.mxu0 0
        %3355 = vmatmul.mubr.bf16.gmra.mrb[0].mxu0 %v3015
        %v3356 = vpop.f32.mrb[0].mxu0
        %v3357 = vadd.f32 0.0, %v3356
        %v3358 = vpop.f32.mrb[0].mxu0
        %v3359 = vpop.f32.mrb[0].mxu0
        %v3360 = vadd.f32 0.0, %v3359
        %v3361 = vpop.f32.mrb[0].mxu0
        %3362 = vmatprep.mubr.bf16.mxu0 0
        %3363 = vmatmul.mubr.bf16.gmra.mrb[0].mxu0 %v3016
        %v3364 = vpop.f32.mrb[0].mxu0
        %v3365 = vadd.f32 0.0, %v3364
        %v3366 = vpop.f32.mrb[0].mxu0
        %v3367 = vpop.f32.mrb[0].mxu0
        %v3368 = vadd.f32 0.0, %v3367
        %v3369 = vpop.f32.mrb[0].mxu0
        %3370 = vdwg.mxu0
        %v3371 = vmax.f32 %v3357, 0.0
        %v3372 = vmax.f32 %v3360, 0.0
        %v3373 = vmax.f32 %v3365, 0.0
        %v3374 = vmax.f32 %v3368, 0.0
        %v3375 = vpack.c.bf16 %v3372, %v3371
        %v3376 = vpack.c.bf16 %v3374, %v3373
        %s3377 = scalar_lea.vmem %s543, 448 [#allocation8]
        %v3378 = vld [vmem:[%s3377] sm:$0xf]
        %v3379 = vld [vmem:[%s3377 + $0x4] sm:$0xf]
        %v3380 = vld [vmem:[%s3377 + $0x8] sm:$0xf]
        %v3381 = vld [vmem:[%s3377 + $0xc] sm:$0xf]
        %v3382 = vld [vmem:[%s3377 + $0x10] sm:$0xf]
        %v3383 = vld [vmem:[%s3377 + $0x14] sm:$0xf]
        %v3384 = vld [vmem:[%s3377 + $0x18] sm:$0xf]
        %v3385 = vld [vmem:[%s3377 + $0x1c] sm:$0xf]
        %v3386 = vld [vmem:[%s3377 + $0x20] sm:$0xf]
        %v3387 = vld [vmem:[%s3377 + $0x24] sm:$0xf]
        %v3388 = vld [vmem:[%s3377 + $0x28] sm:$0xf]
        %v3389 = vld [vmem:[%s3377 + $0x2c] sm:$0xf]
        %v3390 = vld [vmem:[%s3377 + $0x30] sm:$0xf]
        %v3391 = vld [vmem:[%s3377 + $0x34] sm:$0xf]
        %v3392 = vld [vmem:[%s3377 + $0x38] sm:$0xf]
        %v3393 = vld [vmem:[%s3377 + $0x3c] sm:$0xf]
        %v3410 = vunpack.c.l.b16 %v3378
        %v3411 = vunpack.c.l.b16 %v3379
        %v3412 = vunpack.c.l.b16 %v3380
        %v3413 = vunpack.c.l.b16 %v3381
        %v3414 = vunpack.c.l.b16 %v3382
        %v3415 = vunpack.c.l.b16 %v3383
        %v3416 = vunpack.c.l.b16 %v3384
        %v3417 = vunpack.c.l.b16 %v3385
        %v3418 = vunpack.c.l.b16 %v3386
        %v3419 = vunpack.c.l.b16 %v3387
        %v3420 = vunpack.c.l.b16 %v3388
        %v3421 = vunpack.c.l.b16 %v3389
        %v3422 = vunpack.c.l.b16 %v3390
        %v3423 = vunpack.c.l.b16 %v3391
        %v3424 = vunpack.c.l.b16 %v3392
        %v3425 = vunpack.c.l.b16 %v3393
        %v3426 = vpack.c.b16 %v3411, %v3410
        %v3427 = vpack.c.b16 %v3413, %v3412
        %v3428 = vpack.c.b16 %v3415, %v3414
        %v3429 = vpack.c.b16 %v3417, %v3416
        %v3430 = vpack.c.b16 %v3419, %v3418
        %v3431 = vpack.c.b16 %v3421, %v3420
        %v3432 = vpack.c.b16 %v3423, %v3422
        %v3433 = vpack.c.b16 %v3425, %v3424
        %3442 = vmatprep.subr.bf16.mxu0 0
        %3443 = vmatpush1.bf16.msra.mxu0 %v3426
        %3444 = vmatprep.subr.bf16.mxu0 0
        %3445 = vmatpush1.bf16.msra.mxu0 %v3427
        %3446 = vmatprep.subr.bf16.mxu0 0
        %3447 = vmatpush1.bf16.msra.mxu0 %v3428
        %3448 = vmatprep.subr.bf16.mxu0 0
        %3449 = vmatpush1.bf16.msra.mxu0 %v3429
        %3450 = vmatprep.subr.bf16.mxu0 0
        %3451 = vmatpush1.bf16.msra.mxu0 %v3430
        %3452 = vmatprep.subr.bf16.mxu0 0
        %3453 = vmatpush1.bf16.msra.mxu0 %v3431
        %3454 = vmatprep.subr.bf16.mxu0 0
        %3455 = vmatpush1.bf16.msra.mxu0 %v3432
        %3456 = vmatprep.subr.bf16.mxu0 0
        %3457 = vmatpush1.bf16.msra.mxu0 %v3433
        %3458 = vmatprep.subr.bf16.mxu0 0
        %3459 = vmatpush1.bf16.msra.mxu0 0
        %3460 = vmatprep.subr.bf16.mxu0 0
        %3461 = vmatpush1.bf16.msra.mxu0 0
        %3462 = vmatprep.subr.bf16.mxu0 0
        %3463 = vmatpush1.bf16.msra.mxu0 0
        %3464 = vmatprep.subr.bf16.mxu0 0
        %3465 = vmatpush1.bf16.msra.mxu0 0
        %3466 = vmatprep.subr.bf16.mxu0 0
        %3467 = vmatpush1.bf16.msra.mxu0 0
        %3468 = vmatprep.subr.bf16.mxu0 0
        %3469 = vmatpush1.bf16.msra.mxu0 0
        %3470 = vmatprep.subr.bf16.mxu0 0
        %3471 = vmatpush1.bf16.msra.mxu0 0
        %3472 = vmatprep.subr.bf16.mxu0 0
        %3473 = vmatpush1.bf16.msra.mxu0 0
        %3474 = vmatprep.mubr.bf16.mxu0 0
        %3475 = vmatmul.mubr.bf16.gmra.mrb[0].mxu0 %v3135
        %v3476 = vpop.f32.mrb[0].mxu0
        %v3477 = vadd.f32 0.0, %v3476
        %v3478 = vpop.f32.mrb[0].mxu0
        %v3479 = vpop.f32.mrb[0].mxu0
        %v3480 = vadd.f32 0.0, %v3479
        %v3481 = vpop.f32.mrb[0].mxu0
        %3482 = vmatprep.mubr.bf16.mxu0 0
        %3483 = vmatmul.mubr.bf16.gmra.mrb[0].mxu0 %v3136
        %v3484 = vpop.f32.mrb[0].mxu0
        %v3485 = vadd.f32 0.0, %v3484
        %v3486 = vpop.f32.mrb[0].mxu0
        %v3487 = vpop.f32.mrb[0].mxu0
        %v3488 = vadd.f32 0.0, %v3487
        %v3489 = vpop.f32.mrb[0].mxu0
        %3490 = vdwg.mxu0
        %v3491 = vmax.f32 %v3477, 0.0
        %v3492 = vmax.f32 %v3480, 0.0
        %v3493 = vmax.f32 %v3485, 0.0
        %v3494 = vmax.f32 %v3488, 0.0
        %v3495 = vpack.c.bf16 %v3492, %v3491
        %v3496 = vpack.c.bf16 %v3494, %v3493
        %s3497 = scalar_lea.vmem %s556, 448 [#allocation11]
        %v3498 = vld [vmem:[%s3497] sm:$0xf]
        %v3499 = vld [vmem:[%s3497 + $0x4] sm:$0xf]
        %v3500 = vld [vmem:[%s3497 + $0x8] sm:$0xf]
        %v3501 = vld [vmem:[%s3497 + $0xc] sm:$0xf]
        %v3502 = vld [vmem:[%s3497 + $0x10] sm:$0xf]
        %v3503 = vld [vmem:[%s3497 + $0x14] sm:$0xf]
        %v3504 = vld [vmem:[%s3497 + $0x18] sm:$0xf]
        %v3505 = vld [vmem:[%s3497 + $0x1c] sm:$0xf]
        %v3506 = vld [vmem:[%s3497 + $0x20] sm:$0xf]
        %v3507 = vld [vmem:[%s3497 + $0x24] sm:$0xf]
        %v3508 = vld [vmem:[%s3497 + $0x28] sm:$0xf]
        %v3509 = vld [vmem:[%s3497 + $0x2c] sm:$0xf]
        %v3510 = vld [vmem:[%s3497 + $0x30] sm:$0xf]
        %v3511 = vld [vmem:[%s3497 + $0x34] sm:$0xf]
        %v3512 = vld [vmem:[%s3497 + $0x38] sm:$0xf]
        %v3513 = vld [vmem:[%s3497 + $0x3c] sm:$0xf]
        %v3530 = vunpack.c.l.b16 %v3498
        %v3531 = vunpack.c.l.b16 %v3499
        %v3532 = vunpack.c.l.b16 %v3500
        %v3533 = vunpack.c.l.b16 %v3501
        %v3534 = vunpack.c.l.b16 %v3502
        %v3535 = vunpack.c.l.b16 %v3503
        %v3536 = vunpack.c.l.b16 %v3504
        %v3537 = vunpack.c.l.b16 %v3505
        %v3538 = vunpack.c.l.b16 %v3506
        %v3539 = vunpack.c.l.b16 %v3507
        %v3540 = vunpack.c.l.b16 %v3508
        %v3541 = vunpack.c.l.b16 %v3509
        %v3542 = vunpack.c.l.b16 %v3510
        %v3543 = vunpack.c.l.b16 %v3511
        %v3544 = vunpack.c.l.b16 %v3512
        %v3545 = vunpack.c.l.b16 %v3513
        %v3546 = vpack.c.b16 %v3531, %v3530
        %v3547 = vpack.c.b16 %v3533, %v3532
        %v3548 = vpack.c.b16 %v3535, %v3534
        %v3549 = vpack.c.b16 %v3537, %v3536
        %v3550 = vpack.c.b16 %v3539, %v3538
        %v3551 = vpack.c.b16 %v3541, %v3540
        %v3552 = vpack.c.b16 %v3543, %v3542
        %v3553 = vpack.c.b16 %v3545, %v3544
        %3562 = vmatprep.subr.bf16.mxu0 0
        %3563 = vmatpush1.bf16.msra.mxu0 %v3546
        %3564 = vmatprep.subr.bf16.mxu0 0
        %3565 = vmatpush1.bf16.msra.mxu0 %v3547
        %3566 = vmatprep.subr.bf16.mxu0 0
        %3567 = vmatpush1.bf16.msra.mxu0 %v3548
        %3568 = vmatprep.subr.bf16.mxu0 0
        %3569 = vmatpush1.bf16.msra.mxu0 %v3549
        %3570 = vmatprep.subr.bf16.mxu0 0
        %3571 = vmatpush1.bf16.msra.mxu0 %v3550
        %3572 = vmatprep.subr.bf16.mxu0 0
        %3573 = vmatpush1.bf16.msra.mxu0 %v3551
        %3574 = vmatprep.subr.bf16.mxu0 0
        %3575 = vmatpush1.bf16.msra.mxu0 %v3552
        %3576 = vmatprep.subr.bf16.mxu0 0
        %3577 = vmatpush1.bf16.msra.mxu0 %v3553
        %3578 = vmatprep.subr.bf16.mxu0 0
        %3579 = vmatpush1.bf16.msra.mxu0 0
        %3580 = vmatprep.subr.bf16.mxu0 0
        %3581 = vmatpush1.bf16.msra.mxu0 0
        %3582 = vmatprep.subr.bf16.mxu0 0
        %3583 = vmatpush1.bf16.msra.mxu0 0
        %3584 = vmatprep.subr.bf16.mxu0 0
        %3585 = vmatpush1.bf16.msra.mxu0 0
        %3586 = vmatprep.subr.bf16.mxu0 0
        %3587 = vmatpush1.bf16.msra.mxu0 0
        %3588 = vmatprep.subr.bf16.mxu0 0
        %3589 = vmatpush1.bf16.msra.mxu0 0
        %3590 = vmatprep.subr.bf16.mxu0 0
        %3591 = vmatpush1.bf16.msra.mxu0 0
        %3592 = vmatprep.subr.bf16.mxu0 0
        %3593 = vmatpush1.bf16.msra.mxu0 0
        %3594 = vmatprep.mubr.bf16.mxu0 0
        %3595 = vmatmul.mubr.bf16.gmra.mrb[0].mxu0 %v3255
        %v3596 = vpop.f32.mrb[0].mxu0
        %v3597 = vadd.f32 0.0, %v3596
        %v3598 = vpop.f32.mrb[0].mxu0
        %v3599 = vpop.f32.mrb[0].mxu0
        %v3600 = vadd.f32 0.0, %v3599
        %v3601 = vpop.f32.mrb[0].mxu0
        %3602 = vmatprep.mubr.bf16.mxu0 0
        %3603 = vmatmul.mubr.bf16.gmra.mrb[0].mxu0 %v3256
        %v3604 = vpop.f32.mrb[0].mxu0
        %v3605 = vadd.f32 0.0, %v3604
        %v3606 = vpop.f32.mrb[0].mxu0
        %v3607 = vpop.f32.mrb[0].mxu0
        %v3608 = vadd.f32 0.0, %v3607
        %v3609 = vpop.f32.mrb[0].mxu0
        %3610 = vdwg.mxu0
        %v3611 = vmax.f32 %v3597, 0.0
        %v3612 = vmax.f32 %v3600, 0.0
        %v3613 = vmax.f32 %v3605, 0.0
        %v3614 = vmax.f32 %v3608, 0.0
        %v3615 = vpack.c.bf16 %v3612, %v3611
        %v3616 = vpack.c.bf16 %v3614, %v3613
        %s3617 = scalar_lea.vmem %s569, 448 [#allocation14]
        %v3618 = vld [vmem:[%s3617] sm:$0xf]
        %v3619 = vld [vmem:[%s3617 + $0x4] sm:$0xf]
        %v3620 = vld [vmem:[%s3617 + $0x8] sm:$0xf]
        %v3621 = vld [vmem:[%s3617 + $0xc] sm:$0xf]
        %v3622 = vld [vmem:[%s3617 + $0x10] sm:$0xf]
        %v3623 = vld [vmem:[%s3617 + $0x14] sm:$0xf]
        %v3624 = vld [vmem:[%s3617 + $0x18] sm:$0xf]
        %v3625 = vld [vmem:[%s3617 + $0x1c] sm:$0xf]
        %v3626 = vld [vmem:[%s3617 + $0x20] sm:$0xf]
        %v3627 = vld [vmem:[%s3617 + $0x24] sm:$0xf]
        %v3628 = vld [vmem:[%s3617 + $0x28] sm:$0xf]
        %v3629 = vld [vmem:[%s3617 + $0x2c] sm:$0xf]
        %v3630 = vld [vmem:[%s3617 + $0x30] sm:$0xf]
        %v3631 = vld [vmem:[%s3617 + $0x34] sm:$0xf]
        %v3632 = vld [vmem:[%s3617 + $0x38] sm:$0xf]
        %v3633 = vld [vmem:[%s3617 + $0x3c] sm:$0xf]
        %v3650 = vunpack.c.l.b16 %v3618
        %v3651 = vunpack.c.l.b16 %v3619
        %v3652 = vunpack.c.l.b16 %v3620
        %v3653 = vunpack.c.l.b16 %v3621
        %v3654 = vunpack.c.l.b16 %v3622
        %v3655 = vunpack.c.l.b16 %v3623
        %v3656 = vunpack.c.l.b16 %v3624
        %v3657 = vunpack.c.l.b16 %v3625
        %v3658 = vunpack.c.l.b16 %v3626
        %v3659 = vunpack.c.l.b16 %v3627
        %v3660 = vunpack.c.l.b16 %v3628
        %v3661 = vunpack.c.l.b16 %v3629
        %v3662 = vunpack.c.l.b16 %v3630
        %v3663 = vunpack.c.l.b16 %v3631
        %v3664 = vunpack.c.l.b16 %v3632
        %v3665 = vunpack.c.l.b16 %v3633
        %v3666 = vpack.c.b16 %v3651, %v3650
        %v3667 = vpack.c.b16 %v3653, %v3652
        %v3668 = vpack.c.b16 %v3655, %v3654
        %v3669 = vpack.c.b16 %v3657, %v3656
        %v3670 = vpack.c.b16 %v3659, %v3658
        %v3671 = vpack.c.b16 %v3661, %v3660
        %v3672 = vpack.c.b16 %v3663, %v3662
        %v3673 = vpack.c.b16 %v3665, %v3664
        %3682 = vmatprep.subr.bf16.mxu0 0
        %3683 = vmatpush1.bf16.msra.mxu0 %v3666
        %3684 = vmatprep.subr.bf16.mxu0 0
        %3685 = vmatpush1.bf16.msra.mxu0 %v3667
        %3686 = vmatprep.subr.bf16.mxu0 0
        %3687 = vmatpush1.bf16.msra.mxu0 %v3668
        %3688 = vmatprep.subr.bf16.mxu0 0
        %3689 = vmatpush1.bf16.msra.mxu0 %v3669
        %3690 = vmatprep.subr.bf16.mxu0 0
        %3691 = vmatpush1.bf16.msra.mxu0 %v3670
        %3692 = vmatprep.subr.bf16.mxu0 0
        %3693 = vmatpush1.bf16.msra.mxu0 %v3671
        %3694 = vmatprep.subr.bf16.mxu0 0
        %3695 = vmatpush1.bf16.msra.mxu0 %v3672
        %3696 = vmatprep.subr.bf16.mxu0 0
        %3697 = vmatpush1.bf16.msra.mxu0 %v3673
        %3698 = vmatprep.subr.bf16.mxu0 0
        %3699 = vmatpush1.bf16.msra.mxu0 0
        %3700 = vmatprep.subr.bf16.mxu0 0
        %3701 = vmatpush1.bf16.msra.mxu0 0
        %3702 = vmatprep.subr.bf16.mxu0 0
        %3703 = vmatpush1.bf16.msra.mxu0 0
        %3704 = vmatprep.subr.bf16.mxu0 0
        %3705 = vmatpush1.bf16.msra.mxu0 0
        %3706 = vmatprep.subr.bf16.mxu0 0
        %3707 = vmatpush1.bf16.msra.mxu0 0
        %3708 = vmatprep.subr.bf16.mxu0 0
        %3709 = vmatpush1.bf16.msra.mxu0 0
        %3710 = vmatprep.subr.bf16.mxu0 0
        %3711 = vmatpush1.bf16.msra.mxu0 0
        %3712 = vmatprep.subr.bf16.mxu0 0
        %3713 = vmatpush1.bf16.msra.mxu0 0
        %3714 = vmatprep.mubr.bf16.mxu0 0
        %3715 = vmatmul.mubr.bf16.gmra.mrb[0].mxu0 %v3375
        %v3716 = vpop.f32.mrb[0].mxu0
        %v3717 = vadd.f32 0.0, %v3716
        %v3718 = vpop.f32.mrb[0].mxu0
        %v3719 = vpop.f32.mrb[0].mxu0
        %v3720 = vadd.f32 0.0, %v3719
        %v3721 = vpop.f32.mrb[0].mxu0
        %3722 = vmatprep.mubr.bf16.mxu0 0
        %3723 = vmatmul.mubr.bf16.gmra.mrb[0].mxu0 %v3376
        %v3724 = vpop.f32.mrb[0].mxu0
        %v3725 = vadd.f32 0.0, %v3724
        %v3726 = vpop.f32.mrb[0].mxu0
        %v3727 = vpop.f32.mrb[0].mxu0
        %v3728 = vadd.f32 0.0, %v3727
        %v3729 = vpop.f32.mrb[0].mxu0
        %3730 = vdwg.mxu0
        %v3731 = vmax.f32 %v3717, 0.0
        %v3732 = vmax.f32 %v3720, 0.0
        %v3733 = vmax.f32 %v3725, 0.0
        %v3734 = vmax.f32 %v3728, 0.0
        %v3735 = vpack.c.bf16 %v3732, %v3731
        %v3736 = vpack.c.bf16 %v3734, %v3733
        %s3737 = scalar_lea.vmem %s543, 512 [#allocation8]
        %v3738 = vld [vmem:[%s3737] sm:$0xf]
        %v3739 = vld [vmem:[%s3737 + $0x4] sm:$0xf]
        %v3740 = vld [vmem:[%s3737 + $0x8] sm:$0xf]
        %v3741 = vld [vmem:[%s3737 + $0xc] sm:$0xf]
        %v3742 = vld [vmem:[%s3737 + $0x10] sm:$0xf]
        %v3743 = vld [vmem:[%s3737 + $0x14] sm:$0xf]
        %v3744 = vld [vmem:[%s3737 + $0x18] sm:$0xf]
        %v3745 = vld [vmem:[%s3737 + $0x1c] sm:$0xf]
        %v3746 = vld [vmem:[%s3737 + $0x20] sm:$0xf]
        %v3747 = vld [vmem:[%s3737 + $0x24] sm:$0xf]
        %v3748 = vld [vmem:[%s3737 + $0x28] sm:$0xf]
        %v3749 = vld [vmem:[%s3737 + $0x2c] sm:$0xf]
        %v3750 = vld [vmem:[%s3737 + $0x30] sm:$0xf]
        %v3751 = vld [vmem:[%s3737 + $0x34] sm:$0xf]
        %v3752 = vld [vmem:[%s3737 + $0x38] sm:$0xf]
        %v3753 = vld [vmem:[%s3737 + $0x3c] sm:$0xf]
        %v3770 = vunpack.c.l.b16 %v3738
        %v3771 = vunpack.c.l.b16 %v3739
        %v3772 = vunpack.c.l.b16 %v3740
        %v3773 = vunpack.c.l.b16 %v3741
        %v3774 = vunpack.c.l.b16 %v3742
        %v3775 = vunpack.c.l.b16 %v3743
        %v3776 = vunpack.c.l.b16 %v3744
        %v3777 = vunpack.c.l.b16 %v3745
        %v3778 = vunpack.c.l.b16 %v3746
        %v3779 = vunpack.c.l.b16 %v3747
        %v3780 = vunpack.c.l.b16 %v3748
        %v3781 = vunpack.c.l.b16 %v3749
        %v3782 = vunpack.c.l.b16 %v3750
        %v3783 = vunpack.c.l.b16 %v3751
        %v3784 = vunpack.c.l.b16 %v3752
        %v3785 = vunpack.c.l.b16 %v3753
        %v3786 = vpack.c.b16 %v3771, %v3770
        %v3787 = vpack.c.b16 %v3773, %v3772
        %v3788 = vpack.c.b16 %v3775, %v3774
        %v3789 = vpack.c.b16 %v3777, %v3776
        %v3790 = vpack.c.b16 %v3779, %v3778
        %v3791 = vpack.c.b16 %v3781, %v3780
        %v3792 = vpack.c.b16 %v3783, %v3782
        %v3793 = vpack.c.b16 %v3785, %v3784
        %3802 = vmatprep.subr.bf16.mxu0 0
        %3803 = vmatpush1.bf16.msra.mxu0 %v3786
        %3804 = vmatprep.subr.bf16.mxu0 0
        %3805 = vmatpush1.bf16.msra.mxu0 %v3787
        %3806 = vmatprep.subr.bf16.mxu0 0
        %3807 = vmatpush1.bf16.msra.mxu0 %v3788
        %3808 = vmatprep.subr.bf16.mxu0 0
        %3809 = vmatpush1.bf16.msra.mxu0 %v3789
        %3810 = vmatprep.subr.bf16.mxu0 0
        %3811 = vmatpush1.bf16.msra.mxu0 %v3790
        %3812 = vmatprep.subr.bf16.mxu0 0
        %3813 = vmatpush1.bf16.msra.mxu0 %v3791
        %3814 = vmatprep.subr.bf16.mxu0 0
        %3815 = vmatpush1.bf16.msra.mxu0 %v3792
        %3816 = vmatprep.subr.bf16.mxu0 0
        %3817 = vmatpush1.bf16.msra.mxu0 %v3793
        %3818 = vmatprep.subr.bf16.mxu0 0
        %3819 = vmatpush1.bf16.msra.mxu0 0
        %3820 = vmatprep.subr.bf16.mxu0 0
        %3821 = vmatpush1.bf16.msra.mxu0 0
        %3822 = vmatprep.subr.bf16.mxu0 0
        %3823 = vmatpush1.bf16.msra.mxu0 0
        %3824 = vmatprep.subr.bf16.mxu0 0
        %3825 = vmatpush1.bf16.msra.mxu0 0
        %3826 = vmatprep.subr.bf16.mxu0 0
        %3827 = vmatpush1.bf16.msra.mxu0 0
        %3828 = vmatprep.subr.bf16.mxu0 0
        %3829 = vmatpush1.bf16.msra.mxu0 0
        %3830 = vmatprep.subr.bf16.mxu0 0
        %3831 = vmatpush1.bf16.msra.mxu0 0
        %3832 = vmatprep.subr.bf16.mxu0 0
        %3833 = vmatpush1.bf16.msra.mxu0 0
        %3834 = vmatprep.mubr.bf16.mxu0 0
        %3835 = vmatmul.mubr.bf16.gmra.mrb[0].mxu0 %v3495
        %v3836 = vpop.f32.mrb[0].mxu0
        %v3837 = vadd.f32 0.0, %v3836
        %v3838 = vpop.f32.mrb[0].mxu0
        %v3839 = vpop.f32.mrb[0].mxu0
        %v3840 = vadd.f32 0.0, %v3839
        %v3841 = vpop.f32.mrb[0].mxu0
        %3842 = vmatprep.mubr.bf16.mxu0 0
        %3843 = vmatmul.mubr.bf16.gmra.mrb[0].mxu0 %v3496
        %v3844 = vpop.f32.mrb[0].mxu0
        %v3845 = vadd.f32 0.0, %v3844
        %v3846 = vpop.f32.mrb[0].mxu0
        %v3847 = vpop.f32.mrb[0].mxu0
        %v3848 = vadd.f32 0.0, %v3847
        %v3849 = vpop.f32.mrb[0].mxu0
        %3850 = vdwg.mxu0
        %v3851 = vmax.f32 %v3837, 0.0
        %v3852 = vmax.f32 %v3840, 0.0
        %v3853 = vmax.f32 %v3845, 0.0
        %v3854 = vmax.f32 %v3848, 0.0
        %v3855 = vpack.c.bf16 %v3852, %v3851
        %v3856 = vpack.c.bf16 %v3854, %v3853
        %s3857 = scalar_lea.vmem %s556, 512 [#allocation11]
        %v3858 = vld [vmem:[%s3857] sm:$0xf]
        %v3859 = vld [vmem:[%s3857 + $0x4] sm:$0xf]
        %v3860 = vld [vmem:[%s3857 + $0x8] sm:$0xf]
        %v3861 = vld [vmem:[%s3857 + $0xc] sm:$0xf]
        %v3862 = vld [vmem:[%s3857 + $0x10] sm:$0xf]
        %v3863 = vld [vmem:[%s3857 + $0x14] sm:$0xf]
        %v3864 = vld [vmem:[%s3857 + $0x18] sm:$0xf]
        %v3865 = vld [vmem:[%s3857 + $0x1c] sm:$0xf]
        %v3866 = vld [vmem:[%s3857 + $0x20] sm:$0xf]
        %v3867 = vld [vmem:[%s3857 + $0x24] sm:$0xf]
        %v3868 = vld [vmem:[%s3857 + $0x28] sm:$0xf]
        %v3869 = vld [vmem:[%s3857 + $0x2c] sm:$0xf]
        %v3870 = vld [vmem:[%s3857 + $0x30] sm:$0xf]
        %v3871 = vld [vmem:[%s3857 + $0x34] sm:$0xf]
        %v3872 = vld [vmem:[%s3857 + $0x38] sm:$0xf]
        %v3873 = vld [vmem:[%s3857 + $0x3c] sm:$0xf]
        %v3890 = vunpack.c.l.b16 %v3858
        %v3891 = vunpack.c.l.b16 %v3859
        %v3892 = vunpack.c.l.b16 %v3860
        %v3893 = vunpack.c.l.b16 %v3861
        %v3894 = vunpack.c.l.b16 %v3862
        %v3895 = vunpack.c.l.b16 %v3863
        %v3896 = vunpack.c.l.b16 %v3864
        %v3897 = vunpack.c.l.b16 %v3865
        %v3898 = vunpack.c.l.b16 %v3866
        %v3899 = vunpack.c.l.b16 %v3867
        %v3900 = vunpack.c.l.b16 %v3868
        %v3901 = vunpack.c.l.b16 %v3869
        %v3902 = vunpack.c.l.b16 %v3870
        %v3903 = vunpack.c.l.b16 %v3871
        %v3904 = vunpack.c.l.b16 %v3872
        %v3905 = vunpack.c.l.b16 %v3873
        %v3906 = vpack.c.b16 %v3891, %v3890
        %v3907 = vpack.c.b16 %v3893, %v3892
        %v3908 = vpack.c.b16 %v3895, %v3894
        %v3909 = vpack.c.b16 %v3897, %v3896
        %v3910 = vpack.c.b16 %v3899, %v3898
        %v3911 = vpack.c.b16 %v3901, %v3900
        %v3912 = vpack.c.b16 %v3903, %v3902
        %v3913 = vpack.c.b16 %v3905, %v3904
        %3922 = vmatprep.subr.bf16.mxu0 0
        %3923 = vmatpush1.bf16.msra.mxu0 %v3906
        %3924 = vmatprep.subr.bf16.mxu0 0
        %3925 = vmatpush1.bf16.msra.mxu0 %v3907
        %3926 = vmatprep.subr.bf16.mxu0 0
        %3927 = vmatpush1.bf16.msra.mxu0 %v3908
        %3928 = vmatprep.subr.bf16.mxu0 0
        %3929 = vmatpush1.bf16.msra.mxu0 %v3909
        %3930 = vmatprep.subr.bf16.mxu0 0
        %3931 = vmatpush1.bf16.msra.mxu0 %v3910
        %3932 = vmatprep.subr.bf16.mxu0 0
        %3933 = vmatpush1.bf16.msra.mxu0 %v3911
        %3934 = vmatprep.subr.bf16.mxu0 0
        %3935 = vmatpush1.bf16.msra.mxu0 %v3912
        %3936 = vmatprep.subr.bf16.mxu0 0
        %3937 = vmatpush1.bf16.msra.mxu0 %v3913
        %3938 = vmatprep.subr.bf16.mxu0 0
        %3939 = vmatpush1.bf16.msra.mxu0 0
        %3940 = vmatprep.subr.bf16.mxu0 0
        %3941 = vmatpush1.bf16.msra.mxu0 0
        %3942 = vmatprep.subr.bf16.mxu0 0
        %3943 = vmatpush1.bf16.msra.mxu0 0
        %3944 = vmatprep.subr.bf16.mxu0 0
        %3945 = vmatpush1.bf16.msra.mxu0 0
        %3946 = vmatprep.subr.bf16.mxu0 0
        %3947 = vmatpush1.bf16.msra.mxu0 0
        %3948 = vmatprep.subr.bf16.mxu0 0
        %3949 = vmatpush1.bf16.msra.mxu0 0
        %3950 = vmatprep.subr.bf16.mxu0 0
        %3951 = vmatpush1.bf16.msra.mxu0 0
        %3952 = vmatprep.subr.bf16.mxu0 0
        %3953 = vmatpush1.bf16.msra.mxu0 0
        %3954 = vmatprep.mubr.bf16.mxu0 0
        %3955 = vmatmul.mubr.bf16.gmra.mrb[0].mxu0 %v3615
        %v3956 = vpop.f32.mrb[0].mxu0
        %v3957 = vadd.f32 0.0, %v3956
        %v3958 = vpop.f32.mrb[0].mxu0
        %v3959 = vpop.f32.mrb[0].mxu0
        %v3960 = vadd.f32 0.0, %v3959
        %v3961 = vpop.f32.mrb[0].mxu0
        %3962 = vmatprep.mubr.bf16.mxu0 0
        %3963 = vmatmul.mubr.bf16.gmra.mrb[0].mxu0 %v3616
        %v3964 = vpop.f32.mrb[0].mxu0
        %v3965 = vadd.f32 0.0, %v3964
        %v3966 = vpop.f32.mrb[0].mxu0
        %v3967 = vpop.f32.mrb[0].mxu0
        %v3968 = vadd.f32 0.0, %v3967
        %v3969 = vpop.f32.mrb[0].mxu0
        %3970 = vdwg.mxu0
        %v3971 = vmax.f32 %v3957, 0.0
        %v3972 = vmax.f32 %v3960, 0.0
        %v3973 = vmax.f32 %v3965, 0.0
        %v3974 = vmax.f32 %v3968, 0.0
        %v3975 = vpack.c.bf16 %v3972, %v3971
        %v3976 = vpack.c.bf16 %v3974, %v3973
        %s3977 = scalar_lea.vmem %s569, 512 [#allocation14]
        %v3978 = vld [vmem:[%s3977] sm:$0xf]
        %v3979 = vld [vmem:[%s3977 + $0x4] sm:$0xf]
        %v3980 = vld [vmem:[%s3977 + $0x8] sm:$0xf]
        %v3981 = vld [vmem:[%s3977 + $0xc] sm:$0xf]
        %v3982 = vld [vmem:[%s3977 + $0x10] sm:$0xf]
        %v3983 = vld [vmem:[%s3977 + $0x14] sm:$0xf]
        %v3984 = vld [vmem:[%s3977 + $0x18] sm:$0xf]
        %v3985 = vld [vmem:[%s3977 + $0x1c] sm:$0xf]
        %v3986 = vld [vmem:[%s3977 + $0x20] sm:$0xf]
        %v3987 = vld [vmem:[%s3977 + $0x24] sm:$0xf]
        %v3988 = vld [vmem:[%s3977 + $0x28] sm:$0xf]
        %v3989 = vld [vmem:[%s3977 + $0x2c] sm:$0xf]
        %v3990 = vld [vmem:[%s3977 + $0x30] sm:$0xf]
        %v3991 = vld [vmem:[%s3977 + $0x34] sm:$0xf]
        %v3992 = vld [vmem:[%s3977 + $0x38] sm:$0xf]
        %v3993 = vld [vmem:[%s3977 + $0x3c] sm:$0xf]
        %v4010 = vunpack.c.l.b16 %v3978
        %v4011 = vunpack.c.l.b16 %v3979
        %v4012 = vunpack.c.l.b16 %v3980
        %v4013 = vunpack.c.l.b16 %v3981
        %v4014 = vunpack.c.l.b16 %v3982
        %v4015 = vunpack.c.l.b16 %v3983
        %v4016 = vunpack.c.l.b16 %v3984
        %v4017 = vunpack.c.l.b16 %v3985
        %v4018 = vunpack.c.l.b16 %v3986
        %v4019 = vunpack.c.l.b16 %v3987
        %v4020 = vunpack.c.l.b16 %v3988
        %v4021 = vunpack.c.l.b16 %v3989
        %v4022 = vunpack.c.l.b16 %v3990
        %v4023 = vunpack.c.l.b16 %v3991
        %v4024 = vunpack.c.l.b16 %v3992
        %v4025 = vunpack.c.l.b16 %v3993
        %v4026 = vpack.c.b16 %v4011, %v4010
        %v4027 = vpack.c.b16 %v4013, %v4012
        %v4028 = vpack.c.b16 %v4015, %v4014
        %v4029 = vpack.c.b16 %v4017, %v4016
        %v4030 = vpack.c.b16 %v4019, %v4018
        %v4031 = vpack.c.b16 %v4021, %v4020
        %v4032 = vpack.c.b16 %v4023, %v4022
        %v4033 = vpack.c.b16 %v4025, %v4024
        %4042 = vmatprep.subr.bf16.mxu0 0
        %4043 = vmatpush1.bf16.msra.mxu0 %v4026
        %4044 = vmatprep.subr.bf16.mxu0 0
        %4045 = vmatpush1.bf16.msra.mxu0 %v4027
        %4046 = vmatprep.subr.bf16.mxu0 0
        %4047 = vmatpush1.bf16.msra.mxu0 %v4028
        %4048 = vmatprep.subr.bf16.mxu0 0
        %4049 = vmatpush1.bf16.msra.mxu0 %v4029
        %4050 = vmatprep.subr.bf16.mxu0 0
        %4051 = vmatpush1.bf16.msra.mxu0 %v4030
        %4052 = vmatprep.subr.bf16.mxu0 0
        %4053 = vmatpush1.bf16.msra.mxu0 %v4031
        %4054 = vmatprep.subr.bf16.mxu0 0
        %4055 = vmatpush1.bf16.msra.mxu0 %v4032
        %4056 = vmatprep.subr.bf16.mxu0 0
        %4057 = vmatpush1.bf16.msra.mxu0 %v4033
        %4058 = vmatprep.subr.bf16.mxu0 0
        %4059 = vmatpush1.bf16.msra.mxu0 0
        %4060 = vmatprep.subr.bf16.mxu0 0
        %4061 = vmatpush1.bf16.msra.mxu0 0
        %4062 = vmatprep.subr.bf16.mxu0 0
        %4063 = vmatpush1.bf16.msra.mxu0 0
        %4064 = vmatprep.subr.bf16.mxu0 0
        %4065 = vmatpush1.bf16.msra.mxu0 0
        %4066 = vmatprep.subr.bf16.mxu0 0
        %4067 = vmatpush1.bf16.msra.mxu0 0
        %4068 = vmatprep.subr.bf16.mxu0 0
        %4069 = vmatpush1.bf16.msra.mxu0 0
        %4070 = vmatprep.subr.bf16.mxu0 0
        %4071 = vmatpush1.bf16.msra.mxu0 0
        %4072 = vmatprep.subr.bf16.mxu0 0
        %4073 = vmatpush1.bf16.msra.mxu0 0
        %4074 = vmatprep.mubr.bf16.mxu0 0
        %4075 = vmatmul.mubr.bf16.gmra.mrb[0].mxu0 %v3735
        %v4076 = vpop.f32.mrb[0].mxu0
        %v4077 = vadd.f32 0.0, %v4076
        %v4078 = vpop.f32.mrb[0].mxu0
        %v4079 = vpop.f32.mrb[0].mxu0
        %v4080 = vadd.f32 0.0, %v4079
        %v4081 = vpop.f32.mrb[0].mxu0
        %4082 = vmatprep.mubr.bf16.mxu0 0
        %4083 = vmatmul.mubr.bf16.gmra.mrb[0].mxu0 %v3736
        %v4084 = vpop.f32.mrb[0].mxu0
        %v4085 = vadd.f32 0.0, %v4084
        %v4086 = vpop.f32.mrb[0].mxu0
        %v4087 = vpop.f32.mrb[0].mxu0
        %v4088 = vadd.f32 0.0, %v4087
        %v4089 = vpop.f32.mrb[0].mxu0
        %4090 = vdwg.mxu0
        %v4091 = vmax.f32 %v4077, 0.0
        %v4092 = vmax.f32 %v4080, 0.0
        %v4093 = vmax.f32 %v4085, 0.0
        %v4094 = vmax.f32 %v4088, 0.0
        %v4095 = vpack.c.bf16 %v4092, %v4091
        %v4096 = vpack.c.bf16 %v4094, %v4093
        %s4097 = scalar_lea.vmem %s543, 576 [#allocation8]
        %v4098 = vld [vmem:[%s4097] sm:$0xf]
        %v4099 = vld [vmem:[%s4097 + $0x4] sm:$0xf]
        %v4100 = vld [vmem:[%s4097 + $0x8] sm:$0xf]
        %v4101 = vld [vmem:[%s4097 + $0xc] sm:$0xf]
        %v4102 = vld [vmem:[%s4097 + $0x10] sm:$0xf]
        %v4103 = vld [vmem:[%s4097 + $0x14] sm:$0xf]
        %v4104 = vld [vmem:[%s4097 + $0x18] sm:$0xf]
        %v4105 = vld [vmem:[%s4097 + $0x1c] sm:$0xf]
        %v4106 = vld [vmem:[%s4097 + $0x20] sm:$0xf]
        %v4107 = vld [vmem:[%s4097 + $0x24] sm:$0xf]
        %v4108 = vld [vmem:[%s4097 + $0x28] sm:$0xf]
        %v4109 = vld [vmem:[%s4097 + $0x2c] sm:$0xf]
        %v4110 = vld [vmem:[%s4097 + $0x30] sm:$0xf]
        %v4111 = vld [vmem:[%s4097 + $0x34] sm:$0xf]
        %v4112 = vld [vmem:[%s4097 + $0x38] sm:$0xf]
        %v4113 = vld [vmem:[%s4097 + $0x3c] sm:$0xf]
        %v4130 = vunpack.c.l.b16 %v4098
        %v4131 = vunpack.c.l.b16 %v4099
        %v4132 = vunpack.c.l.b16 %v4100
        %v4133 = vunpack.c.l.b16 %v4101
        %v4134 = vunpack.c.l.b16 %v4102
        %v4135 = vunpack.c.l.b16 %v4103
        %v4136 = vunpack.c.l.b16 %v4104
        %v4137 = vunpack.c.l.b16 %v4105
        %v4138 = vunpack.c.l.b16 %v4106
        %v4139 = vunpack.c.l.b16 %v4107
        %v4140 = vunpack.c.l.b16 %v4108
        %v4141 = vunpack.c.l.b16 %v4109
        %v4142 = vunpack.c.l.b16 %v4110
        %v4143 = vunpack.c.l.b16 %v4111
        %v4144 = vunpack.c.l.b16 %v4112
        %v4145 = vunpack.c.l.b16 %v4113
        %v4146 = vpack.c.b16 %v4131, %v4130
        %v4147 = vpack.c.b16 %v4133, %v4132
        %v4148 = vpack.c.b16 %v4135, %v4134
        %v4149 = vpack.c.b16 %v4137, %v4136
        %v4150 = vpack.c.b16 %v4139, %v4138
        %v4151 = vpack.c.b16 %v4141, %v4140
        %v4152 = vpack.c.b16 %v4143, %v4142
        %v4153 = vpack.c.b16 %v4145, %v4144
        %4162 = vmatprep.subr.bf16.mxu0 0
        %4163 = vmatpush1.bf16.msra.mxu0 %v4146
        %4164 = vmatprep.subr.bf16.mxu0 0
        %4165 = vmatpush1.bf16.msra.mxu0 %v4147
        %4166 = vmatprep.subr.bf16.mxu0 0
        %4167 = vmatpush1.bf16.msra.mxu0 %v4148
        %4168 = vmatprep.subr.bf16.mxu0 0
        %4169 = vmatpush1.bf16.msra.mxu0 %v4149
        %4170 = vmatprep.subr.bf16.mxu0 0
        %4171 = vmatpush1.bf16.msra.mxu0 %v4150
        %4172 = vmatprep.subr.bf16.mxu0 0
        %4173 = vmatpush1.bf16.msra.mxu0 %v4151
        %4174 = vmatprep.subr.bf16.mxu0 0
        %4175 = vmatpush1.bf16.msra.mxu0 %v4152
        %4176 = vmatprep.subr.bf16.mxu0 0
        %4177 = vmatpush1.bf16.msra.mxu0 %v4153
        %4178 = vmatprep.subr.bf16.mxu0 0
        %4179 = vmatpush1.bf16.msra.mxu0 0
        %4180 = vmatprep.subr.bf16.mxu0 0
        %4181 = vmatpush1.bf16.msra.mxu0 0
        %4182 = vmatprep.subr.bf16.mxu0 0
        %4183 = vmatpush1.bf16.msra.mxu0 0
        %4184 = vmatprep.subr.bf16.mxu0 0
        %4185 = vmatpush1.bf16.msra.mxu0 0
        %4186 = vmatprep.subr.bf16.mxu0 0
        %4187 = vmatpush1.bf16.msra.mxu0 0
        %4188 = vmatprep.subr.bf16.mxu0 0
        %4189 = vmatpush1.bf16.msra.mxu0 0
        %4190 = vmatprep.subr.bf16.mxu0 0
        %4191 = vmatpush1.bf16.msra.mxu0 0
        %4192 = vmatprep.subr.bf16.mxu0 0
        %4193 = vmatpush1.bf16.msra.mxu0 0
        %4194 = vmatprep.mubr.bf16.mxu0 0
        %4195 = vmatmul.mubr.bf16.gmra.mrb[0].mxu0 %v3855
        %v4196 = vpop.f32.mrb[0].mxu0
        %v4197 = vadd.f32 0.0, %v4196
        %v4198 = vpop.f32.mrb[0].mxu0
        %v4199 = vpop.f32.mrb[0].mxu0
        %v4200 = vadd.f32 0.0, %v4199
        %v4201 = vpop.f32.mrb[0].mxu0
        %4202 = vmatprep.mubr.bf16.mxu0 0
        %4203 = vmatmul.mubr.bf16.gmra.mrb[0].mxu0 %v3856
        %v4204 = vpop.f32.mrb[0].mxu0
        %v4205 = vadd.f32 0.0, %v4204
        %v4206 = vpop.f32.mrb[0].mxu0
        %v4207 = vpop.f32.mrb[0].mxu0
        %v4208 = vadd.f32 0.0, %v4207
        %v4209 = vpop.f32.mrb[0].mxu0
        %4210 = vdwg.mxu0
        %v4211 = vmax.f32 %v4197, 0.0
        %v4212 = vmax.f32 %v4200, 0.0
        %v4213 = vmax.f32 %v4205, 0.0
        %v4214 = vmax.f32 %v4208, 0.0
        %v4215 = vpack.c.bf16 %v4212, %v4211
        %v4216 = vpack.c.bf16 %v4214, %v4213
        %s4217 = scalar_lea.vmem %s556, 576 [#allocation11]
        %v4218 = vld [vmem:[%s4217] sm:$0xf]
        %v4219 = vld [vmem:[%s4217 + $0x4] sm:$0xf]
        %v4220 = vld [vmem:[%s4217 + $0x8] sm:$0xf]
        %v4221 = vld [vmem:[%s4217 + $0xc] sm:$0xf]
        %v4222 = vld [vmem:[%s4217 + $0x10] sm:$0xf]
        %v4223 = vld [vmem:[%s4217 + $0x14] sm:$0xf]
        %v4224 = vld [vmem:[%s4217 + $0x18] sm:$0xf]
        %v4225 = vld [vmem:[%s4217 + $0x1c] sm:$0xf]
        %v4226 = vld [vmem:[%s4217 + $0x20] sm:$0xf]
        %v4227 = vld [vmem:[%s4217 + $0x24] sm:$0xf]
        %v4228 = vld [vmem:[%s4217 + $0x28] sm:$0xf]
        %v4229 = vld [vmem:[%s4217 + $0x2c] sm:$0xf]
        %v4230 = vld [vmem:[%s4217 + $0x30] sm:$0xf]
        %v4231 = vld [vmem:[%s4217 + $0x34] sm:$0xf]
        %v4232 = vld [vmem:[%s4217 + $0x38] sm:$0xf]
        %v4233 = vld [vmem:[%s4217 + $0x3c] sm:$0xf]
        %v4250 = vunpack.c.l.b16 %v4218
        %v4251 = vunpack.c.l.b16 %v4219
        %v4252 = vunpack.c.l.b16 %v4220
        %v4253 = vunpack.c.l.b16 %v4221
        %v4254 = vunpack.c.l.b16 %v4222
        %v4255 = vunpack.c.l.b16 %v4223
        %v4256 = vunpack.c.l.b16 %v4224
        %v4257 = vunpack.c.l.b16 %v4225
        %v4258 = vunpack.c.l.b16 %v4226
        %v4259 = vunpack.c.l.b16 %v4227
        %v4260 = vunpack.c.l.b16 %v4228
        %v4261 = vunpack.c.l.b16 %v4229
        %v4262 = vunpack.c.l.b16 %v4230
        %v4263 = vunpack.c.l.b16 %v4231
        %v4264 = vunpack.c.l.b16 %v4232
        %v4265 = vunpack.c.l.b16 %v4233
        %v4266 = vpack.c.b16 %v4251, %v4250
        %v4267 = vpack.c.b16 %v4253, %v4252
        %v4268 = vpack.c.b16 %v4255, %v4254
        %v4269 = vpack.c.b16 %v4257, %v4256
        %v4270 = vpack.c.b16 %v4259, %v4258
        %v4271 = vpack.c.b16 %v4261, %v4260
        %v4272 = vpack.c.b16 %v4263, %v4262
        %v4273 = vpack.c.b16 %v4265, %v4264
        %4282 = vmatprep.subr.bf16.mxu0 0
        %4283 = vmatpush1.bf16.msra.mxu0 %v4266
        %4284 = vmatprep.subr.bf16.mxu0 0
        %4285 = vmatpush1.bf16.msra.mxu0 %v4267
        %4286 = vmatprep.subr.bf16.mxu0 0
        %4287 = vmatpush1.bf16.msra.mxu0 %v4268
        %4288 = vmatprep.subr.bf16.mxu0 0
        %4289 = vmatpush1.bf16.msra.mxu0 %v4269
        %4290 = vmatprep.subr.bf16.mxu0 0
        %4291 = vmatpush1.bf16.msra.mxu0 %v4270
        %4292 = vmatprep.subr.bf16.mxu0 0
        %4293 = vmatpush1.bf16.msra.mxu0 %v4271
        %4294 = vmatprep.subr.bf16.mxu0 0
        %4295 = vmatpush1.bf16.msra.mxu0 %v4272
        %4296 = vmatprep.subr.bf16.mxu0 0
        %4297 = vmatpush1.bf16.msra.mxu0 %v4273
        %4298 = vmatprep.subr.bf16.mxu0 0
        %4299 = vmatpush1.bf16.msra.mxu0 0
        %4300 = vmatprep.subr.bf16.mxu0 0
        %4301 = vmatpush1.bf16.msra.mxu0 0
        %4302 = vmatprep.subr.bf16.mxu0 0
        %4303 = vmatpush1.bf16.msra.mxu0 0
        %4304 = vmatprep.subr.bf16.mxu0 0
        %4305 = vmatpush1.bf16.msra.mxu0 0
        %4306 = vmatprep.subr.bf16.mxu0 0
        %4307 = vmatpush1.bf16.msra.mxu0 0
        %4308 = vmatprep.subr.bf16.mxu0 0
        %4309 = vmatpush1.bf16.msra.mxu0 0
        %4310 = vmatprep.subr.bf16.mxu0 0
        %4311 = vmatpush1.bf16.msra.mxu0 0
        %4312 = vmatprep.subr.bf16.mxu0 0
        %4313 = vmatpush1.bf16.msra.mxu0 0
        %4314 = vmatprep.mubr.bf16.mxu0 0
        %4315 = vmatmul.mubr.bf16.gmra.mrb[0].mxu0 %v3975
        %v4316 = vpop.f32.mrb[0].mxu0
        %v4317 = vadd.f32 0.0, %v4316
        %v4318 = vpop.f32.mrb[0].mxu0
        %v4319 = vpop.f32.mrb[0].mxu0
        %v4320 = vadd.f32 0.0, %v4319
        %v4321 = vpop.f32.mrb[0].mxu0
        %4322 = vmatprep.mubr.bf16.mxu0 0
        %4323 = vmatmul.mubr.bf16.gmra.mrb[0].mxu0 %v3976
        %v4324 = vpop.f32.mrb[0].mxu0
        %v4325 = vadd.f32 0.0, %v4324
        %v4326 = vpop.f32.mrb[0].mxu0
        %v4327 = vpop.f32.mrb[0].mxu0
        %v4328 = vadd.f32 0.0, %v4327
        %v4329 = vpop.f32.mrb[0].mxu0
        %4330 = vdwg.mxu0
        %v4331 = vmax.f32 %v4317, 0.0
        %v4332 = vmax.f32 %v4320, 0.0
        %v4333 = vmax.f32 %v4325, 0.0
        %v4334 = vmax.f32 %v4328, 0.0
        %v4335 = vpack.c.bf16 %v4332, %v4331
        %v4336 = vpack.c.bf16 %v4334, %v4333
        %s4337 = scalar_lea.vmem %s569, 576 [#allocation14]
        %v4338 = vld [vmem:[%s4337] sm:$0xf]
        %v4339 = vld [vmem:[%s4337 + $0x4] sm:$0xf]
        %v4340 = vld [vmem:[%s4337 + $0x8] sm:$0xf]
        %v4341 = vld [vmem:[%s4337 + $0xc] sm:$0xf]
        %v4342 = vld [vmem:[%s4337 + $0x10] sm:$0xf]
        %v4343 = vld [vmem:[%s4337 + $0x14] sm:$0xf]
        %v4344 = vld [vmem:[%s4337 + $0x18] sm:$0xf]
        %v4345 = vld [vmem:[%s4337 + $0x1c] sm:$0xf]
        %v4346 = vld [vmem:[%s4337 + $0x20] sm:$0xf]
        %v4347 = vld [vmem:[%s4337 + $0x24] sm:$0xf]
        %v4348 = vld [vmem:[%s4337 + $0x28] sm:$0xf]
        %v4349 = vld [vmem:[%s4337 + $0x2c] sm:$0xf]
        %v4350 = vld [vmem:[%s4337 + $0x30] sm:$0xf]
        %v4351 = vld [vmem:[%s4337 + $0x34] sm:$0xf]
        %v4352 = vld [vmem:[%s4337 + $0x38] sm:$0xf]
        %v4353 = vld [vmem:[%s4337 + $0x3c] sm:$0xf]
        %v4370 = vunpack.c.l.b16 %v4338
        %v4371 = vunpack.c.l.b16 %v4339
        %v4372 = vunpack.c.l.b16 %v4340
        %v4373 = vunpack.c.l.b16 %v4341
        %v4374 = vunpack.c.l.b16 %v4342
        %v4375 = vunpack.c.l.b16 %v4343
        %v4376 = vunpack.c.l.b16 %v4344
        %v4377 = vunpack.c.l.b16 %v4345
        %v4378 = vunpack.c.l.b16 %v4346
        %v4379 = vunpack.c.l.b16 %v4347
        %v4380 = vunpack.c.l.b16 %v4348
        %v4381 = vunpack.c.l.b16 %v4349
        %v4382 = vunpack.c.l.b16 %v4350
        %v4383 = vunpack.c.l.b16 %v4351
        %v4384 = vunpack.c.l.b16 %v4352
        %v4385 = vunpack.c.l.b16 %v4353
        %v4386 = vpack.c.b16 %v4371, %v4370
        %v4387 = vpack.c.b16 %v4373, %v4372
        %v4388 = vpack.c.b16 %v4375, %v4374
        %v4389 = vpack.c.b16 %v4377, %v4376
        %v4390 = vpack.c.b16 %v4379, %v4378
        %v4391 = vpack.c.b16 %v4381, %v4380
        %v4392 = vpack.c.b16 %v4383, %v4382
        %v4393 = vpack.c.b16 %v4385, %v4384
        %4402 = vmatprep.subr.bf16.mxu0 0
        %4403 = vmatpush1.bf16.msra.mxu0 %v4386
        %4404 = vmatprep.subr.bf16.mxu0 0
        %4405 = vmatpush1.bf16.msra.mxu0 %v4387
        %4406 = vmatprep.subr.bf16.mxu0 0
        %4407 = vmatpush1.bf16.msra.mxu0 %v4388
        %4408 = vmatprep.subr.bf16.mxu0 0
        %4409 = vmatpush1.bf16.msra.mxu0 %v4389
        %4410 = vmatprep.subr.bf16.mxu0 0
        %4411 = vmatpush1.bf16.msra.mxu0 %v4390
        %4412 = vmatprep.subr.bf16.mxu0 0
        %4413 = vmatpush1.bf16.msra.mxu0 %v4391
        %4414 = vmatprep.subr.bf16.mxu0 0
        %4415 = vmatpush1.bf16.msra.mxu0 %v4392
        %4416 = vmatprep.subr.bf16.mxu0 0
        %4417 = vmatpush1.bf16.msra.mxu0 %v4393
        %4418 = vmatprep.subr.bf16.mxu0 0
        %4419 = vmatpush1.bf16.msra.mxu0 0
        %4420 = vmatprep.subr.bf16.mxu0 0
        %4421 = vmatpush1.bf16.msra.mxu0 0
        %4422 = vmatprep.subr.bf16.mxu0 0
        %4423 = vmatpush1.bf16.msra.mxu0 0
        %4424 = vmatprep.subr.bf16.mxu0 0
        %4425 = vmatpush1.bf16.msra.mxu0 0
        %4426 = vmatprep.subr.bf16.mxu0 0
        %4427 = vmatpush1.bf16.msra.mxu0 0
        %4428 = vmatprep.subr.bf16.mxu0 0
        %4429 = vmatpush1.bf16.msra.mxu0 0
        %4430 = vmatprep.subr.bf16.mxu0 0
        %4431 = vmatpush1.bf16.msra.mxu0 0
        %4432 = vmatprep.subr.bf16.mxu0 0
        %4433 = vmatpush1.bf16.msra.mxu0 0
        %4434 = vmatprep.mubr.bf16.mxu0 0
        %4435 = vmatmul.mubr.bf16.gmra.mrb[0].mxu0 %v4095
        %v4436 = vpop.f32.mrb[0].mxu0
        %v4437 = vadd.f32 0.0, %v4436
        %v4438 = vpop.f32.mrb[0].mxu0
        %v4439 = vpop.f32.mrb[0].mxu0
        %v4440 = vadd.f32 0.0, %v4439
        %v4441 = vpop.f32.mrb[0].mxu0
        %4442 = vmatprep.mubr.bf16.mxu0 0
        %4443 = vmatmul.mubr.bf16.gmra.mrb[0].mxu0 %v4096
        %v4444 = vpop.f32.mrb[0].mxu0
        %v4445 = vadd.f32 0.0, %v4444
        %v4446 = vpop.f32.mrb[0].mxu0
        %v4447 = vpop.f32.mrb[0].mxu0
        %v4448 = vadd.f32 0.0, %v4447
        %v4449 = vpop.f32.mrb[0].mxu0
        %4450 = vdwg.mxu0
        %v4451 = vmax.f32 %v4437, 0.0
        %v4452 = vmax.f32 %v4440, 0.0
        %v4453 = vmax.f32 %v4445, 0.0
        %v4454 = vmax.f32 %v4448, 0.0
        %v4455 = vpack.c.bf16 %v4452, %v4451
        %v4456 = vpack.c.bf16 %v4454, %v4453
        %4457 = vst [vmem:[#allocation2] sm:$0xff] %v4215
        %4458 = vst [vmem:[#allocation2 + $0x8] sm:$0xff] %v4216
        %4459 = vst [vmem:[#allocation3] sm:$0xff] %v4335
        %4460 = vst [vmem:[#allocation3 + $0x8] sm:$0xff] %v4336
        %4461 = vst [vmem:[#allocation4] sm:$0xff] %v4455
        %4462 = vst [vmem:[#allocation4 + $0x8] sm:$0xff] %v4456
        %p4463 = scmp.eq.s32.totalorder %s40, 4
        // Predicated region
        $region105: #{se3net_forward.1} parent=71 // pred_check
          %p4464 = pneg %p4463
        $region106: #{se3net_forward.1} parent=71 // pred_check_branch
          %4466 = sbr.rel (%p4464) target = $region108
        $region107: #{se3net_forward.1} parent=71 // pred_region
          %v4467 = vld [vmem:[%s643] sm:$0xf]
          %v4468 = vld [vmem:[%s643 + $0x4] sm:$0xf]
          %v4469 = vld [vmem:[#allocation2] sm:$0xff]
          %v4470 = vld [vmem:[#allocation2 + $0x8] sm:$0xff]
          %v4471 = vld [vmem:[%s4] sm:$0xf]
          %v4472 = vld [vmem:[%s4 + $0x4] sm:$0xf]
          %v4473 = vld [vmem:[%s4 + $0x8] sm:$0xf]
          %v4474 = vld [vmem:[%s4 + $0xc] sm:$0xf]
          %v4475 = vld [vmem:[%s4 + $0x10] sm:$0xf]
          %v4476 = vld [vmem:[%s4 + $0x14] sm:$0xf]
          %v4477 = vld [vmem:[%s4 + $0x18] sm:$0xf]
          %v4478 = vld [vmem:[%s4 + $0x1c] sm:$0xf]
          %v4479 = vld [vmem:[%s4 + $0x20] sm:$0xf]
          %v4480 = vld [vmem:[%s4 + $0x24] sm:$0xf]
          %v4481 = vld [vmem:[%s4 + $0x28] sm:$0xf]
          %v4482 = vld [vmem:[%s4 + $0x2c] sm:$0xf]
          %v4483 = vld [vmem:[%s4 + $0x30] sm:$0xf]
          %v4484 = vld [vmem:[%s4 + $0x34] sm:$0xf]
          %v4485 = vld [vmem:[%s4 + $0x38] sm:$0xf]
          %v4486 = vld [vmem:[%s4 + $0x3c] sm:$0xf]
          %v4503 = vunpack.c.l.b16 %v4471
          %v4504 = vunpack.c.l.b16 %v4472
          %v4505 = vunpack.c.l.b16 %v4473
          %v4506 = vunpack.c.l.b16 %v4474
          %v4507 = vunpack.c.l.b16 %v4475
          %v4508 = vunpack.c.l.b16 %v4476
          %v4509 = vunpack.c.l.b16 %v4477
          %v4510 = vunpack.c.l.b16 %v4478
          %v4511 = vunpack.c.l.b16 %v4479
          %v4512 = vunpack.c.l.b16 %v4480
          %v4513 = vunpack.c.l.b16 %v4481
          %v4514 = vunpack.c.l.b16 %v4482
          %v4515 = vunpack.c.l.b16 %v4483
          %v4516 = vunpack.c.l.b16 %v4484
          %v4517 = vunpack.c.l.b16 %v4485
          %v4518 = vunpack.c.l.b16 %v4486
          %v4519 = vpack.c.b16 %v4504, %v4503
          %v4520 = vpack.c.b16 %v4506, %v4505
          %v4521 = vpack.c.b16 %v4508, %v4507
          %v4522 = vpack.c.b16 %v4510, %v4509
          %v4523 = vpack.c.b16 %v4512, %v4511
          %v4524 = vpack.c.b16 %v4514, %v4513
          %v4525 = vpack.c.b16 %v4516, %v4515
          %v4526 = vpack.c.b16 %v4518, %v4517
          %4535 = vmatprep.subr.bf16.mxu0 0
          %4536 = vmatpush1.bf16.msra.mxu0 %v4519
          %4537 = vmatprep.subr.bf16.mxu0 0
          %4538 = vmatpush1.bf16.msra.mxu0 %v4520
          %4539 = vmatprep.subr.bf16.mxu0 0
          %4540 = vmatpush1.bf16.msra.mxu0 %v4521
          %4541 = vmatprep.subr.bf16.mxu0 0
          %4542 = vmatpush1.bf16.msra.mxu0 %v4522
          %4543 = vmatprep.subr.bf16.mxu0 0
          %4544 = vmatpush1.bf16.msra.mxu0 %v4523
          %4545 = vmatprep.subr.bf16.mxu0 0
          %4546 = vmatpush1.bf16.msra.mxu0 %v4524
          %4547 = vmatprep.subr.bf16.mxu0 0
          %4548 = vmatpush1.bf16.msra.mxu0 %v4525
          %4549 = vmatprep.subr.bf16.mxu0 0
          %4550 = vmatpush1.bf16.msra.mxu0 %v4526
          %4551 = vmatprep.subr.bf16.mxu0 0
          %4552 = vmatpush1.bf16.msra.mxu0 0
          %4553 = vmatprep.subr.bf16.mxu0 0
          %4554 = vmatpush1.bf16.msra.mxu0 0
          %4555 = vmatprep.subr.bf16.mxu0 0
          %4556 = vmatpush1.bf16.msra.mxu0 0
          %4557 = vmatprep.subr.bf16.mxu0 0
          %4558 = vmatpush1.bf16.msra.mxu0 0
          %4559 = vmatprep.subr.bf16.mxu0 0
          %4560 = vmatpush1.bf16.msra.mxu0 0
          %4561 = vmatprep.subr.bf16.mxu0 0
          %4562 = vmatpush1.bf16.msra.mxu0 0
          %4563 = vmatprep.subr.bf16.mxu0 0
          %4564 = vmatpush1.bf16.msra.mxu0 0
          %4565 = vmatprep.subr.bf16.mxu0 0
          %4566 = vmatpush1.bf16.msra.mxu0 0
          %4567 = vmatprep.mubr.bf16.mxu0 0
          %4568 = vmatmul.mubr.bf16.gmra.mrb[0].mxu0 %v4469
          %v4569 = vpop.f32.mrb[0].mxu0
          %v4570 = vadd.f32 0.0, %v4569
          %v4571 = vpop.f32.mrb[0].mxu0
          %v4572 = vpop.f32.mrb[0].mxu0
          %v4573 = vadd.f32 0.0, %v4572
          %v4574 = vpop.f32.mrb[0].mxu0
          %4575 = vmatprep.mubr.bf16.mxu0 0
          %4576 = vmatmul.mubr.bf16.gmra.mrb[0].mxu0 %v4470
          %v4577 = vpop.f32.mrb[0].mxu0
          %v4578 = vadd.f32 0.0, %v4577
          %v4579 = vpop.f32.mrb[0].mxu0
          %v4580 = vpop.f32.mrb[0].mxu0
          %v4581 = vadd.f32 0.0, %v4580
          %v4582 = vpop.f32.mrb[0].mxu0
          %4583 = vdwg.mxu0
          %v4587 = vunpack.c.l.s4 1966171168
          %v4588 = vunpack.c.0.s8 %v4587
          %v4589 = vlaneseq
          %v4590 = vshrl.u32 %v4589, 7
          %v4591 = vsub.s32 %v4588, %v4590
          %v4592 = vrot.slane %v4467, %v4591
          %v4593 = vcombine.high %v4592, %v4592
          %v4595 = vunpack.c.l.s4 1966171168
          %v4596 = vunpack.c.0.s8 %v4595
          %v4597 = vlaneseq
          %v4598 = vshrl.u32 %v4597, 7
          %v4599 = vsub.s32 %v4596, %v4598
          %v4600 = vrot.slane %v4592, %v4599
          %v4602 = vunpack.c.l.s4 1966171168
          %v4603 = vunpack.c.0.s8 %v4602
          %v4604 = vlaneseq
          %v4605 = vshrl.u32 %v4604, 7
          %v4606 = vsub.s32 %v4603, %v4605
          %v4607 = vrot.slane %v4593, %v4606
          %v4608 = vcombine.high %v4600, %v4600
          %v4609 = vcombine.high %v4607, %v4607
          %v4611 = vunpack.c.l.s4 1966171168
          %v4612 = vunpack.c.0.s8 %v4611
          %v4613 = vlaneseq
          %v4614 = vshrl.u32 %v4613, 7
          %v4615 = vsub.s32 %v4612, %v4614
          %v4616 = vrot.slane %v4468, %v4615
          %v4617 = vcombine.high %v4616, %v4616
          %v4619 = vunpack.c.l.s4 1966171168
          %v4620 = vunpack.c.0.s8 %v4619
          %v4621 = vlaneseq
          %v4622 = vshrl.u32 %v4621, 7
          %v4623 = vsub.s32 %v4620, %v4622
          %v4624 = vrot.slane %v4616, %v4623
          %v4626 = vunpack.c.l.s4 1966171168
          %v4627 = vunpack.c.0.s8 %v4626
          %v4628 = vlaneseq
          %v4629 = vshrl.u32 %v4628, 7
          %v4630 = vsub.s32 %v4627, %v4629
          %v4631 = vrot.slane %v4617, %v4630
          %v4632 = vcombine.high %v4624, %v4624
          %v4633 = vcombine.high %v4631, %v4631
          %v4634 = vlaneseq
          %v4635 = vshrl.u32 %v4634, 7
          %v4636 = vsub.s32 0, %v4635
          %v4637 = vrot.slane %v4600, %v4636
          %v4638 = vlaneseq
          %v4639 = vshrl.u32 %v4638, 7
          %v4640 = vsub.s32 0, %v4639
          %v4641 = vrot.slane %v4607, %v4640
          %v4642 = vlaneseq
          %v4643 = vshrl.u32 %v4642, 7
          %v4644 = vsub.s32 0, %v4643
          %v4645 = vrot.slane %v4608, %v4644
          %v4646 = vlaneseq
          %v4647 = vshrl.u32 %v4646, 7
          %v4648 = vsub.s32 0, %v4647
          %v4649 = vrot.slane %v4609, %v4648
          %v4650 = vlaneseq
          %v4651 = vshrl.u32 %v4650, 7
          %v4652 = vsub.s32 0, %v4651
          %v4653 = vrot.slane %v4624, %v4652
          %v4654 = vlaneseq
          %v4655 = vshrl.u32 %v4654, 7
          %v4656 = vsub.s32 0, %v4655
          %v4657 = vrot.slane %v4631, %v4656
          %v4658 = vlaneseq
          %v4659 = vshrl.u32 %v4658, 7
          %v4660 = vsub.s32 0, %v4659
          %v4661 = vrot.slane %v4632, %v4660
          %v4662 = vlaneseq
          %v4663 = vshrl.u32 %v4662, 7
          %v4664 = vsub.s32 0, %v4663
          %v4665 = vrot.slane %v4633, %v4664
          %4666 = vset.pattern.permute.xlu0 0
          %4667 = vperm.xlu0 %4666, %v4637
          %v4668 = vpop.permute.xlu0 %4667
          %v4671 = vunpack.c.l.s4 839922192
          %v4672 = vunpack.c.0.s8 %v4671
          %v4673 = vlaneseq
          %v4674 = vshrl.u32 %v4673, 7
          %v4675 = vsub.s32 %v4672, %v4674
          %v4676 = vrot.slane %v4668, %v4675
          %4677 = vset.pattern.permute.xlu0 0
          %4678 = vperm.xlu0 %4677, %v4641
          %v4679 = vpop.permute.xlu0 %4678
          %v4682 = vunpack.c.l.s4 839922192
          %v4683 = vunpack.c.0.s8 %v4682
          %v4684 = vlaneseq
          %v4685 = vshrl.u32 %v4684, 7
          %v4686 = vsub.s32 %v4683, %v4685
          %v4687 = vrot.slane %v4679, %v4686
          %4688 = vset.pattern.permute.xlu0 0
          %4689 = vperm.xlu0 %4688, %v4645
          %v4690 = vpop.permute.xlu0 %4689
          %v4693 = vunpack.c.l.s4 839922192
          %v4694 = vunpack.c.0.s8 %v4693
          %v4695 = vlaneseq
          %v4696 = vshrl.u32 %v4695, 7
          %v4697 = vsub.s32 %v4694, %v4696
          %v4698 = vrot.slane %v4690, %v4697
          %4699 = vset.pattern.permute.xlu0 0
          %4700 = vperm.xlu0 %4699, %v4649
          %v4701 = vpop.permute.xlu0 %4700
          %v4704 = vunpack.c.l.s4 839922192
          %v4705 = vunpack.c.0.s8 %v4704
          %v4706 = vlaneseq
          %v4707 = vshrl.u32 %v4706, 7
          %v4708 = vsub.s32 %v4705, %v4707
          %v4709 = vrot.slane %v4701, %v4708
          %4710 = vset.pattern.permute.xlu0 0
          %4711 = vperm.xlu0 %4710, %v4653
          %v4712 = vpop.permute.xlu0 %4711
          %v4715 = vunpack.c.l.s4 839922192
          %v4716 = vunpack.c.0.s8 %v4715
          %v4717 = vlaneseq
          %v4718 = vshrl.u32 %v4717, 7
          %v4719 = vsub.s32 %v4716, %v4718
          %v4720 = vrot.slane %v4712, %v4719
          %4721 = vset.pattern.permute.xlu0 0
          %4722 = vperm.xlu0 %4721, %v4657
          %v4723 = vpop.permute.xlu0 %4722
          %v4726 = vunpack.c.l.s4 839922192
          %v4727 = vunpack.c.0.s8 %v4726
          %v4728 = vlaneseq
          %v4729 = vshrl.u32 %v4728, 7
          %v4730 = vsub.s32 %v4727, %v4729
          %v4731 = vrot.slane %v4723, %v4730
          %4732 = vset.pattern.permute.xlu0 0
          %4733 = vperm.xlu0 %4732, %v4661
          %v4734 = vpop.permute.xlu0 %4733
          %v4737 = vunpack.c.l.s4 839922192
          %v4738 = vunpack.c.0.s8 %v4737
          %v4739 = vlaneseq
          %v4740 = vshrl.u32 %v4739, 7
          %v4741 = vsub.s32 %v4738, %v4740
          %v4742 = vrot.slane %v4734, %v4741
          %4743 = vset.pattern.permute.xlu0 0
          %4744 = vperm.xlu0 %4743, %v4665
          %v4745 = vpop.permute.xlu0 %4744
          %v4748 = vunpack.c.l.s4 839922192
          %v4749 = vunpack.c.0.s8 %v4748
          %v4750 = vlaneseq
          %v4751 = vshrl.u32 %v4750, 7
          %v4752 = vsub.s32 %v4749, %v4751
          %v4753 = vrot.slane %v4745, %v4752
          %v4762 = vcombine.low %v4676, %v4687
          %v4763 = vcombine.low %v4698, %v4709
          %v4764 = vcombine.low %v4720, %v4731
          %v4765 = vcombine.low %v4742, %v4753
          %v4770 = vmul.f32 %v4570, %v4762
          %v4771 = vmul.f32 %v4573, %v4763
          %v4772 = vmul.f32 %v4578, %v4764
          %v4773 = vmul.f32 %v4581, %v4765
          %v4776 = vrot.slane %v4770, 4
          %v4777 = vrot.slane %v4772, 4
          %v4780 = vadd.f32 %v4770, %v4776
          %v4781 = vadd.f32 %v4772, %v4777
          %v4782 = vadd.f32 %v4780, %v4771
          %v4783 = vadd.f32 %v4781, %v4773
          %v4786 = vrot.slane %v4771, 4
          %v4787 = vrot.slane %v4773, 4
          %v4790 = vadd.f32 %v4782, %v4786
          %v4791 = vadd.f32 %v4783, %v4787
          %v4792 = vmul.f32 %v4790, 0.5
          %v4793 = vmul.f32 %v4791, 0.5
          %v4794 = vmax.f32 %v4792, 0.0
          %v4795 = vmax.f32 %v4793, 0.0
          %v4796 = vld [vmem:[#allocation3] sm:$0xff]
          %v4797 = vld [vmem:[#allocation3 + $0x8] sm:$0xff]
          %v4798 = vld [vmem:[%s7] sm:$0xf]
          %v4799 = vld [vmem:[%s7 + $0x4] sm:$0xf]
          %v4800 = vld [vmem:[%s7 + $0x8] sm:$0xf]
          %v4801 = vld [vmem:[%s7 + $0xc] sm:$0xf]
          %v4802 = vld [vmem:[%s7 + $0x10] sm:$0xf]
          %v4803 = vld [vmem:[%s7 + $0x14] sm:$0xf]
          %v4804 = vld [vmem:[%s7 + $0x18] sm:$0xf]
          %v4805 = vld [vmem:[%s7 + $0x1c] sm:$0xf]
          %v4806 = vld [vmem:[%s7 + $0x20] sm:$0xf]
          %v4807 = vld [vmem:[%s7 + $0x24] sm:$0xf]
          %v4808 = vld [vmem:[%s7 + $0x28] sm:$0xf]
          %v4809 = vld [vmem:[%s7 + $0x2c] sm:$0xf]
          %v4810 = vld [vmem:[%s7 + $0x30] sm:$0xf]
          %v4811 = vld [vmem:[%s7 + $0x34] sm:$0xf]
          %v4812 = vld [vmem:[%s7 + $0x38] sm:$0xf]
          %v4813 = vld [vmem:[%s7 + $0x3c] sm:$0xf]
          %v4830 = vunpack.c.l.b16 %v4798
          %v4831 = vunpack.c.l.b16 %v4799
          %v4832 = vunpack.c.l.b16 %v4800
          %v4833 = vunpack.c.l.b16 %v4801
          %v4834 = vunpack.c.l.b16 %v4802
          %v4835 = vunpack.c.l.b16 %v4803
          %v4836 = vunpack.c.l.b16 %v4804
          %v4837 = vunpack.c.l.b16 %v4805
          %v4838 = vunpack.c.l.b16 %v4806
          %v4839 = vunpack.c.l.b16 %v4807
          %v4840 = vunpack.c.l.b16 %v4808
          %v4841 = vunpack.c.l.b16 %v4809
          %v4842 = vunpack.c.l.b16 %v4810
          %v4843 = vunpack.c.l.b16 %v4811
          %v4844 = vunpack.c.l.b16 %v4812
          %v4845 = vunpack.c.l.b16 %v4813
          %v4846 = vpack.c.b16 %v4831, %v4830
          %v4847 = vpack.c.b16 %v4833, %v4832
          %v4848 = vpack.c.b16 %v4835, %v4834
          %v4849 = vpack.c.b16 %v4837, %v4836
          %v4850 = vpack.c.b16 %v4839, %v4838
          %v4851 = vpack.c.b16 %v4841, %v4840
          %v4852 = vpack.c.b16 %v4843, %v4842
          %v4853 = vpack.c.b16 %v4845, %v4844
          %4862 = vmatprep.subr.bf16.mxu0 0
          %4863 = vmatpush1.bf16.msra.mxu0 %v4846
          %4864 = vmatprep.subr.bf16.mxu0 0
          %4865 = vmatpush1.bf16.msra.mxu0 %v4847
          %4866 = vmatprep.subr.bf16.mxu0 0
          %4867 = vmatpush1.bf16.msra.mxu0 %v4848
          %4868 = vmatprep.subr.bf16.mxu0 0
          %4869 = vmatpush1.bf16.msra.mxu0 %v4849
          %4870 = vmatprep.subr.bf16.mxu0 0
          %4871 = vmatpush1.bf16.msra.mxu0 %v4850
          %4872 = vmatprep.subr.bf16.mxu0 0
          %4873 = vmatpush1.bf16.msra.mxu0 %v4851
          %4874 = vmatprep.subr.bf16.mxu0 0
          %4875 = vmatpush1.bf16.msra.mxu0 %v4852
          %4876 = vmatprep.subr.bf16.mxu0 0
          %4877 = vmatpush1.bf16.msra.mxu0 %v4853
          %4878 = vmatprep.subr.bf16.mxu0 0
          %4879 = vmatpush1.bf16.msra.mxu0 0
          %4880 = vmatprep.subr.bf16.mxu0 0
          %4881 = vmatpush1.bf16.msra.mxu0 0
          %4882 = vmatprep.subr.bf16.mxu0 0
          %4883 = vmatpush1.bf16.msra.mxu0 0
          %4884 = vmatprep.subr.bf16.mxu0 0
          %4885 = vmatpush1.bf16.msra.mxu0 0
          %4886 = vmatprep.subr.bf16.mxu0 0
          %4887 = vmatpush1.bf16.msra.mxu0 0
          %4888 = vmatprep.subr.bf16.mxu0 0
          %4889 = vmatpush1.bf16.msra.mxu0 0
          %4890 = vmatprep.subr.bf16.mxu0 0
          %4891 = vmatpush1.bf16.msra.mxu0 0
          %4892 = vmatprep.subr.bf16.mxu0 0
          %4893 = vmatpush1.bf16.msra.mxu0 0
          %4894 = vmatprep.mubr.bf16.mxu0 0
          %4895 = vmatmul.mubr.bf16.gmra.mrb[0].mxu0 %v4796
          %v4896 = vpop.f32.mrb[0].mxu0
          %v4897 = vadd.f32 0.0, %v4896
          %v4898 = vpop.f32.mrb[0].mxu0
          %v4899 = vpop.f32.mrb[0].mxu0
          %v4900 = vadd.f32 0.0, %v4899
          %v4901 = vpop.f32.mrb[0].mxu0
          %4902 = vmatprep.mubr.bf16.mxu0 0
          %4903 = vmatmul.mubr.bf16.gmra.mrb[0].mxu0 %v4797
          %v4904 = vpop.f32.mrb[0].mxu0
          %v4905 = vadd.f32 0.0, %v4904
          %v4906 = vpop.f32.mrb[0].mxu0
          %v4907 = vpop.f32.mrb[0].mxu0
          %v4908 = vadd.f32 0.0, %v4907
          %v4909 = vpop.f32.mrb[0].mxu0
          %4910 = vdwg.mxu0
          %v4914 = vunpack.c.l.s4 1966171168
          %v4915 = vunpack.c.0.s8 %v4914
          %v4916 = vlaneseq
          %v4917 = vshrl.u32 %v4916, 7
          %v4918 = vsub.s32 %v4915, %v4917
          %v4919 = vrot.slane %v4794, %v4918
          %v4920 = vcombine.high %v4919, %v4919
          %v4922 = vunpack.c.l.s4 1966171168
          %v4923 = vunpack.c.0.s8 %v4922
          %v4924 = vlaneseq
          %v4925 = vshrl.u32 %v4924, 7
          %v4926 = vsub.s32 %v4923, %v4925
          %v4927 = vrot.slane %v4919, %v4926
          %v4929 = vunpack.c.l.s4 1966171168
          %v4930 = vunpack.c.0.s8 %v4929
          %v4931 = vlaneseq
          %v4932 = vshrl.u32 %v4931, 7
          %v4933 = vsub.s32 %v4930, %v4932
          %v4934 = vrot.slane %v4920, %v4933
          %v4935 = vcombine.high %v4927, %v4927
          %v4936 = vcombine.high %v4934, %v4934
          %v4938 = vunpack.c.l.s4 1966171168
          %v4939 = vunpack.c.0.s8 %v4938
          %v4940 = vlaneseq
          %v4941 = vshrl.u32 %v4940, 7
          %v4942 = vsub.s32 %v4939, %v4941
          %v4943 = vrot.slane %v4795, %v4942
          %v4944 = vcombine.high %v4943, %v4943
          %v4946 = vunpack.c.l.s4 1966171168
          %v4947 = vunpack.c.0.s8 %v4946
          %v4948 = vlaneseq
          %v4949 = vshrl.u32 %v4948, 7
          %v4950 = vsub.s32 %v4947, %v4949
          %v4951 = vrot.slane %v4943, %v4950
          %v4953 = vunpack.c.l.s4 1966171168
          %v4954 = vunpack.c.0.s8 %v4953
          %v4955 = vlaneseq
          %v4956 = vshrl.u32 %v4955, 7
          %v4957 = vsub.s32 %v4954, %v4956
          %v4958 = vrot.slane %v4944, %v4957
          %v4959 = vcombine.high %v4951, %v4951
          %v4960 = vcombine.high %v4958, %v4958
          %v4961 = vlaneseq
          %v4962 = vshrl.u32 %v4961, 7
          %v4963 = vsub.s32 0, %v4962
          %v4964 = vrot.slane %v4927, %v4963
          %v4965 = vlaneseq
          %v4966 = vshrl.u32 %v4965, 7
          %v4967 = vsub.s32 0, %v4966
          %v4968 = vrot.slane %v4934, %v4967
          %v4969 = vlaneseq
          %v4970 = vshrl.u32 %v4969, 7
          %v4971 = vsub.s32 0, %v4970
          %v4972 = vrot.slane %v4935, %v4971
          %v4973 = vlaneseq
          %v4974 = vshrl.u32 %v4973, 7
          %v4975 = vsub.s32 0, %v4974
          %v4976 = vrot.slane %v4936, %v4975
          %v4977 = vlaneseq
          %v4978 = vshrl.u32 %v4977, 7
          %v4979 = vsub.s32 0, %v4978
          %v4980 = vrot.slane %v4951, %v4979
          %v4981 = vlaneseq
          %v4982 = vshrl.u32 %v4981, 7
          %v4983 = vsub.s32 0, %v4982
          %v4984 = vrot.slane %v4958, %v4983
          %v4985 = vlaneseq
          %v4986 = vshrl.u32 %v4985, 7
          %v4987 = vsub.s32 0, %v4986
          %v4988 = vrot.slane %v4959, %v4987
          %v4989 = vlaneseq
          %v4990 = vshrl.u32 %v4989, 7
          %v4991 = vsub.s32 0, %v4990
          %v4992 = vrot.slane %v4960, %v4991
          %4993 = vset.pattern.permute.xlu0 0
          %4994 = vperm.xlu0 %4993, %v4964
          %v4995 = vpop.permute.xlu0 %4994
          %v4998 = vunpack.c.l.s4 839922192
          %v4999 = vunpack.c.0.s8 %v4998
          %v5000 = vlaneseq
          %v5001 = vshrl.u32 %v5000, 7
          %v5002 = vsub.s32 %v4999, %v5001
          %v5003 = vrot.slane %v4995, %v5002
          %5004 = vset.pattern.permute.xlu0 0
          %5005 = vperm.xlu0 %5004, %v4968
          %v5006 = vpop.permute.xlu0 %5005
          %v5009 = vunpack.c.l.s4 839922192
          %v5010 = vunpack.c.0.s8 %v5009
          %v5011 = vlaneseq
          %v5012 = vshrl.u32 %v5011, 7
          %v5013 = vsub.s32 %v5010, %v5012
          %v5014 = vrot.slane %v5006, %v5013
          %5015 = vset.pattern.permute.xlu0 0
          %5016 = vperm.xlu0 %5015, %v4972
          %v5017 = vpop.permute.xlu0 %5016
          %v5020 = vunpack.c.l.s4 839922192
          %v5021 = vunpack.c.0.s8 %v5020
          %v5022 = vlaneseq
          %v5023 = vshrl.u32 %v5022, 7
          %v5024 = vsub.s32 %v5021, %v5023
          %v5025 = vrot.slane %v5017, %v5024
          %5026 = vset.pattern.permute.xlu0 0
          %5027 = vperm.xlu0 %5026, %v4976
          %v5028 = vpop.permute.xlu0 %5027
          %v5031 = vunpack.c.l.s4 839922192
          %v5032 = vunpack.c.0.s8 %v5031
          %v5033 = vlaneseq
          %v5034 = vshrl.u32 %v5033, 7
          %v5035 = vsub.s32 %v5032, %v5034
          %v5036 = vrot.slane %v5028, %v5035
          %5037 = vset.pattern.permute.xlu0 0
          %5038 = vperm.xlu0 %5037, %v4980
          %v5039 = vpop.permute.xlu0 %5038
          %v5042 = vunpack.c.l.s4 839922192
          %v5043 = vunpack.c.0.s8 %v5042
          %v5044 = vlaneseq
          %v5045 = vshrl.u32 %v5044, 7
          %v5046 = vsub.s32 %v5043, %v5045
          %v5047 = vrot.slane %v5039, %v5046
          %5048 = vset.pattern.permute.xlu0 0
          %5049 = vperm.xlu0 %5048, %v4984
          %v5050 = vpop.permute.xlu0 %5049
          %v5053 = vunpack.c.l.s4 839922192
          %v5054 = vunpack.c.0.s8 %v5053
          %v5055 = vlaneseq
          %v5056 = vshrl.u32 %v5055, 7
          %v5057 = vsub.s32 %v5054, %v5056
          %v5058 = vrot.slane %v5050, %v5057
          %5059 = vset.pattern.permute.xlu0 0
          %5060 = vperm.xlu0 %5059, %v4988
          %v5061 = vpop.permute.xlu0 %5060
          %v5064 = vunpack.c.l.s4 839922192
          %v5065 = vunpack.c.0.s8 %v5064
          %v5066 = vlaneseq
          %v5067 = vshrl.u32 %v5066, 7
          %v5068 = vsub.s32 %v5065, %v5067
          %v5069 = vrot.slane %v5061, %v5068
          %5070 = vset.pattern.permute.xlu0 0
          %5071 = vperm.xlu0 %5070, %v4992
          %v5072 = vpop.permute.xlu0 %5071
          %v5075 = vunpack.c.l.s4 839922192
          %v5076 = vunpack.c.0.s8 %v5075
          %v5077 = vlaneseq
          %v5078 = vshrl.u32 %v5077, 7
          %v5079 = vsub.s32 %v5076, %v5078
          %v5080 = vrot.slane %v5072, %v5079
          %v5089 = vcombine.low %v5003, %v5014
          %v5090 = vcombine.low %v5025, %v5036
          %v5091 = vcombine.low %v5047, %v5058
          %v5092 = vcombine.low %v5069, %v5080
          %v5097 = vmul.f32 %v4897, %v5089
          %v5098 = vmul.f32 %v4900, %v5090
          %v5099 = vmul.f32 %v4905, %v5091
          %v5100 = vmul.f32 %v4908, %v5092
          %5101 = vset.pattern.permute.xlu0 1
          %5102 = vperm.xlu0 %5101, %v4964
          %v5103 = vpop.permute.xlu0 %5102
          %v5106 = vunpack.c.l.s4 839922192
          %v5107 = vunpack.c.0.s8 %v5106
          %v5108 = vlaneseq
          %v5109 = vshrl.u32 %v5108, 7
          %v5110 = vsub.s32 %v5107, %v5109
          %v5111 = vrot.slane %v5103, %v5110
          %5112 = vset.pattern.permute.xlu0 1
          %5113 = vperm.xlu0 %5112, %v4968
          %v5114 = vpop.permute.xlu0 %5113
          %v5117 = vunpack.c.l.s4 839922192
          %v5118 = vunpack.c.0.s8 %v5117
          %v5119 = vlaneseq
          %v5120 = vshrl.u32 %v5119, 7
          %v5121 = vsub.s32 %v5118, %v5120
          %v5122 = vrot.slane %v5114, %v5121
          %5123 = vset.pattern.permute.xlu0 1
          %5124 = vperm.xlu0 %5123, %v4972
          %v5125 = vpop.permute.xlu0 %5124
          %v5128 = vunpack.c.l.s4 839922192
          %v5129 = vunpack.c.0.s8 %v5128
          %v5130 = vlaneseq
          %v5131 = vshrl.u32 %v5130, 7
          %v5132 = vsub.s32 %v5129, %v5131
          %v5133 = vrot.slane %v5125, %v5132
          %5134 = vset.pattern.permute.xlu0 1
          %5135 = vperm.xlu0 %5134, %v4976
          %v5136 = vpop.permute.xlu0 %5135
          %v5139 = vunpack.c.l.s4 839922192
          %v5140 = vunpack.c.0.s8 %v5139
          %v5141 = vlaneseq
          %v5142 = vshrl.u32 %v5141, 7
          %v5143 = vsub.s32 %v5140, %v5142
          %v5144 = vrot.slane %v5136, %v5143
          %5145 = vset.pattern.permute.xlu0 1
          %5146 = vperm.xlu0 %5145, %v4980
          %v5147 = vpop.permute.xlu0 %5146
          %v5150 = vunpack.c.l.s4 839922192
          %v5151 = vunpack.c.0.s8 %v5150
          %v5152 = vlaneseq
          %v5153 = vshrl.u32 %v5152, 7
          %v5154 = vsub.s32 %v5151, %v5153
          %v5155 = vrot.slane %v5147, %v5154
          %5156 = vset.pattern.permute.xlu0 1
          %5157 = vperm.xlu0 %5156, %v4984
          %v5158 = vpop.permute.xlu0 %5157
          %v5161 = vunpack.c.l.s4 839922192
          %v5162 = vunpack.c.0.s8 %v5161
          %v5163 = vlaneseq
          %v5164 = vshrl.u32 %v5163, 7
          %v5165 = vsub.s32 %v5162, %v5164
          %v5166 = vrot.slane %v5158, %v5165
          %5167 = vset.pattern.permute.xlu0 1
          %5168 = vperm.xlu0 %5167, %v4988
          %v5169 = vpop.permute.xlu0 %5168
          %v5172 = vunpack.c.l.s4 839922192
          %v5173 = vunpack.c.0.s8 %v5172
          %v5174 = vlaneseq
          %v5175 = vshrl.u32 %v5174, 7
          %v5176 = vsub.s32 %v5173, %v5175
          %v5177 = vrot.slane %v5169, %v5176
          %5178 = vset.pattern.permute.xlu0 1
          %5179 = vperm.xlu0 %5178, %v4992
          %v5180 = vpop.permute.xlu0 %5179
          %v5183 = vunpack.c.l.s4 839922192
          %v5184 = vunpack.c.0.s8 %v5183
          %v5185 = vlaneseq
          %v5186 = vshrl.u32 %v5185, 7
          %v5187 = vsub.s32 %v5184, %v5186
          %v5188 = vrot.slane %v5180, %v5187
          %v5197 = vcombine.low %v5111, %v5122
          %v5198 = vcombine.low %v5133, %v5144
          %v5199 = vcombine.low %v5155, %v5166
          %v5200 = vcombine.low %v5177, %v5188
          %5201 = vrot.lane.b32.xlu0 %v5197, 16
          %v5202 = vpop.permute.xlu0 %5201
          %5203 = vrot.lane.b32.xlu0 %v5198, 16
          %v5204 = vpop.permute.xlu0 %5203
          %5205 = vrot.lane.b32.xlu0 %v5199, 16
          %v5206 = vpop.permute.xlu0 %5205
          %5207 = vrot.lane.b32.xlu0 %v5200, 16
          %v5208 = vpop.permute.xlu0 %5207
          %v5213 = vmul.f32 %v4897, %v5202
          %v5214 = vmul.f32 %v4900, %v5204
          %v5215 = vmul.f32 %v4905, %v5206
          %v5216 = vmul.f32 %v4908, %v5208
          %5221 = vrot.lane.b32.xlu0 %v5213, 112
          %v5222 = vpop.permute.xlu0 %5221
          %5223 = vrot.lane.b32.xlu0 %v5214, 112
          %v5224 = vpop.permute.xlu0 %5223
          %5225 = vrot.lane.b32.xlu0 %v5215, 112
          %v5226 = vpop.permute.xlu0 %5225
          %5227 = vrot.lane.b32.xlu0 %v5216, 112
          %v5228 = vpop.permute.xlu0 %5227
          %v5233 = vadd.f32 %v5097, %v5222
          %v5234 = vadd.f32 %v5098, %v5224
          %v5235 = vadd.f32 %v5099, %v5226
          %v5236 = vadd.f32 %v5100, %v5228
          %5237 = vset.pattern.permute.xlu0 2
          %5238 = vperm.xlu0 %5237, %v4964
          %v5239 = vpop.permute.xlu0 %5238
          %v5242 = vunpack.c.l.s4 839922192
          %v5243 = vunpack.c.0.s8 %v5242
          %v5244 = vlaneseq
          %v5245 = vshrl.u32 %v5244, 7
          %v5246 = vsub.s32 %v5243, %v5245
          %v5247 = vrot.slane %v5239, %v5246
          %5248 = vset.pattern.permute.xlu0 2
          %5249 = vperm.xlu0 %5248, %v4968
          %v5250 = vpop.permute.xlu0 %5249
          %v5253 = vunpack.c.l.s4 839922192
          %v5254 = vunpack.c.0.s8 %v5253
          %v5255 = vlaneseq
          %v5256 = vshrl.u32 %v5255, 7
          %v5257 = vsub.s32 %v5254, %v5256
          %v5258 = vrot.slane %v5250, %v5257
          %5259 = vset.pattern.permute.xlu0 2
          %5260 = vperm.xlu0 %5259, %v4972
          %v5261 = vpop.permute.xlu0 %5260
          %v5264 = vunpack.c.l.s4 839922192
          %v5265 = vunpack.c.0.s8 %v5264
          %v5266 = vlaneseq
          %v5267 = vshrl.u32 %v5266, 7
          %v5268 = vsub.s32 %v5265, %v5267
          %v5269 = vrot.slane %v5261, %v5268
          %5270 = vset.pattern.permute.xlu0 2
          %5271 = vperm.xlu0 %5270, %v4976
          %v5272 = vpop.permute.xlu0 %5271
          %v5275 = vunpack.c.l.s4 839922192
          %v5276 = vunpack.c.0.s8 %v5275
          %v5277 = vlaneseq
          %v5278 = vshrl.u32 %v5277, 7
          %v5279 = vsub.s32 %v5276, %v5278
          %v5280 = vrot.slane %v5272, %v5279
          %5281 = vset.pattern.permute.xlu0 2
          %5282 = vperm.xlu0 %5281, %v4980
          %v5283 = vpop.permute.xlu0 %5282
          %v5286 = vunpack.c.l.s4 839922192
          %v5287 = vunpack.c.0.s8 %v5286
          %v5288 = vlaneseq
          %v5289 = vshrl.u32 %v5288, 7
          %v5290 = vsub.s32 %v5287, %v5289
          %v5291 = vrot.slane %v5283, %v5290
          %5292 = vset.pattern.permute.xlu0 2
          %5293 = vperm.xlu0 %5292, %v4984
          %v5294 = vpop.permute.xlu0 %5293
          %v5297 = vunpack.c.l.s4 839922192
          %v5298 = vunpack.c.0.s8 %v5297
          %v5299 = vlaneseq
          %v5300 = vshrl.u32 %v5299, 7
          %v5301 = vsub.s32 %v5298, %v5300
          %v5302 = vrot.slane %v5294, %v5301
          %5303 = vset.pattern.permute.xlu0 2
          %5304 = vperm.xlu0 %5303, %v4988
          %v5305 = vpop.permute.xlu0 %5304
          %v5308 = vunpack.c.l.s4 839922192
          %v5309 = vunpack.c.0.s8 %v5308
          %v5310 = vlaneseq
          %v5311 = vshrl.u32 %v5310, 7
          %v5312 = vsub.s32 %v5309, %v5311
          %v5313 = vrot.slane %v5305, %v5312
          %5314 = vset.pattern.permute.xlu0 2
          %5315 = vperm.xlu0 %5314, %v4992
          %v5316 = vpop.permute.xlu0 %5315
          %v5319 = vunpack.c.l.s4 839922192
          %v5320 = vunpack.c.0.s8 %v5319
          %v5321 = vlaneseq
          %v5322 = vshrl.u32 %v5321, 7
          %v5323 = vsub.s32 %v5320, %v5322
          %v5324 = vrot.slane %v5316, %v5323
          %v5333 = vcombine.low %v5247, %v5258
          %v5334 = vcombine.low %v5269, %v5280
          %v5335 = vcombine.low %v5291, %v5302
          %v5336 = vcombine.low %v5313, %v5324
          %5337 = vrot.lane.b32.xlu0 %v5333, 32
          %v5338 = vpop.permute.xlu0 %5337
          %5339 = vrot.lane.b32.xlu0 %v5334, 32
          %v5340 = vpop.permute.xlu0 %5339
          %5341 = vrot.lane.b32.xlu0 %v5335, 32
          %v5342 = vpop.permute.xlu0 %5341
          %5343 = vrot.lane.b32.xlu0 %v5336, 32
          %v5344 = vpop.permute.xlu0 %5343
          %v5349 = vmul.f32 %v4897, %v5338
          %v5350 = vmul.f32 %v4900, %v5340
          %v5351 = vmul.f32 %v4905, %v5342
          %v5352 = vmul.f32 %v4908, %v5344
          %5357 = vrot.lane.b32.xlu0 %v5349, 96
          %v5358 = vpop.permute.xlu0 %5357
          %5359 = vrot.lane.b32.xlu0 %v5350, 96
          %v5360 = vpop.permute.xlu0 %5359
          %5361 = vrot.lane.b32.xlu0 %v5351, 96
          %v5362 = vpop.permute.xlu0 %5361
          %5363 = vrot.lane.b32.xlu0 %v5352, 96
          %v5364 = vpop.permute.xlu0 %5363
          %v5369 = vadd.f32 %v5233, %v5358
          %v5370 = vadd.f32 %v5234, %v5360
          %v5371 = vadd.f32 %v5235, %v5362
          %v5372 = vadd.f32 %v5236, %v5364
          %5373 = vset.pattern.permute.xlu0 3
          %5374 = vperm.xlu0 %5373, %v4964
          %v5375 = vpop.permute.xlu0 %5374
          %v5378 = vunpack.c.l.s4 839922192
          %v5379 = vunpack.c.0.s8 %v5378
          %v5380 = vlaneseq
          %v5381 = vshrl.u32 %v5380, 7
          %v5382 = vsub.s32 %v5379, %v5381
          %v5383 = vrot.slane %v5375, %v5382
          %5384 = vset.pattern.permute.xlu0 3
          %5385 = vperm.xlu0 %5384, %v4968
          %v5386 = vpop.permute.xlu0 %5385
          %v5389 = vunpack.c.l.s4 839922192
          %v5390 = vunpack.c.0.s8 %v5389
          %v5391 = vlaneseq
          %v5392 = vshrl.u32 %v5391, 7
          %v5393 = vsub.s32 %v5390, %v5392
          %v5394 = vrot.slane %v5386, %v5393
          %5395 = vset.pattern.permute.xlu0 3
          %5396 = vperm.xlu0 %5395, %v4972
          %v5397 = vpop.permute.xlu0 %5396
          %v5400 = vunpack.c.l.s4 839922192
          %v5401 = vunpack.c.0.s8 %v5400
          %v5402 = vlaneseq
          %v5403 = vshrl.u32 %v5402, 7
          %v5404 = vsub.s32 %v5401, %v5403
          %v5405 = vrot.slane %v5397, %v5404
          %5406 = vset.pattern.permute.xlu0 3
          %5407 = vperm.xlu0 %5406, %v4976
          %v5408 = vpop.permute.xlu0 %5407
          %v5411 = vunpack.c.l.s4 839922192
          %v5412 = vunpack.c.0.s8 %v5411
          %v5413 = vlaneseq
          %v5414 = vshrl.u32 %v5413, 7
          %v5415 = vsub.s32 %v5412, %v5414
          %v5416 = vrot.slane %v5408, %v5415
          %5417 = vset.pattern.permute.xlu0 3
          %5418 = vperm.xlu0 %5417, %v4980
          %v5419 = vpop.permute.xlu0 %5418
          %v5422 = vunpack.c.l.s4 839922192
          %v5423 = vunpack.c.0.s8 %v5422
          %v5424 = vlaneseq
          %v5425 = vshrl.u32 %v5424, 7
          %v5426 = vsub.s32 %v5423, %v5425
          %v5427 = vrot.slane %v5419, %v5426
          %5428 = vset.pattern.permute.xlu0 3
          %5429 = vperm.xlu0 %5428, %v4984
          %v5430 = vpop.permute.xlu0 %5429
          %v5433 = vunpack.c.l.s4 839922192
          %v5434 = vunpack.c.0.s8 %v5433
          %v5435 = vlaneseq
          %v5436 = vshrl.u32 %v5435, 7
          %v5437 = vsub.s32 %v5434, %v5436
          %v5438 = vrot.slane %v5430, %v5437
          %5439 = vset.pattern.permute.xlu0 3
          %5440 = vperm.xlu0 %5439, %v4988
          %v5441 = vpop.permute.xlu0 %5440
          %v5444 = vunpack.c.l.s4 839922192
          %v5445 = vunpack.c.0.s8 %v5444
          %v5446 = vlaneseq
          %v5447 = vshrl.u32 %v5446, 7
          %v5448 = vsub.s32 %v5445, %v5447
          %v5449 = vrot.slane %v5441, %v5448
          %5450 = vset.pattern.permute.xlu0 3
          %5451 = vperm.xlu0 %5450, %v4992
          %v5452 = vpop.permute.xlu0 %5451
          %v5455 = vunpack.c.l.s4 839922192
          %v5456 = vunpack.c.0.s8 %v5455
          %v5457 = vlaneseq
          %v5458 = vshrl.u32 %v5457, 7
          %v5459 = vsub.s32 %v5456, %v5458
          %v5460 = vrot.slane %v5452, %v5459
          %v5469 = vcombine.low %v5383, %v5394
          %v5470 = vcombine.low %v5405, %v5416
          %v5471 = vcombine.low %v5427, %v5438
          %v5472 = vcombine.low %v5449, %v5460
          %5473 = vrot.lane.b32.xlu0 %v5469, 48
          %v5474 = vpop.permute.xlu0 %5473
          %5475 = vrot.lane.b32.xlu0 %v5470, 48
          %v5476 = vpop.permute.xlu0 %5475
          %5477 = vrot.lane.b32.xlu0 %v5471, 48
          %v5478 = vpop.permute.xlu0 %5477
          %5479 = vrot.lane.b32.xlu0 %v5472, 48
          %v5480 = vpop.permute.xlu0 %5479
          %v5485 = vmul.f32 %v4897, %v5474
          %v5486 = vmul.f32 %v4900, %v5476
          %v5487 = vmul.f32 %v4905, %v5478
          %v5488 = vmul.f32 %v4908, %v5480
          %5493 = vrot.lane.b32.xlu0 %v5485, 80
          %v5494 = vpop.permute.xlu0 %5493
          %5495 = vrot.lane.b32.xlu0 %v5486, 80
          %v5496 = vpop.permute.xlu0 %5495
          %5497 = vrot.lane.b32.xlu0 %v5487, 80
          %v5498 = vpop.permute.xlu0 %5497
          %5499 = vrot.lane.b32.xlu0 %v5488, 80
          %v5500 = vpop.permute.xlu0 %5499
          %v5505 = vadd.f32 %v5369, %v5494
          %v5506 = vadd.f32 %v5370, %v5496
          %v5507 = vadd.f32 %v5371, %v5498
          %v5508 = vadd.f32 %v5372, %v5500
          %v5511 = vrot.slane %v5505, 4
          %v5512 = vrot.slane %v5507, 4
          %v5515 = vadd.f32 %v5505, %v5511
          %v5516 = vadd.f32 %v5507, %v5512
          %v5517 = vadd.f32 %v5515, %v5506
          %v5518 = vadd.f32 %v5516, %v5508
          %v5521 = vrot.slane %v5506, 4
          %v5522 = vrot.slane %v5508, 4
          %v5525 = vadd.f32 %v5517, %v5521
          %v5526 = vadd.f32 %v5518, %v5522
          %v5527 = vmul.f32 %v5525, 0.5
          %v5528 = vmul.f32 %v5526, 0.5
          %v5529 = vmax.f32 %v5527, 0.0
          %v5530 = vmax.f32 %v5528, 0.0
          %v5531 = vld [vmem:[#allocation4] sm:$0xff]
          %v5532 = vld [vmem:[#allocation4 + $0x8] sm:$0xff]
          %v5533 = vld [vmem:[#allocation16] sm:$0xff]
          %v5534 = vld [vmem:[#allocation16 + $0x8] sm:$0xff]
          %v5535 = vld [vmem:[#allocation16 + $0x10] sm:$0xff]
          %v5536 = vld [vmem:[#allocation16 + $0x18] sm:$0xff]
          %v5537 = vld [vmem:[#allocation16 + $0x20] sm:$0xff]
          %v5538 = vld [vmem:[#allocation16 + $0x28] sm:$0xff]
          %v5539 = vld [vmem:[#allocation16 + $0x30] sm:$0xff]
          %v5540 = vld [vmem:[#allocation16 + $0x38] sm:$0xff]
          %v5541 = vld [vmem:[#allocation16 + $0x40] sm:$0xff]
          %v5542 = vld [vmem:[#allocation16 + $0x48] sm:$0xff]
          %v5543 = vld [vmem:[#allocation16 + $0x50] sm:$0xff]
          %v5544 = vld [vmem:[#allocation16 + $0x58] sm:$0xff]
          %v5545 = vld [vmem:[#allocation16 + $0x60] sm:$0xff]
          %v5546 = vld [vmem:[#allocation16 + $0x68] sm:$0xff]
          %v5547 = vld [vmem:[#allocation16 + $0x70] sm:$0xff]
          %v5548 = vld [vmem:[#allocation16 + $0x78] sm:$0xff]
          %v5549 = vld [vmem:[#allocation16 + $0x80] sm:$0xff]
          %v5550 = vld [vmem:[#allocation16 + $0x88] sm:$0xff]
          %v5551 = vld [vmem:[#allocation16 + $0x90] sm:$0xff]
          %v5552 = vld [vmem:[#allocation16 + $0x98] sm:$0xff]
          %v5553 = vld [vmem:[#allocation16 + $0xa0] sm:$0xff]
          %v5554 = vld [vmem:[#allocation16 + $0xa8] sm:$0xff]
          %v5555 = vld [vmem:[#allocation16 + $0xb0] sm:$0xff]
          %v5556 = vld [vmem:[#allocation16 + $0xb8] sm:$0xff]
          %v5557 = vld [vmem:[#allocation16 + $0xc0] sm:$0xff]
          %v5558 = vld [vmem:[#allocation16 + $0xc8] sm:$0xff]
          %v5559 = vld [vmem:[#allocation16 + $0xd0] sm:$0xff]
          %v5560 = vld [vmem:[#allocation16 + $0xd8] sm:$0xff]
          %v5561 = vld [vmem:[#allocation16 + $0xe0] sm:$0xff]
          %v5562 = vld [vmem:[#allocation16 + $0xe8] sm:$0xff]
          %v5563 = vld [vmem:[#allocation16 + $0xf0] sm:$0xff]
          %v5564 = vld [vmem:[#allocation16 + $0xf8] sm:$0xff]
          %v5565 = vld [vmem:[#allocation16 + $0x100] sm:$0xff]
          %v5566 = vld [vmem:[#allocation16 + $0x108] sm:$0xff]
          %v5567 = vld [vmem:[#allocation16 + $0x110] sm:$0xff]
          %v5568 = vld [vmem:[#allocation16 + $0x118] sm:$0xff]
          %v5569 = vld [vmem:[#allocation16 + $0x120] sm:$0xff]
          %v5570 = vld [vmem:[#allocation16 + $0x128] sm:$0xff]
          %v5571 = vld [vmem:[#allocation16 + $0x130] sm:$0xff]
          %v5572 = vld [vmem:[#allocation16 + $0x138] sm:$0xff]
          %v5573 = vld [vmem:[#allocation16 + $0x140] sm:$0xff]
          %v5574 = vld [vmem:[#allocation16 + $0x148] sm:$0xff]
          %v5575 = vld [vmem:[#allocation16 + $0x150] sm:$0xff]
          %v5576 = vld [vmem:[#allocation16 + $0x158] sm:$0xff]
          %v5577 = vld [vmem:[#allocation16 + $0x160] sm:$0xff]
          %v5578 = vld [vmem:[#allocation16 + $0x168] sm:$0xff]
          %v5579 = vld [vmem:[#allocation16 + $0x170] sm:$0xff]
          %v5580 = vld [vmem:[#allocation16 + $0x178] sm:$0xff]
          %v5581 = vld [vmem:[#allocation16 + $0x180] sm:$0xff]
          %v5582 = vld [vmem:[#allocation16 + $0x188] sm:$0xff]
          %v5583 = vld [vmem:[#allocation16 + $0x190] sm:$0xff]
          %v5584 = vld [vmem:[#allocation16 + $0x198] sm:$0xff]
          %v5585 = vld [vmem:[#allocation16 + $0x1a0] sm:$0xff]
          %v5586 = vld [vmem:[#allocation16 + $0x1a8] sm:$0xff]
          %v5587 = vld [vmem:[#allocation16 + $0x1b0] sm:$0xff]
          %v5588 = vld [vmem:[#allocation16 + $0x1b8] sm:$0xff]
          %v5589 = vld [vmem:[#allocation16 + $0x1c0] sm:$0xff]
          %v5590 = vld [vmem:[#allocation16 + $0x1c8] sm:$0xff]
          %v5591 = vld [vmem:[#allocation16 + $0x1d0] sm:$0xff]
          %v5592 = vld [vmem:[#allocation16 + $0x1d8] sm:$0xff]
          %v5593 = vld [vmem:[#allocation16 + $0x1e0] sm:$0xff]
          %v5594 = vld [vmem:[#allocation16 + $0x1e8] sm:$0xff]
          %v5595 = vld [vmem:[#allocation16 + $0x1f0] sm:$0xff]
          %v5596 = vld [vmem:[#allocation16 + $0x1f8] sm:$0xff]
          %v5661 = vunpack.c.l.b16 %v5533
          %v5662 = vunpack.c.h.b16 %v5533
          %v5663 = vunpack.c.l.b16 %v5534
          %v5664 = vunpack.c.h.b16 %v5534
          %v5665 = vunpack.c.l.b16 %v5535
          %v5666 = vunpack.c.h.b16 %v5535
          %v5667 = vunpack.c.l.b16 %v5536
          %v5668 = vunpack.c.h.b16 %v5536
          %v5669 = vunpack.c.l.b16 %v5537
          %v5670 = vunpack.c.h.b16 %v5537
          %v5671 = vunpack.c.l.b16 %v5538
          %v5672 = vunpack.c.h.b16 %v5538
          %v5673 = vunpack.c.l.b16 %v5539
          %v5674 = vunpack.c.h.b16 %v5539
          %v5675 = vunpack.c.l.b16 %v5540
          %v5676 = vunpack.c.h.b16 %v5540
          %v5677 = vunpack.c.l.b16 %v5541
          %v5678 = vunpack.c.h.b16 %v5541
          %v5679 = vunpack.c.l.b16 %v5542
          %v5680 = vunpack.c.h.b16 %v5542
          %v5681 = vunpack.c.l.b16 %v5543
          %v5682 = vunpack.c.h.b16 %v5543
          %v5683 = vunpack.c.l.b16 %v5544
          %v5684 = vunpack.c.h.b16 %v5544
          %v5685 = vunpack.c.l.b16 %v5545
          %v5686 = vunpack.c.h.b16 %v5545
          %v5687 = vunpack.c.l.b16 %v5546
          %v5688 = vunpack.c.h.b16 %v5546
          %v5689 = vunpack.c.l.b16 %v5547
          %v5690 = vunpack.c.h.b16 %v5547
          %v5691 = vunpack.c.l.b16 %v5548
          %v5692 = vunpack.c.h.b16 %v5548
          %v5693 = vunpack.c.l.b16 %v5549
          %v5694 = vunpack.c.h.b16 %v5549
          %v5695 = vunpack.c.l.b16 %v5550
          %v5696 = vunpack.c.h.b16 %v5550
          %v5697 = vunpack.c.l.b16 %v5551
          %v5698 = vunpack.c.h.b16 %v5551
          %v5699 = vunpack.c.l.b16 %v5552
          %v5700 = vunpack.c.h.b16 %v5552
          %v5701 = vunpack.c.l.b16 %v5553
          %v5702 = vunpack.c.h.b16 %v5553
          %v5703 = vunpack.c.l.b16 %v5554
          %v5704 = vunpack.c.h.b16 %v5554
          %v5705 = vunpack.c.l.b16 %v5555
          %v5706 = vunpack.c.h.b16 %v5555
          %v5707 = vunpack.c.l.b16 %v5556
          %v5708 = vunpack.c.h.b16 %v5556
          %v5709 = vunpack.c.l.b16 %v5557
          %v5710 = vunpack.c.h.b16 %v5557
          %v5711 = vunpack.c.l.b16 %v5558
          %v5712 = vunpack.c.h.b16 %v5558
          %v5713 = vunpack.c.l.b16 %v5559
          %v5714 = vunpack.c.h.b16 %v5559
          %v5715 = vunpack.c.l.b16 %v5560
          %v5716 = vunpack.c.h.b16 %v5560
          %v5717 = vunpack.c.l.b16 %v5561
          %v5718 = vunpack.c.h.b16 %v5561
          %v5719 = vunpack.c.l.b16 %v5562
          %v5720 = vunpack.c.h.b16 %v5562
          %v5721 = vunpack.c.l.b16 %v5563
          %v5722 = vunpack.c.h.b16 %v5563
          %v5723 = vunpack.c.l.b16 %v5564
          %v5724 = vunpack.c.h.b16 %v5564
          %v5725 = vunpack.c.l.b16 %v5565
          %v5726 = vunpack.c.h.b16 %v5565
          %v5727 = vunpack.c.l.b16 %v5566
          %v5728 = vunpack.c.h.b16 %v5566
          %v5729 = vunpack.c.l.b16 %v5567
          %v5730 = vunpack.c.h.b16 %v5567
          %v5731 = vunpack.c.l.b16 %v5568
          %v5732 = vunpack.c.h.b16 %v5568
          %v5733 = vunpack.c.l.b16 %v5569
          %v5734 = vunpack.c.h.b16 %v5569
          %v5735 = vunpack.c.l.b16 %v5570
          %v5736 = vunpack.c.h.b16 %v5570
          %v5737 = vunpack.c.l.b16 %v5571
          %v5738 = vunpack.c.h.b16 %v5571
          %v5739 = vunpack.c.l.b16 %v5572
          %v5740 = vunpack.c.h.b16 %v5572
          %v5741 = vunpack.c.l.b16 %v5573
          %v5742 = vunpack.c.h.b16 %v5573
          %v5743 = vunpack.c.l.b16 %v5574
          %v5744 = vunpack.c.h.b16 %v5574
          %v5745 = vunpack.c.l.b16 %v5575
          %v5746 = vunpack.c.h.b16 %v5575
          %v5747 = vunpack.c.l.b16 %v5576
          %v5748 = vunpack.c.h.b16 %v5576
          %v5749 = vunpack.c.l.b16 %v5577
          %v5750 = vunpack.c.h.b16 %v5577
          %v5751 = vunpack.c.l.b16 %v5578
          %v5752 = vunpack.c.h.b16 %v5578
          %v5753 = vunpack.c.l.b16 %v5579
          %v5754 = vunpack.c.h.b16 %v5579
          %v5755 = vunpack.c.l.b16 %v5580
          %v5756 = vunpack.c.h.b16 %v5580
          %v5757 = vunpack.c.l.b16 %v5581
          %v5758 = vunpack.c.h.b16 %v5581
          %v5759 = vunpack.c.l.b16 %v5582
          %v5760 = vunpack.c.h.b16 %v5582
          %v5761 = vunpack.c.l.b16 %v5583
          %v5762 = vunpack.c.h.b16 %v5583
          %v5763 = vunpack.c.l.b16 %v5584
          %v5764 = vunpack.c.h.b16 %v5584
          %v5765 = vunpack.c.l.b16 %v5585
          %v5766 = vunpack.c.h.b16 %v5585
          %v5767 = vunpack.c.l.b16 %v5586
          %v5768 = vunpack.c.h.b16 %v5586
          %v5769 = vunpack.c.l.b16 %v5587
          %v5770 = vunpack.c.h.b16 %v5587
          %v5771 = vunpack.c.l.b16 %v5588
          %v5772 = vunpack.c.h.b16 %v5588
          %v5773 = vunpack.c.l.b16 %v5589
          %v5774 = vunpack.c.h.b16 %v5589
          %v5775 = vunpack.c.l.b16 %v5590
          %v5776 = vunpack.c.h.b16 %v5590
          %v5777 = vunpack.c.l.b16 %v5591
          %v5778 = vunpack.c.h.b16 %v5591
          %v5779 = vunpack.c.l.b16 %v5592
          %v5780 = vunpack.c.h.b16 %v5592
          %v5781 = vunpack.c.l.b16 %v5593
          %v5782 = vunpack.c.h.b16 %v5593
          %v5783 = vunpack.c.l.b16 %v5594
          %v5784 = vunpack.c.h.b16 %v5594
          %v5785 = vunpack.c.l.b16 %v5595
          %v5786 = vunpack.c.h.b16 %v5595
          %v5787 = vunpack.c.l.b16 %v5596
          %v5788 = vunpack.c.h.b16 %v5596
          %v5789 = vpack.c.b16 %v5669, %v5661
          %v5790 = vpack.c.b16 %v5670, %v5662
          %v5791 = vpack.c.b16 %v5671, %v5663
          %v5792 = vpack.c.b16 %v5672, %v5664
          %v5793 = vpack.c.b16 %v5673, %v5665
          %v5794 = vpack.c.b16 %v5674, %v5666
          %v5795 = vpack.c.b16 %v5675, %v5667
          %v5796 = vpack.c.b16 %v5676, %v5668
          %v5797 = vpack.c.b16 %v5685, %v5677
          %v5798 = vpack.c.b16 %v5686, %v5678
          %v5799 = vpack.c.b16 %v5687, %v5679
          %v5800 = vpack.c.b16 %v5688, %v5680
          %v5801 = vpack.c.b16 %v5689, %v5681
          %v5802 = vpack.c.b16 %v5690, %v5682
          %v5803 = vpack.c.b16 %v5691, %v5683
          %v5804 = vpack.c.b16 %v5692, %v5684
          %v5805 = vpack.c.b16 %v5701, %v5693
          %v5806 = vpack.c.b16 %v5702, %v5694
          %v5807 = vpack.c.b16 %v5703, %v5695
          %v5808 = vpack.c.b16 %v5704, %v5696
          %v5809 = vpack.c.b16 %v5705, %v5697
          %v5810 = vpack.c.b16 %v5706, %v5698
          %v5811 = vpack.c.b16 %v5707, %v5699
          %v5812 = vpack.c.b16 %v5708, %v5700
          %v5813 = vpack.c.b16 %v5717, %v5709
          %v5814 = vpack.c.b16 %v5718, %v5710
          %v5815 = vpack.c.b16 %v5719, %v5711
          %v5816 = vpack.c.b16 %v5720, %v5712
          %v5817 = vpack.c.b16 %v5721, %v5713
          %v5818 = vpack.c.b16 %v5722, %v5714
          %v5819 = vpack.c.b16 %v5723, %v5715
          %v5820 = vpack.c.b16 %v5724, %v5716
          %v5821 = vpack.c.b16 %v5733, %v5725
          %v5822 = vpack.c.b16 %v5734, %v5726
          %v5823 = vpack.c.b16 %v5735, %v5727
          %v5824 = vpack.c.b16 %v5736, %v5728
          %v5825 = vpack.c.b16 %v5737, %v5729
          %v5826 = vpack.c.b16 %v5738, %v5730
          %v5827 = vpack.c.b16 %v5739, %v5731
          %v5828 = vpack.c.b16 %v5740, %v5732
          %v5829 = vpack.c.b16 %v5749, %v5741
          %v5830 = vpack.c.b16 %v5750, %v5742
          %v5831 = vpack.c.b16 %v5751, %v5743
          %v5832 = vpack.c.b16 %v5752, %v5744
          %v5833 = vpack.c.b16 %v5753, %v5745
          %v5834 = vpack.c.b16 %v5754, %v5746
          %v5835 = vpack.c.b16 %v5755, %v5747
          %v5836 = vpack.c.b16 %v5756, %v5748
          %v5837 = vpack.c.b16 %v5765, %v5757
          %v5838 = vpack.c.b16 %v5766, %v5758
          %v5839 = vpack.c.b16 %v5767, %v5759
          %v5840 = vpack.c.b16 %v5768, %v5760
          %v5841 = vpack.c.b16 %v5769, %v5761
          %v5842 = vpack.c.b16 %v5770, %v5762
          %v5843 = vpack.c.b16 %v5771, %v5763
          %v5844 = vpack.c.b16 %v5772, %v5764
          %v5845 = vpack.c.b16 %v5781, %v5773
          %v5846 = vpack.c.b16 %v5782, %v5774
          %v5847 = vpack.c.b16 %v5783, %v5775
          %v5848 = vpack.c.b16 %v5784, %v5776
          %v5849 = vpack.c.b16 %v5785, %v5777
          %v5850 = vpack.c.b16 %v5786, %v5778
          %v5851 = vpack.c.b16 %v5787, %v5779
          %v5852 = vpack.c.b16 %v5788, %v5780
          %5917 = vmatprep.subr.bf16.mxu0 %v5790
          %5918 = vmatpush1.bf16.msra.mxu0 %v5789
          %5919 = vmatprep.subr.bf16.mxu0 %v5798
          %5920 = vmatpush1.bf16.msra.mxu0 %v5797
          %5921 = vmatprep.subr.bf16.mxu0 %v5806
          %5922 = vmatpush1.bf16.msra.mxu0 %v5805
          %5923 = vmatprep.subr.bf16.mxu0 %v5814
          %5924 = vmatpush1.bf16.msra.mxu0 %v5813
          %5925 = vmatprep.subr.bf16.mxu0 %v5822
          %5926 = vmatpush1.bf16.msra.mxu0 %v5821
          %5927 = vmatprep.subr.bf16.mxu0 %v5830
          %5928 = vmatpush1.bf16.msra.mxu0 %v5829
          %5929 = vmatprep.subr.bf16.mxu0 %v5838
          %5930 = vmatpush1.bf16.msra.mxu0 %v5837
          %5931 = vmatprep.subr.bf16.mxu0 %v5846
          %5932 = vmatpush1.bf16.msra.mxu0 %v5845
          %5933 = vmatprep.subr.bf16.mxu0 0
          %5934 = vmatpush1.bf16.msra.mxu0 0
          %5935 = vmatprep.subr.bf16.mxu0 0
          %5936 = vmatpush1.bf16.msra.mxu0 0
          %5937 = vmatprep.subr.bf16.mxu0 0
          %5938 = vmatpush1.bf16.msra.mxu0 0
          %5939 = vmatprep.subr.bf16.mxu0 0
          %5940 = vmatpush1.bf16.msra.mxu0 0
          %5941 = vmatprep.subr.bf16.mxu0 0
          %5942 = vmatpush1.bf16.msra.mxu0 0
          %5943 = vmatprep.subr.bf16.mxu0 0
          %5944 = vmatpush1.bf16.msra.mxu0 0
          %5945 = vmatprep.subr.bf16.mxu0 0
          %5946 = vmatpush1.bf16.msra.mxu0 0
          %5947 = vmatprep.subr.bf16.mxu0 0
          %5948 = vmatpush1.bf16.msra.mxu0 0
          %5949 = vmatprep.mubr.bf16.mxu0 0
          %5950 = vmatmul.mubr.bf16.gmra.mrb[0].mxu0 %v5531
          %v5951 = vpop.f32.mrb[0].mxu0
          %v5952 = vadd.f32 0.0, %v5951
          %v5953 = vpop.f32.mrb[0].mxu0
          %v5954 = vadd.f32 0.0, %v5953
          %v5955 = vpop.f32.mrb[0].mxu0
          %v5956 = vadd.f32 0.0, %v5955
          %v5957 = vpop.f32.mrb[0].mxu0
          %v5958 = vadd.f32 0.0, %v5957
          %5959 = vmatprep.mubr.bf16.mxu0 0
          %5960 = vmatmul.mubr.bf16.gmra.mrb[0].mxu0 %v5532
          %v5961 = vpop.f32.mrb[0].mxu0
          %v5962 = vadd.f32 0.0, %v5961
          %v5963 = vpop.f32.mrb[0].mxu0
          %v5964 = vadd.f32 0.0, %v5963
          %v5965 = vpop.f32.mrb[0].mxu0
          %v5966 = vadd.f32 0.0, %v5965
          %v5967 = vpop.f32.mrb[0].mxu0
          %v5968 = vadd.f32 0.0, %v5967
          %5969 = vdwg.mxu0
          %5970 = vmatprep.subr.bf16.mxu0 %v5792
          %5971 = vmatpush1.bf16.msra.mxu0 %v5791
          %5972 = vmatprep.subr.bf16.mxu0 %v5800
          %5973 = vmatpush1.bf16.msra.mxu0 %v5799
          %5974 = vmatprep.subr.bf16.mxu0 %v5808
          %5975 = vmatpush1.bf16.msra.mxu0 %v5807
          %5976 = vmatprep.subr.bf16.mxu0 %v5816
          %5977 = vmatpush1.bf16.msra.mxu0 %v5815
          %5978 = vmatprep.subr.bf16.mxu0 %v5824
          %5979 = vmatpush1.bf16.msra.mxu0 %v5823
          %5980 = vmatprep.subr.bf16.mxu0 %v5832
          %5981 = vmatpush1.bf16.msra.mxu0 %v5831
          %5982 = vmatprep.subr.bf16.mxu0 %v5840
          %5983 = vmatpush1.bf16.msra.mxu0 %v5839
          %5984 = vmatprep.subr.bf16.mxu0 %v5848
          %5985 = vmatpush1.bf16.msra.mxu0 %v5847
          %5986 = vmatprep.subr.bf16.mxu0 0
          %5987 = vmatpush1.bf16.msra.mxu0 0
          %5988 = vmatprep.subr.bf16.mxu0 0
          %5989 = vmatpush1.bf16.msra.mxu0 0
          %5990 = vmatprep.subr.bf16.mxu0 0
          %5991 = vmatpush1.bf16.msra.mxu0 0
          %5992 = vmatprep.subr.bf16.mxu0 0
          %5993 = vmatpush1.bf16.msra.mxu0 0
          %5994 = vmatprep.subr.bf16.mxu0 0
          %5995 = vmatpush1.bf16.msra.mxu0 0
          %5996 = vmatprep.subr.bf16.mxu0 0
          %5997 = vmatpush1.bf16.msra.mxu0 0
          %5998 = vmatprep.subr.bf16.mxu0 0
          %5999 = vmatpush1.bf16.msra.mxu0 0
          %6000 = vmatprep.subr.bf16.mxu0 0
          %6001 = vmatpush1.bf16.msra.mxu0 0
          %6002 = vmatprep.mubr.bf16.mxu0 0
          %6003 = vmatmul.mubr.bf16.gmra.mrb[0].mxu0 %v5531
          %v6004 = vpop.f32.mrb[0].mxu0
          %v6005 = vadd.f32 0.0, %v6004
          %v6006 = vpop.f32.mrb[0].mxu0
          %v6007 = vadd.f32 0.0, %v6006
          %v6008 = vpop.f32.mrb[0].mxu0
          %v6009 = vadd.f32 0.0, %v6008
          %v6010 = vpop.f32.mrb[0].mxu0
          %v6011 = vadd.f32 0.0, %v6010
          %6012 = vmatprep.mubr.bf16.mxu0 0
          %6013 = vmatmul.mubr.bf16.gmra.mrb[0].mxu0 %v5532
          %v6014 = vpop.f32.mrb[0].mxu0
          %v6015 = vadd.f32 0.0, %v6014
          %v6016 = vpop.f32.mrb[0].mxu0
          %v6017 = vadd.f32 0.0, %v6016
          %v6018 = vpop.f32.mrb[0].mxu0
          %v6019 = vadd.f32 0.0, %v6018
          %v6020 = vpop.f32.mrb[0].mxu0
          %v6021 = vadd.f32 0.0, %v6020
          %6022 = vdwg.mxu0
          %6023 = vmatprep.subr.bf16.mxu0 %v5794
          %6024 = vmatpush1.bf16.msra.mxu0 %v5793
          %6025 = vmatprep.subr.bf16.mxu0 %v5802
          %6026 = vmatpush1.bf16.msra.mxu0 %v5801
          %6027 = vmatprep.subr.bf16.mxu0 %v5810
          %6028 = vmatpush1.bf16.msra.mxu0 %v5809
          %6029 = vmatprep.subr.bf16.mxu0 %v5818
          %6030 = vmatpush1.bf16.msra.mxu0 %v5817
          %6031 = vmatprep.subr.bf16.mxu0 %v5826
          %6032 = vmatpush1.bf16.msra.mxu0 %v5825
          %6033 = vmatprep.subr.bf16.mxu0 %v5834
          %6034 = vmatpush1.bf16.msra.mxu0 %v5833
          %6035 = vmatprep.subr.bf16.mxu0 %v5842
          %6036 = vmatpush1.bf16.msra.mxu0 %v5841
          %6037 = vmatprep.subr.bf16.mxu0 %v5850
          %6038 = vmatpush1.bf16.msra.mxu0 %v5849
          %6039 = vmatprep.subr.bf16.mxu0 0
          %6040 = vmatpush1.bf16.msra.mxu0 0
          %6041 = vmatprep.subr.bf16.mxu0 0
          %6042 = vmatpush1.bf16.msra.mxu0 0
          %6043 = vmatprep.subr.bf16.mxu0 0
          %6044 = vmatpush1.bf16.msra.mxu0 0
          %6045 = vmatprep.subr.bf16.mxu0 0
          %6046 = vmatpush1.bf16.msra.mxu0 0
          %6047 = vmatprep.subr.bf16.mxu0 0
          %6048 = vmatpush1.bf16.msra.mxu0 0
          %6049 = vmatprep.subr.bf16.mxu0 0
          %6050 = vmatpush1.bf16.msra.mxu0 0
          %6051 = vmatprep.subr.bf16.mxu0 0
          %6052 = vmatpush1.bf16.msra.mxu0 0
          %6053 = vmatprep.subr.bf16.mxu0 0
          %6054 = vmatpush1.bf16.msra.mxu0 0
          %6055 = vmatprep.mubr.bf16.mxu0 0
          %6056 = vmatmul.mubr.bf16.gmra.mrb[0].mxu0 %v5531
          %v6057 = vpop.f32.mrb[0].mxu0
          %v6058 = vadd.f32 0.0, %v6057
          %v6059 = vpop.f32.mrb[0].mxu0
          %v6060 = vadd.f32 0.0, %v6059
          %v6061 = vpop.f32.mrb[0].mxu0
          %v6062 = vadd.f32 0.0, %v6061
          %v6063 = vpop.f32.mrb[0].mxu0
          %v6064 = vadd.f32 0.0, %v6063
          %6065 = vmatprep.mubr.bf16.mxu0 0
          %6066 = vmatmul.mubr.bf16.gmra.mrb[0].mxu0 %v5532
          %v6067 = vpop.f32.mrb[0].mxu0
          %v6068 = vadd.f32 0.0, %v6067
          %v6069 = vpop.f32.mrb[0].mxu0
          %v6070 = vadd.f32 0.0, %v6069
          %v6071 = vpop.f32.mrb[0].mxu0
          %v6072 = vadd.f32 0.0, %v6071
          %v6073 = vpop.f32.mrb[0].mxu0
          %v6074 = vadd.f32 0.0, %v6073
          %6075 = vdwg.mxu0
          %6076 = vmatprep.subr.bf16.mxu0 %v5796
          %6077 = vmatpush1.bf16.msra.mxu0 %v5795
          %6078 = vmatprep.subr.bf16.mxu0 %v5804
          %6079 = vmatpush1.bf16.msra.mxu0 %v5803
          %6080 = vmatprep.subr.bf16.mxu0 %v5812
          %6081 = vmatpush1.bf16.msra.mxu0 %v5811
          %6082 = vmatprep.subr.bf16.mxu0 %v5820
          %6083 = vmatpush1.bf16.msra.mxu0 %v5819
          %6084 = vmatprep.subr.bf16.mxu0 %v5828
          %6085 = vmatpush1.bf16.msra.mxu0 %v5827
          %6086 = vmatprep.subr.bf16.mxu0 %v5836
          %6087 = vmatpush1.bf16.msra.mxu0 %v5835
          %6088 = vmatprep.subr.bf16.mxu0 %v5844
          %6089 = vmatpush1.bf16.msra.mxu0 %v5843
          %6090 = vmatprep.subr.bf16.mxu0 %v5852
          %6091 = vmatpush1.bf16.msra.mxu0 %v5851
          %6092 = vmatprep.subr.bf16.mxu0 0
          %6093 = vmatpush1.bf16.msra.mxu0 0
          %6094 = vmatprep.subr.bf16.mxu0 0
          %6095 = vmatpush1.bf16.msra.mxu0 0
          %6096 = vmatprep.subr.bf16.mxu0 0
          %6097 = vmatpush1.bf16.msra.mxu0 0
          %6098 = vmatprep.subr.bf16.mxu0 0
          %6099 = vmatpush1.bf16.msra.mxu0 0
          %6100 = vmatprep.subr.bf16.mxu0 0
          %6101 = vmatpush1.bf16.msra.mxu0 0
          %6102 = vmatprep.subr.bf16.mxu0 0
          %6103 = vmatpush1.bf16.msra.mxu0 0
          %6104 = vmatprep.subr.bf16.mxu0 0
          %6105 = vmatpush1.bf16.msra.mxu0 0
          %6106 = vmatprep.subr.bf16.mxu0 0
          %6107 = vmatpush1.bf16.msra.mxu0 0
          %6108 = vmatprep.mubr.bf16.mxu0 0
          %6109 = vmatmul.mubr.bf16.gmra.mrb[0].mxu0 %v5531
          %v6110 = vpop.f32.mrb[0].mxu0
          %v6111 = vadd.f32 0.0, %v6110
          %v6112 = vpop.f32.mrb[0].mxu0
          %v6113 = vadd.f32 0.0, %v6112
          %v6114 = vpop.f32.mrb[0].mxu0
          %v6115 = vadd.f32 0.0, %v6114
          %v6116 = vpop.f32.mrb[0].mxu0
          %v6117 = vadd.f32 0.0, %v6116
          %6118 = vmatprep.mubr.bf16.mxu0 0
          %6119 = vmatmul.mubr.bf16.gmra.mrb[0].mxu0 %v5532
          %v6120 = vpop.f32.mrb[0].mxu0
          %v6121 = vadd.f32 0.0, %v6120
          %v6122 = vpop.f32.mrb[0].mxu0
          %v6123 = vadd.f32 0.0, %v6122
          %v6124 = vpop.f32.mrb[0].mxu0
          %v6125 = vadd.f32 0.0, %v6124
          %v6126 = vpop.f32.mrb[0].mxu0
          %v6127 = vadd.f32 0.0, %v6126
          %6128 = vdwg.mxu0
          %v6132 = vunpack.c.l.s4 1966171168
          %v6133 = vunpack.c.0.s8 %v6132
          %v6134 = vlaneseq
          %v6135 = vshrl.u32 %v6134, 7
          %v6136 = vsub.s32 %v6133, %v6135
          %v6137 = vrot.slane %v5529, %v6136
          %v6138 = vcombine.high %v6137, %v6137
          %v6140 = vunpack.c.l.s4 1966171168
          %v6141 = vunpack.c.0.s8 %v6140
          %v6142 = vlaneseq
          %v6143 = vshrl.u32 %v6142, 7
          %v6144 = vsub.s32 %v6141, %v6143
          %v6145 = vrot.slane %v6137, %v6144
          %v6147 = vunpack.c.l.s4 1966171168
          %v6148 = vunpack.c.0.s8 %v6147
          %v6149 = vlaneseq
          %v6150 = vshrl.u32 %v6149, 7
          %v6151 = vsub.s32 %v6148, %v6150
          %v6152 = vrot.slane %v6138, %v6151
          %v6153 = vcombine.high %v6145, %v6145
          %v6154 = vcombine.high %v6152, %v6152
          %v6156 = vunpack.c.l.s4 1966171168
          %v6157 = vunpack.c.0.s8 %v6156
          %v6158 = vlaneseq
          %v6159 = vshrl.u32 %v6158, 7
          %v6160 = vsub.s32 %v6157, %v6159
          %v6161 = vrot.slane %v5530, %v6160
          %v6162 = vcombine.high %v6161, %v6161
          %v6164 = vunpack.c.l.s4 1966171168
          %v6165 = vunpack.c.0.s8 %v6164
          %v6166 = vlaneseq
          %v6167 = vshrl.u32 %v6166, 7
          %v6168 = vsub.s32 %v6165, %v6167
          %v6169 = vrot.slane %v6161, %v6168
          %v6171 = vunpack.c.l.s4 1966171168
          %v6172 = vunpack.c.0.s8 %v6171
          %v6173 = vlaneseq
          %v6174 = vshrl.u32 %v6173, 7
          %v6175 = vsub.s32 %v6172, %v6174
          %v6176 = vrot.slane %v6162, %v6175
          %v6177 = vcombine.high %v6169, %v6169
          %v6178 = vcombine.high %v6176, %v6176
          %v6179 = vlaneseq
          %v6180 = vshrl.u32 %v6179, 7
          %v6181 = vsub.s32 0, %v6180
          %v6182 = vrot.slane %v6145, %v6181
          %v6183 = vlaneseq
          %v6184 = vshrl.u32 %v6183, 7
          %v6185 = vsub.s32 0, %v6184
          %v6186 = vrot.slane %v6152, %v6185
          %v6187 = vlaneseq
          %v6188 = vshrl.u32 %v6187, 7
          %v6189 = vsub.s32 0, %v6188
          %v6190 = vrot.slane %v6153, %v6189
          %v6191 = vlaneseq
          %v6192 = vshrl.u32 %v6191, 7
          %v6193 = vsub.s32 0, %v6192
          %v6194 = vrot.slane %v6154, %v6193
          %v6195 = vlaneseq
          %v6196 = vshrl.u32 %v6195, 7
          %v6197 = vsub.s32 0, %v6196
          %v6198 = vrot.slane %v6169, %v6197
          %v6199 = vlaneseq
          %v6200 = vshrl.u32 %v6199, 7
          %v6201 = vsub.s32 0, %v6200
          %v6202 = vrot.slane %v6176, %v6201
          %v6203 = vlaneseq
          %v6204 = vshrl.u32 %v6203, 7
          %v6205 = vsub.s32 0, %v6204
          %v6206 = vrot.slane %v6177, %v6205
          %v6207 = vlaneseq
          %v6208 = vshrl.u32 %v6207, 7
          %v6209 = vsub.s32 0, %v6208
          %v6210 = vrot.slane %v6178, %v6209
          %6211 = vset.pattern.permute.xlu0 0
          %6212 = vperm.xlu0 %6211, %v6182
          %v6213 = vpop.permute.xlu0 %6212
          %v6216 = vunpack.c.l.s4 839922192
          %v6217 = vunpack.c.0.s8 %v6216
          %v6218 = vlaneseq
          %v6219 = vshrl.u32 %v6218, 7
          %v6220 = vsub.s32 %v6217, %v6219
          %v6221 = vrot.slane %v6213, %v6220
          %6222 = vset.pattern.permute.xlu0 0
          %6223 = vperm.xlu0 %6222, %v6186
          %v6224 = vpop.permute.xlu0 %6223
          %v6227 = vunpack.c.l.s4 839922192
          %v6228 = vunpack.c.0.s8 %v6227
          %v6229 = vlaneseq
          %v6230 = vshrl.u32 %v6229, 7
          %v6231 = vsub.s32 %v6228, %v6230
          %v6232 = vrot.slane %v6224, %v6231
          %6233 = vset.pattern.permute.xlu0 0
          %6234 = vperm.xlu0 %6233, %v6190
          %v6235 = vpop.permute.xlu0 %6234
          %v6238 = vunpack.c.l.s4 839922192
          %v6239 = vunpack.c.0.s8 %v6238
          %v6240 = vlaneseq
          %v6241 = vshrl.u32 %v6240, 7
          %v6242 = vsub.s32 %v6239, %v6241
          %v6243 = vrot.slane %v6235, %v6242
          %6244 = vset.pattern.permute.xlu0 0
          %6245 = vperm.xlu0 %6244, %v6194
          %v6246 = vpop.permute.xlu0 %6245
          %v6249 = vunpack.c.l.s4 839922192
          %v6250 = vunpack.c.0.s8 %v6249
          %v6251 = vlaneseq
          %v6252 = vshrl.u32 %v6251, 7
          %v6253 = vsub.s32 %v6250, %v6252
          %v6254 = vrot.slane %v6246, %v6253
          %6255 = vset.pattern.permute.xlu0 0
          %6256 = vperm.xlu0 %6255, %v6198
          %v6257 = vpop.permute.xlu0 %6256
          %v6260 = vunpack.c.l.s4 839922192
          %v6261 = vunpack.c.0.s8 %v6260
          %v6262 = vlaneseq
          %v6263 = vshrl.u32 %v6262, 7
          %v6264 = vsub.s32 %v6261, %v6263
          %v6265 = vrot.slane %v6257, %v6264
          %6266 = vset.pattern.permute.xlu0 0
          %6267 = vperm.xlu0 %6266, %v6202
          %v6268 = vpop.permute.xlu0 %6267
          %v6271 = vunpack.c.l.s4 839922192
          %v6272 = vunpack.c.0.s8 %v6271
          %v6273 = vlaneseq
          %v6274 = vshrl.u32 %v6273, 7
          %v6275 = vsub.s32 %v6272, %v6274
          %v6276 = vrot.slane %v6268, %v6275
          %6277 = vset.pattern.permute.xlu0 0
          %6278 = vperm.xlu0 %6277, %v6206
          %v6279 = vpop.permute.xlu0 %6278
          %v6282 = vunpack.c.l.s4 839922192
          %v6283 = vunpack.c.0.s8 %v6282
          %v6284 = vlaneseq
          %v6285 = vshrl.u32 %v6284, 7
          %v6286 = vsub.s32 %v6283, %v6285
          %v6287 = vrot.slane %v6279, %v6286
          %6288 = vset.pattern.permute.xlu0 0
          %6289 = vperm.xlu0 %6288, %v6210
          %v6290 = vpop.permute.xlu0 %6289
          %v6293 = vunpack.c.l.s4 839922192
          %v6294 = vunpack.c.0.s8 %v6293
          %v6295 = vlaneseq
          %v6296 = vshrl.u32 %v6295, 7
          %v6297 = vsub.s32 %v6294, %v6296
          %v6298 = vrot.slane %v6290, %v6297
          %v6307 = vcombine.low %v6221, %v6232
          %v6308 = vcombine.low %v6243, %v6254
          %v6309 = vcombine.low %v6265, %v6276
          %v6310 = vcombine.low %v6287, %v6298
          %v6315 = vmul.f32 %v5952, %v6307
          %v6316 = vmul.f32 %v5956, %v6308
          %v6317 = vmul.f32 %v5962, %v6309
          %v6318 = vmul.f32 %v5966, %v6310
          %6319 = vset.pattern.permute.xlu0 1
          %6320 = vperm.xlu0 %6319, %v6182
          %v6321 = vpop.permute.xlu0 %6320
          %v6324 = vunpack.c.l.s4 839922192
          %v6325 = vunpack.c.0.s8 %v6324
          %v6326 = vlaneseq
          %v6327 = vshrl.u32 %v6326, 7
          %v6328 = vsub.s32 %v6325, %v6327
          %v6329 = vrot.slane %v6321, %v6328
          %6330 = vset.pattern.permute.xlu0 1
          %6331 = vperm.xlu0 %6330, %v6186
          %v6332 = vpop.permute.xlu0 %6331
          %v6335 = vunpack.c.l.s4 839922192
          %v6336 = vunpack.c.0.s8 %v6335
          %v6337 = vlaneseq
          %v6338 = vshrl.u32 %v6337, 7
          %v6339 = vsub.s32 %v6336, %v6338
          %v6340 = vrot.slane %v6332, %v6339
          %6341 = vset.pattern.permute.xlu0 1
          %6342 = vperm.xlu0 %6341, %v6190
          %v6343 = vpop.permute.xlu0 %6342
          %v6346 = vunpack.c.l.s4 839922192
          %v6347 = vunpack.c.0.s8 %v6346
          %v6348 = vlaneseq
          %v6349 = vshrl.u32 %v6348, 7
          %v6350 = vsub.s32 %v6347, %v6349
          %v6351 = vrot.slane %v6343, %v6350
          %6352 = vset.pattern.permute.xlu0 1
          %6353 = vperm.xlu0 %6352, %v6194
          %v6354 = vpop.permute.xlu0 %6353
          %v6357 = vunpack.c.l.s4 839922192
          %v6358 = vunpack.c.0.s8 %v6357
          %v6359 = vlaneseq
          %v6360 = vshrl.u32 %v6359, 7
          %v6361 = vsub.s32 %v6358, %v6360
          %v6362 = vrot.slane %v6354, %v6361
          %6363 = vset.pattern.permute.xlu0 1
          %6364 = vperm.xlu0 %6363, %v6198
          %v6365 = vpop.permute.xlu0 %6364
          %v6368 = vunpack.c.l.s4 839922192
          %v6369 = vunpack.c.0.s8 %v6368
          %v6370 = vlaneseq
          %v6371 = vshrl.u32 %v6370, 7
          %v6372 = vsub.s32 %v6369, %v6371
          %v6373 = vrot.slane %v6365, %v6372
          %6374 = vset.pattern.permute.xlu0 1
          %6375 = vperm.xlu0 %6374, %v6202
          %v6376 = vpop.permute.xlu0 %6375
          %v6379 = vunpack.c.l.s4 839922192
          %v6380 = vunpack.c.0.s8 %v6379
          %v6381 = vlaneseq
          %v6382 = vshrl.u32 %v6381, 7
          %v6383 = vsub.s32 %v6380, %v6382
          %v6384 = vrot.slane %v6376, %v6383
          %6385 = vset.pattern.permute.xlu0 1
          %6386 = vperm.xlu0 %6385, %v6206
          %v6387 = vpop.permute.xlu0 %6386
          %v6390 = vunpack.c.l.s4 839922192
          %v6391 = vunpack.c.0.s8 %v6390
          %v6392 = vlaneseq
          %v6393 = vshrl.u32 %v6392, 7
          %v6394 = vsub.s32 %v6391, %v6393
          %v6395 = vrot.slane %v6387, %v6394
          %6396 = vset.pattern.permute.xlu0 1
          %6397 = vperm.xlu0 %6396, %v6210
          %v6398 = vpop.permute.xlu0 %6397
          %v6401 = vunpack.c.l.s4 839922192
          %v6402 = vunpack.c.0.s8 %v6401
          %v6403 = vlaneseq
          %v6404 = vshrl.u32 %v6403, 7
          %v6405 = vsub.s32 %v6402, %v6404
          %v6406 = vrot.slane %v6398, %v6405
          %v6415 = vcombine.low %v6329, %v6340
          %v6416 = vcombine.low %v6351, %v6362
          %v6417 = vcombine.low %v6373, %v6384
          %v6418 = vcombine.low %v6395, %v6406
          %6419 = vrot.lane.b32.xlu0 %v6415, 64
          %v6420 = vpop.permute.xlu0 %6419
          %6421 = vrot.lane.b32.xlu0 %v6416, 64
          %v6422 = vpop.permute.xlu0 %6421
          %6423 = vrot.lane.b32.xlu0 %v6417, 64
          %v6424 = vpop.permute.xlu0 %6423
          %6425 = vrot.lane.b32.xlu0 %v6418, 64
          %v6426 = vpop.permute.xlu0 %6425
          %v6431 = vmul.f32 %v5952, %v6420
          %v6432 = vmul.f32 %v5956, %v6422
          %v6433 = vmul.f32 %v5962, %v6424
          %v6434 = vmul.f32 %v5966, %v6426
          %6439 = vrot.lane.b32.xlu0 %v6431, 64
          %v6440 = vpop.permute.xlu0 %6439
          %6441 = vrot.lane.b32.xlu0 %v6432, 64
          %v6442 = vpop.permute.xlu0 %6441
          %6443 = vrot.lane.b32.xlu0 %v6433, 64
          %v6444 = vpop.permute.xlu0 %6443
          %6445 = vrot.lane.b32.xlu0 %v6434, 64
          %v6446 = vpop.permute.xlu0 %6445
          %v6451 = vadd.f32 %v6315, %v6440
          %v6452 = vadd.f32 %v6316, %v6442
          %v6453 = vadd.f32 %v6317, %v6444
          %v6454 = vadd.f32 %v6318, %v6446
          %6455 = vset.pattern.permute.xlu0 2
          %6456 = vperm.xlu0 %6455, %v6182
          %v6457 = vpop.permute.xlu0 %6456
          %v6460 = vunpack.c.l.s4 839922192
          %v6461 = vunpack.c.0.s8 %v6460
          %v6462 = vlaneseq
          %v6463 = vshrl.u32 %v6462, 7
          %v6464 = vsub.s32 %v6461, %v6463
          %v6465 = vrot.slane %v6457, %v6464
          %6466 = vset.pattern.permute.xlu0 2
          %6467 = vperm.xlu0 %6466, %v6186
          %v6468 = vpop.permute.xlu0 %6467
          %v6471 = vunpack.c.l.s4 839922192
          %v6472 = vunpack.c.0.s8 %v6471
          %v6473 = vlaneseq
          %v6474 = vshrl.u32 %v6473, 7
          %v6475 = vsub.s32 %v6472, %v6474
          %v6476 = vrot.slane %v6468, %v6475
          %6477 = vset.pattern.permute.xlu0 2
          %6478 = vperm.xlu0 %6477, %v6190
          %v6479 = vpop.permute.xlu0 %6478
          %v6482 = vunpack.c.l.s4 839922192
          %v6483 = vunpack.c.0.s8 %v6482
          %v6484 = vlaneseq
          %v6485 = vshrl.u32 %v6484, 7
          %v6486 = vsub.s32 %v6483, %v6485
          %v6487 = vrot.slane %v6479, %v6486
          %6488 = vset.pattern.permute.xlu0 2
          %6489 = vperm.xlu0 %6488, %v6194
          %v6490 = vpop.permute.xlu0 %6489
          %v6493 = vunpack.c.l.s4 839922192
          %v6494 = vunpack.c.0.s8 %v6493
          %v6495 = vlaneseq
          %v6496 = vshrl.u32 %v6495, 7
          %v6497 = vsub.s32 %v6494, %v6496
          %v6498 = vrot.slane %v6490, %v6497
          %6499 = vset.pattern.permute.xlu0 2
          %6500 = vperm.xlu0 %6499, %v6198
          %v6501 = vpop.permute.xlu0 %6500
          %v6504 = vunpack.c.l.s4 839922192
          %v6505 = vunpack.c.0.s8 %v6504
          %v6506 = vlaneseq
          %v6507 = vshrl.u32 %v6506, 7
          %v6508 = vsub.s32 %v6505, %v6507
          %v6509 = vrot.slane %v6501, %v6508
          %6510 = vset.pattern.permute.xlu0 2
          %6511 = vperm.xlu0 %6510, %v6202
          %v6512 = vpop.permute.xlu0 %6511
          %v6515 = vunpack.c.l.s4 839922192
          %v6516 = vunpack.c.0.s8 %v6515
          %v6517 = vlaneseq
          %v6518 = vshrl.u32 %v6517, 7
          %v6519 = vsub.s32 %v6516, %v6518
          %v6520 = vrot.slane %v6512, %v6519
          %6521 = vset.pattern.permute.xlu0 2
          %6522 = vperm.xlu0 %6521, %v6206
          %v6523 = vpop.permute.xlu0 %6522
          %v6526 = vunpack.c.l.s4 839922192
          %v6527 = vunpack.c.0.s8 %v6526
          %v6528 = vlaneseq
          %v6529 = vshrl.u32 %v6528, 7
          %v6530 = vsub.s32 %v6527, %v6529
          %v6531 = vrot.slane %v6523, %v6530
          %6532 = vset.pattern.permute.xlu0 2
          %6533 = vperm.xlu0 %6532, %v6210
          %v6534 = vpop.permute.xlu0 %6533
          %v6537 = vunpack.c.l.s4 839922192
          %v6538 = vunpack.c.0.s8 %v6537
          %v6539 = vlaneseq
          %v6540 = vshrl.u32 %v6539, 7
          %v6541 = vsub.s32 %v6538, %v6540
          %v6542 = vrot.slane %v6534, %v6541
          %v6551 = vcombine.low %v6465, %v6476
          %v6552 = vcombine.low %v6487, %v6498
          %v6553 = vcombine.low %v6509, %v6520
          %v6554 = vcombine.low %v6531, %v6542
          %v6559 = vmul.f32 %v5954, %v6551
          %v6560 = vmul.f32 %v5958, %v6552
          %v6561 = vmul.f32 %v5964, %v6553
          %v6562 = vmul.f32 %v5968, %v6554
          %v6563 = vadd.f32 %v6451, %v6559
          %v6564 = vadd.f32 %v6452, %v6560
          %v6565 = vadd.f32 %v6453, %v6561
          %v6566 = vadd.f32 %v6454, %v6562
          %6567 = vset.pattern.permute.xlu0 3
          %6568 = vperm.xlu0 %6567, %v6182
          %v6569 = vpop.permute.xlu0 %6568
          %v6572 = vunpack.c.l.s4 839922192
          %v6573 = vunpack.c.0.s8 %v6572
          %v6574 = vlaneseq
          %v6575 = vshrl.u32 %v6574, 7
          %v6576 = vsub.s32 %v6573, %v6575
          %v6577 = vrot.slane %v6569, %v6576
          %6578 = vset.pattern.permute.xlu0 3
          %6579 = vperm.xlu0 %6578, %v6186
          %v6580 = vpop.permute.xlu0 %6579
          %v6583 = vunpack.c.l.s4 839922192
          %v6584 = vunpack.c.0.s8 %v6583
          %v6585 = vlaneseq
          %v6586 = vshrl.u32 %v6585, 7
          %v6587 = vsub.s32 %v6584, %v6586
          %v6588 = vrot.slane %v6580, %v6587
          %6589 = vset.pattern.permute.xlu0 3
          %6590 = vperm.xlu0 %6589, %v6190
          %v6591 = vpop.permute.xlu0 %6590
          %v6594 = vunpack.c.l.s4 839922192
          %v6595 = vunpack.c.0.s8 %v6594
          %v6596 = vlaneseq
          %v6597 = vshrl.u32 %v6596, 7
          %v6598 = vsub.s32 %v6595, %v6597
          %v6599 = vrot.slane %v6591, %v6598
          %6600 = vset.pattern.permute.xlu0 3
          %6601 = vperm.xlu0 %6600, %v6194
          %v6602 = vpop.permute.xlu0 %6601
          %v6605 = vunpack.c.l.s4 839922192
          %v6606 = vunpack.c.0.s8 %v6605
          %v6607 = vlaneseq
          %v6608 = vshrl.u32 %v6607, 7
          %v6609 = vsub.s32 %v6606, %v6608
          %v6610 = vrot.slane %v6602, %v6609
          %6611 = vset.pattern.permute.xlu0 3
          %6612 = vperm.xlu0 %6611, %v6198
          %v6613 = vpop.permute.xlu0 %6612
          %v6616 = vunpack.c.l.s4 839922192
          %v6617 = vunpack.c.0.s8 %v6616
          %v6618 = vlaneseq
          %v6619 = vshrl.u32 %v6618, 7
          %v6620 = vsub.s32 %v6617, %v6619
          %v6621 = vrot.slane %v6613, %v6620
          %6622 = vset.pattern.permute.xlu0 3
          %6623 = vperm.xlu0 %6622, %v6202
          %v6624 = vpop.permute.xlu0 %6623
          %v6627 = vunpack.c.l.s4 839922192
          %v6628 = vunpack.c.0.s8 %v6627
          %v6629 = vlaneseq
          %v6630 = vshrl.u32 %v6629, 7
          %v6631 = vsub.s32 %v6628, %v6630
          %v6632 = vrot.slane %v6624, %v6631
          %6633 = vset.pattern.permute.xlu0 3
          %6634 = vperm.xlu0 %6633, %v6206
          %v6635 = vpop.permute.xlu0 %6634
          %v6638 = vunpack.c.l.s4 839922192
          %v6639 = vunpack.c.0.s8 %v6638
          %v6640 = vlaneseq
          %v6641 = vshrl.u32 %v6640, 7
          %v6642 = vsub.s32 %v6639, %v6641
          %v6643 = vrot.slane %v6635, %v6642
          %6644 = vset.pattern.permute.xlu0 3
          %6645 = vperm.xlu0 %6644, %v6210
          %v6646 = vpop.permute.xlu0 %6645
          %v6649 = vunpack.c.l.s4 839922192
          %v6650 = vunpack.c.0.s8 %v6649
          %v6651 = vlaneseq
          %v6652 = vshrl.u32 %v6651, 7
          %v6653 = vsub.s32 %v6650, %v6652
          %v6654 = vrot.slane %v6646, %v6653
          %v6663 = vcombine.low %v6577, %v6588
          %v6664 = vcombine.low %v6599, %v6610
          %v6665 = vcombine.low %v6621, %v6632
          %v6666 = vcombine.low %v6643, %v6654
          %6667 = vrot.lane.b32.xlu0 %v6663, 64
          %v6668 = vpop.permute.xlu0 %6667
          %6669 = vrot.lane.b32.xlu0 %v6664, 64
          %v6670 = vpop.permute.xlu0 %6669
          %6671 = vrot.lane.b32.xlu0 %v6665, 64
          %v6672 = vpop.permute.xlu0 %6671
          %6673 = vrot.lane.b32.xlu0 %v6666, 64
          %v6674 = vpop.permute.xlu0 %6673
          %v6679 = vmul.f32 %v5954, %v6668
          %v6680 = vmul.f32 %v5958, %v6670
          %v6681 = vmul.f32 %v5964, %v6672
          %v6682 = vmul.f32 %v5968, %v6674
          %6687 = vrot.lane.b32.xlu0 %v6679, 64
          %v6688 = vpop.permute.xlu0 %6687
          %6689 = vrot.lane.b32.xlu0 %v6680, 64
          %v6690 = vpop.permute.xlu0 %6689
          %6691 = vrot.lane.b32.xlu0 %v6681, 64
          %v6692 = vpop.permute.xlu0 %6691
          %6693 = vrot.lane.b32.xlu0 %v6682, 64
          %v6694 = vpop.permute.xlu0 %6693
          %v6699 = vadd.f32 %v6563, %v6688
          %v6700 = vadd.f32 %v6564, %v6690
          %v6701 = vadd.f32 %v6565, %v6692
          %v6702 = vadd.f32 %v6566, %v6694
          %6703 = vset.pattern.permute.xlu0 4
          %6704 = vperm.xlu0 %6703, %v6182
          %v6705 = vpop.permute.xlu0 %6704
          %v6708 = vunpack.c.l.s4 839922192
          %v6709 = vunpack.c.0.s8 %v6708
          %v6710 = vlaneseq
          %v6711 = vshrl.u32 %v6710, 7
          %v6712 = vsub.s32 %v6709, %v6711
          %v6713 = vrot.slane %v6705, %v6712
          %6714 = vset.pattern.permute.xlu0 4
          %6715 = vperm.xlu0 %6714, %v6186
          %v6716 = vpop.permute.xlu0 %6715
          %v6719 = vunpack.c.l.s4 839922192
          %v6720 = vunpack.c.0.s8 %v6719
          %v6721 = vlaneseq
          %v6722 = vshrl.u32 %v6721, 7
          %v6723 = vsub.s32 %v6720, %v6722
          %v6724 = vrot.slane %v6716, %v6723
          %6725 = vset.pattern.permute.xlu0 4
          %6726 = vperm.xlu0 %6725, %v6190
          %v6727 = vpop.permute.xlu0 %6726
          %v6730 = vunpack.c.l.s4 839922192
          %v6731 = vunpack.c.0.s8 %v6730
          %v6732 = vlaneseq
          %v6733 = vshrl.u32 %v6732, 7
          %v6734 = vsub.s32 %v6731, %v6733
          %v6735 = vrot.slane %v6727, %v6734
          %6736 = vset.pattern.permute.xlu0 4
          %6737 = vperm.xlu0 %6736, %v6194
          %v6738 = vpop.permute.xlu0 %6737
          %v6741 = vunpack.c.l.s4 839922192
          %v6742 = vunpack.c.0.s8 %v6741
          %v6743 = vlaneseq
          %v6744 = vshrl.u32 %v6743, 7
          %v6745 = vsub.s32 %v6742, %v6744
          %v6746 = vrot.slane %v6738, %v6745
          %6747 = vset.pattern.permute.xlu0 4
          %6748 = vperm.xlu0 %6747, %v6198
          %v6749 = vpop.permute.xlu0 %6748
          %v6752 = vunpack.c.l.s4 839922192
          %v6753 = vunpack.c.0.s8 %v6752
          %v6754 = vlaneseq
          %v6755 = vshrl.u32 %v6754, 7
          %v6756 = vsub.s32 %v6753, %v6755
          %v6757 = vrot.slane %v6749, %v6756
          %6758 = vset.pattern.permute.xlu0 4
          %6759 = vperm.xlu0 %6758, %v6202
          %v6760 = vpop.permute.xlu0 %6759
          %v6763 = vunpack.c.l.s4 839922192
          %v6764 = vunpack.c.0.s8 %v6763
          %v6765 = vlaneseq
          %v6766 = vshrl.u32 %v6765, 7
          %v6767 = vsub.s32 %v6764, %v6766
          %v6768 = vrot.slane %v6760, %v6767
          %6769 = vset.pattern.permute.xlu0 4
          %6770 = vperm.xlu0 %6769, %v6206
          %v6771 = vpop.permute.xlu0 %6770
          %v6774 = vunpack.c.l.s4 839922192
          %v6775 = vunpack.c.0.s8 %v6774
          %v6776 = vlaneseq
          %v6777 = vshrl.u32 %v6776, 7
          %v6778 = vsub.s32 %v6775, %v6777
          %v6779 = vrot.slane %v6771, %v6778
          %6780 = vset.pattern.permute.xlu0 4
          %6781 = vperm.xlu0 %6780, %v6210
          %v6782 = vpop.permute.xlu0 %6781
          %v6785 = vunpack.c.l.s4 839922192
          %v6786 = vunpack.c.0.s8 %v6785
          %v6787 = vlaneseq
          %v6788 = vshrl.u32 %v6787, 7
          %v6789 = vsub.s32 %v6786, %v6788
          %v6790 = vrot.slane %v6782, %v6789
          %v6799 = vcombine.low %v6713, %v6724
          %v6800 = vcombine.low %v6735, %v6746
          %v6801 = vcombine.low %v6757, %v6768
          %v6802 = vcombine.low %v6779, %v6790
          %v6807 = vmul.f32 %v6005, %v6799
          %v6808 = vmul.f32 %v6009, %v6800
          %v6809 = vmul.f32 %v6015, %v6801
          %v6810 = vmul.f32 %v6019, %v6802
          %v6811 = vadd.f32 %v6699, %v6807
          %v6812 = vadd.f32 %v6700, %v6808
          %v6813 = vadd.f32 %v6701, %v6809
          %v6814 = vadd.f32 %v6702, %v6810
          %6815 = vset.pattern.permute.xlu0 5
          %6816 = vperm.xlu0 %6815, %v6182
          %v6817 = vpop.permute.xlu0 %6816
          %v6820 = vunpack.c.l.s4 839922192
          %v6821 = vunpack.c.0.s8 %v6820
          %v6822 = vlaneseq
          %v6823 = vshrl.u32 %v6822, 7
          %v6824 = vsub.s32 %v6821, %v6823
          %v6825 = vrot.slane %v6817, %v6824
          %6826 = vset.pattern.permute.xlu0 5
          %6827 = vperm.xlu0 %6826, %v6186
          %v6828 = vpop.permute.xlu0 %6827
          %v6831 = vunpack.c.l.s4 839922192
          %v6832 = vunpack.c.0.s8 %v6831
          %v6833 = vlaneseq
          %v6834 = vshrl.u32 %v6833, 7
          %v6835 = vsub.s32 %v6832, %v6834
          %v6836 = vrot.slane %v6828, %v6835
          %6837 = vset.pattern.permute.xlu0 5
          %6838 = vperm.xlu0 %6837, %v6190
          %v6839 = vpop.permute.xlu0 %6838
          %v6842 = vunpack.c.l.s4 839922192
          %v6843 = vunpack.c.0.s8 %v6842
          %v6844 = vlaneseq
          %v6845 = vshrl.u32 %v6844, 7
          %v6846 = vsub.s32 %v6843, %v6845
          %v6847 = vrot.slane %v6839, %v6846
          %6848 = vset.pattern.permute.xlu0 5
          %6849 = vperm.xlu0 %6848, %v6194
          %v6850 = vpop.permute.xlu0 %6849
          %v6853 = vunpack.c.l.s4 839922192
          %v6854 = vunpack.c.0.s8 %v6853
          %v6855 = vlaneseq
          %v6856 = vshrl.u32 %v6855, 7
          %v6857 = vsub.s32 %v6854, %v6856
          %v6858 = vrot.slane %v6850, %v6857
          %6859 = vset.pattern.permute.xlu0 5
          %6860 = vperm.xlu0 %6859, %v6198
          %v6861 = vpop.permute.xlu0 %6860
          %v6864 = vunpack.c.l.s4 839922192
          %v6865 = vunpack.c.0.s8 %v6864
          %v6866 = vlaneseq
          %v6867 = vshrl.u32 %v6866, 7
          %v6868 = vsub.s32 %v6865, %v6867
          %v6869 = vrot.slane %v6861, %v6868
          %6870 = vset.pattern.permute.xlu0 5
          %6871 = vperm.xlu0 %6870, %v6202
          %v6872 = vpop.permute.xlu0 %6871
          %v6875 = vunpack.c.l.s4 839922192
          %v6876 = vunpack.c.0.s8 %v6875
          %v6877 = vlaneseq
          %v6878 = vshrl.u32 %v6877, 7
          %v6879 = vsub.s32 %v6876, %v6878
          %v6880 = vrot.slane %v6872, %v6879
          %6881 = vset.pattern.permute.xlu0 5
          %6882 = vperm.xlu0 %6881, %v6206
          %v6883 = vpop.permute.xlu0 %6882
          %v6886 = vunpack.c.l.s4 839922192
          %v6887 = vunpack.c.0.s8 %v6886
          %v6888 = vlaneseq
          %v6889 = vshrl.u32 %v6888, 7
          %v6890 = vsub.s32 %v6887, %v6889
          %v6891 = vrot.slane %v6883, %v6890
          %6892 = vset.pattern.permute.xlu0 5
          %6893 = vperm.xlu0 %6892, %v6210
          %v6894 = vpop.permute.xlu0 %6893
          %v6897 = vunpack.c.l.s4 839922192
          %v6898 = vunpack.c.0.s8 %v6897
          %v6899 = vlaneseq
          %v6900 = vshrl.u32 %v6899, 7
          %v6901 = vsub.s32 %v6898, %v6900
          %v6902 = vrot.slane %v6894, %v6901
          %v6911 = vcombine.low %v6825, %v6836
          %v6912 = vcombine.low %v6847, %v6858
          %v6913 = vcombine.low %v6869, %v6880
          %v6914 = vcombine.low %v6891, %v6902
          %6915 = vrot.lane.b32.xlu0 %v6911, 64
          %v6916 = vpop.permute.xlu0 %6915
          %6917 = vrot.lane.b32.xlu0 %v6912, 64
          %v6918 = vpop.permute.xlu0 %6917
          %6919 = vrot.lane.b32.xlu0 %v6913, 64
          %v6920 = vpop.permute.xlu0 %6919
          %6921 = vrot.lane.b32.xlu0 %v6914, 64
          %v6922 = vpop.permute.xlu0 %6921
          %v6927 = vmul.f32 %v6005, %v6916
          %v6928 = vmul.f32 %v6009, %v6918
          %v6929 = vmul.f32 %v6015, %v6920
          %v6930 = vmul.f32 %v6019, %v6922
          %6935 = vrot.lane.b32.xlu0 %v6927, 64
          %v6936 = vpop.permute.xlu0 %6935
          %6937 = vrot.lane.b32.xlu0 %v6928, 64
          %v6938 = vpop.permute.xlu0 %6937
          %6939 = vrot.lane.b32.xlu0 %v6929, 64
          %v6940 = vpop.permute.xlu0 %6939
          %6941 = vrot.lane.b32.xlu0 %v6930, 64
          %v6942 = vpop.permute.xlu0 %6941
          %v6947 = vadd.f32 %v6811, %v6936
          %v6948 = vadd.f32 %v6812, %v6938
          %v6949 = vadd.f32 %v6813, %v6940
          %v6950 = vadd.f32 %v6814, %v6942
          %6951 = vset.pattern.permute.xlu0 6
          %6952 = vperm.xlu0 %6951, %v6182
          %v6953 = vpop.permute.xlu0 %6952
          %v6956 = vunpack.c.l.s4 839922192
          %v6957 = vunpack.c.0.s8 %v6956
          %v6958 = vlaneseq
          %v6959 = vshrl.u32 %v6958, 7
          %v6960 = vsub.s32 %v6957, %v6959
          %v6961 = vrot.slane %v6953, %v6960
          %6962 = vset.pattern.permute.xlu0 6
          %6963 = vperm.xlu0 %6962, %v6186
          %v6964 = vpop.permute.xlu0 %6963
          %v6967 = vunpack.c.l.s4 839922192
          %v6968 = vunpack.c.0.s8 %v6967
          %v6969 = vlaneseq
          %v6970 = vshrl.u32 %v6969, 7
          %v6971 = vsub.s32 %v6968, %v6970
          %v6972 = vrot.slane %v6964, %v6971
          %6973 = vset.pattern.permute.xlu0 6
          %6974 = vperm.xlu0 %6973, %v6190
          %v6975 = vpop.permute.xlu0 %6974
          %v6978 = vunpack.c.l.s4 839922192
          %v6979 = vunpack.c.0.s8 %v6978
          %v6980 = vlaneseq
          %v6981 = vshrl.u32 %v6980, 7
          %v6982 = vsub.s32 %v6979, %v6981
          %v6983 = vrot.slane %v6975, %v6982
          %6984 = vset.pattern.permute.xlu0 6
          %6985 = vperm.xlu0 %6984, %v6194
          %v6986 = vpop.permute.xlu0 %6985
          %v6989 = vunpack.c.l.s4 839922192
          %v6990 = vunpack.c.0.s8 %v6989
          %v6991 = vlaneseq
          %v6992 = vshrl.u32 %v6991, 7
          %v6993 = vsub.s32 %v6990, %v6992
          %v6994 = vrot.slane %v6986, %v6993
          %6995 = vset.pattern.permute.xlu0 6
          %6996 = vperm.xlu0 %6995, %v6198
          %v6997 = vpop.permute.xlu0 %6996
          %v7000 = vunpack.c.l.s4 839922192
          %v7001 = vunpack.c.0.s8 %v7000
          %v7002 = vlaneseq
          %v7003 = vshrl.u32 %v7002, 7
          %v7004 = vsub.s32 %v7001, %v7003
          %v7005 = vrot.slane %v6997, %v7004
          %7006 = vset.pattern.permute.xlu0 6
          %7007 = vperm.xlu0 %7006, %v6202
          %v7008 = vpop.permute.xlu0 %7007
          %v7011 = vunpack.c.l.s4 839922192
          %v7012 = vunpack.c.0.s8 %v7011
          %v7013 = vlaneseq
          %v7014 = vshrl.u32 %v7013, 7
          %v7015 = vsub.s32 %v7012, %v7014
          %v7016 = vrot.slane %v7008, %v7015
          %7017 = vset.pattern.permute.xlu0 6
          %7018 = vperm.xlu0 %7017, %v6206
          %v7019 = vpop.permute.xlu0 %7018
          %v7022 = vunpack.c.l.s4 839922192
          %v7023 = vunpack.c.0.s8 %v7022
          %v7024 = vlaneseq
          %v7025 = vshrl.u32 %v7024, 7
          %v7026 = vsub.s32 %v7023, %v7025
          %v7027 = vrot.slane %v7019, %v7026
          %7028 = vset.pattern.permute.xlu0 6
          %7029 = vperm.xlu0 %7028, %v6210
          %v7030 = vpop.permute.xlu0 %7029
          %v7033 = vunpack.c.l.s4 839922192
          %v7034 = vunpack.c.0.s8 %v7033
          %v7035 = vlaneseq
          %v7036 = vshrl.u32 %v7035, 7
          %v7037 = vsub.s32 %v7034, %v7036
          %v7038 = vrot.slane %v7030, %v7037
          %v7047 = vcombine.low %v6961, %v6972
          %v7048 = vcombine.low %v6983, %v6994
          %v7049 = vcombine.low %v7005, %v7016
          %v7050 = vcombine.low %v7027, %v7038
          %v7055 = vmul.f32 %v6007, %v7047
          %v7056 = vmul.f32 %v6011, %v7048
          %v7057 = vmul.f32 %v6017, %v7049
          %v7058 = vmul.f32 %v6021, %v7050
          %v7059 = vadd.f32 %v6947, %v7055
          %v7060 = vadd.f32 %v6948, %v7056
          %v7061 = vadd.f32 %v6949, %v7057
          %v7062 = vadd.f32 %v6950, %v7058
          %7063 = vset.pattern.permute.xlu0 7
          %7064 = vperm.xlu0 %7063, %v6182
          %v7065 = vpop.permute.xlu0 %7064
          %v7068 = vunpack.c.l.s4 839922192
          %v7069 = vunpack.c.0.s8 %v7068
          %v7070 = vlaneseq
          %v7071 = vshrl.u32 %v7070, 7
          %v7072 = vsub.s32 %v7069, %v7071
          %v7073 = vrot.slane %v7065, %v7072
          %7074 = vset.pattern.permute.xlu0 7
          %7075 = vperm.xlu0 %7074, %v6186
          %v7076 = vpop.permute.xlu0 %7075
          %v7079 = vunpack.c.l.s4 839922192
          %v7080 = vunpack.c.0.s8 %v7079
          %v7081 = vlaneseq
          %v7082 = vshrl.u32 %v7081, 7
          %v7083 = vsub.s32 %v7080, %v7082
          %v7084 = vrot.slane %v7076, %v7083
          %7085 = vset.pattern.permute.xlu0 7
          %7086 = vperm.xlu0 %7085, %v6190
          %v7087 = vpop.permute.xlu0 %7086
          %v7090 = vunpack.c.l.s4 839922192
          %v7091 = vunpack.c.0.s8 %v7090
          %v7092 = vlaneseq
          %v7093 = vshrl.u32 %v7092, 7
          %v7094 = vsub.s32 %v7091, %v7093
          %v7095 = vrot.slane %v7087, %v7094
          %7096 = vset.pattern.permute.xlu0 7
          %7097 = vperm.xlu0 %7096, %v6194
          %v7098 = vpop.permute.xlu0 %7097
          %v7101 = vunpack.c.l.s4 839922192
          %v7102 = vunpack.c.0.s8 %v7101
          %v7103 = vlaneseq
          %v7104 = vshrl.u32 %v7103, 7
          %v7105 = vsub.s32 %v7102, %v7104
          %v7106 = vrot.slane %v7098, %v7105
          %7107 = vset.pattern.permute.xlu0 7
          %7108 = vperm.xlu0 %7107, %v6198
          %v7109 = vpop.permute.xlu0 %7108
          %v7112 = vunpack.c.l.s4 839922192
          %v7113 = vunpack.c.0.s8 %v7112
          %v7114 = vlaneseq
          %v7115 = vshrl.u32 %v7114, 7
          %v7116 = vsub.s32 %v7113, %v7115
          %v7117 = vrot.slane %v7109, %v7116
          %7118 = vset.pattern.permute.xlu0 7
          %7119 = vperm.xlu0 %7118, %v6202
          %v7120 = vpop.permute.xlu0 %7119
          %v7123 = vunpack.c.l.s4 839922192
          %v7124 = vunpack.c.0.s8 %v7123
          %v7125 = vlaneseq
          %v7126 = vshrl.u32 %v7125, 7
          %v7127 = vsub.s32 %v7124, %v7126
          %v7128 = vrot.slane %v7120, %v7127
          %7129 = vset.pattern.permute.xlu0 7
          %7130 = vperm.xlu0 %7129, %v6206
          %v7131 = vpop.permute.xlu0 %7130
          %v7134 = vunpack.c.l.s4 839922192
          %v7135 = vunpack.c.0.s8 %v7134
          %v7136 = vlaneseq
          %v7137 = vshrl.u32 %v7136, 7
          %v7138 = vsub.s32 %v7135, %v7137
          %v7139 = vrot.slane %v7131, %v7138
          %7140 = vset.pattern.permute.xlu0 7
          %7141 = vperm.xlu0 %7140, %v6210
          %v7142 = vpop.permute.xlu0 %7141
          %v7145 = vunpack.c.l.s4 839922192
          %v7146 = vunpack.c.0.s8 %v7145
          %v7147 = vlaneseq
          %v7148 = vshrl.u32 %v7147, 7
          %v7149 = vsub.s32 %v7146, %v7148
          %v7150 = vrot.slane %v7142, %v7149
          %v7159 = vcombine.low %v7073, %v7084
          %v7160 = vcombine.low %v7095, %v7106
          %v7161 = vcombine.low %v7117, %v7128
          %v7162 = vcombine.low %v7139, %v7150
          %7163 = vrot.lane.b32.xlu0 %v7159, 64
          %v7164 = vpop.permute.xlu0 %7163
          %7165 = vrot.lane.b32.xlu0 %v7160, 64
          %v7166 = vpop.permute.xlu0 %7165
          %7167 = vrot.lane.b32.xlu0 %v7161, 64
          %v7168 = vpop.permute.xlu0 %7167
          %7169 = vrot.lane.b32.xlu0 %v7162, 64
          %v7170 = vpop.permute.xlu0 %7169
          %v7175 = vmul.f32 %v6007, %v7164
          %v7176 = vmul.f32 %v6011, %v7166
          %v7177 = vmul.f32 %v6017, %v7168
          %v7178 = vmul.f32 %v6021, %v7170
          %7183 = vrot.lane.b32.xlu0 %v7175, 64
          %v7184 = vpop.permute.xlu0 %7183
          %7185 = vrot.lane.b32.xlu0 %v7176, 64
          %v7186 = vpop.permute.xlu0 %7185
          %7187 = vrot.lane.b32.xlu0 %v7177, 64
          %v7188 = vpop.permute.xlu0 %7187
          %7189 = vrot.lane.b32.xlu0 %v7178, 64
          %v7190 = vpop.permute.xlu0 %7189
          %v7195 = vadd.f32 %v7059, %v7184
          %v7196 = vadd.f32 %v7060, %v7186
          %v7197 = vadd.f32 %v7061, %v7188
          %v7198 = vadd.f32 %v7062, %v7190
          %7199 = vset.pattern.permute.xlu0 8
          %7200 = vperm.xlu0 %7199, %v6182
          %v7201 = vpop.permute.xlu0 %7200
          %v7204 = vunpack.c.l.s4 839922192
          %v7205 = vunpack.c.0.s8 %v7204
          %v7206 = vlaneseq
          %v7207 = vshrl.u32 %v7206, 7
          %v7208 = vsub.s32 %v7205, %v7207
          %v7209 = vrot.slane %v7201, %v7208
          %7210 = vset.pattern.permute.xlu0 8
          %7211 = vperm.xlu0 %7210, %v6186
          %v7212 = vpop.permute.xlu0 %7211
          %v7215 = vunpack.c.l.s4 839922192
          %v7216 = vunpack.c.0.s8 %v7215
          %v7217 = vlaneseq
          %v7218 = vshrl.u32 %v7217, 7
          %v7219 = vsub.s32 %v7216, %v7218
          %v7220 = vrot.slane %v7212, %v7219
          %7221 = vset.pattern.permute.xlu0 8
          %7222 = vperm.xlu0 %7221, %v6190
          %v7223 = vpop.permute.xlu0 %7222
          %v7226 = vunpack.c.l.s4 839922192
          %v7227 = vunpack.c.0.s8 %v7226
          %v7228 = vlaneseq
          %v7229 = vshrl.u32 %v7228, 7
          %v7230 = vsub.s32 %v7227, %v7229
          %v7231 = vrot.slane %v7223, %v7230
          %7232 = vset.pattern.permute.xlu0 8
          %7233 = vperm.xlu0 %7232, %v6194
          %v7234 = vpop.permute.xlu0 %7233
          %v7237 = vunpack.c.l.s4 839922192
          %v7238 = vunpack.c.0.s8 %v7237
          %v7239 = vlaneseq
          %v7240 = vshrl.u32 %v7239, 7
          %v7241 = vsub.s32 %v7238, %v7240
          %v7242 = vrot.slane %v7234, %v7241
          %7243 = vset.pattern.permute.xlu0 8
          %7244 = vperm.xlu0 %7243, %v6198
          %v7245 = vpop.permute.xlu0 %7244
          %v7248 = vunpack.c.l.s4 839922192
          %v7249 = vunpack.c.0.s8 %v7248
          %v7250 = vlaneseq
          %v7251 = vshrl.u32 %v7250, 7
          %v7252 = vsub.s32 %v7249, %v7251
          %v7253 = vrot.slane %v7245, %v7252
          %7254 = vset.pattern.permute.xlu0 8
          %7255 = vperm.xlu0 %7254, %v6202
          %v7256 = vpop.permute.xlu0 %7255
          %v7259 = vunpack.c.l.s4 839922192
          %v7260 = vunpack.c.0.s8 %v7259
          %v7261 = vlaneseq
          %v7262 = vshrl.u32 %v7261, 7
          %v7263 = vsub.s32 %v7260, %v7262
          %v7264 = vrot.slane %v7256, %v7263
          %7265 = vset.pattern.permute.xlu0 8
          %7266 = vperm.xlu0 %7265, %v6206
          %v7267 = vpop.permute.xlu0 %7266
          %v7270 = vunpack.c.l.s4 839922192
          %v7271 = vunpack.c.0.s8 %v7270
          %v7272 = vlaneseq
          %v7273 = vshrl.u32 %v7272, 7
          %v7274 = vsub.s32 %v7271, %v7273
          %v7275 = vrot.slane %v7267, %v7274
          %7276 = vset.pattern.permute.xlu0 8
          %7277 = vperm.xlu0 %7276, %v6210
          %v7278 = vpop.permute.xlu0 %7277
          %v7281 = vunpack.c.l.s4 839922192
          %v7282 = vunpack.c.0.s8 %v7281
          %v7283 = vlaneseq
          %v7284 = vshrl.u32 %v7283, 7
          %v7285 = vsub.s32 %v7282, %v7284
          %v7286 = vrot.slane %v7278, %v7285
          %v7295 = vcombine.low %v7209, %v7220
          %v7296 = vcombine.low %v7231, %v7242
          %v7297 = vcombine.low %v7253, %v7264
          %v7298 = vcombine.low %v7275, %v7286
          %v7303 = vmul.f32 %v6058, %v7295
          %v7304 = vmul.f32 %v6062, %v7296
          %v7305 = vmul.f32 %v6068, %v7297
          %v7306 = vmul.f32 %v6072, %v7298
          %v7307 = vadd.f32 %v7195, %v7303
          %v7308 = vadd.f32 %v7196, %v7304
          %v7309 = vadd.f32 %v7197, %v7305
          %v7310 = vadd.f32 %v7198, %v7306
          %7311 = vset.pattern.permute.xlu0 9
          %7312 = vperm.xlu0 %7311, %v6182
          %v7313 = vpop.permute.xlu0 %7312
          %v7316 = vunpack.c.l.s4 839922192
          %v7317 = vunpack.c.0.s8 %v7316
          %v7318 = vlaneseq
          %v7319 = vshrl.u32 %v7318, 7
          %v7320 = vsub.s32 %v7317, %v7319
          %v7321 = vrot.slane %v7313, %v7320
          %7322 = vset.pattern.permute.xlu0 9
          %7323 = vperm.xlu0 %7322, %v6186
          %v7324 = vpop.permute.xlu0 %7323
          %v7327 = vunpack.c.l.s4 839922192
          %v7328 = vunpack.c.0.s8 %v7327
          %v7329 = vlaneseq
          %v7330 = vshrl.u32 %v7329, 7
          %v7331 = vsub.s32 %v7328, %v7330
          %v7332 = vrot.slane %v7324, %v7331
          %7333 = vset.pattern.permute.xlu0 9
          %7334 = vperm.xlu0 %7333, %v6190
          %v7335 = vpop.permute.xlu0 %7334
          %v7338 = vunpack.c.l.s4 839922192
          %v7339 = vunpack.c.0.s8 %v7338
          %v7340 = vlaneseq
          %v7341 = vshrl.u32 %v7340, 7
          %v7342 = vsub.s32 %v7339, %v7341
          %v7343 = vrot.slane %v7335, %v7342
          %7344 = vset.pattern.permute.xlu0 9
          %7345 = vperm.xlu0 %7344, %v6194
          %v7346 = vpop.permute.xlu0 %7345
          %v7349 = vunpack.c.l.s4 839922192
          %v7350 = vunpack.c.0.s8 %v7349
          %v7351 = vlaneseq
          %v7352 = vshrl.u32 %v7351, 7
          %v7353 = vsub.s32 %v7350, %v7352
          %v7354 = vrot.slane %v7346, %v7353
          %7355 = vset.pattern.permute.xlu0 9
          %7356 = vperm.xlu0 %7355, %v6198
          %v7357 = vpop.permute.xlu0 %7356
          %v7360 = vunpack.c.l.s4 839922192
          %v7361 = vunpack.c.0.s8 %v7360
          %v7362 = vlaneseq
          %v7363 = vshrl.u32 %v7362, 7
          %v7364 = vsub.s32 %v7361, %v7363
          %v7365 = vrot.slane %v7357, %v7364
          %7366 = vset.pattern.permute.xlu0 9
          %7367 = vperm.xlu0 %7366, %v6202
          %v7368 = vpop.permute.xlu0 %7367
          %v7371 = vunpack.c.l.s4 839922192
          %v7372 = vunpack.c.0.s8 %v7371
          %v7373 = vlaneseq
          %v7374 = vshrl.u32 %v7373, 7
          %v7375 = vsub.s32 %v7372, %v7374
          %v7376 = vrot.slane %v7368, %v7375
          %7377 = vset.pattern.permute.xlu0 9
          %7378 = vperm.xlu0 %7377, %v6206
          %v7379 = vpop.permute.xlu0 %7378
          %v7382 = vunpack.c.l.s4 839922192
          %v7383 = vunpack.c.0.s8 %v7382
          %v7384 = vlaneseq
          %v7385 = vshrl.u32 %v7384, 7
          %v7386 = vsub.s32 %v7383, %v7385
          %v7387 = vrot.slane %v7379, %v7386
          %7388 = vset.pattern.permute.xlu0 9
          %7389 = vperm.xlu0 %7388, %v6210
          %v7390 = vpop.permute.xlu0 %7389
          %v7393 = vunpack.c.l.s4 839922192
          %v7394 = vunpack.c.0.s8 %v7393
          %v7395 = vlaneseq
          %v7396 = vshrl.u32 %v7395, 7
          %v7397 = vsub.s32 %v7394, %v7396
          %v7398 = vrot.slane %v7390, %v7397
          %v7407 = vcombine.low %v7321, %v7332
          %v7408 = vcombine.low %v7343, %v7354
          %v7409 = vcombine.low %v7365, %v7376
          %v7410 = vcombine.low %v7387, %v7398
          %7411 = vrot.lane.b32.xlu0 %v7407, 64
          %v7412 = vpop.permute.xlu0 %7411
          %7413 = vrot.lane.b32.xlu0 %v7408, 64
          %v7414 = vpop.permute.xlu0 %7413
          %7415 = vrot.lane.b32.xlu0 %v7409, 64
          %v7416 = vpop.permute.xlu0 %7415
          %7417 = vrot.lane.b32.xlu0 %v7410, 64
          %v7418 = vpop.permute.xlu0 %7417
          %v7423 = vmul.f32 %v6058, %v7412
          %v7424 = vmul.f32 %v6062, %v7414
          %v7425 = vmul.f32 %v6068, %v7416
          %v7426 = vmul.f32 %v6072, %v7418
          %7431 = vrot.lane.b32.xlu0 %v7423, 64
          %v7432 = vpop.permute.xlu0 %7431
          %7433 = vrot.lane.b32.xlu0 %v7424, 64
          %v7434 = vpop.permute.xlu0 %7433
          %7435 = vrot.lane.b32.xlu0 %v7425, 64
          %v7436 = vpop.permute.xlu0 %7435
          %7437 = vrot.lane.b32.xlu0 %v7426, 64
          %v7438 = vpop.permute.xlu0 %7437
          %v7443 = vadd.f32 %v7307, %v7432
          %v7444 = vadd.f32 %v7308, %v7434
          %v7445 = vadd.f32 %v7309, %v7436
          %v7446 = vadd.f32 %v7310, %v7438
          %7447 = vset.pattern.permute.xlu0 10
          %7448 = vperm.xlu0 %7447, %v6182
          %v7449 = vpop.permute.xlu0 %7448
          %v7452 = vunpack.c.l.s4 839922192
          %v7453 = vunpack.c.0.s8 %v7452
          %v7454 = vlaneseq
          %v7455 = vshrl.u32 %v7454, 7
          %v7456 = vsub.s32 %v7453, %v7455
          %v7457 = vrot.slane %v7449, %v7456
          %7458 = vset.pattern.permute.xlu0 10
          %7459 = vperm.xlu0 %7458, %v6186
          %v7460 = vpop.permute.xlu0 %7459
          %v7463 = vunpack.c.l.s4 839922192
          %v7464 = vunpack.c.0.s8 %v7463
          %v7465 = vlaneseq
          %v7466 = vshrl.u32 %v7465, 7
          %v7467 = vsub.s32 %v7464, %v7466
          %v7468 = vrot.slane %v7460, %v7467
          %7469 = vset.pattern.permute.xlu0 10
          %7470 = vperm.xlu0 %7469, %v6190
          %v7471 = vpop.permute.xlu0 %7470
          %v7474 = vunpack.c.l.s4 839922192
          %v7475 = vunpack.c.0.s8 %v7474
          %v7476 = vlaneseq
          %v7477 = vshrl.u32 %v7476, 7
          %v7478 = vsub.s32 %v7475, %v7477
          %v7479 = vrot.slane %v7471, %v7478
          %7480 = vset.pattern.permute.xlu0 10
          %7481 = vperm.xlu0 %7480, %v6194
          %v7482 = vpop.permute.xlu0 %7481
          %v7485 = vunpack.c.l.s4 839922192
          %v7486 = vunpack.c.0.s8 %v7485
          %v7487 = vlaneseq
          %v7488 = vshrl.u32 %v7487, 7
          %v7489 = vsub.s32 %v7486, %v7488
          %v7490 = vrot.slane %v7482, %v7489
          %7491 = vset.pattern.permute.xlu0 10
          %7492 = vperm.xlu0 %7491, %v6198
          %v7493 = vpop.permute.xlu0 %7492
          %v7496 = vunpack.c.l.s4 839922192
          %v7497 = vunpack.c.0.s8 %v7496
          %v7498 = vlaneseq
          %v7499 = vshrl.u32 %v7498, 7
          %v7500 = vsub.s32 %v7497, %v7499
          %v7501 = vrot.slane %v7493, %v7500
          %7502 = vset.pattern.permute.xlu0 10
          %7503 = vperm.xlu0 %7502, %v6202
          %v7504 = vpop.permute.xlu0 %7503
          %v7507 = vunpack.c.l.s4 839922192
          %v7508 = vunpack.c.0.s8 %v7507
          %v7509 = vlaneseq
          %v7510 = vshrl.u32 %v7509, 7
          %v7511 = vsub.s32 %v7508, %v7510
          %v7512 = vrot.slane %v7504, %v7511
          %7513 = vset.pattern.permute.xlu0 10
          %7514 = vperm.xlu0 %7513, %v6206
          %v7515 = vpop.permute.xlu0 %7514
          %v7518 = vunpack.c.l.s4 839922192
          %v7519 = vunpack.c.0.s8 %v7518
          %v7520 = vlaneseq
          %v7521 = vshrl.u32 %v7520, 7
          %v7522 = vsub.s32 %v7519, %v7521
          %v7523 = vrot.slane %v7515, %v7522
          %7524 = vset.pattern.permute.xlu0 10
          %7525 = vperm.xlu0 %7524, %v6210
          %v7526 = vpop.permute.xlu0 %7525
          %v7529 = vunpack.c.l.s4 839922192
          %v7530 = vunpack.c.0.s8 %v7529
          %v7531 = vlaneseq
          %v7532 = vshrl.u32 %v7531, 7
          %v7533 = vsub.s32 %v7530, %v7532
          %v7534 = vrot.slane %v7526, %v7533
          %v7543 = vcombine.low %v7457, %v7468
          %v7544 = vcombine.low %v7479, %v7490
          %v7545 = vcombine.low %v7501, %v7512
          %v7546 = vcombine.low %v7523, %v7534
          %v7551 = vmul.f32 %v6060, %v7543
          %v7552 = vmul.f32 %v6064, %v7544
          %v7553 = vmul.f32 %v6070, %v7545
          %v7554 = vmul.f32 %v6074, %v7546
          %v7555 = vadd.f32 %v7443, %v7551
          %v7556 = vadd.f32 %v7444, %v7552
          %v7557 = vadd.f32 %v7445, %v7553
          %v7558 = vadd.f32 %v7446, %v7554
          %7559 = vset.pattern.permute.xlu0 11
          %7560 = vperm.xlu0 %7559, %v6182
          %v7561 = vpop.permute.xlu0 %7560
          %v7564 = vunpack.c.l.s4 839922192
          %v7565 = vunpack.c.0.s8 %v7564
          %v7566 = vlaneseq
          %v7567 = vshrl.u32 %v7566, 7
          %v7568 = vsub.s32 %v7565, %v7567
          %v7569 = vrot.slane %v7561, %v7568
          %7570 = vset.pattern.permute.xlu0 11
          %7571 = vperm.xlu0 %7570, %v6186
          %v7572 = vpop.permute.xlu0 %7571
          %v7575 = vunpack.c.l.s4 839922192
          %v7576 = vunpack.c.0.s8 %v7575
          %v7577 = vlaneseq
          %v7578 = vshrl.u32 %v7577, 7
          %v7579 = vsub.s32 %v7576, %v7578
          %v7580 = vrot.slane %v7572, %v7579
          %7581 = vset.pattern.permute.xlu0 11
          %7582 = vperm.xlu0 %7581, %v6190
          %v7583 = vpop.permute.xlu0 %7582
          %v7586 = vunpack.c.l.s4 839922192
          %v7587 = vunpack.c.0.s8 %v7586
          %v7588 = vlaneseq
          %v7589 = vshrl.u32 %v7588, 7
          %v7590 = vsub.s32 %v7587, %v7589
          %v7591 = vrot.slane %v7583, %v7590
          %7592 = vset.pattern.permute.xlu0 11
          %7593 = vperm.xlu0 %7592, %v6194
          %v7594 = vpop.permute.xlu0 %7593
          %v7597 = vunpack.c.l.s4 839922192
          %v7598 = vunpack.c.0.s8 %v7597
          %v7599 = vlaneseq
          %v7600 = vshrl.u32 %v7599, 7
          %v7601 = vsub.s32 %v7598, %v7600
          %v7602 = vrot.slane %v7594, %v7601
          %7603 = vset.pattern.permute.xlu0 11
          %7604 = vperm.xlu0 %7603, %v6198
          %v7605 = vpop.permute.xlu0 %7604
          %v7608 = vunpack.c.l.s4 839922192
          %v7609 = vunpack.c.0.s8 %v7608
          %v7610 = vlaneseq
          %v7611 = vshrl.u32 %v7610, 7
          %v7612 = vsub.s32 %v7609, %v7611
          %v7613 = vrot.slane %v7605, %v7612
          %7614 = vset.pattern.permute.xlu0 11
          %7615 = vperm.xlu0 %7614, %v6202
          %v7616 = vpop.permute.xlu0 %7615
          %v7619 = vunpack.c.l.s4 839922192
          %v7620 = vunpack.c.0.s8 %v7619
          %v7621 = vlaneseq
          %v7622 = vshrl.u32 %v7621, 7
          %v7623 = vsub.s32 %v7620, %v7622
          %v7624 = vrot.slane %v7616, %v7623
          %7625 = vset.pattern.permute.xlu0 11
          %7626 = vperm.xlu0 %7625, %v6206
          %v7627 = vpop.permute.xlu0 %7626
          %v7630 = vunpack.c.l.s4 839922192
          %v7631 = vunpack.c.0.s8 %v7630
          %v7632 = vlaneseq
          %v7633 = vshrl.u32 %v7632, 7
          %v7634 = vsub.s32 %v7631, %v7633
          %v7635 = vrot.slane %v7627, %v7634
          %7636 = vset.pattern.permute.xlu0 11
          %7637 = vperm.xlu0 %7636, %v6210
          %v7638 = vpop.permute.xlu0 %7637
          %v7641 = vunpack.c.l.s4 839922192
          %v7642 = vunpack.c.0.s8 %v7641
          %v7643 = vlaneseq
          %v7644 = vshrl.u32 %v7643, 7
          %v7645 = vsub.s32 %v7642, %v7644
          %v7646 = vrot.slane %v7638, %v7645
          %v7655 = vcombine.low %v7569, %v7580
          %v7656 = vcombine.low %v7591, %v7602
          %v7657 = vcombine.low %v7613, %v7624
          %v7658 = vcombine.low %v7635, %v7646
          %7659 = vrot.lane.b32.xlu0 %v7655, 64
          %v7660 = vpop.permute.xlu0 %7659
          %7661 = vrot.lane.b32.xlu0 %v7656, 64
          %v7662 = vpop.permute.xlu0 %7661
          %7663 = vrot.lane.b32.xlu0 %v7657, 64
          %v7664 = vpop.permute.xlu0 %7663
          %7665 = vrot.lane.b32.xlu0 %v7658, 64
          %v7666 = vpop.permute.xlu0 %7665
          %v7671 = vmul.f32 %v6060, %v7660
          %v7672 = vmul.f32 %v6064, %v7662
          %v7673 = vmul.f32 %v6070, %v7664
          %v7674 = vmul.f32 %v6074, %v7666
          %7679 = vrot.lane.b32.xlu0 %v7671, 64
          %v7680 = vpop.permute.xlu0 %7679
          %7681 = vrot.lane.b32.xlu0 %v7672, 64
          %v7682 = vpop.permute.xlu0 %7681
          %7683 = vrot.lane.b32.xlu0 %v7673, 64
          %v7684 = vpop.permute.xlu0 %7683
          %7685 = vrot.lane.b32.xlu0 %v7674, 64
          %v7686 = vpop.permute.xlu0 %7685
          %v7691 = vadd.f32 %v7555, %v7680
          %v7692 = vadd.f32 %v7556, %v7682
          %v7693 = vadd.f32 %v7557, %v7684
          %v7694 = vadd.f32 %v7558, %v7686
          %7695 = vset.pattern.permute.xlu0 12
          %7696 = vperm.xlu0 %7695, %v6182
          %v7697 = vpop.permute.xlu0 %7696
          %v7700 = vunpack.c.l.s4 839922192
          %v7701 = vunpack.c.0.s8 %v7700
          %v7702 = vlaneseq
          %v7703 = vshrl.u32 %v7702, 7
          %v7704 = vsub.s32 %v7701, %v7703
          %v7705 = vrot.slane %v7697, %v7704
          %7706 = vset.pattern.permute.xlu0 12
          %7707 = vperm.xlu0 %7706, %v6186
          %v7708 = vpop.permute.xlu0 %7707
          %v7711 = vunpack.c.l.s4 839922192
          %v7712 = vunpack.c.0.s8 %v7711
          %v7713 = vlaneseq
          %v7714 = vshrl.u32 %v7713, 7
          %v7715 = vsub.s32 %v7712, %v7714
          %v7716 = vrot.slane %v7708, %v7715
          %7717 = vset.pattern.permute.xlu0 12
          %7718 = vperm.xlu0 %7717, %v6190
          %v7719 = vpop.permute.xlu0 %7718
          %v7722 = vunpack.c.l.s4 839922192
          %v7723 = vunpack.c.0.s8 %v7722
          %v7724 = vlaneseq
          %v7725 = vshrl.u32 %v7724, 7
          %v7726 = vsub.s32 %v7723, %v7725
          %v7727 = vrot.slane %v7719, %v7726
          %7728 = vset.pattern.permute.xlu0 12
          %7729 = vperm.xlu0 %7728, %v6194
          %v7730 = vpop.permute.xlu0 %7729
          %v7733 = vunpack.c.l.s4 839922192
          %v7734 = vunpack.c.0.s8 %v7733
          %v7735 = vlaneseq
          %v7736 = vshrl.u32 %v7735, 7
          %v7737 = vsub.s32 %v7734, %v7736
          %v7738 = vrot.slane %v7730, %v7737
          %7739 = vset.pattern.permute.xlu0 12
          %7740 = vperm.xlu0 %7739, %v6198
          %v7741 = vpop.permute.xlu0 %7740
          %v7744 = vunpack.c.l.s4 839922192
          %v7745 = vunpack.c.0.s8 %v7744
          %v7746 = vlaneseq
          %v7747 = vshrl.u32 %v7746, 7
          %v7748 = vsub.s32 %v7745, %v7747
          %v7749 = vrot.slane %v7741, %v7748
          %7750 = vset.pattern.permute.xlu0 12
          %7751 = vperm.xlu0 %7750, %v6202
          %v7752 = vpop.permute.xlu0 %7751
          %v7755 = vunpack.c.l.s4 839922192
          %v7756 = vunpack.c.0.s8 %v7755
          %v7757 = vlaneseq
          %v7758 = vshrl.u32 %v7757, 7
          %v7759 = vsub.s32 %v7756, %v7758
          %v7760 = vrot.slane %v7752, %v7759
          %7761 = vset.pattern.permute.xlu0 12
          %7762 = vperm.xlu0 %7761, %v6206
          %v7763 = vpop.permute.xlu0 %7762
          %v7766 = vunpack.c.l.s4 839922192
          %v7767 = vunpack.c.0.s8 %v7766
          %v7768 = vlaneseq
          %v7769 = vshrl.u32 %v7768, 7
          %v7770 = vsub.s32 %v7767, %v7769
          %v7771 = vrot.slane %v7763, %v7770
          %7772 = vset.pattern.permute.xlu0 12
          %7773 = vperm.xlu0 %7772, %v6210
          %v7774 = vpop.permute.xlu0 %7773
          %v7777 = vunpack.c.l.s4 839922192
          %v7778 = vunpack.c.0.s8 %v7777
          %v7779 = vlaneseq
          %v7780 = vshrl.u32 %v7779, 7
          %v7781 = vsub.s32 %v7778, %v7780
          %v7782 = vrot.slane %v7774, %v7781
          %v7791 = vcombine.low %v7705, %v7716
          %v7792 = vcombine.low %v7727, %v7738
          %v7793 = vcombine.low %v7749, %v7760
          %v7794 = vcombine.low %v7771, %v7782
          %v7799 = vmul.f32 %v6111, %v7791
          %v7800 = vmul.f32 %v6115, %v7792
          %v7801 = vmul.f32 %v6121, %v7793
          %v7802 = vmul.f32 %v6125, %v7794
          %v7803 = vadd.f32 %v7691, %v7799
          %v7804 = vadd.f32 %v7692, %v7800
          %v7805 = vadd.f32 %v7693, %v7801
          %v7806 = vadd.f32 %v7694, %v7802
          %7807 = vset.pattern.permute.xlu0 13
          %7808 = vperm.xlu0 %7807, %v6182
          %v7809 = vpop.permute.xlu0 %7808
          %v7812 = vunpack.c.l.s4 839922192
          %v7813 = vunpack.c.0.s8 %v7812
          %v7814 = vlaneseq
          %v7815 = vshrl.u32 %v7814, 7
          %v7816 = vsub.s32 %v7813, %v7815
          %v7817 = vrot.slane %v7809, %v7816
          %7818 = vset.pattern.permute.xlu0 13
          %7819 = vperm.xlu0 %7818, %v6186
          %v7820 = vpop.permute.xlu0 %7819
          %v7823 = vunpack.c.l.s4 839922192
          %v7824 = vunpack.c.0.s8 %v7823
          %v7825 = vlaneseq
          %v7826 = vshrl.u32 %v7825, 7
          %v7827 = vsub.s32 %v7824, %v7826
          %v7828 = vrot.slane %v7820, %v7827
          %7829 = vset.pattern.permute.xlu0 13
          %7830 = vperm.xlu0 %7829, %v6190
          %v7831 = vpop.permute.xlu0 %7830
          %v7834 = vunpack.c.l.s4 839922192
          %v7835 = vunpack.c.0.s8 %v7834
          %v7836 = vlaneseq
          %v7837 = vshrl.u32 %v7836, 7
          %v7838 = vsub.s32 %v7835, %v7837
          %v7839 = vrot.slane %v7831, %v7838
          %7840 = vset.pattern.permute.xlu0 13
          %7841 = vperm.xlu0 %7840, %v6194
          %v7842 = vpop.permute.xlu0 %7841
          %v7845 = vunpack.c.l.s4 839922192
          %v7846 = vunpack.c.0.s8 %v7845
          %v7847 = vlaneseq
          %v7848 = vshrl.u32 %v7847, 7
          %v7849 = vsub.s32 %v7846, %v7848
          %v7850 = vrot.slane %v7842, %v7849
          %7851 = vset.pattern.permute.xlu0 13
          %7852 = vperm.xlu0 %7851, %v6198
          %v7853 = vpop.permute.xlu0 %7852
          %v7856 = vunpack.c.l.s4 839922192
          %v7857 = vunpack.c.0.s8 %v7856
          %v7858 = vlaneseq
          %v7859 = vshrl.u32 %v7858, 7
          %v7860 = vsub.s32 %v7857, %v7859
          %v7861 = vrot.slane %v7853, %v7860
          %7862 = vset.pattern.permute.xlu0 13
          %7863 = vperm.xlu0 %7862, %v6202
          %v7864 = vpop.permute.xlu0 %7863
          %v7867 = vunpack.c.l.s4 839922192
          %v7868 = vunpack.c.0.s8 %v7867
          %v7869 = vlaneseq
          %v7870 = vshrl.u32 %v7869, 7
          %v7871 = vsub.s32 %v7868, %v7870
          %v7872 = vrot.slane %v7864, %v7871
          %7873 = vset.pattern.permute.xlu0 13
          %7874 = vperm.xlu0 %7873, %v6206
          %v7875 = vpop.permute.xlu0 %7874
          %v7878 = vunpack.c.l.s4 839922192
          %v7879 = vunpack.c.0.s8 %v7878
          %v7880 = vlaneseq
          %v7881 = vshrl.u32 %v7880, 7
          %v7882 = vsub.s32 %v7879, %v7881
          %v7883 = vrot.slane %v7875, %v7882
          %7884 = vset.pattern.permute.xlu0 13
          %7885 = vperm.xlu0 %7884, %v6210
          %v7886 = vpop.permute.xlu0 %7885
          %v7889 = vunpack.c.l.s4 839922192
          %v7890 = vunpack.c.0.s8 %v7889
          %v7891 = vlaneseq
          %v7892 = vshrl.u32 %v7891, 7
          %v7893 = vsub.s32 %v7890, %v7892
          %v7894 = vrot.slane %v7886, %v7893
          %v7903 = vcombine.low %v7817, %v7828
          %v7904 = vcombine.low %v7839, %v7850
          %v7905 = vcombine.low %v7861, %v7872
          %v7906 = vcombine.low %v7883, %v7894
          %7907 = vrot.lane.b32.xlu0 %v7903, 64
          %v7908 = vpop.permute.xlu0 %7907
          %7909 = vrot.lane.b32.xlu0 %v7904, 64
          %v7910 = vpop.permute.xlu0 %7909
          %7911 = vrot.lane.b32.xlu0 %v7905, 64
          %v7912 = vpop.permute.xlu0 %7911
          %7913 = vrot.lane.b32.xlu0 %v7906, 64
          %v7914 = vpop.permute.xlu0 %7913
          %v7919 = vmul.f32 %v6111, %v7908
          %v7920 = vmul.f32 %v6115, %v7910
          %v7921 = vmul.f32 %v6121, %v7912
          %v7922 = vmul.f32 %v6125, %v7914
          %7927 = vrot.lane.b32.xlu0 %v7919, 64
          %v7928 = vpop.permute.xlu0 %7927
          %7929 = vrot.lane.b32.xlu0 %v7920, 64
          %v7930 = vpop.permute.xlu0 %7929
          %7931 = vrot.lane.b32.xlu0 %v7921, 64
          %v7932 = vpop.permute.xlu0 %7931
          %7933 = vrot.lane.b32.xlu0 %v7922, 64
          %v7934 = vpop.permute.xlu0 %7933
          %v7939 = vadd.f32 %v7803, %v7928
          %v7940 = vadd.f32 %v7804, %v7930
          %v7941 = vadd.f32 %v7805, %v7932
          %v7942 = vadd.f32 %v7806, %v7934
          %7943 = vset.pattern.permute.xlu0 14
          %7944 = vperm.xlu0 %7943, %v6182
          %v7945 = vpop.permute.xlu0 %7944
          %v7948 = vunpack.c.l.s4 839922192
          %v7949 = vunpack.c.0.s8 %v7948
          %v7950 = vlaneseq
          %v7951 = vshrl.u32 %v7950, 7
          %v7952 = vsub.s32 %v7949, %v7951
          %v7953 = vrot.slane %v7945, %v7952
          %7954 = vset.pattern.permute.xlu0 14
          %7955 = vperm.xlu0 %7954, %v6186
          %v7956 = vpop.permute.xlu0 %7955
          %v7959 = vunpack.c.l.s4 839922192
          %v7960 = vunpack.c.0.s8 %v7959
          %v7961 = vlaneseq
          %v7962 = vshrl.u32 %v7961, 7
          %v7963 = vsub.s32 %v7960, %v7962
          %v7964 = vrot.slane %v7956, %v7963
          %7965 = vset.pattern.permute.xlu0 14
          %7966 = vperm.xlu0 %7965, %v6190
          %v7967 = vpop.permute.xlu0 %7966
          %v7970 = vunpack.c.l.s4 839922192
          %v7971 = vunpack.c.0.s8 %v7970
          %v7972 = vlaneseq
          %v7973 = vshrl.u32 %v7972, 7
          %v7974 = vsub.s32 %v7971, %v7973
          %v7975 = vrot.slane %v7967, %v7974
          %7976 = vset.pattern.permute.xlu0 14
          %7977 = vperm.xlu0 %7976, %v6194
          %v7978 = vpop.permute.xlu0 %7977
          %v7981 = vunpack.c.l.s4 839922192
          %v7982 = vunpack.c.0.s8 %v7981
          %v7983 = vlaneseq
          %v7984 = vshrl.u32 %v7983, 7
          %v7985 = vsub.s32 %v7982, %v7984
          %v7986 = vrot.slane %v7978, %v7985
          %7987 = vset.pattern.permute.xlu0 14
          %7988 = vperm.xlu0 %7987, %v6198
          %v7989 = vpop.permute.xlu0 %7988
          %v7992 = vunpack.c.l.s4 839922192
          %v7993 = vunpack.c.0.s8 %v7992
          %v7994 = vlaneseq
          %v7995 = vshrl.u32 %v7994, 7
          %v7996 = vsub.s32 %v7993, %v7995
          %v7997 = vrot.slane %v7989, %v7996
          %7998 = vset.pattern.permute.xlu0 14
          %7999 = vperm.xlu0 %7998, %v6202
          %v8000 = vpop.permute.xlu0 %7999
          %v8003 = vunpack.c.l.s4 839922192
          %v8004 = vunpack.c.0.s8 %v8003
          %v8005 = vlaneseq
          %v8006 = vshrl.u32 %v8005, 7
          %v8007 = vsub.s32 %v8004, %v8006
          %v8008 = vrot.slane %v8000, %v8007
          %8009 = vset.pattern.permute.xlu0 14
          %8010 = vperm.xlu0 %8009, %v6206
          %v8011 = vpop.permute.xlu0 %8010
          %v8014 = vunpack.c.l.s4 839922192
          %v8015 = vunpack.c.0.s8 %v8014
          %v8016 = vlaneseq
          %v8017 = vshrl.u32 %v8016, 7
          %v8018 = vsub.s32 %v8015, %v8017
          %v8019 = vrot.slane %v8011, %v8018
          %8020 = vset.pattern.permute.xlu0 14
          %8021 = vperm.xlu0 %8020, %v6210
          %v8022 = vpop.permute.xlu0 %8021
          %v8025 = vunpack.c.l.s4 839922192
          %v8026 = vunpack.c.0.s8 %v8025
          %v8027 = vlaneseq
          %v8028 = vshrl.u32 %v8027, 7
          %v8029 = vsub.s32 %v8026, %v8028
          %v8030 = vrot.slane %v8022, %v8029
          %v8039 = vcombine.low %v7953, %v7964
          %v8040 = vcombine.low %v7975, %v7986
          %v8041 = vcombine.low %v7997, %v8008
          %v8042 = vcombine.low %v8019, %v8030
          %v8047 = vmul.f32 %v6113, %v8039
          %v8048 = vmul.f32 %v6117, %v8040
          %v8049 = vmul.f32 %v6123, %v8041
          %v8050 = vmul.f32 %v6127, %v8042
          %v8051 = vadd.f32 %v7939, %v8047
          %v8052 = vadd.f32 %v7940, %v8048
          %v8053 = vadd.f32 %v7941, %v8049
          %v8054 = vadd.f32 %v7942, %v8050
          %8055 = vset.pattern.permute.xlu0 15
          %8056 = vperm.xlu0 %8055, %v6182
          %v8057 = vpop.permute.xlu0 %8056
          %v8060 = vunpack.c.l.s4 839922192
          %v8061 = vunpack.c.0.s8 %v8060
          %v8062 = vlaneseq
          %v8063 = vshrl.u32 %v8062, 7
          %v8064 = vsub.s32 %v8061, %v8063
          %v8065 = vrot.slane %v8057, %v8064
          %8066 = vset.pattern.permute.xlu0 15
          %8067 = vperm.xlu0 %8066, %v6186
          %v8068 = vpop.permute.xlu0 %8067
          %v8071 = vunpack.c.l.s4 839922192
          %v8072 = vunpack.c.0.s8 %v8071
          %v8073 = vlaneseq
          %v8074 = vshrl.u32 %v8073, 7
          %v8075 = vsub.s32 %v8072, %v8074
          %v8076 = vrot.slane %v8068, %v8075
          %8077 = vset.pattern.permute.xlu0 15
          %8078 = vperm.xlu0 %8077, %v6190
          %v8079 = vpop.permute.xlu0 %8078
          %v8082 = vunpack.c.l.s4 839922192
          %v8083 = vunpack.c.0.s8 %v8082
          %v8084 = vlaneseq
          %v8085 = vshrl.u32 %v8084, 7
          %v8086 = vsub.s32 %v8083, %v8085
          %v8087 = vrot.slane %v8079, %v8086
          %8088 = vset.pattern.permute.xlu0 15
          %8089 = vperm.xlu0 %8088, %v6194
          %v8090 = vpop.permute.xlu0 %8089
          %v8093 = vunpack.c.l.s4 839922192
          %v8094 = vunpack.c.0.s8 %v8093
          %v8095 = vlaneseq
          %v8096 = vshrl.u32 %v8095, 7
          %v8097 = vsub.s32 %v8094, %v8096
          %v8098 = vrot.slane %v8090, %v8097
          %8099 = vset.pattern.permute.xlu0 15
          %8100 = vperm.xlu0 %8099, %v6198
          %v8101 = vpop.permute.xlu0 %8100
          %v8104 = vunpack.c.l.s4 839922192
          %v8105 = vunpack.c.0.s8 %v8104
          %v8106 = vlaneseq
          %v8107 = vshrl.u32 %v8106, 7
          %v8108 = vsub.s32 %v8105, %v8107
          %v8109 = vrot.slane %v8101, %v8108
          %8110 = vset.pattern.permute.xlu0 15
          %8111 = vperm.xlu0 %8110, %v6202
          %v8112 = vpop.permute.xlu0 %8111
          %v8115 = vunpack.c.l.s4 839922192
          %v8116 = vunpack.c.0.s8 %v8115
          %v8117 = vlaneseq
          %v8118 = vshrl.u32 %v8117, 7
          %v8119 = vsub.s32 %v8116, %v8118
          %v8120 = vrot.slane %v8112, %v8119
          %8121 = vset.pattern.permute.xlu0 15
          %8122 = vperm.xlu0 %8121, %v6206
          %v8123 = vpop.permute.xlu0 %8122
          %v8126 = vunpack.c.l.s4 839922192
          %v8127 = vunpack.c.0.s8 %v8126
          %v8128 = vlaneseq
          %v8129 = vshrl.u32 %v8128, 7
          %v8130 = vsub.s32 %v8127, %v8129
          %v8131 = vrot.slane %v8123, %v8130
          %8132 = vset.pattern.permute.xlu0 15
          %8133 = vperm.xlu0 %8132, %v6210
          %v8134 = vpop.permute.xlu0 %8133
          %v8137 = vunpack.c.l.s4 839922192
          %v8138 = vunpack.c.0.s8 %v8137
          %v8139 = vlaneseq
          %v8140 = vshrl.u32 %v8139, 7
          %v8141 = vsub.s32 %v8138, %v8140
          %v8142 = vrot.slane %v8134, %v8141
          %v8151 = vcombine.low %v8065, %v8076
          %v8152 = vcombine.low %v8087, %v8098
          %v8153 = vcombine.low %v8109, %v8120
          %v8154 = vcombine.low %v8131, %v8142
          %8155 = vrot.lane.b32.xlu0 %v8151, 64
          %v8156 = vpop.permute.xlu0 %8155
          %8157 = vrot.lane.b32.xlu0 %v8152, 64
          %v8158 = vpop.permute.xlu0 %8157
          %8159 = vrot.lane.b32.xlu0 %v8153, 64
          %v8160 = vpop.permute.xlu0 %8159
          %8161 = vrot.lane.b32.xlu0 %v8154, 64
          %v8162 = vpop.permute.xlu0 %8161
          %v8167 = vmul.f32 %v6113, %v8156
          %v8168 = vmul.f32 %v6117, %v8158
          %v8169 = vmul.f32 %v6123, %v8160
          %v8170 = vmul.f32 %v6127, %v8162
          %8175 = vrot.lane.b32.xlu0 %v8167, 64
          %v8176 = vpop.permute.xlu0 %8175
          %8177 = vrot.lane.b32.xlu0 %v8168, 64
          %v8178 = vpop.permute.xlu0 %8177
          %8179 = vrot.lane.b32.xlu0 %v8169, 64
          %v8180 = vpop.permute.xlu0 %8179
          %8181 = vrot.lane.b32.xlu0 %v8170, 64
          %v8182 = vpop.permute.xlu0 %8181
          %v8187 = vadd.f32 %v8051, %v8176
          %v8188 = vadd.f32 %v8052, %v8178
          %v8189 = vadd.f32 %v8053, %v8180
          %v8190 = vadd.f32 %v8054, %v8182
          %v8193 = vrot.slane %v8187, 4
          %v8194 = vrot.slane %v8189, 4
          %v8197 = vadd.f32 %v8187, %v8193
          %v8198 = vadd.f32 %v8189, %v8194
          %v8199 = vadd.f32 %v8197, %v8188
          %v8200 = vadd.f32 %v8198, %v8190
          %v8203 = vrot.slane %v8188, 4
          %v8204 = vrot.slane %v8190, 4
          %v8207 = vadd.f32 %v8199, %v8203
          %v8208 = vadd.f32 %v8200, %v8204
          %v8209 = vmul.f32 %v8207, 0.5
          %v8210 = vmul.f32 %v8208, 0.5
          %v8211 = vmax.f32 %v8209, 0.0
          %v8212 = vmax.f32 %v8210, 0.0
          %vm8213 = vcmask 519168
          %v8214 = vsel %vm8213, %v8211, 0.0
          %v8215 = vrot.slane %v8214, 4
          %v8216 = vadd.f32 %v8214, %v8215
          %v8217 = vrot.slane %v8216, 2
          %v8218 = vadd.f32 %v8216, %v8217
          %v8219 = vrot.slane %v8218, 1
          %v8220 = vadd.f32 %v8218, %v8219
          %v8221 = vsel %vm8213, %v8212, 0.0
          %v8222 = vrot.slane %v8221, 4
          %v8223 = vadd.f32 %v8221, %v8222
          %v8224 = vrot.slane %v8223, 2
          %v8225 = vadd.f32 %v8223, %v8224
          %v8226 = vrot.slane %v8225, 1
          %v8227 = vadd.f32 %v8225, %v8226
          %v8228 = vrcp.pop 4.0
          %v8229 = vmul.f32 %v8220, %v8228
          %v8230 = vmul.f32 %v8227, %v8228
          %v8231 = vld [vmem:[%s11] sm:$0xff]
          %v8232 = vld [vmem:[%s11 + $0x8] sm:$0xff]
          %v8233 = vld [vmem:[%s11 + $0x10] sm:$0xff]
          %v8234 = vld [vmem:[%s11 + $0x18] sm:$0xff]
          %v8235 = vld [vmem:[%s11 + $0x20] sm:$0xff]
          %v8236 = vld [vmem:[%s11 + $0x28] sm:$0xff]
          %v8237 = vld [vmem:[%s11 + $0x30] sm:$0xff]
          %v8238 = vld [vmem:[%s11 + $0x38] sm:$0xff]
          %v8239 = vld [vmem:[%s12] sm:$0x1]
          %v8241 = vlaneseq
          %v8242 = vshrl.u32 %v8241, 7
          %v8243 = vsub.s32 0, %v8242
          %v8244 = vrot.slane %v8239, %v8243
          %vm8248 = vcmask 1041409
          %v8249 = vsel %vm8248, %v8230, %v8229
          %vm8250 = vcmask 523264
          %v8251 = vsel %vm8250, %v8249, 0
          %8253 = vmatprep.subr.mxu0 0.0
          %8254 = vmatpush1.msra.mxu0 %v8231
          %8255 = vmatprep.subr.mxu0 0.0
          %8256 = vmatpush1.msra.mxu0 %v8232
          %8257 = vmatprep.subr.mxu0 0.0
          %8258 = vmatpush1.msra.mxu0 %v8233
          %8259 = vmatprep.subr.mxu0 0.0
          %8260 = vmatpush1.msra.mxu0 %v8234
          %8261 = vmatprep.subr.mxu0 0.0
          %8262 = vmatpush1.msra.mxu0 %v8235
          %8263 = vmatprep.subr.mxu0 0.0
          %8264 = vmatpush1.msra.mxu0 %v8236
          %8265 = vmatprep.subr.mxu0 0.0
          %8266 = vmatpush1.msra.mxu0 %v8237
          %8267 = vmatprep.subr.mxu0 0.0
          %8268 = vmatpush1.msra.mxu0 %v8238
          %8269 = vmatprep.subr.mxu0 0.0
          %8270 = vmatpush1.msra.mxu0 0.0
          %8271 = vmatprep.subr.mxu0 0.0
          %8272 = vmatpush1.msra.mxu0 0.0
          %8273 = vmatprep.subr.mxu0 0.0
          %8274 = vmatpush1.msra.mxu0 0.0
          %8275 = vmatprep.subr.mxu0 0.0
          %8276 = vmatpush1.msra.mxu0 0.0
          %8277 = vmatprep.subr.mxu0 0.0
          %8278 = vmatpush1.msra.mxu0 0.0
          %8279 = vmatprep.subr.mxu0 0.0
          %8280 = vmatpush1.msra.mxu0 0.0
          %8281 = vmatprep.subr.mxu0 0.0
          %8282 = vmatpush1.msra.mxu0 0.0
          %8283 = vmatprep.subr.mxu0 0.0
          %8284 = vmatpush1.msra.mxu0 0.0
          %8285 = vmatprep.subr.mxu0 0.0
          %8286 = vmatpush1.msra.mxu0 0.0
          %8287 = vmatprep.subr.mxu0 0.0
          %8288 = vmatpush1.msra.mxu0 0.0
          %8289 = vmatprep.subr.mxu0 0.0
          %8290 = vmatpush1.msra.mxu0 0.0
          %8291 = vmatprep.subr.mxu0 0.0
          %8292 = vmatpush1.msra.mxu0 0.0
          %8293 = vmatprep.subr.mxu0 0.0
          %8294 = vmatpush1.msra.mxu0 0.0
          %8295 = vmatprep.subr.mxu0 0.0
          %8296 = vmatpush1.msra.mxu0 0.0
          %8297 = vmatprep.subr.mxu0 0.0
          %8298 = vmatpush1.msra.mxu0 0.0
          %8299 = vmatprep.subr.mxu0 0.0
          %8300 = vmatpush1.msra.mxu0 0.0
          %8301 = vmatprep.subr.mxu0 0.0
          %8302 = vmatpush1.msra.mxu0 0.0
          %8303 = vmatprep.subr.mxu0 0.0
          %8304 = vmatpush1.msra.mxu0 0.0
          %8305 = vmatprep.subr.mxu0 0.0
          %8306 = vmatpush1.msra.mxu0 0.0
          %8307 = vmatprep.subr.mxu0 0.0
          %8308 = vmatpush1.msra.mxu0 0.0
          %8309 = vmatprep.subr.mxu0 0.0
          %8310 = vmatpush1.msra.mxu0 0.0
          %8311 = vmatprep.subr.mxu0 0.0
          %8312 = vmatpush1.msra.mxu0 0.0
          %8313 = vmatprep.subr.mxu0 0.0
          %8314 = vmatpush1.msra.mxu0 0.0
          %8315 = vmatprep.subr.mxu0 0.0
          %8316 = vmatpush1.msra.mxu0 0.0
          %8317 = vmatprep.mubr.f32.mxu0 0.0
          %8318 = vmatmul.mubr.f32.gmra.mrb[0].mxu0 %v8251
          %v8319 = vpop.f32.mrb[0].mxu0
          %v8320 = vadd.f32 %v8244, %v8319
          %v8321 = vpop.f32.mrb[0].mxu0
          %8322 = vdwg.mxu0
          %v8325 = vunpack.c.l.s4 1966171168
          %v8326 = vunpack.c.0.s8 %v8325
          %v8327 = vlaneseq
          %v8328 = vshrl.u32 %v8327, 7
          %v8329 = vsub.s32 %v8326, %v8328
          %v8330 = vrot.slane %v8320, %v8329
          %v8331 = vcombine.high %v8330, %v8330
          %v8333 = vunpack.c.l.s4 1966171168
          %v8334 = vunpack.c.0.s8 %v8333
          %v8335 = vlaneseq
          %v8336 = vshrl.u32 %v8335, 7
          %v8337 = vsub.s32 %v8334, %v8336
          %v8338 = vrot.slane %v8330, %v8337
          %v8340 = vunpack.c.l.s4 1966171168
          %v8341 = vunpack.c.0.s8 %v8340
          %v8342 = vlaneseq
          %v8343 = vshrl.u32 %v8342, 7
          %v8344 = vsub.s32 %v8341, %v8343
          %v8345 = vrot.slane %v8331, %v8344
          %8348 = vst [vmem:[#allocation17] sm:$0x1] %v8338
          %8349 = vst [vmem:[#allocation17 + $0x1] sm:$0x1] %v8345
        $region108: #{se3net_forward.1} parent=71 // pred_fallthru
          _
        // Predicated region
        $region109: #{se3net_forward.1} parent=71 // pred_check
          %p8350 = pneg %p363
        $region110: #{se3net_forward.1} parent=71 // pred_check_branch
          %8352 = sbr.rel (%p8350) target = $region112
        $region111: #{se3net_forward.1} parent=71 // pred_region
          %s8353 = smul.u32 2, %s39
          %s8355 = ssub.s32 32, 32
          %8356 = vsyncadd [#allocation7], %s8355
          %s8357 = smul.addr %s8353, 16
          %s8358 = scalar_lea.hbm %s13, %s8357
          %s8359 = sshll.u32 [#allocation17], 4
          %s8360 = int_to_ptr.vmem [resolvable:$true] %s8359
          %8365 = dma.vmem_to_hbm [thread:$0]  %s8360, 32, %s8358, [#allocation7], 16, 16, 1
        $region112: #{se3net_forward.1} parent=71 // pred_fallthru
          _
        // Predicated region
        $region113: #{se3net_forward.1} parent=71 // pred_check
          %p8366 = pneg %p363
        $region114: #{se3net_forward.1} parent=71 // pred_check_branch
          %8368 = sbr.rel (%p8366) target = $region116
        $region115: #{se3net_forward.1} parent=71 // pred_region
          %8369 = dma.done [#allocation7], 32
        $region116: #{se3net_forward.1} parent=71 // pred_fallthru
          _
      $region72: #{se3net_forward.1} parent=5 // pred_fallthru
        _
      %p8370 = scmp.le.s32.totalorder 2, %s30
      // Predicated region
      $region117: #{se3net_forward.1} parent=5 // pred_check
        %p8371 = pneg %p8370
      $region118: #{se3net_forward.1} parent=5 // pred_check_branch
        %8373 = sbr.rel (%p8371) target = $region120
      $region119: #{se3net_forward.1} parent=5 // pred_region
        %s8374 = ssub.s32 %s30, 2
      $region120: #{se3net_forward.1} parent=5 // pred_fallthru
        _
    $region6: #{se3net_forward.1} parent=1 // loop_footer
      %s34 = sadd.s32 1, %s30
    $region7: #{se3net_forward.1} parent=1 // loop_footer_branch
      %29 = sbr.rel target = $region3
    $region8: #{se3net_forward.1} parent=1 // loop_exit
      _
    %8375 = vsyncpa [#allocation6], 1
    %s8376 = scalar_lea.sflag [#allocation6], 1
    %8377 = vsyncpa %s8376, 1
    %8378 = vsyncpa [#allocation9], 1
    %s8379 = scalar_lea.sflag [#allocation9], 1
    %8380 = vsyncpa %s8379, 1
    %8381 = vsyncpa [#allocation12], 1
    %s8382 = scalar_lea.sflag [#allocation12], 1
    %8383 = vsyncpa %s8382, 1
    %8384 = vsyncpa [#allocation15], 1
    %s8385 = scalar_lea.sflag [#allocation15], 1
    %8386 = vsyncpa %s8385, 1
    %8387 = vsyncpa [#allocation7], 1
    %s8388 = scalar_lea.sflag [#allocation7], 1
    %8389 = vsyncpa %s8388, 1

</llo_original>
